<compile_context>
chip_gen: v7x
topology: tpu7x:2x2x1
jax: 0.10.0
libtpu: 0.0.40
codegen_flags: <defaults>
</compile_context>

<pallas_src>
import functools

import jax
import jax.numpy as jnp
from jax import lax
from jax.experimental import pallas as pl
from jax.experimental.pallas import tpu as pltpu


# --------------------------------------------------------------------------
# Coordinate helpers (plain JAX; tiny)
# --------------------------------------------------------------------------
def normalize_coordinate(p, plane, padding=0.0):
    if plane == "xz":
        xy = p[..., jnp.array([0, 2])]
    elif plane == "xy":
        xy = p[..., jnp.array([0, 1])]
    else:  # 'yz'
        xy = p[..., jnp.array([1, 2])]
    xy = xy / (1.0 + padding + 1e-5) + 0.5
    xy = jnp.where(xy >= 1.0, 1.0 - 1e-5, xy)
    xy = jnp.where(xy < 0.0, 0.0, xy)
    return xy


def _pixel_coords(p, plane, h, w):
    """normalize_coordinate + grid_sample(align_corners=True, border) affine:
    continuous pixel-space coords in [0, W-1] x [0, H-1]."""
    xy = normalize_coordinate(p, plane, padding=0.0)
    vx = 2.0 * xy[..., 0] - 1.0
    vy = 2.0 * xy[..., 1] - 1.0
    px = jnp.clip((vx + 1.0) * 0.5 * (w - 1), 0.0, w - 1)
    py = jnp.clip((vy + 1.0) * 0.5 * (h - 1), 0.0, h - 1)
    return px, py


def _bilinear_corners(H, W, grid_xy):
    gx, gy = grid_xy[..., 0], grid_xy[..., 1]
    ix = jnp.clip((gx + 1.0) * 0.5 * (W - 1), 0.0, W - 1)   # border padding
    iy = jnp.clip((gy + 1.0) * 0.5 * (H - 1), 0.0, H - 1)
    ix0 = jnp.floor(ix)
    iy0 = jnp.floor(iy)
    wx1 = ix - ix0
    wy1 = iy - iy0
    wx0 = 1.0 - wx1
    wy0 = 1.0 - wy1
    ix0i = jnp.clip(ix0, 0, W - 1).astype(jnp.int32)
    ix1i = jnp.clip(ix0 + 1.0, 0, W - 1).astype(jnp.int32)
    iy0i = jnp.clip(iy0, 0, H - 1).astype(jnp.int32)
    iy1i = jnp.clip(iy0 + 1.0, 0, H - 1).astype(jnp.int32)
    return (ix0i, ix1i, iy0i, iy1i), (wx0, wx1, wy0, wy1)


def grid_sample_border_bilinear(c, grid_xy):
    """Gather-based reference sampler (returns (B, C, S) like PyTorch)."""
    B, C, H, W = c.shape
    (ix0i, ix1i, iy0i, iy1i), (wx0, wx1, wy0, wy1) = _bilinear_corners(H, W, grid_xy)

    def gather_b(cb, iyb, ixb):      # cb: (C, H, W), iyb/ixb: (S,)
        return cb[:, iyb, ixb]       # (C, S)

    v00 = jax.vmap(gather_b)(c, iy0i, ix0i)
    v01 = jax.vmap(gather_b)(c, iy0i, ix1i)
    v10 = jax.vmap(gather_b)(c, iy1i, ix0i)
    v11 = jax.vmap(gather_b)(c, iy1i, ix1i)
    wx0, wx1 = wx0[:, None, :], wx1[:, None, :]
    wy0, wy1 = wy0[:, None, :], wy1[:, None, :]
    return v00 * wy0 * wx0 + v01 * wy0 * wx1 + v10 * wy1 * wx0 + v11 * wy1 * wx1


# --------------------------------------------------------------------------
# Fused Pallas kernel:
#   tri-plane bilinear sample -> lifting -> n_blocks x (fc_c + ResnetBlockFC)
#   -> out_layer, all on one (ts, .) row tile per grid step.
# --------------------------------------------------------------------------
def _fused_decoder_kernel(coord_ref, slab_ref, lw_ref, lb_ref,
                          wc_ref, bc_ref, w0_ref, b0_ref, w1_ref, b1_ref,
                          ow_ref, ob_ref, o_ref, *, n_blocks, plane_h, plane_w):
    ts = coord_ref.shape[1]
    n_planes = coord_ref.shape[2] // 2
    hw = slab_ref.shape[1]
    c_per_plane = slab_ref.shape[2] // n_planes
    hn = lw_ref.shape[1]

    coords = coord_ref[0]                                       # (ts, 2P) pixel coords
    hw_iota = lax.broadcasted_iota(jnp.int32, (ts, hw), 1)

    # ---- tri-plane bilinear sampling (one-hot matmul) fused with the lifting
    lift_acc = None
    for p_i in range(n_planes):
        px = coords[:, 2 * p_i:2 * p_i + 1]                     # (ts, 1) in [0, W-1]
        py = coords[:, 2 * p_i + 1:2 * p_i + 2]
        x0 = jnp.floor(px)
        y0 = jnp.floor(py)
        wx1 = px - x0
        wy1 = py - y0
        wx0 = 1.0 - wx1
        wy0 = 1.0 - wy1
        ix0 = x0.astype(jnp.int32)
        iy0 = y0.astype(jnp.int32)
        ix1 = jnp.minimum(ix0 + 1, plane_w - 1)
        iy1 = jnp.minimum(iy0 + 1, plane_h - 1)

        def tap(iy, ix, w):
            return jnp.where(hw_iota == iy * plane_w + ix, w, 0.0)

        onehot = (tap(iy0, ix0, wy0 * wx0) + tap(iy0, ix1, wy0 * wx1)
                  + tap(iy1, ix0, wy1 * wx0) + tap(iy1, ix1, wy1 * wx1))   # (ts, hw) f32

        slab_p = slab_ref[0, :, p_i * c_per_plane:(p_i + 1) * c_per_plane]  # (hw, C)
        feat_p = jnp.dot(onehot, slab_p, preferred_element_type=jnp.float32)  # (ts, C)
        lw_p = lw_ref[p_i * c_per_plane:(p_i + 1) * c_per_plane, :]           # (C, hn)
        part = jnp.dot(feat_p, lw_p, preferred_element_type=jnp.float32)      # (ts, hn)
        lift_acc = part if lift_acc is None else lift_acc + part
    lifted = lift_acc + lb_ref[...]                              # (ts, hn) f32

    # ---- fc_c for all blocks at once (shared LHS): (ts, hn) @ (hn, nb*hn)
    lifted_bf = lifted.astype(jnp.bfloat16)
    cc = jnp.dot(lifted_bf, wc_ref[...],
                 preferred_element_type=jnp.float32) + bc_ref[...]   # (ts, nb*hn) f32

    # ---- residual MLP (ResnetBlockFC: x + fc_1(relu(fc_0(relu(x)))))
    def res_block(net, i):
        h = jnp.maximum(net, 0.0).astype(jnp.bfloat16)
        h = jnp.dot(h, w0_ref[i], preferred_element_type=jnp.float32) + b0_ref[i]
        h = jnp.maximum(h, 0.0).astype(jnp.bfloat16)
        dx = jnp.dot(h, w1_ref[i], preferred_element_type=jnp.float32) + b1_ref[i]
        return net + dx

    # block 0: net starts at zero, so net = fc_c[0](lifted) directly
    net = res_block(cc[:, 0:hn], 0)
    for i in range(1, n_blocks):                                  # static unroll
        net = res_block(net + cc[:, i * hn:(i + 1) * hn], i)

    # ---- lane-dense epilogue: out^T = W_out . net^T  -> (OUT_ROWS, ts)
    out_t = lax.dot_general(ow_ref[...], net, (((1,), (1,)), ((), ())),
                            preferred_element_type=jnp.float32) + ob_ref[...]
    o_ref[0] = out_t.astype(o_ref.dtype)


def _choose_seq_tile(s, b, hw):
    """Sample-axis tile: multiple of 128, as large as possible (amortize
    per-step overhead and RHS staging), capped so the transient (ts, HW)
    one-hot stays within a few MiB (v7x 64 MiB VMEM headroom), preferring an
    even total grid-step count (v7x has two TensorCores)."""
    cap = max(128, min(1024, ((4 << 20) // max(hw * 4, 1)) // 128 * 128))
    ts = 128
    for cand in (1024, 512, 256, 128):
        if cand <= cap and s >= 2 * cand:
            ts = cand
            break

    def total_steps(t):
        return b * ((s + t - 1) // t)

    if ts > 128 and total_steps(ts) % 2 == 1 and total_steps(ts // 2) % 2 == 0:
        ts //= 2
    return ts


# --------------------------------------------------------------------------
# Parameter init (deterministic, PyTorch (out, in) weight convention)
# --------------------------------------------------------------------------
def init_params(key, in_size, out_size, N, hidden, n_blocks):
    ks = jax.random.split(key, 4 + 6 * n_blocks)
    s = 0.2

    def w(k, shape):
        return (s * jax.random.normal(k, shape)).astype(jnp.float32)

    params = {
        "lift_w": w(ks[0], (hidden * N, in_size)),   # enn.Linear(in_type, hidden_type)
        "lift_b": w(ks[1], (hidden * N,)),
        "out_w": w(ks[2], (out_size, hidden * N)),   # enn.Linear(hidden_type, out_type)
        "out_b": w(ks[3], (out_size,)),
    }
    idx = 4
    for name in ("wc", "w0", "w1"):
        Ws, Bs = [], []
        for _ in range(n_blocks):
            Ws.append(w(ks[idx], (hidden, hidden))); idx += 1
            Bs.append(w(ks[idx], (hidden,))); idx += 1
        params[name] = jnp.stack(Ws)
        params[name.replace("w", "b")] = jnp.stack(Bs)
    return params


# --------------------------------------------------------------------------
# Full forward pass (inv_map=False branch)
# --------------------------------------------------------------------------
def tri_equi_local_decoder_forward(p, c_plane, params, *, N, hidden, n_blocks):
    B, S, _ = p.shape
    p = p.astype(jnp.float32)

    planes = [k for k in ("xy", "xz", "yz") if k in c_plane]
    n_planes = len(planes)

    # Pixel-space sampling coords (B, S, 2P) and per-batch plane slab (B, HW, P*C)
    coord_cols, slabs = [], []
    plane_h = plane_w = None
    for plane in planes:
        c = c_plane[plane].astype(jnp.float32)
        _, C, H, W = c.shape
        plane_h, plane_w = H, W   # TODO(synk): per-plane resolutions would need separate slabs
        px, py = _pixel_coords(p, plane, H, W)
        coord_cols += [px, py]
        slabs.append(jnp.transpose(c.reshape(B, C, H * W), (0, 2, 1)))   # (B, HW, C)
    coords = jnp.stack(coord_cols, axis=-1)                              # (B, S, 2P)
    slab = jnp.concatenate(slabs, axis=-1)                               # (B, HW, P*C)
    HW = plane_h * plane_w
    in_size = slab.shape[-1]

    HN = hidden * N
    nb = n_blocks
    out_size = params["out_w"].shape[0]
    OUT_ROWS = max(8, ((out_size + 7) // 8) * 8)

    # Block-diagonalize the per-block (hidden x hidden) weights so they act on
    # the (c f)-ordered hidden*N axis:  y = x @ kron(W.T, I_N).
    eye = jnp.eye(N, dtype=jnp.float32)

    def bd_w(w):    # (nb, h, h) PyTorch (out,in) -> (nb, HN, HN), x @ W layout
        return jnp.einsum("noc,fg->ncfog", w, eye).reshape(nb, HN, HN)

    def bd_b(b):    # (nb, h) -> (nb, 1, HN): bias broadcast over the group axis
        return jnp.repeat(b, N, axis=-1).reshape(nb, 1, HN)

    wc_bd, w0_bd, w1_bd = bd_w(params["wc"]), bd_w(params["w0"]), bd_w(params["w1"])
    bc_bd, b0_bd, b1_bd = bd_b(params["bc"]), bd_b(params["b0"]), bd_b(params["b1"])

    # fc_c blocks share the same LHS -> one wide (HN, nb*HN) matmul
    wc_cat = jnp.transpose(wc_bd, (1, 0, 2)).reshape(HN, nb * HN)
    bc_cat = bc_bd.reshape(1, nb * HN)

    # bf16 MXU operands for the MLP (f32 accumulation); lift/out stay f32
    wc_cat = wc_cat.astype(jnp.bfloat16)
    w0_bd = w0_bd.astype(jnp.bfloat16)
    w1_bd = w1_bd.astype(jnp.bfloat16)

    lift_w_t = params["lift_w"].T.astype(jnp.float32)           # (in_size, HN)
    lift_b = params["lift_b"].reshape(1, HN).astype(jnp.float32)
    ow2 = jnp.zeros((OUT_ROWS, HN), jnp.float32).at[:out_size].set(params["out_w"])
    ob2 = jnp.zeros((OUT_ROWS, 1), jnp.float32).at[:out_size, 0].set(params["out_b"])

    # Tiling over the sample axis; grid = (B, S_pad // ts)
    ts = _choose_seq_tile(S, B, HW)
    S_pad = ((S + ts - 1) // ts) * ts
    if S_pad != S:
        coords = jnp.pad(coords, ((0, 0), (0, S_pad - S), (0, 0)))

    kernel = functools.partial(_fused_decoder_kernel, n_blocks=nb,
                               plane_h=plane_h, plane_w=plane_w)
    inv2 = lambda b, i: (0, 0)
    inv3 = lambda b, i: (0, 0, 0)

    out = pl.pallas_call(
        kernel,
        out_shape=jax.ShapeDtypeStruct((B, OUT_ROWS, S_pad), jnp.float32),
        grid_spec=pltpu.PrefetchScalarGridSpec(
            num_scalar_prefetch=0,
            grid=(B, S_pad // ts),
            in_specs=[
                pl.BlockSpec((1, ts, 2 * n_planes), lambda b, i: (b, i, 0)),  # coords
                pl.BlockSpec((1, HW, in_size), lambda b, i: (b, 0, 0)),       # plane slab
                pl.BlockSpec((in_size, HN), inv2),                            # lift W
                pl.BlockSpec((1, HN), inv2),                                  # lift b
                pl.BlockSpec((HN, nb * HN), inv2),                            # fc_c (wide)
                pl.BlockSpec((1, nb * HN), inv2),
                pl.BlockSpec((nb, HN, HN), inv3),                             # fc_0
                pl.BlockSpec((nb, 1, HN), inv3),
                pl.BlockSpec((nb, HN, HN), inv3),                             # fc_1
                pl.BlockSpec((nb, 1, HN), inv3),
                pl.BlockSpec((OUT_ROWS, HN), inv2),                           # out W
                pl.BlockSpec((OUT_ROWS, 1), inv2),                            # out b
            ],
            out_specs=pl.BlockSpec((1, OUT_ROWS, ts), lambda b, i: (b, 0, i)),
        ),
        compiler_params=pltpu.CompilerParams(
            dimension_semantics=("parallel", "parallel")),
    )(coords, slab, lift_w_t, lift_b, wc_cat, bc_cat,
      w0_bd, b0_bd, w1_bd, b1_bd, ow2, ob2)

    out = jnp.transpose(out[:, :out_size, :S], (0, 2, 1))        # (B, S, out_size)
    if out.shape[-1] == 1:
        out = out[..., 0]                                        # .squeeze(-1)
    return out


# --------------------------------------------------------------------------
# Pure-jnp reference: gather-based sampling + explicit rearranges + 32-wide
# per-block matmuls (mirrors the PyTorch module step by step, all f32).
# --------------------------------------------------------------------------
def reference_forward(p, c_plane, params, *, N, hidden, n_blocks):
    B, S, _ = p.shape
    feats = []
    for plane in ("xy", "xz", "yz"):
        if plane in c_plane:
            xy = normalize_coordinate(p.astype(jnp.float32), plane, padding=0.0)
            feats.append(grid_sample_border_bilinear(c_plane[plane], 2.0 * xy - 1.0))
    c = jnp.transpose(jnp.concatenate(feats, axis=1), (0, 2, 1))
    lifted = c.reshape(B * S, -1) @ params["lift_w"].T + params["lift_b"]
    # rearrange '(b s) (c f) -> (b f) s c'
    cmlp = lifted.reshape(B, S, hidden, N).transpose(0, 3, 1, 2).reshape(B * N * S, hidden)
    net = jnp.zeros_like(cmlp)
    for i in range(n_blocks):
        net = net + cmlp @ params["wc"][i].T + params["bc"][i]
        h = jnp.maximum(net, 0.0) @ params["w0"][i].T + params["b0"][i]
        dx = jnp.maximum(h, 0.0) @ params["w1"][i].T + params["b1"][i]
        net = net + dx
    # rearrange '(b f) s c -> (b s) (c f)'
    net = net.reshape(B, N, S, hidden).transpose(0, 2, 3, 1).reshape(B * S, hidden * N)
    out = net @ params["out_w"].T + params["out_b"]
    out = out.reshape(B, S, -1)
    if out.shape[-1] == 1:
        out = out[..., 0]
    return out


if __name__ == "__main__":
    key = jax.random.PRNGKey(0)
    B, S = 2, 8                 # batch, query points
    N = 4                       # cyclic group order C_N
    hidden, n_blocks = 32, 5
    C_plane, H, W = 8, 16, 16   # per-plane feature channels / resolution
    in_size = 3 * C_plane       # in_type.size (concat of 3 planes)
    out_size = 1                # out_type.size (occupancy)

    kp, kw, k1, k2, k3 = jax.random.split(key, 5)
    p = jax.random.uniform(kp, (B, S, 3), jnp.float32, minval=-0.5, maxval=0.5)
    c_plane = {
        "xy": jax.random.normal(k1, (B, C_plane, H, W), jnp.float32),
        "xz": jax.random.normal(k2, (B, C_plane, H, W), jnp.float32),
        "yz": jax.random.normal(k3, (B, C_plane, H, W), jnp.float32),
    }
    params = init_params(kw, in_size, out_size, N, hidden, n_blocks)

    fwd = jax.jit(functools.partial(tri_equi_local_decoder_forward,
                                    N=N, hidden=hidden, n_blocks=n_blocks))
    out = jax.block_until_ready(fwd(p, c_plane, params))

    ref = reference_forward(p, c_plane, params, N=N, hidden=hidden, n_blocks=n_blocks)
    assert out.shape == (B, S), out.shape
    # bf16 MXU operands in the residual MLP -> compare at bf16-level tolerance,
    # normalized by the output scale (robust when individual outputs are ~0).
    err = float(jnp.max(jnp.abs(out - ref)))
    scale = float(jnp.max(jnp.abs(ref)))
    assert err <= 2e-2 * scale + 1e-2, (err, scale)
    print("KERNEL_OK")
</pallas_src>

<mosaic_0001>
module attributes {stable_mosaic.version = 11 : i64} {
  func.func @_fused_decoder_kernel(%arg0: i32, %arg1: i32, %arg2: memref<1x128x6xf32, #tpu.memory_space<vmem>>, %arg3: memref<1x256x24xf32, #tpu.memory_space<vmem>>, %arg4: memref<24x128xf32, #tpu.memory_space<vmem>>, %arg5: memref<1x128xf32, #tpu.memory_space<vmem>>, %arg6: memref<128x640xbf16, #tpu.memory_space<vmem>>, %arg7: memref<1x640xf32, #tpu.memory_space<vmem>>, %arg8: memref<5x128x128xbf16, #tpu.memory_space<vmem>>, %arg9: memref<5x1x128xf32, #tpu.memory_space<vmem>>, %arg10: memref<5x128x128xbf16, #tpu.memory_space<vmem>>, %arg11: memref<5x1x128xf32, #tpu.memory_space<vmem>>, %arg12: memref<8x128xf32, #tpu.memory_space<vmem>>, %arg13: memref<8x1xf32, #tpu.memory_space<vmem>>, %arg14: memref<1x8x128xf32, #tpu.memory_space<vmem>>) attributes {dimension_semantics = [#tpu.dimension_semantics<parallel>, #tpu.dimension_semantics<parallel>], iteration_bounds = array<i64: 2, 1>, scalar_prefetch = 0 : i64, scratch_operands = 0 : i64, tpu.core_type = #tpu.core_type<tc>, window_params = [{transform_indices = @transform_0, window_bounds = array<i64: 1, 128, 6>}, {transform_indices = @transform_1, window_bounds = array<i64: 1, 256, 24>}, {pipeline_mode = #tpu.pipeline_mode<synchronous>, transform_indices = @transform_2, window_bounds = array<i64: 24, 128>}, {pipeline_mode = #tpu.pipeline_mode<synchronous>, transform_indices = @transform_3, window_bounds = array<i64: 1, 128>}, {pipeline_mode = #tpu.pipeline_mode<synchronous>, transform_indices = @transform_4, window_bounds = array<i64: 128, 640>}, {pipeline_mode = #tpu.pipeline_mode<synchronous>, transform_indices = @transform_5, window_bounds = array<i64: 1, 640>}, {pipeline_mode = #tpu.pipeline_mode<synchronous>, transform_indices = @transform_6, window_bounds = array<i64: 5, 128, 128>}, {pipeline_mode = #tpu.pipeline_mode<synchronous>, transform_indices = @transform_7, window_bounds = array<i64: 5, 1, 128>}, {pipeline_mode = #tpu.pipeline_mode<synchronous>, transform_indices = @transform_8, window_bounds = array<i64: 5, 128, 128>}, {pipeline_mode = #tpu.pipeline_mode<synchronous>, transform_indices = @transform_9, window_bounds = array<i64: 5, 1, 128>}, {pipeline_mode = #tpu.pipeline_mode<synchronous>, transform_indices = @transform_10, window_bounds = array<i64: 8, 128>}, {pipeline_mode = #tpu.pipeline_mode<synchronous>, transform_indices = @transform_11, window_bounds = array<i64: 8, 1>}, {transform_indices = @transform_12, window_bounds = array<i64: 1, 8, 128>}]} {
    %c0 = arith.constant 0 : index
    %c0_0 = arith.constant 0 : index
    %c0_1 = arith.constant 0 : index
    %0 = vector.load %arg2[%c0, %c0_0, %c0_1] : memref<1x128x6xf32, #tpu.memory_space<vmem>>, vector<1x128x6xf32>
    %1 = vector.shape_cast %0 : vector<1x128x6xf32> to vector<128x6xf32>
    %2 = tpu.iota {dimensions = array<i32: 1>} : vector<128x256xi32>
    %3 = vector.extract_strided_slice %1 {offsets = [0, 0], sizes = [128, 1], strides = [1, 1]} : vector<128x6xf32> to vector<128x1xf32>
    %4 = vector.extract_strided_slice %1 {offsets = [0, 1], sizes = [128, 1], strides = [1, 1]} : vector<128x6xf32> to vector<128x1xf32>
    %5 = math.floor %3 : vector<128x1xf32>
    %6 = math.floor %4 : vector<128x1xf32>
    %7 = arith.subf %3, %5 : vector<128x1xf32>
    %8 = arith.subf %4, %6 : vector<128x1xf32>
    %cst = arith.constant 1.000000e+00 : f32
    %9 = vector.broadcast %cst : f32 to vector<128x1xf32>
    %10 = arith.subf %9, %7 : vector<128x1xf32>
    %cst_2 = arith.constant 1.000000e+00 : f32
    %11 = vector.broadcast %cst_2 : f32 to vector<128x1xf32>
    %12 = arith.subf %11, %8 : vector<128x1xf32>
    %13 = arith.fptosi %5 : vector<128x1xf32> to vector<128x1xi32>
    %14 = arith.fptosi %6 : vector<128x1xf32> to vector<128x1xi32>
    %c1_i32 = arith.constant 1 : i32
    %15 = vector.broadcast %c1_i32 : i32 to vector<128x1xi32>
    %16 = arith.addi %13, %15 : vector<128x1xi32>
    %c15_i32 = arith.constant 15 : i32
    %17 = vector.broadcast %c15_i32 : i32 to vector<128x1xi32>
    %18 = arith.minsi %16, %17 : vector<128x1xi32>
    %c1_i32_3 = arith.constant 1 : i32
    %19 = vector.broadcast %c1_i32_3 : i32 to vector<128x1xi32>
    %20 = arith.addi %14, %19 : vector<128x1xi32>
    %c15_i32_4 = arith.constant 15 : i32
    %21 = vector.broadcast %c15_i32_4 : i32 to vector<128x1xi32>
    %22 = arith.minsi %20, %21 : vector<128x1xi32>
    %23 = arith.mulf %12, %10 : vector<128x1xf32>
    %c16_i32 = arith.constant 16 : i32
    %24 = vector.broadcast %c16_i32 : i32 to vector<128x1xi32>
    %25 = arith.muli %14, %24 : vector<128x1xi32>
    %26 = arith.addi %25, %13 : vector<128x1xi32>
    %27 = vector.broadcast %26 : vector<128x1xi32> to vector<128x256xi32>
    %28 = arith.cmpi eq, %2, %27 : vector<128x256xi32>
    %cst_5 = arith.constant 0.000000e+00 : f32
    %29 = vector.shape_cast %23 : vector<128x1xf32> to vector<128x1xf32>
    %30 = vector.broadcast %29 : vector<128x1xf32> to vector<128x256xf32>
    %31 = vector.broadcast %cst_5 : f32 to vector<128x256xf32>
    %32 = arith.select %28, %30, %31 : vector<128x256xi1>, vector<128x256xf32>
    %33 = arith.mulf %12, %7 : vector<128x1xf32>
    %c16_i32_6 = arith.constant 16 : i32
    %34 = vector.broadcast %c16_i32_6 : i32 to vector<128x1xi32>
    %35 = arith.muli %14, %34 : vector<128x1xi32>
    %36 = arith.addi %35, %18 : vector<128x1xi32>
    %37 = vector.broadcast %36 : vector<128x1xi32> to vector<128x256xi32>
    %38 = arith.cmpi eq, %2, %37 : vector<128x256xi32>
    %cst_7 = arith.constant 0.000000e+00 : f32
    %39 = vector.shape_cast %33 : vector<128x1xf32> to vector<128x1xf32>
    %40 = vector.broadcast %39 : vector<128x1xf32> to vector<128x256xf32>
    %41 = vector.broadcast %cst_7 : f32 to vector<128x256xf32>
    %42 = arith.select %38, %40, %41 : vector<128x256xi1>, vector<128x256xf32>
    %43 = arith.addf %32, %42 : vector<128x256xf32>
    %44 = arith.mulf %8, %10 : vector<128x1xf32>
    %c16_i32_8 = arith.constant 16 : i32
    %45 = vector.broadcast %c16_i32_8 : i32 to vector<128x1xi32>
    %46 = arith.muli %22, %45 : vector<128x1xi32>
    %47 = arith.addi %46, %13 : vector<128x1xi32>
    %48 = vector.broadcast %47 : vector<128x1xi32> to vector<128x256xi32>
    %49 = arith.cmpi eq, %2, %48 : vector<128x256xi32>
    %cst_9 = arith.constant 0.000000e+00 : f32
    %50 = vector.shape_cast %44 : vector<128x1xf32> to vector<128x1xf32>
    %51 = vector.broadcast %50 : vector<128x1xf32> to vector<128x256xf32>
    %52 = vector.broadcast %cst_9 : f32 to vector<128x256xf32>
    %53 = arith.select %49, %51, %52 : vector<128x256xi1>, vector<128x256xf32>
    %54 = arith.addf %43, %53 : vector<128x256xf32>
    %55 = arith.mulf %8, %7 : vector<128x1xf32>
    %c16_i32_10 = arith.constant 16 : i32
    %56 = vector.broadcast %c16_i32_10 : i32 to vector<128x1xi32>
    %57 = arith.muli %22, %56 : vector<128x1xi32>
    %58 = arith.addi %57, %18 : vector<128x1xi32>
    %59 = vector.broadcast %58 : vector<128x1xi32> to vector<128x256xi32>
    %60 = arith.cmpi eq, %2, %59 : vector<128x256xi32>
    %cst_11 = arith.constant 0.000000e+00 : f32
    %61 = vector.shape_cast %55 : vector<128x1xf32> to vector<128x1xf32>
    %62 = vector.broadcast %61 : vector<128x1xf32> to vector<128x256xf32>
    %63 = vector.broadcast %cst_11 : f32 to vector<128x256xf32>
    %64 = arith.select %60, %62, %63 : vector<128x256xi1>, vector<128x256xf32>
    %65 = arith.addf %54, %64 : vector<128x256xf32>
    %c0_12 = arith.constant 0 : index
    %c0_13 = arith.constant 0 : index
    %c0_14 = arith.constant 0 : index
    %66 = vector.load %arg3[%c0_12, %c0_13, %c0_14] : memref<1x256x24xf32, #tpu.memory_space<vmem>>, vector<1x256x8xf32>
    %67 = vector.shape_cast %66 : vector<1x256x8xf32> to vector<256x8xf32>
    %cst_15 = arith.constant dense<0.000000e+00> : vector<128x8xf32>
    %68 = tpu.matmul %65, %67, %cst_15 {dimension_numbers = #tpu.dot_dimension_numbers<[1], [0], [0], [1], [0, 0, 1, 1], [], []>} : vector<128x256xf32>, vector<256x8xf32>, vector<128x8xf32> -> vector<128x8xf32>
    %c0_16 = arith.constant 0 : index
    %c0_17 = arith.constant 0 : index
    %69 = vector.load %arg4[%c0_16, %c0_17] : memref<24x128xf32, #tpu.memory_space<vmem>>, vector<8x128xf32>
    %cst_18 = arith.constant dense<0.000000e+00> : vector<128x128xf32>
    %70 = tpu.matmul %68, %69, %cst_18 {dimension_numbers = #tpu.dot_dimension_numbers<[1], [0], [0], [1], [0, 0, 1, 1], [], []>} : vector<128x8xf32>, vector<8x128xf32>, vector<128x128xf32> -> vector<128x128xf32>
    %71 = vector.extract_strided_slice %1 {offsets = [0, 2], sizes = [128, 1], strides = [1, 1]} : vector<128x6xf32> to vector<128x1xf32>
    %72 = vector.extract_strided_slice %1 {offsets = [0, 3], sizes = [128, 1], strides = [1, 1]} : vector<128x6xf32> to vector<128x1xf32>
    %73 = math.floor %71 : vector<128x1xf32>
    %74 = math.floor %72 : vector<128x1xf32>
    %75 = arith.subf %71, %73 : vector<128x1xf32>
    %76 = arith.subf %72, %74 : vector<128x1xf32>
    %cst_19 = arith.constant 1.000000e+00 : f32
    %77 = vector.broadcast %cst_19 : f32 to vector<128x1xf32>
    %78 = arith.subf %77, %75 : vector<128x1xf32>
    %cst_20 = arith.constant 1.000000e+00 : f32
    %79 = vector.broadcast %cst_20 : f32 to vector<128x1xf32>
    %80 = arith.subf %79, %76 : vector<128x1xf32>
    %81 = arith.fptosi %73 : vector<128x1xf32> to vector<128x1xi32>
    %82 = arith.fptosi %74 : vector<128x1xf32> to vector<128x1xi32>
    %c1_i32_21 = arith.constant 1 : i32
    %83 = vector.broadcast %c1_i32_21 : i32 to vector<128x1xi32>
    %84 = arith.addi %81, %83 : vector<128x1xi32>
    %c15_i32_22 = arith.constant 15 : i32
    %85 = vector.broadcast %c15_i32_22 : i32 to vector<128x1xi32>
    %86 = arith.minsi %84, %85 : vector<128x1xi32>
    %c1_i32_23 = arith.constant 1 : i32
    %87 = vector.broadcast %c1_i32_23 : i32 to vector<128x1xi32>
    %88 = arith.addi %82, %87 : vector<128x1xi32>
    %c15_i32_24 = arith.constant 15 : i32
    %89 = vector.broadcast %c15_i32_24 : i32 to vector<128x1xi32>
    %90 = arith.minsi %88, %89 : vector<128x1xi32>
    %91 = arith.mulf %80, %78 : vector<128x1xf32>
    %c16_i32_25 = arith.constant 16 : i32
    %92 = vector.broadcast %c16_i32_25 : i32 to vector<128x1xi32>
    %93 = arith.muli %82, %92 : vector<128x1xi32>
    %94 = arith.addi %93, %81 : vector<128x1xi32>
    %95 = vector.broadcast %94 : vector<128x1xi32> to vector<128x256xi32>
    %96 = arith.cmpi eq, %2, %95 : vector<128x256xi32>
    %cst_26 = arith.constant 0.000000e+00 : f32
    %97 = vector.shape_cast %91 : vector<128x1xf32> to vector<128x1xf32>
    %98 = vector.broadcast %97 : vector<128x1xf32> to vector<128x256xf32>
    %99 = vector.broadcast %cst_26 : f32 to vector<128x256xf32>
    %100 = arith.select %96, %98, %99 : vector<128x256xi1>, vector<128x256xf32>
    %101 = arith.mulf %80, %75 : vector<128x1xf32>
    %c16_i32_27 = arith.constant 16 : i32
    %102 = vector.broadcast %c16_i32_27 : i32 to vector<128x1xi32>
    %103 = arith.muli %82, %102 : vector<128x1xi32>
    %104 = arith.addi %103, %86 : vector<128x1xi32>
    %105 = vector.broadcast %104 : vector<128x1xi32> to vector<128x256xi32>
    %106 = arith.cmpi eq, %2, %105 : vector<128x256xi32>
    %cst_28 = arith.constant 0.000000e+00 : f32
    %107 = vector.shape_cast %101 : vector<128x1xf32> to vector<128x1xf32>
    %108 = vector.broadcast %107 : vector<128x1xf32> to vector<128x256xf32>
    %109 = vector.broadcast %cst_28 : f32 to vector<128x256xf32>
    %110 = arith.select %106, %108, %109 : vector<128x256xi1>, vector<128x256xf32>
    %111 = arith.addf %100, %110 : vector<128x256xf32>
    %112 = arith.mulf %76, %78 : vector<128x1xf32>
    %c16_i32_29 = arith.constant 16 : i32
    %113 = vector.broadcast %c16_i32_29 : i32 to vector<128x1xi32>
    %114 = arith.muli %90, %113 : vector<128x1xi32>
    %115 = arith.addi %114, %81 : vector<128x1xi32>
    %116 = vector.broadcast %115 : vector<128x1xi32> to vector<128x256xi32>
    %117 = arith.cmpi eq, %2, %116 : vector<128x256xi32>
    %cst_30 = arith.constant 0.000000e+00 : f32
    %118 = vector.shape_cast %112 : vector<128x1xf32> to vector<128x1xf32>
    %119 = vector.broadcast %118 : vector<128x1xf32> to vector<128x256xf32>
    %120 = vector.broadcast %cst_30 : f32 to vector<128x256xf32>
    %121 = arith.select %117, %119, %120 : vector<128x256xi1>, vector<128x256xf32>
    %122 = arith.addf %111, %121 : vector<128x256xf32>
    %123 = arith.mulf %76, %75 : vector<128x1xf32>
    %c16_i32_31 = arith.constant 16 : i32
    %124 = vector.broadcast %c16_i32_31 : i32 to vector<128x1xi32>
    %125 = arith.muli %90, %124 : vector<128x1xi32>
    %126 = arith.addi %125, %86 : vector<128x1xi32>
    %127 = vector.broadcast %126 : vector<128x1xi32> to vector<128x256xi32>
    %128 = arith.cmpi eq, %2, %127 : vector<128x256xi32>
    %cst_32 = arith.constant 0.000000e+00 : f32
    %129 = vector.shape_cast %123 : vector<128x1xf32> to vector<128x1xf32>
    %130 = vector.broadcast %129 : vector<128x1xf32> to vector<128x256xf32>
    %131 = vector.broadcast %cst_32 : f32 to vector<128x256xf32>
    %132 = arith.select %128, %130, %131 : vector<128x256xi1>, vector<128x256xf32>
    %133 = arith.addf %122, %132 : vector<128x256xf32>
    %c0_33 = arith.constant 0 : index
    %c0_34 = arith.constant 0 : index
    %c8 = arith.constant 8 : index
    %134 = vector.load %arg3[%c0_33, %c0_34, %c8] : memref<1x256x24xf32, #tpu.memory_space<vmem>>, vector<1x256x8xf32>
    %135 = vector.shape_cast %134 : vector<1x256x8xf32> to vector<256x8xf32>
    %cst_35 = arith.constant dense<0.000000e+00> : vector<128x8xf32>
    %136 = tpu.matmul %133, %135, %cst_35 {dimension_numbers = #tpu.dot_dimension_numbers<[1], [0], [0], [1], [0, 0, 1, 1], [], []>} : vector<128x256xf32>, vector<256x8xf32>, vector<128x8xf32> -> vector<128x8xf32>
    %c8_36 = arith.constant 8 : index
    %c0_37 = arith.constant 0 : index
    %137 = vector.load %arg4[%c8_36, %c0_37] : memref<24x128xf32, #tpu.memory_space<vmem>>, vector<8x128xf32>
    %cst_38 = arith.constant dense<0.000000e+00> : vector<128x128xf32>
    %138 = tpu.matmul %136, %137, %cst_38 {dimension_numbers = #tpu.dot_dimension_numbers<[1], [0], [0], [1], [0, 0, 1, 1], [], []>} : vector<128x8xf32>, vector<8x128xf32>, vector<128x128xf32> -> vector<128x128xf32>
    %139 = arith.addf %70, %138 : vector<128x128xf32>
    %140 = vector.extract_strided_slice %1 {offsets = [0, 4], sizes = [128, 1], strides = [1, 1]} : vector<128x6xf32> to vector<128x1xf32>
    %141 = vector.extract_strided_slice %1 {offsets = [0, 5], sizes = [128, 1], strides = [1, 1]} : vector<128x6xf32> to vector<128x1xf32>
    %142 = math.floor %140 : vector<128x1xf32>
    %143 = math.floor %141 : vector<128x1xf32>
    %144 = arith.subf %140, %142 : vector<128x1xf32>
    %145 = arith.subf %141, %143 : vector<128x1xf32>
    %cst_39 = arith.constant 1.000000e+00 : f32
    %146 = vector.broadcast %cst_39 : f32 to vector<128x1xf32>
    %147 = arith.subf %146, %144 : vector<128x1xf32>
    %cst_40 = arith.constant 1.000000e+00 : f32
    %148 = vector.broadcast %cst_40 : f32 to vector<128x1xf32>
    %149 = arith.subf %148, %145 : vector<128x1xf32>
    %150 = arith.fptosi %142 : vector<128x1xf32> to vector<128x1xi32>
    %151 = arith.fptosi %143 : vector<128x1xf32> to vector<128x1xi32>
    %c1_i32_41 = arith.constant 1 : i32
    %152 = vector.broadcast %c1_i32_41 : i32 to vector<128x1xi32>
    %153 = arith.addi %150, %152 : vector<128x1xi32>
    %c15_i32_42 = arith.constant 15 : i32
    %154 = vector.broadcast %c15_i32_42 : i32 to vector<128x1xi32>
    %155 = arith.minsi %153, %154 : vector<128x1xi32>
    %c1_i32_43 = arith.constant 1 : i32
    %156 = vector.broadcast %c1_i32_43 : i32 to vector<128x1xi32>
    %157 = arith.addi %151, %156 : vector<128x1xi32>
    %c15_i32_44 = arith.constant 15 : i32
    %158 = vector.broadcast %c15_i32_44 : i32 to vector<128x1xi32>
    %159 = arith.minsi %157, %158 : vector<128x1xi32>
    %160 = arith.mulf %149, %147 : vector<128x1xf32>
    %c16_i32_45 = arith.constant 16 : i32
    %161 = vector.broadcast %c16_i32_45 : i32 to vector<128x1xi32>
    %162 = arith.muli %151, %161 : vector<128x1xi32>
    %163 = arith.addi %162, %150 : vector<128x1xi32>
    %164 = vector.broadcast %163 : vector<128x1xi32> to vector<128x256xi32>
    %165 = arith.cmpi eq, %2, %164 : vector<128x256xi32>
    %cst_46 = arith.constant 0.000000e+00 : f32
    %166 = vector.shape_cast %160 : vector<128x1xf32> to vector<128x1xf32>
    %167 = vector.broadcast %166 : vector<128x1xf32> to vector<128x256xf32>
    %168 = vector.broadcast %cst_46 : f32 to vector<128x256xf32>
    %169 = arith.select %165, %167, %168 : vector<128x256xi1>, vector<128x256xf32>
    %170 = arith.mulf %149, %144 : vector<128x1xf32>
    %c16_i32_47 = arith.constant 16 : i32
    %171 = vector.broadcast %c16_i32_47 : i32 to vector<128x1xi32>
    %172 = arith.muli %151, %171 : vector<128x1xi32>
    %173 = arith.addi %172, %155 : vector<128x1xi32>
    %174 = vector.broadcast %173 : vector<128x1xi32> to vector<128x256xi32>
    %175 = arith.cmpi eq, %2, %174 : vector<128x256xi32>
    %cst_48 = arith.constant 0.000000e+00 : f32
    %176 = vector.shape_cast %170 : vector<128x1xf32> to vector<128x1xf32>
    %177 = vector.broadcast %176 : vector<128x1xf32> to vector<128x256xf32>
    %178 = vector.broadcast %cst_48 : f32 to vector<128x256xf32>
    %179 = arith.select %175, %177, %178 : vector<128x256xi1>, vector<128x256xf32>
    %180 = arith.addf %169, %179 : vector<128x256xf32>
    %181 = arith.mulf %145, %147 : vector<128x1xf32>
    %c16_i32_49 = arith.constant 16 : i32
    %182 = vector.broadcast %c16_i32_49 : i32 to vector<128x1xi32>
    %183 = arith.muli %159, %182 : vector<128x1xi32>
    %184 = arith.addi %183, %150 : vector<128x1xi32>
    %185 = vector.broadcast %184 : vector<128x1xi32> to vector<128x256xi32>
    %186 = arith.cmpi eq, %2, %185 : vector<128x256xi32>
    %cst_50 = arith.constant 0.000000e+00 : f32
    %187 = vector.shape_cast %181 : vector<128x1xf32> to vector<128x1xf32>
    %188 = vector.broadcast %187 : vector<128x1xf32> to vector<128x256xf32>
    %189 = vector.broadcast %cst_50 : f32 to vector<128x256xf32>
    %190 = arith.select %186, %188, %189 : vector<128x256xi1>, vector<128x256xf32>
    %191 = arith.addf %180, %190 : vector<128x256xf32>
    %192 = arith.mulf %145, %144 : vector<128x1xf32>
    %c16_i32_51 = arith.constant 16 : i32
    %193 = vector.broadcast %c16_i32_51 : i32 to vector<128x1xi32>
    %194 = arith.muli %159, %193 : vector<128x1xi32>
    %195 = arith.addi %194, %155 : vector<128x1xi32>
    %196 = vector.broadcast %195 : vector<128x1xi32> to vector<128x256xi32>
    %197 = arith.cmpi eq, %2, %196 : vector<128x256xi32>
    %cst_52 = arith.constant 0.000000e+00 : f32
    %198 = vector.shape_cast %192 : vector<128x1xf32> to vector<128x1xf32>
    %199 = vector.broadcast %198 : vector<128x1xf32> to vector<128x256xf32>
    %200 = vector.broadcast %cst_52 : f32 to vector<128x256xf32>
    %201 = arith.select %197, %199, %200 : vector<128x256xi1>, vector<128x256xf32>
    %202 = arith.addf %191, %201 : vector<128x256xf32>
    %c0_53 = arith.constant 0 : index
    %c0_54 = arith.constant 0 : index
    %c16 = arith.constant 16 : index
    %203 = vector.load %arg3[%c0_53, %c0_54, %c16] : memref<1x256x24xf32, #tpu.memory_space<vmem>>, vector<1x256x8xf32>
    %204 = vector.shape_cast %203 : vector<1x256x8xf32> to vector<256x8xf32>
    %cst_55 = arith.constant dense<0.000000e+00> : vector<128x8xf32>
    %205 = tpu.matmul %202, %204, %cst_55 {dimension_numbers = #tpu.dot_dimension_numbers<[1], [0], [0], [1], [0, 0, 1, 1], [], []>} : vector<128x256xf32>, vector<256x8xf32>, vector<128x8xf32> -> vector<128x8xf32>
    %c16_56 = arith.constant 16 : index
    %c0_57 = arith.constant 0 : index
    %206 = vector.load %arg4[%c16_56, %c0_57] : memref<24x128xf32, #tpu.memory_space<vmem>>, vector<8x128xf32>
    %cst_58 = arith.constant dense<0.000000e+00> : vector<128x128xf32>
    %207 = tpu.matmul %205, %206, %cst_58 {dimension_numbers = #tpu.dot_dimension_numbers<[1], [0], [0], [1], [0, 0, 1, 1], [], []>} : vector<128x8xf32>, vector<8x128xf32>, vector<128x128xf32> -> vector<128x128xf32>
    %208 = arith.addf %139, %207 : vector<128x128xf32>
    %c0_59 = arith.constant 0 : index
    %c0_60 = arith.constant 0 : index
    %209 = vector.load %arg5[%c0_59, %c0_60] : memref<1x128xf32, #tpu.memory_space<vmem>>, vector<1x128xf32>
    %210 = vector.broadcast %209 : vector<1x128xf32> to vector<128x128xf32>
    %211 = arith.addf %208, %210 : vector<128x128xf32>
    %212 = arith.truncf %211 : vector<128x128xf32> to vector<128x128xbf16>
    %c0_61 = arith.constant 0 : index
    %c0_62 = arith.constant 0 : index
    %213 = vector.load %arg6[%c0_61, %c0_62] : memref<128x640xbf16, #tpu.memory_space<vmem>>, vector<128x640xbf16>
    %cst_63 = arith.constant dense<0.000000e+00> : vector<128x640xf32>
    %214 = tpu.matmul %212, %213, %cst_63 {dimension_numbers = #tpu.dot_dimension_numbers<[1], [0], [0], [1], [0, 0, 1, 1], [], []>} : vector<128x128xbf16>, vector<128x640xbf16>, vector<128x640xf32> -> vector<128x640xf32>
    %c0_64 = arith.constant 0 : index
    %c0_65 = arith.constant 0 : index
    %215 = vector.load %arg7[%c0_64, %c0_65] : memref<1x640xf32, #tpu.memory_space<vmem>>, vector<1x640xf32>
    %216 = vector.broadcast %215 : vector<1x640xf32> to vector<128x640xf32>
    %217 = arith.addf %214, %216 : vector<128x640xf32>
    %218 = vector.extract_strided_slice %217 {offsets = [0, 0], sizes = [128, 128], strides = [1, 1]} : vector<128x640xf32> to vector<128x128xf32>
    %cst_66 = arith.constant 0.000000e+00 : f32
    %219 = vector.broadcast %cst_66 : f32 to vector<128x128xf32>
    %220 = arith.maximumf %218, %219 : vector<128x128xf32>
    %221 = arith.truncf %220 : vector<128x128xf32> to vector<128x128xbf16>
    %c0_67 = arith.constant 0 : index
    %c0_68 = arith.constant 0 : index
    %c0_69 = arith.constant 0 : index
    %222 = vector.load %arg8[%c0_67, %c0_68, %c0_69] : memref<5x128x128xbf16, #tpu.memory_space<vmem>>, vector<1x128x128xbf16>
    %223 = vector.shape_cast %222 : vector<1x128x128xbf16> to vector<128x128xbf16>
    %cst_70 = arith.constant dense<0.000000e+00> : vector<128x128xf32>
    %224 = tpu.matmul %221, %223, %cst_70 {dimension_numbers = #tpu.dot_dimension_numbers<[1], [0], [0], [1], [0, 0, 1, 1], [], []>} : vector<128x128xbf16>, vector<128x128xbf16>, vector<128x128xf32> -> vector<128x128xf32>
    %c0_71 = arith.constant 0 : index
    %c0_72 = arith.constant 0 : index
    %c0_73 = arith.constant 0 : index
    %225 = vector.load %arg9[%c0_71, %c0_72, %c0_73] : memref<5x1x128xf32, #tpu.memory_space<vmem>>, vector<1x1x128xf32>
    %226 = vector.shape_cast %225 : vector<1x1x128xf32> to vector<1x128xf32>
    %227 = vector.broadcast %226 : vector<1x128xf32> to vector<128x128xf32>
    %228 = arith.addf %224, %227 : vector<128x128xf32>
    %cst_74 = arith.constant 0.000000e+00 : f32
    %229 = vector.broadcast %cst_74 : f32 to vector<128x128xf32>
    %230 = arith.maximumf %228, %229 : vector<128x128xf32>
    %231 = arith.truncf %230 : vector<128x128xf32> to vector<128x128xbf16>
    %c0_75 = arith.constant 0 : index
    %c0_76 = arith.constant 0 : index
    %c0_77 = arith.constant 0 : index
    %232 = vector.load %arg10[%c0_75, %c0_76, %c0_77] : memref<5x128x128xbf16, #tpu.memory_space<vmem>>, vector<1x128x128xbf16>
    %233 = vector.shape_cast %232 : vector<1x128x128xbf16> to vector<128x128xbf16>
    %cst_78 = arith.constant dense<0.000000e+00> : vector<128x128xf32>
    %234 = tpu.matmul %231, %233, %cst_78 {dimension_numbers = #tpu.dot_dimension_numbers<[1], [0], [0], [1], [0, 0, 1, 1], [], []>} : vector<128x128xbf16>, vector<128x128xbf16>, vector<128x128xf32> -> vector<128x128xf32>
    %c0_79 = arith.constant 0 : index
    %c0_80 = arith.constant 0 : index
    %c0_81 = arith.constant 0 : index
    %235 = vector.load %arg11[%c0_79, %c0_80, %c0_81] : memref<5x1x128xf32, #tpu.memory_space<vmem>>, vector<1x1x128xf32>
    %236 = vector.shape_cast %235 : vector<1x1x128xf32> to vector<1x128xf32>
    %237 = vector.broadcast %236 : vector<1x128xf32> to vector<128x128xf32>
    %238 = arith.addf %234, %237 : vector<128x128xf32>
    %239 = arith.addf %218, %238 : vector<128x128xf32>
    %240 = vector.extract_strided_slice %217 {offsets = [0, 128], sizes = [128, 128], strides = [1, 1]} : vector<128x640xf32> to vector<128x128xf32>
    %241 = arith.addf %239, %240 : vector<128x128xf32>
    %cst_82 = arith.constant 0.000000e+00 : f32
    %242 = vector.broadcast %cst_82 : f32 to vector<128x128xf32>
    %243 = arith.maximumf %241, %242 : vector<128x128xf32>
    %244 = arith.truncf %243 : vector<128x128xf32> to vector<128x128xbf16>
    %c1 = arith.constant 1 : index
    %c0_83 = arith.constant 0 : index
    %c0_84 = arith.constant 0 : index
    %245 = vector.load %arg8[%c1, %c0_83, %c0_84] : memref<5x128x128xbf16, #tpu.memory_space<vmem>>, vector<1x128x128xbf16>
    %246 = vector.shape_cast %245 : vector<1x128x128xbf16> to vector<128x128xbf16>
    %cst_85 = arith.constant dense<0.000000e+00> : vector<128x128xf32>
    %247 = tpu.matmul %244, %246, %cst_85 {dimension_numbers = #tpu.dot_dimension_numbers<[1], [0], [0], [1], [0, 0, 1, 1], [], []>} : vector<128x128xbf16>, vector<128x128xbf16>, vector<128x128xf32> -> vector<128x128xf32>
    %c1_86 = arith.constant 1 : index
    %c0_87 = arith.constant 0 : index
    %c0_88 = arith.constant 0 : index
    %248 = vector.load %arg9[%c1_86, %c0_87, %c0_88] : memref<5x1x128xf32, #tpu.memory_space<vmem>>, vector<1x1x128xf32>
    %249 = vector.shape_cast %248 : vector<1x1x128xf32> to vector<1x128xf32>
    %250 = vector.broadcast %249 : vector<1x128xf32> to vector<128x128xf32>
    %251 = arith.addf %247, %250 : vector<128x128xf32>
    %cst_89 = arith.constant 0.000000e+00 : f32
    %252 = vector.broadcast %cst_89 : f32 to vector<128x128xf32>
    %253 = arith.maximumf %251, %252 : vector<128x128xf32>
    %254 = arith.truncf %253 : vector<128x128xf32> to vector<128x128xbf16>
    %c1_90 = arith.constant 1 : index
    %c0_91 = arith.constant 0 : index
    %c0_92 = arith.constant 0 : index
    %255 = vector.load %arg10[%c1_90, %c0_91, %c0_92] : memref<5x128x128xbf16, #tpu.memory_space<vmem>>, vector<1x128x128xbf16>
    %256 = vector.shape_cast %255 : vector<1x128x128xbf16> to vector<128x128xbf16>
    %cst_93 = arith.constant dense<0.000000e+00> : vector<128x128xf32>
    %257 = tpu.matmul %254, %256, %cst_93 {dimension_numbers = #tpu.dot_dimension_numbers<[1], [0], [0], [1], [0, 0, 1, 1], [], []>} : vector<128x128xbf16>, vector<128x128xbf16>, vector<128x128xf32> -> vector<128x128xf32>
    %c1_94 = arith.constant 1 : index
    %c0_95 = arith.constant 0 : index
    %c0_96 = arith.constant 0 : index
    %258 = vector.load %arg11[%c1_94, %c0_95, %c0_96] : memref<5x1x128xf32, #tpu.memory_space<vmem>>, vector<1x1x128xf32>
    %259 = vector.shape_cast %258 : vector<1x1x128xf32> to vector<1x128xf32>
    %260 = vector.broadcast %259 : vector<1x128xf32> to vector<128x128xf32>
    %261 = arith.addf %257, %260 : vector<128x128xf32>
    %262 = arith.addf %241, %261 : vector<128x128xf32>
    %263 = vector.extract_strided_slice %217 {offsets = [0, 256], sizes = [128, 128], strides = [1, 1]} : vector<128x640xf32> to vector<128x128xf32>
    %264 = arith.addf %262, %263 : vector<128x128xf32>
    %cst_97 = arith.constant 0.000000e+00 : f32
    %265 = vector.broadcast %cst_97 : f32 to vector<128x128xf32>
    %266 = arith.maximumf %264, %265 : vector<128x128xf32>
    %267 = arith.truncf %266 : vector<128x128xf32> to vector<128x128xbf16>
    %c2 = arith.constant 2 : index
    %c0_98 = arith.constant 0 : index
    %c0_99 = arith.constant 0 : index
    %268 = vector.load %arg8[%c2, %c0_98, %c0_99] : memref<5x128x128xbf16, #tpu.memory_space<vmem>>, vector<1x128x128xbf16>
    %269 = vector.shape_cast %268 : vector<1x128x128xbf16> to vector<128x128xbf16>
    %cst_100 = arith.constant dense<0.000000e+00> : vector<128x128xf32>
    %270 = tpu.matmul %267, %269, %cst_100 {dimension_numbers = #tpu.dot_dimension_numbers<[1], [0], [0], [1], [0, 0, 1, 1], [], []>} : vector<128x128xbf16>, vector<128x128xbf16>, vector<128x128xf32> -> vector<128x128xf32>
    %c2_101 = arith.constant 2 : index
    %c0_102 = arith.constant 0 : index
    %c0_103 = arith.constant 0 : index
    %271 = vector.load %arg9[%c2_101, %c0_102, %c0_103] : memref<5x1x128xf32, #tpu.memory_space<vmem>>, vector<1x1x128xf32>
    %272 = vector.shape_cast %271 : vector<1x1x128xf32> to vector<1x128xf32>
    %273 = vector.broadcast %272 : vector<1x128xf32> to vector<128x128xf32>
    %274 = arith.addf %270, %273 : vector<128x128xf32>
    %cst_104 = arith.constant 0.000000e+00 : f32
    %275 = vector.broadcast %cst_104 : f32 to vector<128x128xf32>
    %276 = arith.maximumf %274, %275 : vector<128x128xf32>
    %277 = arith.truncf %276 : vector<128x128xf32> to vector<128x128xbf16>
    %c2_105 = arith.constant 2 : index
    %c0_106 = arith.constant 0 : index
    %c0_107 = arith.constant 0 : index
    %278 = vector.load %arg10[%c2_105, %c0_106, %c0_107] : memref<5x128x128xbf16, #tpu.memory_space<vmem>>, vector<1x128x128xbf16>
    %279 = vector.shape_cast %278 : vector<1x128x128xbf16> to vector<128x128xbf16>
    %cst_108 = arith.constant dense<0.000000e+00> : vector<128x128xf32>
    %280 = tpu.matmul %277, %279, %cst_108 {dimension_numbers = #tpu.dot_dimension_numbers<[1], [0], [0], [1], [0, 0, 1, 1], [], []>} : vector<128x128xbf16>, vector<128x128xbf16>, vector<128x128xf32> -> vector<128x128xf32>
    %c2_109 = arith.constant 2 : index
    %c0_110 = arith.constant 0 : index
    %c0_111 = arith.constant 0 : index
    %281 = vector.load %arg11[%c2_109, %c0_110, %c0_111] : memref<5x1x128xf32, #tpu.memory_space<vmem>>, vector<1x1x128xf32>
    %282 = vector.shape_cast %281 : vector<1x1x128xf32> to vector<1x128xf32>
    %283 = vector.broadcast %282 : vector<1x128xf32> to vector<128x128xf32>
    %284 = arith.addf %280, %283 : vector<128x128xf32>
    %285 = arith.addf %264, %284 : vector<128x128xf32>
    %286 = vector.extract_strided_slice %217 {offsets = [0, 384], sizes = [128, 128], strides = [1, 1]} : vector<128x640xf32> to vector<128x128xf32>
    %287 = arith.addf %285, %286 : vector<128x128xf32>
    %cst_112 = arith.constant 0.000000e+00 : f32
    %288 = vector.broadcast %cst_112 : f32 to vector<128x128xf32>
    %289 = arith.maximumf %287, %288 : vector<128x128xf32>
    %290 = arith.truncf %289 : vector<128x128xf32> to vector<128x128xbf16>
    %c3 = arith.constant 3 : index
    %c0_113 = arith.constant 0 : index
    %c0_114 = arith.constant 0 : index
    %291 = vector.load %arg8[%c3, %c0_113, %c0_114] : memref<5x128x128xbf16, #tpu.memory_space<vmem>>, vector<1x128x128xbf16>
    %292 = vector.shape_cast %291 : vector<1x128x128xbf16> to vector<128x128xbf16>
    %cst_115 = arith.constant dense<0.000000e+00> : vector<128x128xf32>
    %293 = tpu.matmul %290, %292, %cst_115 {dimension_numbers = #tpu.dot_dimension_numbers<[1], [0], [0], [1], [0, 0, 1, 1], [], []>} : vector<128x128xbf16>, vector<128x128xbf16>, vector<128x128xf32> -> vector<128x128xf32>
    %c3_116 = arith.constant 3 : index
    %c0_117 = arith.constant 0 : index
    %c0_118 = arith.constant 0 : index
    %294 = vector.load %arg9[%c3_116, %c0_117, %c0_118] : memref<5x1x128xf32, #tpu.memory_space<vmem>>, vector<1x1x128xf32>
    %295 = vector.shape_cast %294 : vector<1x1x128xf32> to vector<1x128xf32>
    %296 = vector.broadcast %295 : vector<1x128xf32> to vector<128x128xf32>
    %297 = arith.addf %293, %296 : vector<128x128xf32>
    %cst_119 = arith.constant 0.000000e+00 : f32
    %298 = vector.broadcast %cst_119 : f32 to vector<128x128xf32>
    %299 = arith.maximumf %297, %298 : vector<128x128xf32>
    %300 = arith.truncf %299 : vector<128x128xf32> to vector<128x128xbf16>
    %c3_120 = arith.constant 3 : index
    %c0_121 = arith.constant 0 : index
    %c0_122 = arith.constant 0 : index
    %301 = vector.load %arg10[%c3_120, %c0_121, %c0_122] : memref<5x128x128xbf16, #tpu.memory_space<vmem>>, vector<1x128x128xbf16>
    %302 = vector.shape_cast %301 : vector<1x128x128xbf16> to vector<128x128xbf16>
    %cst_123 = arith.constant dense<0.000000e+00> : vector<128x128xf32>
    %303 = tpu.matmul %300, %302, %cst_123 {dimension_numbers = #tpu.dot_dimension_numbers<[1], [0], [0], [1], [0, 0, 1, 1], [], []>} : vector<128x128xbf16>, vector<128x128xbf16>, vector<128x128xf32> -> vector<128x128xf32>
    %c3_124 = arith.constant 3 : index
    %c0_125 = arith.constant 0 : index
    %c0_126 = arith.constant 0 : index
    %304 = vector.load %arg11[%c3_124, %c0_125, %c0_126] : memref<5x1x128xf32, #tpu.memory_space<vmem>>, vector<1x1x128xf32>
    %305 = vector.shape_cast %304 : vector<1x1x128xf32> to vector<1x128xf32>
    %306 = vector.broadcast %305 : vector<1x128xf32> to vector<128x128xf32>
    %307 = arith.addf %303, %306 : vector<128x128xf32>
    %308 = arith.addf %287, %307 : vector<128x128xf32>
    %309 = vector.extract_strided_slice %217 {offsets = [0, 512], sizes = [128, 128], strides = [1, 1]} : vector<128x640xf32> to vector<128x128xf32>
    %310 = arith.addf %308, %309 : vector<128x128xf32>
    %cst_127 = arith.constant 0.000000e+00 : f32
    %311 = vector.broadcast %cst_127 : f32 to vector<128x128xf32>
    %312 = arith.maximumf %310, %311 : vector<128x128xf32>
    %313 = arith.truncf %312 : vector<128x128xf32> to vector<128x128xbf16>
    %c4 = arith.constant 4 : index
    %c0_128 = arith.constant 0 : index
    %c0_129 = arith.constant 0 : index
    %314 = vector.load %arg8[%c4, %c0_128, %c0_129] : memref<5x128x128xbf16, #tpu.memory_space<vmem>>, vector<1x128x128xbf16>
    %315 = vector.shape_cast %314 : vector<1x128x128xbf16> to vector<128x128xbf16>
    %cst_130 = arith.constant dense<0.000000e+00> : vector<128x128xf32>
    %316 = tpu.matmul %313, %315, %cst_130 {dimension_numbers = #tpu.dot_dimension_numbers<[1], [0], [0], [1], [0, 0, 1, 1], [], []>} : vector<128x128xbf16>, vector<128x128xbf16>, vector<128x128xf32> -> vector<128x128xf32>
    %c4_131 = arith.constant 4 : index
    %c0_132 = arith.constant 0 : index
    %c0_133 = arith.constant 0 : index
    %317 = vector.load %arg9[%c4_131, %c0_132, %c0_133] : memref<5x1x128xf32, #tpu.memory_space<vmem>>, vector<1x1x128xf32>
    %318 = vector.shape_cast %317 : vector<1x1x128xf32> to vector<1x128xf32>
    %319 = vector.broadcast %318 : vector<1x128xf32> to vector<128x128xf32>
    %320 = arith.addf %316, %319 : vector<128x128xf32>
    %cst_134 = arith.constant 0.000000e+00 : f32
    %321 = vector.broadcast %cst_134 : f32 to vector<128x128xf32>
    %322 = arith.maximumf %320, %321 : vector<128x128xf32>
    %323 = arith.truncf %322 : vector<128x128xf32> to vector<128x128xbf16>
    %c4_135 = arith.constant 4 : index
    %c0_136 = arith.constant 0 : index
    %c0_137 = arith.constant 0 : index
    %324 = vector.load %arg10[%c4_135, %c0_136, %c0_137] : memref<5x128x128xbf16, #tpu.memory_space<vmem>>, vector<1x128x128xbf16>
    %325 = vector.shape_cast %324 : vector<1x128x128xbf16> to vector<128x128xbf16>
    %cst_138 = arith.constant dense<0.000000e+00> : vector<128x128xf32>
    %326 = tpu.matmul %323, %325, %cst_138 {dimension_numbers = #tpu.dot_dimension_numbers<[1], [0], [0], [1], [0, 0, 1, 1], [], []>} : vector<128x128xbf16>, vector<128x128xbf16>, vector<128x128xf32> -> vector<128x128xf32>
    %c4_139 = arith.constant 4 : index
    %c0_140 = arith.constant 0 : index
    %c0_141 = arith.constant 0 : index
    %327 = vector.load %arg11[%c4_139, %c0_140, %c0_141] : memref<5x1x128xf32, #tpu.memory_space<vmem>>, vector<1x1x128xf32>
    %328 = vector.shape_cast %327 : vector<1x1x128xf32> to vector<1x128xf32>
    %329 = vector.broadcast %328 : vector<1x128xf32> to vector<128x128xf32>
    %330 = arith.addf %326, %329 : vector<128x128xf32>
    %331 = arith.addf %310, %330 : vector<128x128xf32>
    %c0_142 = arith.constant 0 : index
    %c0_143 = arith.constant 0 : index
    %332 = vector.load %arg12[%c0_142, %c0_143] : memref<8x128xf32, #tpu.memory_space<vmem>>, vector<8x128xf32>
    %cst_144 = arith.constant dense<0.000000e+00> : vector<8x128xf32>
    %333 = tpu.matmul %332, %331, %cst_144 {dimension_numbers = #tpu.dot_dimension_numbers<[1], [1], [0], [0], [0, 0, 1, 0], [], []>} : vector<8x128xf32>, vector<128x128xf32>, vector<8x128xf32> -> vector<8x128xf32>
    %c0_145 = arith.constant 0 : index
    %c0_146 = arith.constant 0 : index
    %334 = vector.load %arg13[%c0_145, %c0_146] : memref<8x1xf32, #tpu.memory_space<vmem>>, vector<8x1xf32>
    %335 = vector.broadcast %334 : vector<8x1xf32> to vector<8x128xf32>
    %336 = arith.addf %333, %335 : vector<8x128xf32>
    %c0_147 = arith.constant 0 : index
    %c0_148 = arith.constant 0 : index
    %c0_149 = arith.constant 0 : index
    %337 = vector.load %arg14[%c0_147, %c0_148, %c0_149] : memref<1x8x128xf32, #tpu.memory_space<vmem>>, vector<1x8x128xf32>
    %338 = vector.shape_cast %337 : vector<1x8x128xf32> to vector<8x128xf32>
    %339 = vector.shape_cast %336 : vector<8x128xf32> to vector<1x8x128xf32>
    tpu.vector_store %arg14[%c0_147, %c0_148, %c0_149], %339 {strides = array<i32>} : memref<1x8x128xf32, #tpu.memory_space<vmem>>, vector<1x8x128xf32>,
    return
  }
  func.func @transform_0(%arg0: i32, %arg1: i32) -> (i32, i32, i32) {
    %c0_i32 = arith.constant 0 : i32
    %c0_i32_0 = arith.constant 0 : i32
    return %arg0, %arg1, %c0_i32 : i32, i32, i32
  }
  func.func @transform_1(%arg0: i32, %arg1: i32) -> (i32, i32, i32) {
    %c0_i32 = arith.constant 0 : i32
    %c0_i32_0 = arith.constant 0 : i32
    %c0_i32_1 = arith.constant 0 : i32
    return %arg0, %c0_i32, %c0_i32_0 : i32, i32, i32
  }
  func.func @transform_2(%arg0: i32, %arg1: i32) -> (i32, i32) {
    %c0_i32 = arith.constant 0 : i32
    %c0_i32_0 = arith.constant 0 : i32
    %c0_i32_1 = arith.constant 0 : i32
    return %c0_i32, %c0_i32_0 : i32, i32
  }
  func.func @transform_3(%arg0: i32, %arg1: i32) -> (i32, i32) {
    %c0_i32 = arith.constant 0 : i32
    %c0_i32_0 = arith.constant 0 : i32
    %c0_i32_1 = arith.constant 0 : i32
    return %c0_i32, %c0_i32_0 : i32, i32
  }
  func.func @transform_4(%arg0: i32, %arg1: i32) -> (i32, i32) {
    %c0_i32 = arith.constant 0 : i32
    %c0_i32_0 = arith.constant 0 : i32
    %c0_i32_1 = arith.constant 0 : i32
    return %c0_i32, %c0_i32_0 : i32, i32
  }
  func.func @transform_5(%arg0: i32, %arg1: i32) -> (i32, i32) {
    %c0_i32 = arith.constant 0 : i32
    %c0_i32_0 = arith.constant 0 : i32
    %c0_i32_1 = arith.constant 0 : i32
    return %c0_i32, %c0_i32_0 : i32, i32
  }
  func.func @transform_6(%arg0: i32, %arg1: i32) -> (i32, i32, i32) {
    %c0_i32 = arith.constant 0 : i32
    %c0_i32_0 = arith.constant 0 : i32
    %c0_i32_1 = arith.constant 0 : i32
    %c0_i32_2 = arith.constant 0 : i32
    return %c0_i32, %c0_i32_0, %c0_i32_1 : i32, i32, i32
  }
  func.func @transform_7(%arg0: i32, %arg1: i32) -> (i32, i32, i32) {
    %c0_i32 = arith.constant 0 : i32
    %c0_i32_0 = arith.constant 0 : i32
    %c0_i32_1 = arith.constant 0 : i32
    %c0_i32_2 = arith.constant 0 : i32
    return %c0_i32, %c0_i32_0, %c0_i32_1 : i32, i32, i32
  }
  func.func @transform_8(%arg0: i32, %arg1: i32) -> (i32, i32, i32) {
    %c0_i32 = arith.constant 0 : i32
    %c0_i32_0 = arith.constant 0 : i32
    %c0_i32_1 = arith.constant 0 : i32
    %c0_i32_2 = arith.constant 0 : i32
    return %c0_i32, %c0_i32_0, %c0_i32_1 : i32, i32, i32
  }
  func.func @transform_9(%arg0: i32, %arg1: i32) -> (i32, i32, i32) {
    %c0_i32 = arith.constant 0 : i32
    %c0_i32_0 = arith.constant 0 : i32
    %c0_i32_1 = arith.constant 0 : i32
    %c0_i32_2 = arith.constant 0 : i32
    return %c0_i32, %c0_i32_0, %c0_i32_1 : i32, i32, i32
  }
  func.func @transform_10(%arg0: i32, %arg1: i32) -> (i32, i32) {
    %c0_i32 = arith.constant 0 : i32
    %c0_i32_0 = arith.constant 0 : i32
    %c0_i32_1 = arith.constant 0 : i32
    return %c0_i32, %c0_i32_0 : i32, i32
  }
  func.func @transform_11(%arg0: i32, %arg1: i32) -> (i32, i32) {
    %c0_i32 = arith.constant 0 : i32
    %c0_i32_0 = arith.constant 0 : i32
    %c0_i32_1 = arith.constant 0 : i32
    return %c0_i32, %c0_i32_0 : i32, i32
  }
  func.func @transform_12(%arg0: i32, %arg1: i32) -> (i32, i32, i32) {
    %c0_i32 = arith.constant 0 : i32
    %c0_i32_0 = arith.constant 0 : i32
    return %arg0, %c0_i32, %arg1 : i32, i32, i32
  }
}

</mosaic_0001>

<llo_original>
// kernel: tri_equi_local_decoder_forward.1
$region0: #{tri_equi_local_decoder_forward.1}
  #allocation0 [shape = 'u32[]', space=smem, size = 0x4, offset = 0x4, fixed_abs, tag = 'smem constant byte address 0x4 - core index']
  #allocation1 [shape = 'u32[144,128]{1,0:T(1,128)}', space=vmem, size = 0x12000, scoped, tag = 'internal scratch']
  %s0 = inlined_call_operand.vmem [shape: f32[2,128,6], index: 0, kind: input, shape index: {}]
  %s1 = inlined_call_operand.vmem [shape: f32[2,256,24], index: 1, kind: input, shape index: {}]
  %s2 = inlined_call_operand.vmem [shape: f32[24,128], index: 2, kind: input, shape index: {}]
  %s3 = inlined_call_operand.vmem [shape: f32[1,128], index: 3, kind: input, shape index: {}]
  %s4 = inlined_call_operand.vmem [shape: bf16[128,640], index: 4, kind: input, shape index: {}]
  %s5 = inlined_call_operand.vmem [shape: f32[1,640], index: 5, kind: input, shape index: {}]
  %s6 = inlined_call_operand.vmem [shape: bf16[5,128,128], index: 6, kind: input, shape index: {}]
  %s7 = inlined_call_operand.vmem [shape: f32[5,1,128], index: 7, kind: input, shape index: {}]
  %s8 = inlined_call_operand.vmem [shape: bf16[5,128,128], index: 8, kind: input, shape index: {}]
  %s9 = inlined_call_operand.vmem [shape: f32[5,1,128], index: 9, kind: input, shape index: {}]
  %s10 = inlined_call_operand.vmem [shape: f32[8,128], index: 10, kind: input, shape index: {}]
  %s11 = inlined_call_operand.vmem [shape: f32[8,1], index: 11, kind: input, shape index: {}]
  %s12 = inlined_call_operand.vmem [shape: f32[2,8,128], index: 12, kind: output, shape index: {}]
  %s13 = sld [smem:[#allocation0]]
  $region81: #{tri_equi_local_decoder_forward.1} parent=0
    _
  %s15 = ssub.s32 1, %s13
  %s16 = scalar_select 0, %s15, %s13
  loop: start=0, step=1, limit=4
  $region2: #{tri_equi_local_decoder_forward.1} parent=0 // loop_pre_header
    _
  $region3: #{tri_equi_local_decoder_forward.1} parent=0 // loop_header
    %s18 = sphi 0, %s22
    %p19 = scmp.ge.s32.totalorder %s18, 4
    %s25 = sphi 0, %s37
    %s26 = sphi 0, %s33
    %s27 = sphi 0, %s25
    %s28 = sphi 0, %s26
    %s29 = sphi 0, %s27
    %s30 = sphi 0, %s28
    %s42 = sphi 0, %s44
    %s45 = sphi 0, %s42
    %s46 = sphi 0, %s45
    %s62 = sphi 0, %s46
    %s68 = sphi 0, %s70
    %s71 = sphi 0, %s68
    %s72 = sphi 0, %s71
    %s88 = sphi 0, %s72
    %s92 = sphi 0, %s92
    %s94 = sphi 0, %s92
    %s95 = sphi 0, %s94
    %s109 = sphi 0, %s95
    %s113 = sphi 0, %s113
    %s115 = sphi 0, %s113
    %s116 = sphi 0, %s115
    %s130 = sphi 0, %s116
    %s134 = sphi 0, %s134
    %s136 = sphi 0, %s134
    %s137 = sphi 0, %s136
    %s151 = sphi 0, %s137
    %s155 = sphi 0, %s155
    %s157 = sphi 0, %s155
    %s158 = sphi 0, %s157
    %s172 = sphi 0, %s158
    %s176 = sphi 0, %s176
    %s178 = sphi 0, %s176
    %s179 = sphi 0, %s178
    %s193 = sphi 0, %s179
    %s197 = sphi 0, %s197
    %s199 = sphi 0, %s197
    %s200 = sphi 0, %s199
    %s214 = sphi 0, %s200
    %s218 = sphi 0, %s218
    %s220 = sphi 0, %s218
    %s221 = sphi 0, %s220
    %s235 = sphi 0, %s221
    %s239 = sphi 0, %s239
    %s241 = sphi 0, %s239
    %s242 = sphi 0, %s241
    %s256 = sphi 0, %s242
    %s260 = sphi 0, %s260
    %s262 = sphi 0, %s260
    %s263 = sphi 0, %s262
    %s277 = sphi 0, %s263
    %s281 = sphi 0, %s281
    %s283 = sphi 0, %s281
    %s284 = sphi 0, %s283
    %s298 = sphi 0, %s284
    %s306 = sphi 0, %s308
    %s309 = sphi 0, %s306
    %s310 = sphi 0, %s309
    %s326 = sphi 0, %s310
  $region4: #{tri_equi_local_decoder_forward.1} parent=0 // loop_header_branch
    %21 = sbr.rel (%p19) target = $region8
  $region5: #{tri_equi_local_decoder_forward.1} parent=0 // loop_body
    %s23 = ssub.s32 %s18, 1
    %s24 = ssub.s32 %s18, 2
    %s31 = sadd.s32 1, %s26
    %p32 = scmp.ge.s32.totalorder %s31, 1
    %s33 = scalar_select %p32, 0, %s31
    %s34 = sadd.s32 1, %s25
    %s35 = scalar_select %p32, %s34, %s25
    %p36 = scmp.ge.s32.totalorder %s35, 2
    %s37 = scalar_select %p36, 0, %s35
    %s38 = ssub.s32 %s25, %s37
    %s39 = ssub.s32 %s26, %s33
    %s40 = sor.u32 %s38, %s39
    %p41 = scmp.eq.s32.totalorder %s40, 0
    %s43 = sadd.s32 %s42, 1
    %s44 = scalar_select %p41, %s42, %s43
    %p47 = pneg %p41
    %p48 = scmp.eq.s32.totalorder %s18, 1
    %p49 = por %p47, %p48
    %p50 = scmp.ne.s32.totalorder %s42, %s45
    %p51 = scmp.eq.s32.totalorder %s18, 0
    %p52 = por %p50, %p51
    %p53 = scmp.ne.s32.totalorder %s42, %s45
    %p54 = scmp.eq.s32.totalorder %s23, 1
    %p55 = por %p53, %p54
    %p56 = scmp.ne.s32.totalorder %s45, %s46
    %p57 = scmp.eq.s32.totalorder %s23, 0
    %p58 = por %p56, %p57
    %p59 = scmp.ne.s32.totalorder %s45, %s46
    %p60 = scmp.eq.s32.totalorder %s24, 1
    %p61 = por %p59, %p60
    %p63 = scmp.ne.s32.totalorder %s46, %s62
    %p64 = scmp.eq.s32.totalorder %s24, 0
    %p65 = por %p63, %p64
    %s66 = ssub.s32 %s25, %s37
    %p67 = scmp.eq.s32.totalorder %s66, 0
    %s69 = sadd.s32 %s68, 1
    %s70 = scalar_select %p67, %s68, %s69
    %p73 = pneg %p67
    %p74 = scmp.eq.s32.totalorder %s18, 1
    %p75 = por %p73, %p74
    %p76 = scmp.ne.s32.totalorder %s68, %s71
    %p77 = scmp.eq.s32.totalorder %s18, 0
    %p78 = por %p76, %p77
    %p79 = scmp.ne.s32.totalorder %s68, %s71
    %p80 = scmp.eq.s32.totalorder %s23, 1
    %p81 = por %p79, %p80
    %p82 = scmp.ne.s32.totalorder %s71, %s72
    %p83 = scmp.eq.s32.totalorder %s23, 0
    %p84 = por %p82, %p83
    %p85 = scmp.ne.s32.totalorder %s71, %s72
    %p86 = scmp.eq.s32.totalorder %s24, 1
    %p87 = por %p85, %p86
    %p89 = scmp.ne.s32.totalorder %s72, %s88
    %p90 = scmp.eq.s32.totalorder %s24, 0
    %p91 = por %p89, %p90
    %s93 = sadd.s32 %s92, 1
    %p96 = scmp.eq.s32.totalorder %s18, 1
    %p97 = scmp.ne.s32.totalorder %s92, %s94
    %p98 = scmp.eq.s32.totalorder %s18, 0
    %p99 = por %p97, %p98
    %p100 = scmp.ne.s32.totalorder %s92, %s94
    %p101 = scmp.eq.s32.totalorder %s23, 1
    %p102 = por %p100, %p101
    %p103 = scmp.ne.s32.totalorder %s94, %s95
    %p104 = scmp.eq.s32.totalorder %s23, 0
    %p105 = por %p103, %p104
    %p106 = scmp.ne.s32.totalorder %s94, %s95
    %p107 = scmp.eq.s32.totalorder %s24, 1
    %p108 = por %p106, %p107
    %p110 = scmp.ne.s32.totalorder %s95, %s109
    %p111 = scmp.eq.s32.totalorder %s24, 0
    %p112 = por %p110, %p111
    %s114 = sadd.s32 %s113, 1
    %p117 = scmp.eq.s32.totalorder %s18, 1
    %p118 = scmp.ne.s32.totalorder %s113, %s115
    %p119 = scmp.eq.s32.totalorder %s18, 0
    %p120 = por %p118, %p119
    %p121 = scmp.ne.s32.totalorder %s113, %s115
    %p122 = scmp.eq.s32.totalorder %s23, 1
    %p123 = por %p121, %p122
    %p124 = scmp.ne.s32.totalorder %s115, %s116
    %p125 = scmp.eq.s32.totalorder %s23, 0
    %p126 = por %p124, %p125
    %p127 = scmp.ne.s32.totalorder %s115, %s116
    %p128 = scmp.eq.s32.totalorder %s24, 1
    %p129 = por %p127, %p128
    %p131 = scmp.ne.s32.totalorder %s116, %s130
    %p132 = scmp.eq.s32.totalorder %s24, 0
    %p133 = por %p131, %p132
    %s135 = sadd.s32 %s134, 1
    %p138 = scmp.eq.s32.totalorder %s18, 1
    %p139 = scmp.ne.s32.totalorder %s134, %s136
    %p140 = scmp.eq.s32.totalorder %s18, 0
    %p141 = por %p139, %p140
    %p142 = scmp.ne.s32.totalorder %s134, %s136
    %p143 = scmp.eq.s32.totalorder %s23, 1
    %p144 = por %p142, %p143
    %p145 = scmp.ne.s32.totalorder %s136, %s137
    %p146 = scmp.eq.s32.totalorder %s23, 0
    %p147 = por %p145, %p146
    %p148 = scmp.ne.s32.totalorder %s136, %s137
    %p149 = scmp.eq.s32.totalorder %s24, 1
    %p150 = por %p148, %p149
    %p152 = scmp.ne.s32.totalorder %s137, %s151
    %p153 = scmp.eq.s32.totalorder %s24, 0
    %p154 = por %p152, %p153
    %s156 = sadd.s32 %s155, 1
    %p159 = scmp.eq.s32.totalorder %s18, 1
    %p160 = scmp.ne.s32.totalorder %s155, %s157
    %p161 = scmp.eq.s32.totalorder %s18, 0
    %p162 = por %p160, %p161
    %p163 = scmp.ne.s32.totalorder %s155, %s157
    %p164 = scmp.eq.s32.totalorder %s23, 1
    %p165 = por %p163, %p164
    %p166 = scmp.ne.s32.totalorder %s157, %s158
    %p167 = scmp.eq.s32.totalorder %s23, 0
    %p168 = por %p166, %p167
    %p169 = scmp.ne.s32.totalorder %s157, %s158
    %p170 = scmp.eq.s32.totalorder %s24, 1
    %p171 = por %p169, %p170
    %p173 = scmp.ne.s32.totalorder %s158, %s172
    %p174 = scmp.eq.s32.totalorder %s24, 0
    %p175 = por %p173, %p174
    %s177 = sadd.s32 %s176, 1
    %p180 = scmp.eq.s32.totalorder %s18, 1
    %p181 = scmp.ne.s32.totalorder %s176, %s178
    %p182 = scmp.eq.s32.totalorder %s18, 0
    %p183 = por %p181, %p182
    %p184 = scmp.ne.s32.totalorder %s176, %s178
    %p185 = scmp.eq.s32.totalorder %s23, 1
    %p186 = por %p184, %p185
    %p187 = scmp.ne.s32.totalorder %s178, %s179
    %p188 = scmp.eq.s32.totalorder %s23, 0
    %p189 = por %p187, %p188
    %p190 = scmp.ne.s32.totalorder %s178, %s179
    %p191 = scmp.eq.s32.totalorder %s24, 1
    %p192 = por %p190, %p191
    %p194 = scmp.ne.s32.totalorder %s179, %s193
    %p195 = scmp.eq.s32.totalorder %s24, 0
    %p196 = por %p194, %p195
    %s198 = sadd.s32 %s197, 1
    %p201 = scmp.eq.s32.totalorder %s18, 1
    %p202 = scmp.ne.s32.totalorder %s197, %s199
    %p203 = scmp.eq.s32.totalorder %s18, 0
    %p204 = por %p202, %p203
    %p205 = scmp.ne.s32.totalorder %s197, %s199
    %p206 = scmp.eq.s32.totalorder %s23, 1
    %p207 = por %p205, %p206
    %p208 = scmp.ne.s32.totalorder %s199, %s200
    %p209 = scmp.eq.s32.totalorder %s23, 0
    %p210 = por %p208, %p209
    %p211 = scmp.ne.s32.totalorder %s199, %s200
    %p212 = scmp.eq.s32.totalorder %s24, 1
    %p213 = por %p211, %p212
    %p215 = scmp.ne.s32.totalorder %s200, %s214
    %p216 = scmp.eq.s32.totalorder %s24, 0
    %p217 = por %p215, %p216
    %s219 = sadd.s32 %s218, 1
    %p222 = scmp.eq.s32.totalorder %s18, 1
    %p223 = scmp.ne.s32.totalorder %s218, %s220
    %p224 = scmp.eq.s32.totalorder %s18, 0
    %p225 = por %p223, %p224
    %p226 = scmp.ne.s32.totalorder %s218, %s220
    %p227 = scmp.eq.s32.totalorder %s23, 1
    %p228 = por %p226, %p227
    %p229 = scmp.ne.s32.totalorder %s220, %s221
    %p230 = scmp.eq.s32.totalorder %s23, 0
    %p231 = por %p229, %p230
    %p232 = scmp.ne.s32.totalorder %s220, %s221
    %p233 = scmp.eq.s32.totalorder %s24, 1
    %p234 = por %p232, %p233
    %p236 = scmp.ne.s32.totalorder %s221, %s235
    %p237 = scmp.eq.s32.totalorder %s24, 0
    %p238 = por %p236, %p237
    %s240 = sadd.s32 %s239, 1
    %p243 = scmp.eq.s32.totalorder %s18, 1
    %p244 = scmp.ne.s32.totalorder %s239, %s241
    %p245 = scmp.eq.s32.totalorder %s18, 0
    %p246 = por %p244, %p245
    %p247 = scmp.ne.s32.totalorder %s239, %s241
    %p248 = scmp.eq.s32.totalorder %s23, 1
    %p249 = por %p247, %p248
    %p250 = scmp.ne.s32.totalorder %s241, %s242
    %p251 = scmp.eq.s32.totalorder %s23, 0
    %p252 = por %p250, %p251
    %p253 = scmp.ne.s32.totalorder %s241, %s242
    %p254 = scmp.eq.s32.totalorder %s24, 1
    %p255 = por %p253, %p254
    %p257 = scmp.ne.s32.totalorder %s242, %s256
    %p258 = scmp.eq.s32.totalorder %s24, 0
    %p259 = por %p257, %p258
    %s261 = sadd.s32 %s260, 1
    %p264 = scmp.eq.s32.totalorder %s18, 1
    %p265 = scmp.ne.s32.totalorder %s260, %s262
    %p266 = scmp.eq.s32.totalorder %s18, 0
    %p267 = por %p265, %p266
    %p268 = scmp.ne.s32.totalorder %s260, %s262
    %p269 = scmp.eq.s32.totalorder %s23, 1
    %p270 = por %p268, %p269
    %p271 = scmp.ne.s32.totalorder %s262, %s263
    %p272 = scmp.eq.s32.totalorder %s23, 0
    %p273 = por %p271, %p272
    %p274 = scmp.ne.s32.totalorder %s262, %s263
    %p275 = scmp.eq.s32.totalorder %s24, 1
    %p276 = por %p274, %p275
    %p278 = scmp.ne.s32.totalorder %s263, %s277
    %p279 = scmp.eq.s32.totalorder %s24, 0
    %p280 = por %p278, %p279
    %s282 = sadd.s32 %s281, 1
    %p285 = scmp.eq.s32.totalorder %s18, 1
    %p286 = scmp.ne.s32.totalorder %s281, %s283
    %p287 = scmp.eq.s32.totalorder %s18, 0
    %p288 = por %p286, %p287
    %p289 = scmp.ne.s32.totalorder %s281, %s283
    %p290 = scmp.eq.s32.totalorder %s23, 1
    %p291 = por %p289, %p290
    %p292 = scmp.ne.s32.totalorder %s283, %s284
    %p293 = scmp.eq.s32.totalorder %s23, 0
    %p294 = por %p292, %p293
    %p295 = scmp.ne.s32.totalorder %s283, %s284
    %p296 = scmp.eq.s32.totalorder %s24, 1
    %p297 = por %p295, %p296
    %p299 = scmp.ne.s32.totalorder %s284, %s298
    %p300 = scmp.eq.s32.totalorder %s24, 0
    %p301 = por %p299, %p300
    %s302 = ssub.s32 %s25, %s37
    %s303 = ssub.s32 %s26, %s33
    %s304 = sor.u32 %s302, %s303
    %p305 = scmp.eq.s32.totalorder %s304, 0
    %s307 = sadd.s32 %s306, 1
    %s308 = scalar_select %p305, %s306, %s307
    %p311 = pneg %p305
    %p312 = scmp.eq.s32.totalorder %s18, 1
    %p313 = por %p311, %p312
    %p314 = scmp.ne.s32.totalorder %s306, %s309
    %p315 = scmp.eq.s32.totalorder %s18, 0
    %p316 = por %p314, %p315
    %p317 = scmp.ne.s32.totalorder %s306, %s309
    %p318 = scmp.eq.s32.totalorder %s23, 1
    %p319 = por %p317, %p318
    %p320 = scmp.ne.s32.totalorder %s309, %s310
    %p321 = scmp.eq.s32.totalorder %s23, 0
    %p322 = por %p320, %p321
    %p323 = scmp.ne.s32.totalorder %s309, %s310
    %p324 = scmp.eq.s32.totalorder %s24, 1
    %p325 = por %p323, %p324
    %p327 = scmp.ne.s32.totalorder %s310, %s326
    %p328 = scmp.eq.s32.totalorder %s24, 0
    %p329 = por %p327, %p328
    %p330 = scmp.le.s32.totalorder 1, %s18
    %p331 = scmp.lt.s32.totalorder %s18, 3
    %p332 = pnand %p330, %p331
    %p333 = pneg %p332
    // Predicated region
    $region9: #{tri_equi_local_decoder_forward.1} parent=5 // pred_check
      _
    $region10: #{tri_equi_local_decoder_forward.1} parent=5 // pred_check_branch
      %335 = sbr.rel (%p332) target = $region12
    $region11: #{tri_equi_local_decoder_forward.1} parent=5 // pred_region
      %s336 = ssub.s32 %s18, 1
      // Predicated region
      $region13: #{tri_equi_local_decoder_forward.1} parent=11 // pred_check
        %p337 = pneg %p105
      $region14: #{tri_equi_local_decoder_forward.1} parent=11 // pred_check_branch
        %339 = sbr.rel (%p337) target = $region16
      $region15: #{tri_equi_local_decoder_forward.1} parent=11 // pred_region
        _
      $region16: #{tri_equi_local_decoder_forward.1} parent=11 // pred_fallthru
        _
      // Predicated region
      $region17: #{tri_equi_local_decoder_forward.1} parent=11 // pred_check
        %p340 = pneg %p126
      $region18: #{tri_equi_local_decoder_forward.1} parent=11 // pred_check_branch
        %342 = sbr.rel (%p340) target = $region20
      $region19: #{tri_equi_local_decoder_forward.1} parent=11 // pred_region
        _
      $region20: #{tri_equi_local_decoder_forward.1} parent=11 // pred_fallthru
        _
      // Predicated region
      $region21: #{tri_equi_local_decoder_forward.1} parent=11 // pred_check
        %p343 = pneg %p147
      $region22: #{tri_equi_local_decoder_forward.1} parent=11 // pred_check_branch
        %345 = sbr.rel (%p343) target = $region24
      $region23: #{tri_equi_local_decoder_forward.1} parent=11 // pred_region
        _
      $region24: #{tri_equi_local_decoder_forward.1} parent=11 // pred_fallthru
        _
      // Predicated region
      $region25: #{tri_equi_local_decoder_forward.1} parent=11 // pred_check
        %p346 = pneg %p168
      $region26: #{tri_equi_local_decoder_forward.1} parent=11 // pred_check_branch
        %348 = sbr.rel (%p346) target = $region28
      $region27: #{tri_equi_local_decoder_forward.1} parent=11 // pred_region
        _
      $region28: #{tri_equi_local_decoder_forward.1} parent=11 // pred_fallthru
        _
      // Predicated region
      $region29: #{tri_equi_local_decoder_forward.1} parent=11 // pred_check
        %p349 = pneg %p189
      $region30: #{tri_equi_local_decoder_forward.1} parent=11 // pred_check_branch
        %351 = sbr.rel (%p349) target = $region32
      $region31: #{tri_equi_local_decoder_forward.1} parent=11 // pred_region
        _
      $region32: #{tri_equi_local_decoder_forward.1} parent=11 // pred_fallthru
        _
      // Predicated region
      $region33: #{tri_equi_local_decoder_forward.1} parent=11 // pred_check
        %p352 = pneg %p210
      $region34: #{tri_equi_local_decoder_forward.1} parent=11 // pred_check_branch
        %354 = sbr.rel (%p352) target = $region36
      $region35: #{tri_equi_local_decoder_forward.1} parent=11 // pred_region
        _
      $region36: #{tri_equi_local_decoder_forward.1} parent=11 // pred_fallthru
        _
      // Predicated region
      $region37: #{tri_equi_local_decoder_forward.1} parent=11 // pred_check
        %p355 = pneg %p231
      $region38: #{tri_equi_local_decoder_forward.1} parent=11 // pred_check_branch
        %357 = sbr.rel (%p355) target = $region40
      $region39: #{tri_equi_local_decoder_forward.1} parent=11 // pred_region
        _
      $region40: #{tri_equi_local_decoder_forward.1} parent=11 // pred_fallthru
        _
      // Predicated region
      $region41: #{tri_equi_local_decoder_forward.1} parent=11 // pred_check
        %p358 = pneg %p252
      $region42: #{tri_equi_local_decoder_forward.1} parent=11 // pred_check_branch
        %360 = sbr.rel (%p358) target = $region44
      $region43: #{tri_equi_local_decoder_forward.1} parent=11 // pred_region
        _
      $region44: #{tri_equi_local_decoder_forward.1} parent=11 // pred_fallthru
        _
      // Predicated region
      $region45: #{tri_equi_local_decoder_forward.1} parent=11 // pred_check
        %p361 = pneg %p273
      $region46: #{tri_equi_local_decoder_forward.1} parent=11 // pred_check_branch
        %363 = sbr.rel (%p361) target = $region48
      $region47: #{tri_equi_local_decoder_forward.1} parent=11 // pred_region
        _
      $region48: #{tri_equi_local_decoder_forward.1} parent=11 // pred_fallthru
        _
      // Predicated region
      $region49: #{tri_equi_local_decoder_forward.1} parent=11 // pred_check
        %p364 = pneg %p294
      $region50: #{tri_equi_local_decoder_forward.1} parent=11 // pred_check_branch
        %366 = sbr.rel (%p364) target = $region52
      $region51: #{tri_equi_local_decoder_forward.1} parent=11 // pred_region
        _
      $region52: #{tri_equi_local_decoder_forward.1} parent=11 // pred_fallthru
        _
    $region12: #{tri_equi_local_decoder_forward.1} parent=5 // pred_fallthru
      _
    %p367 = scmp.lt.s32.totalorder %s18, 2
    // Predicated region
    $region53: #{tri_equi_local_decoder_forward.1} parent=5 // pred_check
      %p368 = pneg %p367
    $region54: #{tri_equi_local_decoder_forward.1} parent=5 // pred_check_branch
      %370 = sbr.rel (%p368) target = $region56
    $region55: #{tri_equi_local_decoder_forward.1} parent=5 // pred_region
      // Predicated region
      $region57: #{tri_equi_local_decoder_forward.1} parent=55 // pred_check
        %p371 = pneg %p52
      $region58: #{tri_equi_local_decoder_forward.1} parent=55 // pred_check_branch
        %373 = sbr.rel (%p371) target = $region60
      $region59: #{tri_equi_local_decoder_forward.1} parent=55 // pred_region
        %s374 = smul.u32 16, %s26
        %p375 = scmp.lt.s32.totalorder %s25, 1
        %s376 = scalar_select %p375, %s25, 1
        %p377 = scmp.lt.s32.totalorder %s374, 15
        %s378 = scalar_select %p377, %s374, 15
        %s379 = smul.addr %s376, 16
        %s380 = sadd.s32 %s378, %s379
        %s381 = smul.addr %s380, 8
        %s382 = scalar_lea.vmem %s0, %s381
        %s383 = smul.u32 16, %s26
      $region60: #{tri_equi_local_decoder_forward.1} parent=55 // pred_fallthru
        _
      // Predicated region
      $region61: #{tri_equi_local_decoder_forward.1} parent=55 // pred_check
        %p384 = pneg %p78
      $region62: #{tri_equi_local_decoder_forward.1} parent=55 // pred_check_branch
        %386 = sbr.rel (%p384) target = $region64
      $region63: #{tri_equi_local_decoder_forward.1} parent=55 // pred_region
        %p387 = scmp.lt.s32.totalorder %s25, 1
        %s388 = scalar_select %p387, %s25, 1
        %s389 = smul.addr %s388, 32
        %s390 = smul.addr %s389, 8
        %s391 = scalar_lea.vmem %s1, %s390
      $region64: #{tri_equi_local_decoder_forward.1} parent=55 // pred_fallthru
        _
    $region56: #{tri_equi_local_decoder_forward.1} parent=5 // pred_fallthru
      _
    %p392 = scmp.le.s32.totalorder 1, %s18
    %p393 = scmp.lt.s32.totalorder %s18, 3
    %p394 = pnand %p392, %p393
    %p395 = pneg %p394
    // Predicated region
    $region65: #{tri_equi_local_decoder_forward.1} parent=5 // pred_check
      _
    $region66: #{tri_equi_local_decoder_forward.1} parent=5 // pred_check_branch
      %397 = sbr.rel (%p394) target = $region68
    $region67: #{tri_equi_local_decoder_forward.1} parent=5 // pred_region
      %s398 = ssub.s32 %s18, 1
      %s399 = smul.u32 16, %s28
      %p400 = scmp.lt.s32.totalorder %s27, 1
      %s401 = scalar_select %p400, %s27, 1
      %p402 = scmp.lt.s32.totalorder %s399, 15
      %s403 = scalar_select %p402, %s399, 15
      %s404 = smul.addr %s401, 16
      %s405 = sadd.s32 %s403, %s404
      %s406 = smul.addr %s405, 8
      %s407 = scalar_lea.vmem %s0, %s406
      %p408 = pneg %p58
      %p409 = pneg %p55
      %p410 = scmp.lt.s32.totalorder %s27, 1
      %s411 = scalar_select %p410, %s27, 1
      %s412 = smul.addr %s411, 32
      %s413 = smul.addr %s412, 8
      %s414 = scalar_lea.vmem %s1, %s413
      %p415 = pneg %p84
      %p416 = pneg %p81
      %p417 = pneg %p105
      %p418 = pneg %p102
      %p419 = pneg %p126
      %p420 = pneg %p123
      %p421 = pneg %p147
      %p422 = pneg %p144
      %p423 = pneg %p168
      %p424 = pneg %p165
      %p425 = pneg %p189
      %p426 = pneg %p186
      %p427 = pneg %p210
      %p428 = pneg %p207
      %p429 = pneg %p231
      %p430 = pneg %p228
      %p431 = pneg %p252
      %p432 = pneg %p249
      %p433 = pneg %p273
      %p434 = pneg %p270
      %p435 = pneg %p294
      %p436 = pneg %p291
      %p437 = pneg %p322
      %p438 = pneg %p319
      %p439 = scmp.lt.s32.totalorder %s27, 1
      %s440 = scalar_select %p439, %s27, 1
      %p441 = scmp.lt.s32.totalorder %s28, 0
      %s442 = scalar_select %p441, %s28, 0
      %s443 = sadd.s32 %s442, %s440
      %s444 = smul.addr %s443, 8
      %s445 = scalar_lea.vmem %s12, %s444
      %s446 = smul.u32 16, %s28
      %p447 = scmp.lt.s32.totalorder %s27, 1
      %s448 = scalar_select %p447, %s27, 1
      %p449 = scmp.lt.s32.totalorder %s446, 15
      %s450 = scalar_select %p449, %s446, 15
      %s451 = smul.addr %s448, 16
      %s452 = sadd.s32 %s450, %s451
      %s453 = smul.addr %s452, 8
      %s454 = scalar_lea.vmem %s0, %s453
      %s455 = smul.u32 16, %s28
      %p456 = scmp.lt.s32.totalorder %s27, 1
      %s457 = scalar_select %p456, %s27, 1
      %s458 = smul.addr %s457, 32
      %s459 = smul.addr %s458, 8
      %s460 = scalar_lea.vmem %s1, %s459
      %p461 = scmp.lt.s32.totalorder %s27, 1
      %s462 = scalar_select %p461, %s27, 1
      %p463 = scmp.lt.s32.totalorder %s28, 0
      %s464 = scalar_select %p463, %s28, 0
      %s465 = sadd.s32 %s464, %s462
      %s466 = smul.addr %s465, 8
      %s467 = scalar_lea.vmem %s12, %s466
      %v469 = vld [vmem:[%s454] sm:$0xff]
      %v470 = vld [vmem:[%s454 + $0x8] sm:$0xff]
      %v471 = vld [vmem:[%s454 + $0x10] sm:$0xff]
      %v472 = vld [vmem:[%s454 + $0x18] sm:$0xff]
      %v473 = vld [vmem:[%s454 + $0x20] sm:$0xff]
      %v474 = vld [vmem:[%s454 + $0x28] sm:$0xff]
      %v475 = vld [vmem:[%s454 + $0x30] sm:$0xff]
      %v476 = vld [vmem:[%s454 + $0x38] sm:$0xff]
      %v477 = vld [vmem:[%s454 + $0x40] sm:$0xff]
      %v478 = vld [vmem:[%s454 + $0x48] sm:$0xff]
      %v479 = vld [vmem:[%s454 + $0x50] sm:$0xff]
      %v480 = vld [vmem:[%s454 + $0x58] sm:$0xff]
      %v481 = vld [vmem:[%s454 + $0x60] sm:$0xff]
      %v482 = vld [vmem:[%s454 + $0x68] sm:$0xff]
      %v483 = vld [vmem:[%s454 + $0x70] sm:$0xff]
      %v484 = vld [vmem:[%s454 + $0x78] sm:$0xff]
      %v485 = vlaneseq
      %v486 = vand.u32 %v485, 127
      %v487 = vadd.s32 %v486, 128
      %v488 = vfloor.f32 %v469
      %v489 = vfloor.f32 %v470
      %v490 = vfloor.f32 %v471
      %v491 = vfloor.f32 %v472
      %v492 = vfloor.f32 %v473
      %v493 = vfloor.f32 %v474
      %v494 = vfloor.f32 %v475
      %v495 = vfloor.f32 %v476
      %v496 = vfloor.f32 %v477
      %v497 = vfloor.f32 %v478
      %v498 = vfloor.f32 %v479
      %v499 = vfloor.f32 %v480
      %v500 = vfloor.f32 %v481
      %v501 = vfloor.f32 %v482
      %v502 = vfloor.f32 %v483
      %v503 = vfloor.f32 %v484
      %v504 = vsub.f32 %v469, %v488
      %v505 = vsub.f32 %v470, %v489
      %v506 = vsub.f32 %v471, %v490
      %v507 = vsub.f32 %v472, %v491
      %v508 = vsub.f32 %v473, %v492
      %v509 = vsub.f32 %v474, %v493
      %v510 = vsub.f32 %v475, %v494
      %v511 = vsub.f32 %v476, %v495
      %v512 = vsub.f32 %v477, %v496
      %v513 = vsub.f32 %v478, %v497
      %v514 = vsub.f32 %v479, %v498
      %v515 = vsub.f32 %v480, %v499
      %v516 = vsub.f32 %v481, %v500
      %v517 = vsub.f32 %v482, %v501
      %v518 = vsub.f32 %v483, %v502
      %v519 = vsub.f32 %v484, %v503
      %v520 = vsub.f32 1.0, %v504
      %v521 = vsub.f32 1.0, %v505
      %v522 = vsub.f32 1.0, %v506
      %v523 = vsub.f32 1.0, %v507
      %v524 = vsub.f32 1.0, %v508
      %v525 = vsub.f32 1.0, %v509
      %v526 = vsub.f32 1.0, %v510
      %v527 = vsub.f32 1.0, %v511
      %v528 = vsub.f32 1.0, %v512
      %v529 = vsub.f32 1.0, %v513
      %v530 = vsub.f32 1.0, %v514
      %v531 = vsub.f32 1.0, %v515
      %v532 = vsub.f32 1.0, %v516
      %v533 = vsub.f32 1.0, %v517
      %v534 = vsub.f32 1.0, %v518
      %v535 = vsub.f32 1.0, %v519
      %v536 = vcvt.f32.s32.to.zero.pseudo %v488
      %v537 = vcvt.f32.s32.to.zero.pseudo %v489
      %v538 = vcvt.f32.s32.to.zero.pseudo %v490
      %v539 = vcvt.f32.s32.to.zero.pseudo %v491
      %v540 = vcvt.f32.s32.to.zero.pseudo %v492
      %v541 = vcvt.f32.s32.to.zero.pseudo %v493
      %v542 = vcvt.f32.s32.to.zero.pseudo %v494
      %v543 = vcvt.f32.s32.to.zero.pseudo %v495
      %v544 = vcvt.f32.s32.to.zero.pseudo %v496
      %v545 = vcvt.f32.s32.to.zero.pseudo %v497
      %v546 = vcvt.f32.s32.to.zero.pseudo %v498
      %v547 = vcvt.f32.s32.to.zero.pseudo %v499
      %v548 = vcvt.f32.s32.to.zero.pseudo %v500
      %v549 = vcvt.f32.s32.to.zero.pseudo %v501
      %v550 = vcvt.f32.s32.to.zero.pseudo %v502
      %v551 = vcvt.f32.s32.to.zero.pseudo %v503
      %v552 = vadd.s32 %v536, 1
      %v553 = vadd.s32 %v537, 1
      %v554 = vadd.s32 %v538, 1
      %v555 = vadd.s32 %v539, 1
      %v556 = vadd.s32 %v540, 1
      %v557 = vadd.s32 %v541, 1
      %v558 = vadd.s32 %v542, 1
      %v559 = vadd.s32 %v543, 1
      %v560 = vadd.s32 %v544, 1
      %v561 = vadd.s32 %v545, 1
      %v562 = vadd.s32 %v546, 1
      %v563 = vadd.s32 %v547, 1
      %v564 = vadd.s32 %v548, 1
      %v565 = vadd.s32 %v549, 1
      %v566 = vadd.s32 %v550, 1
      %v567 = vadd.s32 %v551, 1
      %vm568 = vcmp.lt.s32.totalorder %v552, 15
      %v569 = vsel %vm568, %v552, 15
      %vm570 = vcmp.lt.s32.totalorder %v553, 15
      %v571 = vsel %vm570, %v553, 15
      %vm572 = vcmp.lt.s32.totalorder %v554, 15
      %v573 = vsel %vm572, %v554, 15
      %vm574 = vcmp.lt.s32.totalorder %v555, 15
      %v575 = vsel %vm574, %v555, 15
      %vm576 = vcmp.lt.s32.totalorder %v556, 15
      %v577 = vsel %vm576, %v556, 15
      %vm578 = vcmp.lt.s32.totalorder %v557, 15
      %v579 = vsel %vm578, %v557, 15
      %vm580 = vcmp.lt.s32.totalorder %v558, 15
      %v581 = vsel %vm580, %v558, 15
      %vm582 = vcmp.lt.s32.totalorder %v559, 15
      %v583 = vsel %vm582, %v559, 15
      %vm584 = vcmp.lt.s32.totalorder %v560, 15
      %v585 = vsel %vm584, %v560, 15
      %vm586 = vcmp.lt.s32.totalorder %v561, 15
      %v587 = vsel %vm586, %v561, 15
      %vm588 = vcmp.lt.s32.totalorder %v562, 15
      %v589 = vsel %vm588, %v562, 15
      %vm590 = vcmp.lt.s32.totalorder %v563, 15
      %v591 = vsel %vm590, %v563, 15
      %vm592 = vcmp.lt.s32.totalorder %v564, 15
      %v593 = vsel %vm592, %v564, 15
      %vm594 = vcmp.lt.s32.totalorder %v565, 15
      %v595 = vsel %vm594, %v565, 15
      %vm596 = vcmp.lt.s32.totalorder %v566, 15
      %v597 = vsel %vm596, %v566, 15
      %vm598 = vcmp.lt.s32.totalorder %v567, 15
      %v599 = vsel %vm598, %v567, 15
      %616 = vrot.lane.b32.xlu0 %v520, 1
      %v617 = vpop.permute.xlu0 %616
      %618 = vrot.lane.b32.xlu0 %v521, 1
      %v619 = vpop.permute.xlu0 %618
      %620 = vrot.lane.b32.xlu0 %v522, 1
      %v621 = vpop.permute.xlu0 %620
      %622 = vrot.lane.b32.xlu0 %v523, 1
      %v623 = vpop.permute.xlu0 %622
      %624 = vrot.lane.b32.xlu0 %v524, 1
      %v625 = vpop.permute.xlu0 %624
      %626 = vrot.lane.b32.xlu0 %v525, 1
      %v627 = vpop.permute.xlu0 %626
      %628 = vrot.lane.b32.xlu0 %v526, 1
      %v629 = vpop.permute.xlu0 %628
      %630 = vrot.lane.b32.xlu0 %v527, 1
      %v631 = vpop.permute.xlu0 %630
      %632 = vrot.lane.b32.xlu0 %v528, 1
      %v633 = vpop.permute.xlu0 %632
      %634 = vrot.lane.b32.xlu0 %v529, 1
      %v635 = vpop.permute.xlu0 %634
      %636 = vrot.lane.b32.xlu0 %v530, 1
      %v637 = vpop.permute.xlu0 %636
      %638 = vrot.lane.b32.xlu0 %v531, 1
      %v639 = vpop.permute.xlu0 %638
      %640 = vrot.lane.b32.xlu0 %v532, 1
      %v641 = vpop.permute.xlu0 %640
      %642 = vrot.lane.b32.xlu0 %v533, 1
      %v643 = vpop.permute.xlu0 %642
      %644 = vrot.lane.b32.xlu0 %v534, 1
      %v645 = vpop.permute.xlu0 %644
      %646 = vrot.lane.b32.xlu0 %v535, 1
      %v647 = vpop.permute.xlu0 %646
      %v664 = vmul.f32 %v520, %v617
      %v665 = vmul.f32 %v521, %v619
      %v666 = vmul.f32 %v522, %v621
      %v667 = vmul.f32 %v523, %v623
      %v668 = vmul.f32 %v524, %v625
      %v669 = vmul.f32 %v525, %v627
      %v670 = vmul.f32 %v526, %v629
      %v671 = vmul.f32 %v527, %v631
      %v672 = vmul.f32 %v528, %v633
      %v673 = vmul.f32 %v529, %v635
      %v674 = vmul.f32 %v530, %v637
      %v675 = vmul.f32 %v531, %v639
      %v676 = vmul.f32 %v532, %v641
      %v677 = vmul.f32 %v533, %v643
      %v678 = vmul.f32 %v534, %v645
      %v679 = vmul.f32 %v535, %v647
      %v680 = vmul.u32 %v536, 16
      %v681 = vmul.u32 %v537, 16
      %v682 = vmul.u32 %v538, 16
      %v683 = vmul.u32 %v539, 16
      %v684 = vmul.u32 %v540, 16
      %v685 = vmul.u32 %v541, 16
      %v686 = vmul.u32 %v542, 16
      %v687 = vmul.u32 %v543, 16
      %v688 = vmul.u32 %v544, 16
      %v689 = vmul.u32 %v545, 16
      %v690 = vmul.u32 %v546, 16
      %v691 = vmul.u32 %v547, 16
      %v692 = vmul.u32 %v548, 16
      %v693 = vmul.u32 %v549, 16
      %v694 = vmul.u32 %v550, 16
      %v695 = vmul.u32 %v551, 16
      %696 = vrot.lane.b32.xlu0 %v536, 1
      %v697 = vpop.permute.xlu0 %696
      %698 = vrot.lane.b32.xlu0 %v537, 1
      %v699 = vpop.permute.xlu0 %698
      %700 = vrot.lane.b32.xlu0 %v538, 1
      %v701 = vpop.permute.xlu0 %700
      %702 = vrot.lane.b32.xlu0 %v539, 1
      %v703 = vpop.permute.xlu0 %702
      %704 = vrot.lane.b32.xlu0 %v540, 1
      %v705 = vpop.permute.xlu0 %704
      %706 = vrot.lane.b32.xlu0 %v541, 1
      %v707 = vpop.permute.xlu0 %706
      %708 = vrot.lane.b32.xlu0 %v542, 1
      %v709 = vpop.permute.xlu0 %708
      %710 = vrot.lane.b32.xlu0 %v543, 1
      %v711 = vpop.permute.xlu0 %710
      %712 = vrot.lane.b32.xlu0 %v544, 1
      %v713 = vpop.permute.xlu0 %712
      %714 = vrot.lane.b32.xlu0 %v545, 1
      %v715 = vpop.permute.xlu0 %714
      %716 = vrot.lane.b32.xlu0 %v546, 1
      %v717 = vpop.permute.xlu0 %716
      %718 = vrot.lane.b32.xlu0 %v547, 1
      %v719 = vpop.permute.xlu0 %718
      %720 = vrot.lane.b32.xlu0 %v548, 1
      %v721 = vpop.permute.xlu0 %720
      %722 = vrot.lane.b32.xlu0 %v549, 1
      %v723 = vpop.permute.xlu0 %722
      %724 = vrot.lane.b32.xlu0 %v550, 1
      %v725 = vpop.permute.xlu0 %724
      %726 = vrot.lane.b32.xlu0 %v551, 1
      %v727 = vpop.permute.xlu0 %726
      %v728 = vadd.s32 %v680, %v697
      %v729 = vadd.s32 %v681, %v699
      %v730 = vadd.s32 %v682, %v701
      %v731 = vadd.s32 %v683, %v703
      %v732 = vadd.s32 %v684, %v705
      %v733 = vadd.s32 %v685, %v707
      %v734 = vadd.s32 %v686, %v709
      %v735 = vadd.s32 %v687, %v711
      %v736 = vadd.s32 %v688, %v713
      %v737 = vadd.s32 %v689, %v715
      %v738 = vadd.s32 %v690, %v717
      %v739 = vadd.s32 %v691, %v719
      %v740 = vadd.s32 %v692, %v721
      %v741 = vadd.s32 %v693, %v723
      %v742 = vadd.s32 %v694, %v725
      %v743 = vadd.s32 %v695, %v727
      %744 = vset.pattern.permute.xlu0 1
      %745 = vperm.xlu0 %744, %v728
      %v746 = vpop.permute.xlu0 %745
      %747 = vset.pattern.permute.xlu0 1
      %748 = vperm.xlu0 %747, %v729
      %v749 = vpop.permute.xlu0 %748
      %750 = vset.pattern.permute.xlu0 1
      %751 = vperm.xlu0 %750, %v730
      %v752 = vpop.permute.xlu0 %751
      %753 = vset.pattern.permute.xlu0 1
      %754 = vperm.xlu0 %753, %v731
      %v755 = vpop.permute.xlu0 %754
      %756 = vset.pattern.permute.xlu0 1
      %757 = vperm.xlu0 %756, %v732
      %v758 = vpop.permute.xlu0 %757
      %759 = vset.pattern.permute.xlu0 1
      %760 = vperm.xlu0 %759, %v733
      %v761 = vpop.permute.xlu0 %760
      %762 = vset.pattern.permute.xlu0 1
      %763 = vperm.xlu0 %762, %v734
      %v764 = vpop.permute.xlu0 %763
      %765 = vset.pattern.permute.xlu0 1
      %766 = vperm.xlu0 %765, %v735
      %v767 = vpop.permute.xlu0 %766
      %768 = vset.pattern.permute.xlu0 1
      %769 = vperm.xlu0 %768, %v736
      %v770 = vpop.permute.xlu0 %769
      %771 = vset.pattern.permute.xlu0 1
      %772 = vperm.xlu0 %771, %v737
      %v773 = vpop.permute.xlu0 %772
      %774 = vset.pattern.permute.xlu0 1
      %775 = vperm.xlu0 %774, %v738
      %v776 = vpop.permute.xlu0 %775
      %777 = vset.pattern.permute.xlu0 1
      %778 = vperm.xlu0 %777, %v739
      %v779 = vpop.permute.xlu0 %778
      %780 = vset.pattern.permute.xlu0 1
      %781 = vperm.xlu0 %780, %v740
      %v782 = vpop.permute.xlu0 %781
      %783 = vset.pattern.permute.xlu0 1
      %784 = vperm.xlu0 %783, %v741
      %v785 = vpop.permute.xlu0 %784
      %786 = vset.pattern.permute.xlu0 1
      %787 = vperm.xlu0 %786, %v742
      %v788 = vpop.permute.xlu0 %787
      %789 = vset.pattern.permute.xlu0 1
      %790 = vperm.xlu0 %789, %v743
      %v791 = vpop.permute.xlu0 %790
      %vm792 = vcmp.eq.s32.totalorder %v486, %v746
      %vm793 = vcmp.eq.s32.totalorder %v487, %v746
      %vm794 = vcmp.eq.s32.totalorder %v486, %v749
      %vm795 = vcmp.eq.s32.totalorder %v487, %v749
      %vm796 = vcmp.eq.s32.totalorder %v486, %v752
      %vm797 = vcmp.eq.s32.totalorder %v487, %v752
      %vm798 = vcmp.eq.s32.totalorder %v486, %v755
      %vm799 = vcmp.eq.s32.totalorder %v487, %v755
      %vm800 = vcmp.eq.s32.totalorder %v486, %v758
      %vm801 = vcmp.eq.s32.totalorder %v487, %v758
      %vm802 = vcmp.eq.s32.totalorder %v486, %v761
      %vm803 = vcmp.eq.s32.totalorder %v487, %v761
      %vm804 = vcmp.eq.s32.totalorder %v486, %v764
      %vm805 = vcmp.eq.s32.totalorder %v487, %v764
      %vm806 = vcmp.eq.s32.totalorder %v486, %v767
      %vm807 = vcmp.eq.s32.totalorder %v487, %v767
      %vm808 = vcmp.eq.s32.totalorder %v486, %v770
      %vm809 = vcmp.eq.s32.totalorder %v487, %v770
      %vm810 = vcmp.eq.s32.totalorder %v486, %v773
      %vm811 = vcmp.eq.s32.totalorder %v487, %v773
      %vm812 = vcmp.eq.s32.totalorder %v486, %v776
      %vm813 = vcmp.eq.s32.totalorder %v487, %v776
      %vm814 = vcmp.eq.s32.totalorder %v486, %v779
      %vm815 = vcmp.eq.s32.totalorder %v487, %v779
      %vm816 = vcmp.eq.s32.totalorder %v486, %v782
      %vm817 = vcmp.eq.s32.totalorder %v487, %v782
      %vm818 = vcmp.eq.s32.totalorder %v486, %v785
      %vm819 = vcmp.eq.s32.totalorder %v487, %v785
      %vm820 = vcmp.eq.s32.totalorder %v486, %v788
      %vm821 = vcmp.eq.s32.totalorder %v487, %v788
      %vm822 = vcmp.eq.s32.totalorder %v486, %v791
      %vm823 = vcmp.eq.s32.totalorder %v487, %v791
      %825 = vset.pattern.permute.xlu0 1
      %826 = vperm.xlu0 %825, %v664
      %v827 = vpop.permute.xlu0 %826
      %830 = vset.pattern.permute.xlu0 1
      %831 = vperm.xlu0 %830, %v665
      %v832 = vpop.permute.xlu0 %831
      %835 = vset.pattern.permute.xlu0 1
      %836 = vperm.xlu0 %835, %v666
      %v837 = vpop.permute.xlu0 %836
      %840 = vset.pattern.permute.xlu0 1
      %841 = vperm.xlu0 %840, %v667
      %v842 = vpop.permute.xlu0 %841
      %845 = vset.pattern.permute.xlu0 1
      %846 = vperm.xlu0 %845, %v668
      %v847 = vpop.permute.xlu0 %846
      %850 = vset.pattern.permute.xlu0 1
      %851 = vperm.xlu0 %850, %v669
      %v852 = vpop.permute.xlu0 %851
      %855 = vset.pattern.permute.xlu0 1
      %856 = vperm.xlu0 %855, %v670
      %v857 = vpop.permute.xlu0 %856
      %860 = vset.pattern.permute.xlu0 1
      %861 = vperm.xlu0 %860, %v671
      %v862 = vpop.permute.xlu0 %861
      %865 = vset.pattern.permute.xlu0 1
      %866 = vperm.xlu0 %865, %v672
      %v867 = vpop.permute.xlu0 %866
      %870 = vset.pattern.permute.xlu0 1
      %871 = vperm.xlu0 %870, %v673
      %v872 = vpop.permute.xlu0 %871
      %875 = vset.pattern.permute.xlu0 1
      %876 = vperm.xlu0 %875, %v674
      %v877 = vpop.permute.xlu0 %876
      %880 = vset.pattern.permute.xlu0 1
      %881 = vperm.xlu0 %880, %v675
      %v882 = vpop.permute.xlu0 %881
      %885 = vset.pattern.permute.xlu0 1
      %886 = vperm.xlu0 %885, %v676
      %v887 = vpop.permute.xlu0 %886
      %890 = vset.pattern.permute.xlu0 1
      %891 = vperm.xlu0 %890, %v677
      %v892 = vpop.permute.xlu0 %891
      %895 = vset.pattern.permute.xlu0 1
      %896 = vperm.xlu0 %895, %v678
      %v897 = vpop.permute.xlu0 %896
      %900 = vset.pattern.permute.xlu0 1
      %901 = vperm.xlu0 %900, %v679
      %v902 = vpop.permute.xlu0 %901
      %v904 = vsel %vm792, %v827, 0.0
      %v905 = vsel %vm793, %v827, 0.0
      %v906 = vsel %vm794, %v832, 0.0
      %v907 = vsel %vm795, %v832, 0.0
      %v908 = vsel %vm796, %v837, 0.0
      %v909 = vsel %vm797, %v837, 0.0
      %v910 = vsel %vm798, %v842, 0.0
      %v911 = vsel %vm799, %v842, 0.0
      %v912 = vsel %vm800, %v847, 0.0
      %v913 = vsel %vm801, %v847, 0.0
      %v914 = vsel %vm802, %v852, 0.0
      %v915 = vsel %vm803, %v852, 0.0
      %v916 = vsel %vm804, %v857, 0.0
      %v917 = vsel %vm805, %v857, 0.0
      %v918 = vsel %vm806, %v862, 0.0
      %v919 = vsel %vm807, %v862, 0.0
      %v920 = vsel %vm808, %v867, 0.0
      %v921 = vsel %vm809, %v867, 0.0
      %v922 = vsel %vm810, %v872, 0.0
      %v923 = vsel %vm811, %v872, 0.0
      %v924 = vsel %vm812, %v877, 0.0
      %v925 = vsel %vm813, %v877, 0.0
      %v926 = vsel %vm814, %v882, 0.0
      %v927 = vsel %vm815, %v882, 0.0
      %v928 = vsel %vm816, %v887, 0.0
      %v929 = vsel %vm817, %v887, 0.0
      %v930 = vsel %vm818, %v892, 0.0
      %v931 = vsel %vm819, %v892, 0.0
      %v932 = vsel %vm820, %v897, 0.0
      %v933 = vsel %vm821, %v897, 0.0
      %v934 = vsel %vm822, %v902, 0.0
      %v935 = vsel %vm823, %v902, 0.0
      %952 = vrot.lane.b32.xlu0 %v504, 1
      %v953 = vpop.permute.xlu0 %952
      %954 = vrot.lane.b32.xlu0 %v505, 1
      %v955 = vpop.permute.xlu0 %954
      %956 = vrot.lane.b32.xlu0 %v506, 1
      %v957 = vpop.permute.xlu0 %956
      %958 = vrot.lane.b32.xlu0 %v507, 1
      %v959 = vpop.permute.xlu0 %958
      %960 = vrot.lane.b32.xlu0 %v508, 1
      %v961 = vpop.permute.xlu0 %960
      %962 = vrot.lane.b32.xlu0 %v509, 1
      %v963 = vpop.permute.xlu0 %962
      %964 = vrot.lane.b32.xlu0 %v510, 1
      %v965 = vpop.permute.xlu0 %964
      %966 = vrot.lane.b32.xlu0 %v511, 1
      %v967 = vpop.permute.xlu0 %966
      %968 = vrot.lane.b32.xlu0 %v512, 1
      %v969 = vpop.permute.xlu0 %968
      %970 = vrot.lane.b32.xlu0 %v513, 1
      %v971 = vpop.permute.xlu0 %970
      %972 = vrot.lane.b32.xlu0 %v514, 1
      %v973 = vpop.permute.xlu0 %972
      %974 = vrot.lane.b32.xlu0 %v515, 1
      %v975 = vpop.permute.xlu0 %974
      %976 = vrot.lane.b32.xlu0 %v516, 1
      %v977 = vpop.permute.xlu0 %976
      %978 = vrot.lane.b32.xlu0 %v517, 1
      %v979 = vpop.permute.xlu0 %978
      %980 = vrot.lane.b32.xlu0 %v518, 1
      %v981 = vpop.permute.xlu0 %980
      %982 = vrot.lane.b32.xlu0 %v519, 1
      %v983 = vpop.permute.xlu0 %982
      %v1000 = vmul.f32 %v520, %v953
      %v1001 = vmul.f32 %v521, %v955
      %v1002 = vmul.f32 %v522, %v957
      %v1003 = vmul.f32 %v523, %v959
      %v1004 = vmul.f32 %v524, %v961
      %v1005 = vmul.f32 %v525, %v963
      %v1006 = vmul.f32 %v526, %v965
      %v1007 = vmul.f32 %v527, %v967
      %v1008 = vmul.f32 %v528, %v969
      %v1009 = vmul.f32 %v529, %v971
      %v1010 = vmul.f32 %v530, %v973
      %v1011 = vmul.f32 %v531, %v975
      %v1012 = vmul.f32 %v532, %v977
      %v1013 = vmul.f32 %v533, %v979
      %v1014 = vmul.f32 %v534, %v981
      %v1015 = vmul.f32 %v535, %v983
      %1016 = vrot.lane.b32.xlu0 %v569, 1
      %v1017 = vpop.permute.xlu0 %1016
      %1018 = vrot.lane.b32.xlu0 %v571, 1
      %v1019 = vpop.permute.xlu0 %1018
      %1020 = vrot.lane.b32.xlu0 %v573, 1
      %v1021 = vpop.permute.xlu0 %1020
      %1022 = vrot.lane.b32.xlu0 %v575, 1
      %v1023 = vpop.permute.xlu0 %1022
      %1024 = vrot.lane.b32.xlu0 %v577, 1
      %v1025 = vpop.permute.xlu0 %1024
      %1026 = vrot.lane.b32.xlu0 %v579, 1
      %v1027 = vpop.permute.xlu0 %1026
      %1028 = vrot.lane.b32.xlu0 %v581, 1
      %v1029 = vpop.permute.xlu0 %1028
      %1030 = vrot.lane.b32.xlu0 %v583, 1
      %v1031 = vpop.permute.xlu0 %1030
      %1032 = vrot.lane.b32.xlu0 %v585, 1
      %v1033 = vpop.permute.xlu0 %1032
      %1034 = vrot.lane.b32.xlu0 %v587, 1
      %v1035 = vpop.permute.xlu0 %1034
      %1036 = vrot.lane.b32.xlu0 %v589, 1
      %v1037 = vpop.permute.xlu0 %1036
      %1038 = vrot.lane.b32.xlu0 %v591, 1
      %v1039 = vpop.permute.xlu0 %1038
      %1040 = vrot.lane.b32.xlu0 %v593, 1
      %v1041 = vpop.permute.xlu0 %1040
      %1042 = vrot.lane.b32.xlu0 %v595, 1
      %v1043 = vpop.permute.xlu0 %1042
      %1044 = vrot.lane.b32.xlu0 %v597, 1
      %v1045 = vpop.permute.xlu0 %1044
      %1046 = vrot.lane.b32.xlu0 %v599, 1
      %v1047 = vpop.permute.xlu0 %1046
      %v1048 = vadd.s32 %v680, %v1017
      %v1049 = vadd.s32 %v681, %v1019
      %v1050 = vadd.s32 %v682, %v1021
      %v1051 = vadd.s32 %v683, %v1023
      %v1052 = vadd.s32 %v684, %v1025
      %v1053 = vadd.s32 %v685, %v1027
      %v1054 = vadd.s32 %v686, %v1029
      %v1055 = vadd.s32 %v687, %v1031
      %v1056 = vadd.s32 %v688, %v1033
      %v1057 = vadd.s32 %v689, %v1035
      %v1058 = vadd.s32 %v690, %v1037
      %v1059 = vadd.s32 %v691, %v1039
      %v1060 = vadd.s32 %v692, %v1041
      %v1061 = vadd.s32 %v693, %v1043
      %v1062 = vadd.s32 %v694, %v1045
      %v1063 = vadd.s32 %v695, %v1047
      %1064 = vset.pattern.permute.xlu0 1
      %1065 = vperm.xlu0 %1064, %v1048
      %v1066 = vpop.permute.xlu0 %1065
      %1067 = vset.pattern.permute.xlu0 1
      %1068 = vperm.xlu0 %1067, %v1049
      %v1069 = vpop.permute.xlu0 %1068
      %1070 = vset.pattern.permute.xlu0 1
      %1071 = vperm.xlu0 %1070, %v1050
      %v1072 = vpop.permute.xlu0 %1071
      %1073 = vset.pattern.permute.xlu0 1
      %1074 = vperm.xlu0 %1073, %v1051
      %v1075 = vpop.permute.xlu0 %1074
      %1076 = vset.pattern.permute.xlu0 1
      %1077 = vperm.xlu0 %1076, %v1052
      %v1078 = vpop.permute.xlu0 %1077
      %1079 = vset.pattern.permute.xlu0 1
      %1080 = vperm.xlu0 %1079, %v1053
      %v1081 = vpop.permute.xlu0 %1080
      %1082 = vset.pattern.permute.xlu0 1
      %1083 = vperm.xlu0 %1082, %v1054
      %v1084 = vpop.permute.xlu0 %1083
      %1085 = vset.pattern.permute.xlu0 1
      %1086 = vperm.xlu0 %1085, %v1055
      %v1087 = vpop.permute.xlu0 %1086
      %1088 = vset.pattern.permute.xlu0 1
      %1089 = vperm.xlu0 %1088, %v1056
      %v1090 = vpop.permute.xlu0 %1089
      %1091 = vset.pattern.permute.xlu0 1
      %1092 = vperm.xlu0 %1091, %v1057
      %v1093 = vpop.permute.xlu0 %1092
      %1094 = vset.pattern.permute.xlu0 1
      %1095 = vperm.xlu0 %1094, %v1058
      %v1096 = vpop.permute.xlu0 %1095
      %1097 = vset.pattern.permute.xlu0 1
      %1098 = vperm.xlu0 %1097, %v1059
      %v1099 = vpop.permute.xlu0 %1098
      %1100 = vset.pattern.permute.xlu0 1
      %1101 = vperm.xlu0 %1100, %v1060
      %v1102 = vpop.permute.xlu0 %1101
      %1103 = vset.pattern.permute.xlu0 1
      %1104 = vperm.xlu0 %1103, %v1061
      %v1105 = vpop.permute.xlu0 %1104
      %1106 = vset.pattern.permute.xlu0 1
      %1107 = vperm.xlu0 %1106, %v1062
      %v1108 = vpop.permute.xlu0 %1107
      %1109 = vset.pattern.permute.xlu0 1
      %1110 = vperm.xlu0 %1109, %v1063
      %v1111 = vpop.permute.xlu0 %1110
      %vm1112 = vcmp.eq.s32.totalorder %v486, %v1066
      %vm1113 = vcmp.eq.s32.totalorder %v487, %v1066
      %vm1114 = vcmp.eq.s32.totalorder %v486, %v1069
      %vm1115 = vcmp.eq.s32.totalorder %v487, %v1069
      %vm1116 = vcmp.eq.s32.totalorder %v486, %v1072
      %vm1117 = vcmp.eq.s32.totalorder %v487, %v1072
      %vm1118 = vcmp.eq.s32.totalorder %v486, %v1075
      %vm1119 = vcmp.eq.s32.totalorder %v487, %v1075
      %vm1120 = vcmp.eq.s32.totalorder %v486, %v1078
      %vm1121 = vcmp.eq.s32.totalorder %v487, %v1078
      %vm1122 = vcmp.eq.s32.totalorder %v486, %v1081
      %vm1123 = vcmp.eq.s32.totalorder %v487, %v1081
      %vm1124 = vcmp.eq.s32.totalorder %v486, %v1084
      %vm1125 = vcmp.eq.s32.totalorder %v487, %v1084
      %vm1126 = vcmp.eq.s32.totalorder %v486, %v1087
      %vm1127 = vcmp.eq.s32.totalorder %v487, %v1087
      %vm1128 = vcmp.eq.s32.totalorder %v486, %v1090
      %vm1129 = vcmp.eq.s32.totalorder %v487, %v1090
      %vm1130 = vcmp.eq.s32.totalorder %v486, %v1093
      %vm1131 = vcmp.eq.s32.totalorder %v487, %v1093
      %vm1132 = vcmp.eq.s32.totalorder %v486, %v1096
      %vm1133 = vcmp.eq.s32.totalorder %v487, %v1096
      %vm1134 = vcmp.eq.s32.totalorder %v486, %v1099
      %vm1135 = vcmp.eq.s32.totalorder %v487, %v1099
      %vm1136 = vcmp.eq.s32.totalorder %v486, %v1102
      %vm1137 = vcmp.eq.s32.totalorder %v487, %v1102
      %vm1138 = vcmp.eq.s32.totalorder %v486, %v1105
      %vm1139 = vcmp.eq.s32.totalorder %v487, %v1105
      %vm1140 = vcmp.eq.s32.totalorder %v486, %v1108
      %vm1141 = vcmp.eq.s32.totalorder %v487, %v1108
      %vm1142 = vcmp.eq.s32.totalorder %v486, %v1111
      %vm1143 = vcmp.eq.s32.totalorder %v487, %v1111
      %1145 = vset.pattern.permute.xlu0 1
      %1146 = vperm.xlu0 %1145, %v1000
      %v1147 = vpop.permute.xlu0 %1146
      %1150 = vset.pattern.permute.xlu0 1
      %1151 = vperm.xlu0 %1150, %v1001
      %v1152 = vpop.permute.xlu0 %1151
      %1155 = vset.pattern.permute.xlu0 1
      %1156 = vperm.xlu0 %1155, %v1002
      %v1157 = vpop.permute.xlu0 %1156
      %1160 = vset.pattern.permute.xlu0 1
      %1161 = vperm.xlu0 %1160, %v1003
      %v1162 = vpop.permute.xlu0 %1161
      %1165 = vset.pattern.permute.xlu0 1
      %1166 = vperm.xlu0 %1165, %v1004
      %v1167 = vpop.permute.xlu0 %1166
      %1170 = vset.pattern.permute.xlu0 1
      %1171 = vperm.xlu0 %1170, %v1005
      %v1172 = vpop.permute.xlu0 %1171
      %1175 = vset.pattern.permute.xlu0 1
      %1176 = vperm.xlu0 %1175, %v1006
      %v1177 = vpop.permute.xlu0 %1176
      %1180 = vset.pattern.permute.xlu0 1
      %1181 = vperm.xlu0 %1180, %v1007
      %v1182 = vpop.permute.xlu0 %1181
      %1185 = vset.pattern.permute.xlu0 1
      %1186 = vperm.xlu0 %1185, %v1008
      %v1187 = vpop.permute.xlu0 %1186
      %1190 = vset.pattern.permute.xlu0 1
      %1191 = vperm.xlu0 %1190, %v1009
      %v1192 = vpop.permute.xlu0 %1191
      %1195 = vset.pattern.permute.xlu0 1
      %1196 = vperm.xlu0 %1195, %v1010
      %v1197 = vpop.permute.xlu0 %1196
      %1200 = vset.pattern.permute.xlu0 1
      %1201 = vperm.xlu0 %1200, %v1011
      %v1202 = vpop.permute.xlu0 %1201
      %1205 = vset.pattern.permute.xlu0 1
      %1206 = vperm.xlu0 %1205, %v1012
      %v1207 = vpop.permute.xlu0 %1206
      %1210 = vset.pattern.permute.xlu0 1
      %1211 = vperm.xlu0 %1210, %v1013
      %v1212 = vpop.permute.xlu0 %1211
      %1215 = vset.pattern.permute.xlu0 1
      %1216 = vperm.xlu0 %1215, %v1014
      %v1217 = vpop.permute.xlu0 %1216
      %1220 = vset.pattern.permute.xlu0 1
      %1221 = vperm.xlu0 %1220, %v1015
      %v1222 = vpop.permute.xlu0 %1221
      %v1224 = vsel %vm1112, %v1147, 0.0
      %v1225 = vsel %vm1113, %v1147, 0.0
      %v1226 = vsel %vm1114, %v1152, 0.0
      %v1227 = vsel %vm1115, %v1152, 0.0
      %v1228 = vsel %vm1116, %v1157, 0.0
      %v1229 = vsel %vm1117, %v1157, 0.0
      %v1230 = vsel %vm1118, %v1162, 0.0
      %v1231 = vsel %vm1119, %v1162, 0.0
      %v1232 = vsel %vm1120, %v1167, 0.0
      %v1233 = vsel %vm1121, %v1167, 0.0
      %v1234 = vsel %vm1122, %v1172, 0.0
      %v1235 = vsel %vm1123, %v1172, 0.0
      %v1236 = vsel %vm1124, %v1177, 0.0
      %v1237 = vsel %vm1125, %v1177, 0.0
      %v1238 = vsel %vm1126, %v1182, 0.0
      %v1239 = vsel %vm1127, %v1182, 0.0
      %v1240 = vsel %vm1128, %v1187, 0.0
      %v1241 = vsel %vm1129, %v1187, 0.0
      %v1242 = vsel %vm1130, %v1192, 0.0
      %v1243 = vsel %vm1131, %v1192, 0.0
      %v1244 = vsel %vm1132, %v1197, 0.0
      %v1245 = vsel %vm1133, %v1197, 0.0
      %v1246 = vsel %vm1134, %v1202, 0.0
      %v1247 = vsel %vm1135, %v1202, 0.0
      %v1248 = vsel %vm1136, %v1207, 0.0
      %v1249 = vsel %vm1137, %v1207, 0.0
      %v1250 = vsel %vm1138, %v1212, 0.0
      %v1251 = vsel %vm1139, %v1212, 0.0
      %v1252 = vsel %vm1140, %v1217, 0.0
      %v1253 = vsel %vm1141, %v1217, 0.0
      %v1254 = vsel %vm1142, %v1222, 0.0
      %v1255 = vsel %vm1143, %v1222, 0.0
      %v1256 = vadd.f32 %v904, %v1224
      %v1257 = vadd.f32 %v905, %v1225
      %v1258 = vadd.f32 %v906, %v1226
      %v1259 = vadd.f32 %v907, %v1227
      %v1260 = vadd.f32 %v908, %v1228
      %v1261 = vadd.f32 %v909, %v1229
      %v1262 = vadd.f32 %v910, %v1230
      %v1263 = vadd.f32 %v911, %v1231
      %v1264 = vadd.f32 %v912, %v1232
      %v1265 = vadd.f32 %v913, %v1233
      %v1266 = vadd.f32 %v914, %v1234
      %v1267 = vadd.f32 %v915, %v1235
      %v1268 = vadd.f32 %v916, %v1236
      %v1269 = vadd.f32 %v917, %v1237
      %v1270 = vadd.f32 %v918, %v1238
      %v1271 = vadd.f32 %v919, %v1239
      %v1272 = vadd.f32 %v920, %v1240
      %v1273 = vadd.f32 %v921, %v1241
      %v1274 = vadd.f32 %v922, %v1242
      %v1275 = vadd.f32 %v923, %v1243
      %v1276 = vadd.f32 %v924, %v1244
      %v1277 = vadd.f32 %v925, %v1245
      %v1278 = vadd.f32 %v926, %v1246
      %v1279 = vadd.f32 %v927, %v1247
      %v1280 = vadd.f32 %v928, %v1248
      %v1281 = vadd.f32 %v929, %v1249
      %v1282 = vadd.f32 %v930, %v1250
      %v1283 = vadd.f32 %v931, %v1251
      %v1284 = vadd.f32 %v932, %v1252
      %v1285 = vadd.f32 %v933, %v1253
      %v1286 = vadd.f32 %v934, %v1254
      %v1287 = vadd.f32 %v935, %v1255
      %v1288 = vmul.f32 %v504, %v617
      %v1289 = vmul.f32 %v505, %v619
      %v1290 = vmul.f32 %v506, %v621
      %v1291 = vmul.f32 %v507, %v623
      %v1292 = vmul.f32 %v508, %v625
      %v1293 = vmul.f32 %v509, %v627
      %v1294 = vmul.f32 %v510, %v629
      %v1295 = vmul.f32 %v511, %v631
      %v1296 = vmul.f32 %v512, %v633
      %v1297 = vmul.f32 %v513, %v635
      %v1298 = vmul.f32 %v514, %v637
      %v1299 = vmul.f32 %v515, %v639
      %v1300 = vmul.f32 %v516, %v641
      %v1301 = vmul.f32 %v517, %v643
      %v1302 = vmul.f32 %v518, %v645
      %v1303 = vmul.f32 %v519, %v647
      %v1304 = vmul.u32 %v569, 16
      %v1305 = vmul.u32 %v571, 16
      %v1306 = vmul.u32 %v573, 16
      %v1307 = vmul.u32 %v575, 16
      %v1308 = vmul.u32 %v577, 16
      %v1309 = vmul.u32 %v579, 16
      %v1310 = vmul.u32 %v581, 16
      %v1311 = vmul.u32 %v583, 16
      %v1312 = vmul.u32 %v585, 16
      %v1313 = vmul.u32 %v587, 16
      %v1314 = vmul.u32 %v589, 16
      %v1315 = vmul.u32 %v591, 16
      %v1316 = vmul.u32 %v593, 16
      %v1317 = vmul.u32 %v595, 16
      %v1318 = vmul.u32 %v597, 16
      %v1319 = vmul.u32 %v599, 16
      %v1320 = vadd.s32 %v1304, %v697
      %v1321 = vadd.s32 %v1305, %v699
      %v1322 = vadd.s32 %v1306, %v701
      %v1323 = vadd.s32 %v1307, %v703
      %v1324 = vadd.s32 %v1308, %v705
      %v1325 = vadd.s32 %v1309, %v707
      %v1326 = vadd.s32 %v1310, %v709
      %v1327 = vadd.s32 %v1311, %v711
      %v1328 = vadd.s32 %v1312, %v713
      %v1329 = vadd.s32 %v1313, %v715
      %v1330 = vadd.s32 %v1314, %v717
      %v1331 = vadd.s32 %v1315, %v719
      %v1332 = vadd.s32 %v1316, %v721
      %v1333 = vadd.s32 %v1317, %v723
      %v1334 = vadd.s32 %v1318, %v725
      %v1335 = vadd.s32 %v1319, %v727
      %1336 = vset.pattern.permute.xlu0 1
      %1337 = vperm.xlu0 %1336, %v1320
      %v1338 = vpop.permute.xlu0 %1337
      %1339 = vset.pattern.permute.xlu0 1
      %1340 = vperm.xlu0 %1339, %v1321
      %v1341 = vpop.permute.xlu0 %1340
      %1342 = vset.pattern.permute.xlu0 1
      %1343 = vperm.xlu0 %1342, %v1322
      %v1344 = vpop.permute.xlu0 %1343
      %1345 = vset.pattern.permute.xlu0 1
      %1346 = vperm.xlu0 %1345, %v1323
      %v1347 = vpop.permute.xlu0 %1346
      %1348 = vset.pattern.permute.xlu0 1
      %1349 = vperm.xlu0 %1348, %v1324
      %v1350 = vpop.permute.xlu0 %1349
      %1351 = vset.pattern.permute.xlu0 1
      %1352 = vperm.xlu0 %1351, %v1325
      %v1353 = vpop.permute.xlu0 %1352
      %1354 = vset.pattern.permute.xlu0 1
      %1355 = vperm.xlu0 %1354, %v1326
      %v1356 = vpop.permute.xlu0 %1355
      %1357 = vset.pattern.permute.xlu0 1
      %1358 = vperm.xlu0 %1357, %v1327
      %v1359 = vpop.permute.xlu0 %1358
      %1360 = vset.pattern.permute.xlu0 1
      %1361 = vperm.xlu0 %1360, %v1328
      %v1362 = vpop.permute.xlu0 %1361
      %1363 = vset.pattern.permute.xlu0 1
      %1364 = vperm.xlu0 %1363, %v1329
      %v1365 = vpop.permute.xlu0 %1364
      %1366 = vset.pattern.permute.xlu0 1
      %1367 = vperm.xlu0 %1366, %v1330
      %v1368 = vpop.permute.xlu0 %1367
      %1369 = vset.pattern.permute.xlu0 1
      %1370 = vperm.xlu0 %1369, %v1331
      %v1371 = vpop.permute.xlu0 %1370
      %1372 = vset.pattern.permute.xlu0 1
      %1373 = vperm.xlu0 %1372, %v1332
      %v1374 = vpop.permute.xlu0 %1373
      %1375 = vset.pattern.permute.xlu0 1
      %1376 = vperm.xlu0 %1375, %v1333
      %v1377 = vpop.permute.xlu0 %1376
      %1378 = vset.pattern.permute.xlu0 1
      %1379 = vperm.xlu0 %1378, %v1334
      %v1380 = vpop.permute.xlu0 %1379
      %1381 = vset.pattern.permute.xlu0 1
      %1382 = vperm.xlu0 %1381, %v1335
      %v1383 = vpop.permute.xlu0 %1382
      %vm1384 = vcmp.eq.s32.totalorder %v486, %v1338
      %vm1385 = vcmp.eq.s32.totalorder %v487, %v1338
      %vm1386 = vcmp.eq.s32.totalorder %v486, %v1341
      %vm1387 = vcmp.eq.s32.totalorder %v487, %v1341
      %vm1388 = vcmp.eq.s32.totalorder %v486, %v1344
      %vm1389 = vcmp.eq.s32.totalorder %v487, %v1344
      %vm1390 = vcmp.eq.s32.totalorder %v486, %v1347
      %vm1391 = vcmp.eq.s32.totalorder %v487, %v1347
      %vm1392 = vcmp.eq.s32.totalorder %v486, %v1350
      %vm1393 = vcmp.eq.s32.totalorder %v487, %v1350
      %vm1394 = vcmp.eq.s32.totalorder %v486, %v1353
      %vm1395 = vcmp.eq.s32.totalorder %v487, %v1353
      %vm1396 = vcmp.eq.s32.totalorder %v486, %v1356
      %vm1397 = vcmp.eq.s32.totalorder %v487, %v1356
      %vm1398 = vcmp.eq.s32.totalorder %v486, %v1359
      %vm1399 = vcmp.eq.s32.totalorder %v487, %v1359
      %vm1400 = vcmp.eq.s32.totalorder %v486, %v1362
      %vm1401 = vcmp.eq.s32.totalorder %v487, %v1362
      %vm1402 = vcmp.eq.s32.totalorder %v486, %v1365
      %vm1403 = vcmp.eq.s32.totalorder %v487, %v1365
      %vm1404 = vcmp.eq.s32.totalorder %v486, %v1368
      %vm1405 = vcmp.eq.s32.totalorder %v487, %v1368
      %vm1406 = vcmp.eq.s32.totalorder %v486, %v1371
      %vm1407 = vcmp.eq.s32.totalorder %v487, %v1371
      %vm1408 = vcmp.eq.s32.totalorder %v486, %v1374
      %vm1409 = vcmp.eq.s32.totalorder %v487, %v1374
      %vm1410 = vcmp.eq.s32.totalorder %v486, %v1377
      %vm1411 = vcmp.eq.s32.totalorder %v487, %v1377
      %vm1412 = vcmp.eq.s32.totalorder %v486, %v1380
      %vm1413 = vcmp.eq.s32.totalorder %v487, %v1380
      %vm1414 = vcmp.eq.s32.totalorder %v486, %v1383
      %vm1415 = vcmp.eq.s32.totalorder %v487, %v1383
      %1417 = vset.pattern.permute.xlu0 1
      %1418 = vperm.xlu0 %1417, %v1288
      %v1419 = vpop.permute.xlu0 %1418
      %1422 = vset.pattern.permute.xlu0 1
      %1423 = vperm.xlu0 %1422, %v1289
      %v1424 = vpop.permute.xlu0 %1423
      %1427 = vset.pattern.permute.xlu0 1
      %1428 = vperm.xlu0 %1427, %v1290
      %v1429 = vpop.permute.xlu0 %1428
      %1432 = vset.pattern.permute.xlu0 1
      %1433 = vperm.xlu0 %1432, %v1291
      %v1434 = vpop.permute.xlu0 %1433
      %1437 = vset.pattern.permute.xlu0 1
      %1438 = vperm.xlu0 %1437, %v1292
      %v1439 = vpop.permute.xlu0 %1438
      %1442 = vset.pattern.permute.xlu0 1
      %1443 = vperm.xlu0 %1442, %v1293
      %v1444 = vpop.permute.xlu0 %1443
      %1447 = vset.pattern.permute.xlu0 1
      %1448 = vperm.xlu0 %1447, %v1294
      %v1449 = vpop.permute.xlu0 %1448
      %1452 = vset.pattern.permute.xlu0 1
      %1453 = vperm.xlu0 %1452, %v1295
      %v1454 = vpop.permute.xlu0 %1453
      %1457 = vset.pattern.permute.xlu0 1
      %1458 = vperm.xlu0 %1457, %v1296
      %v1459 = vpop.permute.xlu0 %1458
      %1462 = vset.pattern.permute.xlu0 1
      %1463 = vperm.xlu0 %1462, %v1297
      %v1464 = vpop.permute.xlu0 %1463
      %1467 = vset.pattern.permute.xlu0 1
      %1468 = vperm.xlu0 %1467, %v1298
      %v1469 = vpop.permute.xlu0 %1468
      %1472 = vset.pattern.permute.xlu0 1
      %1473 = vperm.xlu0 %1472, %v1299
      %v1474 = vpop.permute.xlu0 %1473
      %1477 = vset.pattern.permute.xlu0 1
      %1478 = vperm.xlu0 %1477, %v1300
      %v1479 = vpop.permute.xlu0 %1478
      %1482 = vset.pattern.permute.xlu0 1
      %1483 = vperm.xlu0 %1482, %v1301
      %v1484 = vpop.permute.xlu0 %1483
      %1487 = vset.pattern.permute.xlu0 1
      %1488 = vperm.xlu0 %1487, %v1302
      %v1489 = vpop.permute.xlu0 %1488
      %1492 = vset.pattern.permute.xlu0 1
      %1493 = vperm.xlu0 %1492, %v1303
      %v1494 = vpop.permute.xlu0 %1493
      %v1496 = vsel %vm1384, %v1419, 0.0
      %v1497 = vsel %vm1385, %v1419, 0.0
      %v1498 = vsel %vm1386, %v1424, 0.0
      %v1499 = vsel %vm1387, %v1424, 0.0
      %v1500 = vsel %vm1388, %v1429, 0.0
      %v1501 = vsel %vm1389, %v1429, 0.0
      %v1502 = vsel %vm1390, %v1434, 0.0
      %v1503 = vsel %vm1391, %v1434, 0.0
      %v1504 = vsel %vm1392, %v1439, 0.0
      %v1505 = vsel %vm1393, %v1439, 0.0
      %v1506 = vsel %vm1394, %v1444, 0.0
      %v1507 = vsel %vm1395, %v1444, 0.0
      %v1508 = vsel %vm1396, %v1449, 0.0
      %v1509 = vsel %vm1397, %v1449, 0.0
      %v1510 = vsel %vm1398, %v1454, 0.0
      %v1511 = vsel %vm1399, %v1454, 0.0
      %v1512 = vsel %vm1400, %v1459, 0.0
      %v1513 = vsel %vm1401, %v1459, 0.0
      %v1514 = vsel %vm1402, %v1464, 0.0
      %v1515 = vsel %vm1403, %v1464, 0.0
      %v1516 = vsel %vm1404, %v1469, 0.0
      %v1517 = vsel %vm1405, %v1469, 0.0
      %v1518 = vsel %vm1406, %v1474, 0.0
      %v1519 = vsel %vm1407, %v1474, 0.0
      %v1520 = vsel %vm1408, %v1479, 0.0
      %v1521 = vsel %vm1409, %v1479, 0.0
      %v1522 = vsel %vm1410, %v1484, 0.0
      %v1523 = vsel %vm1411, %v1484, 0.0
      %v1524 = vsel %vm1412, %v1489, 0.0
      %v1525 = vsel %vm1413, %v1489, 0.0
      %v1526 = vsel %vm1414, %v1494, 0.0
      %v1527 = vsel %vm1415, %v1494, 0.0
      %v1528 = vadd.f32 %v1256, %v1496
      %v1529 = vadd.f32 %v1257, %v1497
      %v1530 = vadd.f32 %v1258, %v1498
      %v1531 = vadd.f32 %v1259, %v1499
      %v1532 = vadd.f32 %v1260, %v1500
      %v1533 = vadd.f32 %v1261, %v1501
      %v1534 = vadd.f32 %v1262, %v1502
      %v1535 = vadd.f32 %v1263, %v1503
      %v1536 = vadd.f32 %v1264, %v1504
      %v1537 = vadd.f32 %v1265, %v1505
      %v1538 = vadd.f32 %v1266, %v1506
      %v1539 = vadd.f32 %v1267, %v1507
      %v1540 = vadd.f32 %v1268, %v1508
      %v1541 = vadd.f32 %v1269, %v1509
      %v1542 = vadd.f32 %v1270, %v1510
      %v1543 = vadd.f32 %v1271, %v1511
      %v1544 = vadd.f32 %v1272, %v1512
      %v1545 = vadd.f32 %v1273, %v1513
      %v1546 = vadd.f32 %v1274, %v1514
      %v1547 = vadd.f32 %v1275, %v1515
      %v1548 = vadd.f32 %v1276, %v1516
      %v1549 = vadd.f32 %v1277, %v1517
      %v1550 = vadd.f32 %v1278, %v1518
      %v1551 = vadd.f32 %v1279, %v1519
      %v1552 = vadd.f32 %v1280, %v1520
      %v1553 = vadd.f32 %v1281, %v1521
      %v1554 = vadd.f32 %v1282, %v1522
      %v1555 = vadd.f32 %v1283, %v1523
      %v1556 = vadd.f32 %v1284, %v1524
      %v1557 = vadd.f32 %v1285, %v1525
      %v1558 = vadd.f32 %v1286, %v1526
      %v1559 = vadd.f32 %v1287, %v1527
      %v1560 = vmul.f32 %v504, %v953
      %v1561 = vmul.f32 %v505, %v955
      %v1562 = vmul.f32 %v506, %v957
      %v1563 = vmul.f32 %v507, %v959
      %v1564 = vmul.f32 %v508, %v961
      %v1565 = vmul.f32 %v509, %v963
      %v1566 = vmul.f32 %v510, %v965
      %v1567 = vmul.f32 %v511, %v967
      %v1568 = vmul.f32 %v512, %v969
      %v1569 = vmul.f32 %v513, %v971
      %v1570 = vmul.f32 %v514, %v973
      %v1571 = vmul.f32 %v515, %v975
      %v1572 = vmul.f32 %v516, %v977
      %v1573 = vmul.f32 %v517, %v979
      %v1574 = vmul.f32 %v518, %v981
      %v1575 = vmul.f32 %v519, %v983
      %v1576 = vadd.s32 %v1304, %v1017
      %v1577 = vadd.s32 %v1305, %v1019
      %v1578 = vadd.s32 %v1306, %v1021
      %v1579 = vadd.s32 %v1307, %v1023
      %v1580 = vadd.s32 %v1308, %v1025
      %v1581 = vadd.s32 %v1309, %v1027
      %v1582 = vadd.s32 %v1310, %v1029
      %v1583 = vadd.s32 %v1311, %v1031
      %v1584 = vadd.s32 %v1312, %v1033
      %v1585 = vadd.s32 %v1313, %v1035
      %v1586 = vadd.s32 %v1314, %v1037
      %v1587 = vadd.s32 %v1315, %v1039
      %v1588 = vadd.s32 %v1316, %v1041
      %v1589 = vadd.s32 %v1317, %v1043
      %v1590 = vadd.s32 %v1318, %v1045
      %v1591 = vadd.s32 %v1319, %v1047
      %1592 = vset.pattern.permute.xlu0 1
      %1593 = vperm.xlu0 %1592, %v1576
      %v1594 = vpop.permute.xlu0 %1593
      %1595 = vset.pattern.permute.xlu0 1
      %1596 = vperm.xlu0 %1595, %v1577
      %v1597 = vpop.permute.xlu0 %1596
      %1598 = vset.pattern.permute.xlu0 1
      %1599 = vperm.xlu0 %1598, %v1578
      %v1600 = vpop.permute.xlu0 %1599
      %1601 = vset.pattern.permute.xlu0 1
      %1602 = vperm.xlu0 %1601, %v1579
      %v1603 = vpop.permute.xlu0 %1602
      %1604 = vset.pattern.permute.xlu0 1
      %1605 = vperm.xlu0 %1604, %v1580
      %v1606 = vpop.permute.xlu0 %1605
      %1607 = vset.pattern.permute.xlu0 1
      %1608 = vperm.xlu0 %1607, %v1581
      %v1609 = vpop.permute.xlu0 %1608
      %1610 = vset.pattern.permute.xlu0 1
      %1611 = vperm.xlu0 %1610, %v1582
      %v1612 = vpop.permute.xlu0 %1611
      %1613 = vset.pattern.permute.xlu0 1
      %1614 = vperm.xlu0 %1613, %v1583
      %v1615 = vpop.permute.xlu0 %1614
      %1616 = vset.pattern.permute.xlu0 1
      %1617 = vperm.xlu0 %1616, %v1584
      %v1618 = vpop.permute.xlu0 %1617
      %1619 = vset.pattern.permute.xlu0 1
      %1620 = vperm.xlu0 %1619, %v1585
      %v1621 = vpop.permute.xlu0 %1620
      %1622 = vset.pattern.permute.xlu0 1
      %1623 = vperm.xlu0 %1622, %v1586
      %v1624 = vpop.permute.xlu0 %1623
      %1625 = vset.pattern.permute.xlu0 1
      %1626 = vperm.xlu0 %1625, %v1587
      %v1627 = vpop.permute.xlu0 %1626
      %1628 = vset.pattern.permute.xlu0 1
      %1629 = vperm.xlu0 %1628, %v1588
      %v1630 = vpop.permute.xlu0 %1629
      %1631 = vset.pattern.permute.xlu0 1
      %1632 = vperm.xlu0 %1631, %v1589
      %v1633 = vpop.permute.xlu0 %1632
      %1634 = vset.pattern.permute.xlu0 1
      %1635 = vperm.xlu0 %1634, %v1590
      %v1636 = vpop.permute.xlu0 %1635
      %1637 = vset.pattern.permute.xlu0 1
      %1638 = vperm.xlu0 %1637, %v1591
      %v1639 = vpop.permute.xlu0 %1638
      %vm1640 = vcmp.eq.s32.totalorder %v486, %v1594
      %vm1641 = vcmp.eq.s32.totalorder %v487, %v1594
      %vm1642 = vcmp.eq.s32.totalorder %v486, %v1597
      %vm1643 = vcmp.eq.s32.totalorder %v487, %v1597
      %vm1644 = vcmp.eq.s32.totalorder %v486, %v1600
      %vm1645 = vcmp.eq.s32.totalorder %v487, %v1600
      %vm1646 = vcmp.eq.s32.totalorder %v486, %v1603
      %vm1647 = vcmp.eq.s32.totalorder %v487, %v1603
      %vm1648 = vcmp.eq.s32.totalorder %v486, %v1606
      %vm1649 = vcmp.eq.s32.totalorder %v487, %v1606
      %vm1650 = vcmp.eq.s32.totalorder %v486, %v1609
      %vm1651 = vcmp.eq.s32.totalorder %v487, %v1609
      %vm1652 = vcmp.eq.s32.totalorder %v486, %v1612
      %vm1653 = vcmp.eq.s32.totalorder %v487, %v1612
      %vm1654 = vcmp.eq.s32.totalorder %v486, %v1615
      %vm1655 = vcmp.eq.s32.totalorder %v487, %v1615
      %vm1656 = vcmp.eq.s32.totalorder %v486, %v1618
      %vm1657 = vcmp.eq.s32.totalorder %v487, %v1618
      %vm1658 = vcmp.eq.s32.totalorder %v486, %v1621
      %vm1659 = vcmp.eq.s32.totalorder %v487, %v1621
      %vm1660 = vcmp.eq.s32.totalorder %v486, %v1624
      %vm1661 = vcmp.eq.s32.totalorder %v487, %v1624
      %vm1662 = vcmp.eq.s32.totalorder %v486, %v1627
      %vm1663 = vcmp.eq.s32.totalorder %v487, %v1627
      %vm1664 = vcmp.eq.s32.totalorder %v486, %v1630
      %vm1665 = vcmp.eq.s32.totalorder %v487, %v1630
      %vm1666 = vcmp.eq.s32.totalorder %v486, %v1633
      %vm1667 = vcmp.eq.s32.totalorder %v487, %v1633
      %vm1668 = vcmp.eq.s32.totalorder %v486, %v1636
      %vm1669 = vcmp.eq.s32.totalorder %v487, %v1636
      %vm1670 = vcmp.eq.s32.totalorder %v486, %v1639
      %vm1671 = vcmp.eq.s32.totalorder %v487, %v1639
      %1673 = vset.pattern.permute.xlu0 1
      %1674 = vperm.xlu0 %1673, %v1560
      %v1675 = vpop.permute.xlu0 %1674
      %1678 = vset.pattern.permute.xlu0 1
      %1679 = vperm.xlu0 %1678, %v1561
      %v1680 = vpop.permute.xlu0 %1679
      %1683 = vset.pattern.permute.xlu0 1
      %1684 = vperm.xlu0 %1683, %v1562
      %v1685 = vpop.permute.xlu0 %1684
      %1688 = vset.pattern.permute.xlu0 1
      %1689 = vperm.xlu0 %1688, %v1563
      %v1690 = vpop.permute.xlu0 %1689
      %1693 = vset.pattern.permute.xlu0 1
      %1694 = vperm.xlu0 %1693, %v1564
      %v1695 = vpop.permute.xlu0 %1694
      %1698 = vset.pattern.permute.xlu0 1
      %1699 = vperm.xlu0 %1698, %v1565
      %v1700 = vpop.permute.xlu0 %1699
      %1703 = vset.pattern.permute.xlu0 1
      %1704 = vperm.xlu0 %1703, %v1566
      %v1705 = vpop.permute.xlu0 %1704
      %1708 = vset.pattern.permute.xlu0 1
      %1709 = vperm.xlu0 %1708, %v1567
      %v1710 = vpop.permute.xlu0 %1709
      %1713 = vset.pattern.permute.xlu0 1
      %1714 = vperm.xlu0 %1713, %v1568
      %v1715 = vpop.permute.xlu0 %1714
      %1718 = vset.pattern.permute.xlu0 1
      %1719 = vperm.xlu0 %1718, %v1569
      %v1720 = vpop.permute.xlu0 %1719
      %1723 = vset.pattern.permute.xlu0 1
      %1724 = vperm.xlu0 %1723, %v1570
      %v1725 = vpop.permute.xlu0 %1724
      %1728 = vset.pattern.permute.xlu0 1
      %1729 = vperm.xlu0 %1728, %v1571
      %v1730 = vpop.permute.xlu0 %1729
      %1733 = vset.pattern.permute.xlu0 1
      %1734 = vperm.xlu0 %1733, %v1572
      %v1735 = vpop.permute.xlu0 %1734
      %1738 = vset.pattern.permute.xlu0 1
      %1739 = vperm.xlu0 %1738, %v1573
      %v1740 = vpop.permute.xlu0 %1739
      %1743 = vset.pattern.permute.xlu0 1
      %1744 = vperm.xlu0 %1743, %v1574
      %v1745 = vpop.permute.xlu0 %1744
      %1748 = vset.pattern.permute.xlu0 1
      %1749 = vperm.xlu0 %1748, %v1575
      %v1750 = vpop.permute.xlu0 %1749
      %v1752 = vsel %vm1640, %v1675, 0.0
      %v1753 = vsel %vm1641, %v1675, 0.0
      %v1754 = vsel %vm1642, %v1680, 0.0
      %v1755 = vsel %vm1643, %v1680, 0.0
      %v1756 = vsel %vm1644, %v1685, 0.0
      %v1757 = vsel %vm1645, %v1685, 0.0
      %v1758 = vsel %vm1646, %v1690, 0.0
      %v1759 = vsel %vm1647, %v1690, 0.0
      %v1760 = vsel %vm1648, %v1695, 0.0
      %v1761 = vsel %vm1649, %v1695, 0.0
      %v1762 = vsel %vm1650, %v1700, 0.0
      %v1763 = vsel %vm1651, %v1700, 0.0
      %v1764 = vsel %vm1652, %v1705, 0.0
      %v1765 = vsel %vm1653, %v1705, 0.0
      %v1766 = vsel %vm1654, %v1710, 0.0
      %v1767 = vsel %vm1655, %v1710, 0.0
      %v1768 = vsel %vm1656, %v1715, 0.0
      %v1769 = vsel %vm1657, %v1715, 0.0
      %v1770 = vsel %vm1658, %v1720, 0.0
      %v1771 = vsel %vm1659, %v1720, 0.0
      %v1772 = vsel %vm1660, %v1725, 0.0
      %v1773 = vsel %vm1661, %v1725, 0.0
      %v1774 = vsel %vm1662, %v1730, 0.0
      %v1775 = vsel %vm1663, %v1730, 0.0
      %v1776 = vsel %vm1664, %v1735, 0.0
      %v1777 = vsel %vm1665, %v1735, 0.0
      %v1778 = vsel %vm1666, %v1740, 0.0
      %v1779 = vsel %vm1667, %v1740, 0.0
      %v1780 = vsel %vm1668, %v1745, 0.0
      %v1781 = vsel %vm1669, %v1745, 0.0
      %v1782 = vsel %vm1670, %v1750, 0.0
      %v1783 = vsel %vm1671, %v1750, 0.0
      %v1784 = vadd.f32 %v1528, %v1752
      %v1785 = vadd.f32 %v1529, %v1753
      %v1786 = vadd.f32 %v1530, %v1754
      %v1787 = vadd.f32 %v1531, %v1755
      %v1788 = vadd.f32 %v1532, %v1756
      %v1789 = vadd.f32 %v1533, %v1757
      %v1790 = vadd.f32 %v1534, %v1758
      %v1791 = vadd.f32 %v1535, %v1759
      %v1792 = vadd.f32 %v1536, %v1760
      %v1793 = vadd.f32 %v1537, %v1761
      %v1794 = vadd.f32 %v1538, %v1762
      %v1795 = vadd.f32 %v1539, %v1763
      %v1796 = vadd.f32 %v1540, %v1764
      %v1797 = vadd.f32 %v1541, %v1765
      %v1798 = vadd.f32 %v1542, %v1766
      %v1799 = vadd.f32 %v1543, %v1767
      %v1800 = vadd.f32 %v1544, %v1768
      %v1801 = vadd.f32 %v1545, %v1769
      %v1802 = vadd.f32 %v1546, %v1770
      %v1803 = vadd.f32 %v1547, %v1771
      %v1804 = vadd.f32 %v1548, %v1772
      %v1805 = vadd.f32 %v1549, %v1773
      %v1806 = vadd.f32 %v1550, %v1774
      %v1807 = vadd.f32 %v1551, %v1775
      %v1808 = vadd.f32 %v1552, %v1776
      %v1809 = vadd.f32 %v1553, %v1777
      %v1810 = vadd.f32 %v1554, %v1778
      %v1811 = vadd.f32 %v1555, %v1779
      %v1812 = vadd.f32 %v1556, %v1780
      %v1813 = vadd.f32 %v1557, %v1781
      %v1814 = vadd.f32 %v1558, %v1782
      %v1815 = vadd.f32 %v1559, %v1783
      %v1816 = vld [vmem:[%s460] sm:$0xff]
      %v1817 = vld [vmem:[%s460 + $0x8] sm:$0xff]
      %v1818 = vld [vmem:[%s460 + $0x10] sm:$0xff]
      %v1819 = vld [vmem:[%s460 + $0x18] sm:$0xff]
      %v1820 = vld [vmem:[%s460 + $0x20] sm:$0xff]
      %v1821 = vld [vmem:[%s460 + $0x28] sm:$0xff]
      %v1822 = vld [vmem:[%s460 + $0x30] sm:$0xff]
      %v1823 = vld [vmem:[%s460 + $0x38] sm:$0xff]
      %v1824 = vld [vmem:[%s460 + $0x40] sm:$0xff]
      %v1825 = vld [vmem:[%s460 + $0x48] sm:$0xff]
      %v1826 = vld [vmem:[%s460 + $0x50] sm:$0xff]
      %v1827 = vld [vmem:[%s460 + $0x58] sm:$0xff]
      %v1828 = vld [vmem:[%s460 + $0x60] sm:$0xff]
      %v1829 = vld [vmem:[%s460 + $0x68] sm:$0xff]
      %v1830 = vld [vmem:[%s460 + $0x70] sm:$0xff]
      %v1831 = vld [vmem:[%s460 + $0x78] sm:$0xff]
      %v1832 = vld [vmem:[%s460 + $0x80] sm:$0xff]
      %v1833 = vld [vmem:[%s460 + $0x88] sm:$0xff]
      %v1834 = vld [vmem:[%s460 + $0x90] sm:$0xff]
      %v1835 = vld [vmem:[%s460 + $0x98] sm:$0xff]
      %v1836 = vld [vmem:[%s460 + $0xa0] sm:$0xff]
      %v1837 = vld [vmem:[%s460 + $0xa8] sm:$0xff]
      %v1838 = vld [vmem:[%s460 + $0xb0] sm:$0xff]
      %v1839 = vld [vmem:[%s460 + $0xb8] sm:$0xff]
      %v1840 = vld [vmem:[%s460 + $0xc0] sm:$0xff]
      %v1841 = vld [vmem:[%s460 + $0xc8] sm:$0xff]
      %v1842 = vld [vmem:[%s460 + $0xd0] sm:$0xff]
      %v1843 = vld [vmem:[%s460 + $0xd8] sm:$0xff]
      %v1844 = vld [vmem:[%s460 + $0xe0] sm:$0xff]
      %v1845 = vld [vmem:[%s460 + $0xe8] sm:$0xff]
      %v1846 = vld [vmem:[%s460 + $0xf0] sm:$0xff]
      %v1847 = vld [vmem:[%s460 + $0xf8] sm:$0xff]
      %1848 = vmatprep.subr.mxu0 0.0
      %1849 = vmatpush1.msra.mxu0 %v1816
      %1850 = vmatprep.subr.mxu0 0.0
      %1851 = vmatpush1.msra.mxu0 %v1817
      %1852 = vmatprep.subr.mxu0 0.0
      %1853 = vmatpush1.msra.mxu0 %v1818
      %1854 = vmatprep.subr.mxu0 0.0
      %1855 = vmatpush1.msra.mxu0 %v1819
      %1856 = vmatprep.subr.mxu0 0.0
      %1857 = vmatpush1.msra.mxu0 %v1820
      %1858 = vmatprep.subr.mxu0 0.0
      %1859 = vmatpush1.msra.mxu0 %v1821
      %1860 = vmatprep.subr.mxu0 0.0
      %1861 = vmatpush1.msra.mxu0 %v1822
      %1862 = vmatprep.subr.mxu0 0.0
      %1863 = vmatpush1.msra.mxu0 %v1823
      %1864 = vmatprep.subr.mxu0 0.0
      %1865 = vmatpush1.msra.mxu0 %v1824
      %1866 = vmatprep.subr.mxu0 0.0
      %1867 = vmatpush1.msra.mxu0 %v1825
      %1868 = vmatprep.subr.mxu0 0.0
      %1869 = vmatpush1.msra.mxu0 %v1826
      %1870 = vmatprep.subr.mxu0 0.0
      %1871 = vmatpush1.msra.mxu0 %v1827
      %1872 = vmatprep.subr.mxu0 0.0
      %1873 = vmatpush1.msra.mxu0 %v1828
      %1874 = vmatprep.subr.mxu0 0.0
      %1875 = vmatpush1.msra.mxu0 %v1829
      %1876 = vmatprep.subr.mxu0 0.0
      %1877 = vmatpush1.msra.mxu0 %v1830
      %1878 = vmatprep.subr.mxu0 0.0
      %1879 = vmatpush1.msra.mxu0 %v1831
      %1880 = vmatprep.subr.mxu0 0.0
      %1881 = vmatpush1.msra.mxu0 %v1832
      %1882 = vmatprep.subr.mxu0 0.0
      %1883 = vmatpush1.msra.mxu0 %v1833
      %1884 = vmatprep.subr.mxu0 0.0
      %1885 = vmatpush1.msra.mxu0 %v1834
      %1886 = vmatprep.subr.mxu0 0.0
      %1887 = vmatpush1.msra.mxu0 %v1835
      %1888 = vmatprep.subr.mxu0 0.0
      %1889 = vmatpush1.msra.mxu0 %v1836
      %1890 = vmatprep.subr.mxu0 0.0
      %1891 = vmatpush1.msra.mxu0 %v1837
      %1892 = vmatprep.subr.mxu0 0.0
      %1893 = vmatpush1.msra.mxu0 %v1838
      %1894 = vmatprep.subr.mxu0 0.0
      %1895 = vmatpush1.msra.mxu0 %v1839
      %1896 = vmatprep.subr.mxu0 0.0
      %1897 = vmatpush1.msra.mxu0 %v1840
      %1898 = vmatprep.subr.mxu0 0.0
      %1899 = vmatpush1.msra.mxu0 %v1841
      %1900 = vmatprep.subr.mxu0 0.0
      %1901 = vmatpush1.msra.mxu0 %v1842
      %1902 = vmatprep.subr.mxu0 0.0
      %1903 = vmatpush1.msra.mxu0 %v1843
      %1904 = vmatprep.subr.mxu0 0.0
      %1905 = vmatpush1.msra.mxu0 %v1844
      %1906 = vmatprep.subr.mxu0 0.0
      %1907 = vmatpush1.msra.mxu0 %v1845
      %1908 = vmatprep.subr.mxu0 0.0
      %1909 = vmatpush1.msra.mxu0 %v1846
      %1910 = vmatprep.subr.mxu0 0.0
      %1911 = vmatpush1.msra.mxu0 %v1847
      %1912 = vmatprep.mubr.f32.mxu0 %v1785
      %1913 = vmatmul.mubr.f32.gmra.mrb[0].mxu0 %v1784
      %v1914 = vpop.f32.mrb[0].mxu0
      %v1915 = vadd.f32 0.0, %v1914
      %v1916 = vpop.f32.mrb[0].mxu0
      %1917 = vmatprep.mubr.f32.mxu0 %v1787
      %1918 = vmatmul.mubr.f32.gmra.mrb[0].mxu0 %v1786
      %v1919 = vpop.f32.mrb[0].mxu0
      %v1920 = vadd.f32 0.0, %v1919
      %v1921 = vpop.f32.mrb[0].mxu0
      %1922 = vmatprep.mubr.f32.mxu0 %v1789
      %1923 = vmatmul.mubr.f32.gmra.mrb[0].mxu0 %v1788
      %v1924 = vpop.f32.mrb[0].mxu0
      %v1925 = vadd.f32 0.0, %v1924
      %v1926 = vpop.f32.mrb[0].mxu0
      %1927 = vmatprep.mubr.f32.mxu0 %v1791
      %1928 = vmatmul.mubr.f32.gmra.mrb[0].mxu0 %v1790
      %v1929 = vpop.f32.mrb[0].mxu0
      %v1930 = vadd.f32 0.0, %v1929
      %v1931 = vpop.f32.mrb[0].mxu0
      %1932 = vmatprep.mubr.f32.mxu0 %v1793
      %1933 = vmatmul.mubr.f32.gmra.mrb[0].mxu0 %v1792
      %v1934 = vpop.f32.mrb[0].mxu0
      %v1935 = vadd.f32 0.0, %v1934
      %v1936 = vpop.f32.mrb[0].mxu0
      %1937 = vmatprep.mubr.f32.mxu0 %v1795
      %1938 = vmatmul.mubr.f32.gmra.mrb[0].mxu0 %v1794
      %v1939 = vpop.f32.mrb[0].mxu0
      %v1940 = vadd.f32 0.0, %v1939
      %v1941 = vpop.f32.mrb[0].mxu0
      %1942 = vmatprep.mubr.f32.mxu0 %v1797
      %1943 = vmatmul.mubr.f32.gmra.mrb[0].mxu0 %v1796
      %v1944 = vpop.f32.mrb[0].mxu0
      %v1945 = vadd.f32 0.0, %v1944
      %v1946 = vpop.f32.mrb[0].mxu0
      %1947 = vmatprep.mubr.f32.mxu0 %v1799
      %1948 = vmatmul.mubr.f32.gmra.mrb[0].mxu0 %v1798
      %v1949 = vpop.f32.mrb[0].mxu0
      %v1950 = vadd.f32 0.0, %v1949
      %v1951 = vpop.f32.mrb[0].mxu0
      %1952 = vmatprep.mubr.f32.mxu0 %v1801
      %1953 = vmatmul.mubr.f32.gmra.mrb[0].mxu0 %v1800
      %v1954 = vpop.f32.mrb[0].mxu0
      %v1955 = vadd.f32 0.0, %v1954
      %v1956 = vpop.f32.mrb[0].mxu0
      %1957 = vmatprep.mubr.f32.mxu0 %v1803
      %1958 = vmatmul.mubr.f32.gmra.mrb[0].mxu0 %v1802
      %v1959 = vpop.f32.mrb[0].mxu0
      %v1960 = vadd.f32 0.0, %v1959
      %v1961 = vpop.f32.mrb[0].mxu0
      %1962 = vmatprep.mubr.f32.mxu0 %v1805
      %1963 = vmatmul.mubr.f32.gmra.mrb[0].mxu0 %v1804
      %v1964 = vpop.f32.mrb[0].mxu0
      %v1965 = vadd.f32 0.0, %v1964
      %v1966 = vpop.f32.mrb[0].mxu0
      %1967 = vmatprep.mubr.f32.mxu0 %v1807
      %1968 = vmatmul.mubr.f32.gmra.mrb[0].mxu0 %v1806
      %v1969 = vpop.f32.mrb[0].mxu0
      %v1970 = vadd.f32 0.0, %v1969
      %v1971 = vpop.f32.mrb[0].mxu0
      %1972 = vmatprep.mubr.f32.mxu0 %v1809
      %1973 = vmatmul.mubr.f32.gmra.mrb[0].mxu0 %v1808
      %v1974 = vpop.f32.mrb[0].mxu0
      %v1975 = vadd.f32 0.0, %v1974
      %v1976 = vpop.f32.mrb[0].mxu0
      %1977 = vmatprep.mubr.f32.mxu0 %v1811
      %1978 = vmatmul.mubr.f32.gmra.mrb[0].mxu0 %v1810
      %v1979 = vpop.f32.mrb[0].mxu0
      %v1980 = vadd.f32 0.0, %v1979
      %v1981 = vpop.f32.mrb[0].mxu0
      %1982 = vmatprep.mubr.f32.mxu0 %v1813
      %1983 = vmatmul.mubr.f32.gmra.mrb[0].mxu0 %v1812
      %v1984 = vpop.f32.mrb[0].mxu0
      %v1985 = vadd.f32 0.0, %v1984
      %v1986 = vpop.f32.mrb[0].mxu0
      %1987 = vmatprep.mubr.f32.mxu0 %v1815
      %1988 = vmatmul.mubr.f32.gmra.mrb[0].mxu0 %v1814
      %v1989 = vpop.f32.mrb[0].mxu0
      %v1990 = vadd.f32 0.0, %v1989
      %v1991 = vpop.f32.mrb[0].mxu0
      %1992 = vdwg.mxu0
      %v1993 = vld [vmem:[%s2] sm:$0xff]
      %1994 = vset.pattern.permute.xlu0 3
      %1995 = vperm.xlu0 %1994, %v728
      %v1996 = vpop.permute.xlu0 %1995
      %1997 = vset.pattern.permute.xlu0 3
      %1998 = vperm.xlu0 %1997, %v729
      %v1999 = vpop.permute.xlu0 %1998
      %2000 = vset.pattern.permute.xlu0 3
      %2001 = vperm.xlu0 %2000, %v730
      %v2002 = vpop.permute.xlu0 %2001
      %2003 = vset.pattern.permute.xlu0 3
      %2004 = vperm.xlu0 %2003, %v731
      %v2005 = vpop.permute.xlu0 %2004
      %2006 = vset.pattern.permute.xlu0 3
      %2007 = vperm.xlu0 %2006, %v732
      %v2008 = vpop.permute.xlu0 %2007
      %2009 = vset.pattern.permute.xlu0 3
      %2010 = vperm.xlu0 %2009, %v733
      %v2011 = vpop.permute.xlu0 %2010
      %2012 = vset.pattern.permute.xlu0 3
      %2013 = vperm.xlu0 %2012, %v734
      %v2014 = vpop.permute.xlu0 %2013
      %2015 = vset.pattern.permute.xlu0 3
      %2016 = vperm.xlu0 %2015, %v735
      %v2017 = vpop.permute.xlu0 %2016
      %2018 = vset.pattern.permute.xlu0 3
      %2019 = vperm.xlu0 %2018, %v736
      %v2020 = vpop.permute.xlu0 %2019
      %2021 = vset.pattern.permute.xlu0 3
      %2022 = vperm.xlu0 %2021, %v737
      %v2023 = vpop.permute.xlu0 %2022
      %2024 = vset.pattern.permute.xlu0 3
      %2025 = vperm.xlu0 %2024, %v738
      %v2026 = vpop.permute.xlu0 %2025
      %2027 = vset.pattern.permute.xlu0 3
      %2028 = vperm.xlu0 %2027, %v739
      %v2029 = vpop.permute.xlu0 %2028
      %2030 = vset.pattern.permute.xlu0 3
      %2031 = vperm.xlu0 %2030, %v740
      %v2032 = vpop.permute.xlu0 %2031
      %2033 = vset.pattern.permute.xlu0 3
      %2034 = vperm.xlu0 %2033, %v741
      %v2035 = vpop.permute.xlu0 %2034
      %2036 = vset.pattern.permute.xlu0 3
      %2037 = vperm.xlu0 %2036, %v742
      %v2038 = vpop.permute.xlu0 %2037
      %2039 = vset.pattern.permute.xlu0 3
      %2040 = vperm.xlu0 %2039, %v743
      %v2041 = vpop.permute.xlu0 %2040
      %vm2042 = vcmp.eq.s32.totalorder %v486, %v1996
      %vm2043 = vcmp.eq.s32.totalorder %v487, %v1996
      %vm2044 = vcmp.eq.s32.totalorder %v486, %v1999
      %vm2045 = vcmp.eq.s32.totalorder %v487, %v1999
      %vm2046 = vcmp.eq.s32.totalorder %v486, %v2002
      %vm2047 = vcmp.eq.s32.totalorder %v487, %v2002
      %vm2048 = vcmp.eq.s32.totalorder %v486, %v2005
      %vm2049 = vcmp.eq.s32.totalorder %v487, %v2005
      %vm2050 = vcmp.eq.s32.totalorder %v486, %v2008
      %vm2051 = vcmp.eq.s32.totalorder %v487, %v2008
      %vm2052 = vcmp.eq.s32.totalorder %v486, %v2011
      %vm2053 = vcmp.eq.s32.totalorder %v487, %v2011
      %vm2054 = vcmp.eq.s32.totalorder %v486, %v2014
      %vm2055 = vcmp.eq.s32.totalorder %v487, %v2014
      %vm2056 = vcmp.eq.s32.totalorder %v486, %v2017
      %vm2057 = vcmp.eq.s32.totalorder %v487, %v2017
      %vm2058 = vcmp.eq.s32.totalorder %v486, %v2020
      %vm2059 = vcmp.eq.s32.totalorder %v487, %v2020
      %vm2060 = vcmp.eq.s32.totalorder %v486, %v2023
      %vm2061 = vcmp.eq.s32.totalorder %v487, %v2023
      %vm2062 = vcmp.eq.s32.totalorder %v486, %v2026
      %vm2063 = vcmp.eq.s32.totalorder %v487, %v2026
      %vm2064 = vcmp.eq.s32.totalorder %v486, %v2029
      %vm2065 = vcmp.eq.s32.totalorder %v487, %v2029
      %vm2066 = vcmp.eq.s32.totalorder %v486, %v2032
      %vm2067 = vcmp.eq.s32.totalorder %v487, %v2032
      %vm2068 = vcmp.eq.s32.totalorder %v486, %v2035
      %vm2069 = vcmp.eq.s32.totalorder %v487, %v2035
      %vm2070 = vcmp.eq.s32.totalorder %v486, %v2038
      %vm2071 = vcmp.eq.s32.totalorder %v487, %v2038
      %vm2072 = vcmp.eq.s32.totalorder %v486, %v2041
      %vm2073 = vcmp.eq.s32.totalorder %v487, %v2041
      %2074 = vset.pattern.permute.xlu0 3
      %2075 = vperm.xlu0 %2074, %v664
      %v2076 = vpop.permute.xlu0 %2075
      %2078 = vset.pattern.permute.xlu0 3
      %2079 = vperm.xlu0 %2078, %v665
      %v2080 = vpop.permute.xlu0 %2079
      %2082 = vset.pattern.permute.xlu0 3
      %2083 = vperm.xlu0 %2082, %v666
      %v2084 = vpop.permute.xlu0 %2083
      %2086 = vset.pattern.permute.xlu0 3
      %2087 = vperm.xlu0 %2086, %v667
      %v2088 = vpop.permute.xlu0 %2087
      %2090 = vset.pattern.permute.xlu0 3
      %2091 = vperm.xlu0 %2090, %v668
      %v2092 = vpop.permute.xlu0 %2091
      %2094 = vset.pattern.permute.xlu0 3
      %2095 = vperm.xlu0 %2094, %v669
      %v2096 = vpop.permute.xlu0 %2095
      %2098 = vset.pattern.permute.xlu0 3
      %2099 = vperm.xlu0 %2098, %v670
      %v2100 = vpop.permute.xlu0 %2099
      %2102 = vset.pattern.permute.xlu0 3
      %2103 = vperm.xlu0 %2102, %v671
      %v2104 = vpop.permute.xlu0 %2103
      %2106 = vset.pattern.permute.xlu0 3
      %2107 = vperm.xlu0 %2106, %v672
      %v2108 = vpop.permute.xlu0 %2107
      %2110 = vset.pattern.permute.xlu0 3
      %2111 = vperm.xlu0 %2110, %v673
      %v2112 = vpop.permute.xlu0 %2111
      %2114 = vset.pattern.permute.xlu0 3
      %2115 = vperm.xlu0 %2114, %v674
      %v2116 = vpop.permute.xlu0 %2115
      %2118 = vset.pattern.permute.xlu0 3
      %2119 = vperm.xlu0 %2118, %v675
      %v2120 = vpop.permute.xlu0 %2119
      %2122 = vset.pattern.permute.xlu0 3
      %2123 = vperm.xlu0 %2122, %v676
      %v2124 = vpop.permute.xlu0 %2123
      %2126 = vset.pattern.permute.xlu0 3
      %2127 = vperm.xlu0 %2126, %v677
      %v2128 = vpop.permute.xlu0 %2127
      %2130 = vset.pattern.permute.xlu0 3
      %2131 = vperm.xlu0 %2130, %v678
      %v2132 = vpop.permute.xlu0 %2131
      %2134 = vset.pattern.permute.xlu0 3
      %2135 = vperm.xlu0 %2134, %v679
      %v2136 = vpop.permute.xlu0 %2135
      %v2138 = vsel %vm2042, %v2076, 0.0
      %v2139 = vsel %vm2043, %v2076, 0.0
      %v2140 = vsel %vm2044, %v2080, 0.0
      %v2141 = vsel %vm2045, %v2080, 0.0
      %v2142 = vsel %vm2046, %v2084, 0.0
      %v2143 = vsel %vm2047, %v2084, 0.0
      %v2144 = vsel %vm2048, %v2088, 0.0
      %v2145 = vsel %vm2049, %v2088, 0.0
      %v2146 = vsel %vm2050, %v2092, 0.0
      %v2147 = vsel %vm2051, %v2092, 0.0
      %v2148 = vsel %vm2052, %v2096, 0.0
      %v2149 = vsel %vm2053, %v2096, 0.0
      %v2150 = vsel %vm2054, %v2100, 0.0
      %v2151 = vsel %vm2055, %v2100, 0.0
      %v2152 = vsel %vm2056, %v2104, 0.0
      %v2153 = vsel %vm2057, %v2104, 0.0
      %v2154 = vsel %vm2058, %v2108, 0.0
      %v2155 = vsel %vm2059, %v2108, 0.0
      %v2156 = vsel %vm2060, %v2112, 0.0
      %v2157 = vsel %vm2061, %v2112, 0.0
      %v2158 = vsel %vm2062, %v2116, 0.0
      %v2159 = vsel %vm2063, %v2116, 0.0
      %v2160 = vsel %vm2064, %v2120, 0.0
      %v2161 = vsel %vm2065, %v2120, 0.0
      %v2162 = vsel %vm2066, %v2124, 0.0
      %v2163 = vsel %vm2067, %v2124, 0.0
      %v2164 = vsel %vm2068, %v2128, 0.0
      %v2165 = vsel %vm2069, %v2128, 0.0
      %v2166 = vsel %vm2070, %v2132, 0.0
      %v2167 = vsel %vm2071, %v2132, 0.0
      %v2168 = vsel %vm2072, %v2136, 0.0
      %v2169 = vsel %vm2073, %v2136, 0.0
      %2170 = vset.pattern.permute.xlu0 3
      %2171 = vperm.xlu0 %2170, %v1048
      %v2172 = vpop.permute.xlu0 %2171
      %2173 = vset.pattern.permute.xlu0 3
      %2174 = vperm.xlu0 %2173, %v1049
      %v2175 = vpop.permute.xlu0 %2174
      %2176 = vset.pattern.permute.xlu0 3
      %2177 = vperm.xlu0 %2176, %v1050
      %v2178 = vpop.permute.xlu0 %2177
      %2179 = vset.pattern.permute.xlu0 3
      %2180 = vperm.xlu0 %2179, %v1051
      %v2181 = vpop.permute.xlu0 %2180
      %2182 = vset.pattern.permute.xlu0 3
      %2183 = vperm.xlu0 %2182, %v1052
      %v2184 = vpop.permute.xlu0 %2183
      %2185 = vset.pattern.permute.xlu0 3
      %2186 = vperm.xlu0 %2185, %v1053
      %v2187 = vpop.permute.xlu0 %2186
      %2188 = vset.pattern.permute.xlu0 3
      %2189 = vperm.xlu0 %2188, %v1054
      %v2190 = vpop.permute.xlu0 %2189
      %2191 = vset.pattern.permute.xlu0 3
      %2192 = vperm.xlu0 %2191, %v1055
      %v2193 = vpop.permute.xlu0 %2192
      %2194 = vset.pattern.permute.xlu0 3
      %2195 = vperm.xlu0 %2194, %v1056
      %v2196 = vpop.permute.xlu0 %2195
      %2197 = vset.pattern.permute.xlu0 3
      %2198 = vperm.xlu0 %2197, %v1057
      %v2199 = vpop.permute.xlu0 %2198
      %2200 = vset.pattern.permute.xlu0 3
      %2201 = vperm.xlu0 %2200, %v1058
      %v2202 = vpop.permute.xlu0 %2201
      %2203 = vset.pattern.permute.xlu0 3
      %2204 = vperm.xlu0 %2203, %v1059
      %v2205 = vpop.permute.xlu0 %2204
      %2206 = vset.pattern.permute.xlu0 3
      %2207 = vperm.xlu0 %2206, %v1060
      %v2208 = vpop.permute.xlu0 %2207
      %2209 = vset.pattern.permute.xlu0 3
      %2210 = vperm.xlu0 %2209, %v1061
      %v2211 = vpop.permute.xlu0 %2210
      %2212 = vset.pattern.permute.xlu0 3
      %2213 = vperm.xlu0 %2212, %v1062
      %v2214 = vpop.permute.xlu0 %2213
      %2215 = vset.pattern.permute.xlu0 3
      %2216 = vperm.xlu0 %2215, %v1063
      %v2217 = vpop.permute.xlu0 %2216
      %vm2218 = vcmp.eq.s32.totalorder %v486, %v2172
      %vm2219 = vcmp.eq.s32.totalorder %v487, %v2172
      %vm2220 = vcmp.eq.s32.totalorder %v486, %v2175
      %vm2221 = vcmp.eq.s32.totalorder %v487, %v2175
      %vm2222 = vcmp.eq.s32.totalorder %v486, %v2178
      %vm2223 = vcmp.eq.s32.totalorder %v487, %v2178
      %vm2224 = vcmp.eq.s32.totalorder %v486, %v2181
      %vm2225 = vcmp.eq.s32.totalorder %v487, %v2181
      %vm2226 = vcmp.eq.s32.totalorder %v486, %v2184
      %vm2227 = vcmp.eq.s32.totalorder %v487, %v2184
      %vm2228 = vcmp.eq.s32.totalorder %v486, %v2187
      %vm2229 = vcmp.eq.s32.totalorder %v487, %v2187
      %vm2230 = vcmp.eq.s32.totalorder %v486, %v2190
      %vm2231 = vcmp.eq.s32.totalorder %v487, %v2190
      %vm2232 = vcmp.eq.s32.totalorder %v486, %v2193
      %vm2233 = vcmp.eq.s32.totalorder %v487, %v2193
      %vm2234 = vcmp.eq.s32.totalorder %v486, %v2196
      %vm2235 = vcmp.eq.s32.totalorder %v487, %v2196
      %vm2236 = vcmp.eq.s32.totalorder %v486, %v2199
      %vm2237 = vcmp.eq.s32.totalorder %v487, %v2199
      %vm2238 = vcmp.eq.s32.totalorder %v486, %v2202
      %vm2239 = vcmp.eq.s32.totalorder %v487, %v2202
      %vm2240 = vcmp.eq.s32.totalorder %v486, %v2205
      %vm2241 = vcmp.eq.s32.totalorder %v487, %v2205
      %vm2242 = vcmp.eq.s32.totalorder %v486, %v2208
      %vm2243 = vcmp.eq.s32.totalorder %v487, %v2208
      %vm2244 = vcmp.eq.s32.totalorder %v486, %v2211
      %vm2245 = vcmp.eq.s32.totalorder %v487, %v2211
      %vm2246 = vcmp.eq.s32.totalorder %v486, %v2214
      %vm2247 = vcmp.eq.s32.totalorder %v487, %v2214
      %vm2248 = vcmp.eq.s32.totalorder %v486, %v2217
      %vm2249 = vcmp.eq.s32.totalorder %v487, %v2217
      %2250 = vset.pattern.permute.xlu0 3
      %2251 = vperm.xlu0 %2250, %v1000
      %v2252 = vpop.permute.xlu0 %2251
      %2254 = vset.pattern.permute.xlu0 3
      %2255 = vperm.xlu0 %2254, %v1001
      %v2256 = vpop.permute.xlu0 %2255
      %2258 = vset.pattern.permute.xlu0 3
      %2259 = vperm.xlu0 %2258, %v1002
      %v2260 = vpop.permute.xlu0 %2259
      %2262 = vset.pattern.permute.xlu0 3
      %2263 = vperm.xlu0 %2262, %v1003
      %v2264 = vpop.permute.xlu0 %2263
      %2266 = vset.pattern.permute.xlu0 3
      %2267 = vperm.xlu0 %2266, %v1004
      %v2268 = vpop.permute.xlu0 %2267
      %2270 = vset.pattern.permute.xlu0 3
      %2271 = vperm.xlu0 %2270, %v1005
      %v2272 = vpop.permute.xlu0 %2271
      %2274 = vset.pattern.permute.xlu0 3
      %2275 = vperm.xlu0 %2274, %v1006
      %v2276 = vpop.permute.xlu0 %2275
      %2278 = vset.pattern.permute.xlu0 3
      %2279 = vperm.xlu0 %2278, %v1007
      %v2280 = vpop.permute.xlu0 %2279
      %2282 = vset.pattern.permute.xlu0 3
      %2283 = vperm.xlu0 %2282, %v1008
      %v2284 = vpop.permute.xlu0 %2283
      %2286 = vset.pattern.permute.xlu0 3
      %2287 = vperm.xlu0 %2286, %v1009
      %v2288 = vpop.permute.xlu0 %2287
      %2290 = vset.pattern.permute.xlu0 3
      %2291 = vperm.xlu0 %2290, %v1010
      %v2292 = vpop.permute.xlu0 %2291
      %2294 = vset.pattern.permute.xlu0 3
      %2295 = vperm.xlu0 %2294, %v1011
      %v2296 = vpop.permute.xlu0 %2295
      %2298 = vset.pattern.permute.xlu0 3
      %2299 = vperm.xlu0 %2298, %v1012
      %v2300 = vpop.permute.xlu0 %2299
      %2302 = vset.pattern.permute.xlu0 3
      %2303 = vperm.xlu0 %2302, %v1013
      %v2304 = vpop.permute.xlu0 %2303
      %2306 = vset.pattern.permute.xlu0 3
      %2307 = vperm.xlu0 %2306, %v1014
      %v2308 = vpop.permute.xlu0 %2307
      %2310 = vset.pattern.permute.xlu0 3
      %2311 = vperm.xlu0 %2310, %v1015
      %v2312 = vpop.permute.xlu0 %2311
      %v2314 = vsel %vm2218, %v2252, 0.0
      %v2315 = vsel %vm2219, %v2252, 0.0
      %v2316 = vsel %vm2220, %v2256, 0.0
      %v2317 = vsel %vm2221, %v2256, 0.0
      %v2318 = vsel %vm2222, %v2260, 0.0
      %v2319 = vsel %vm2223, %v2260, 0.0
      %v2320 = vsel %vm2224, %v2264, 0.0
      %v2321 = vsel %vm2225, %v2264, 0.0
      %v2322 = vsel %vm2226, %v2268, 0.0
      %v2323 = vsel %vm2227, %v2268, 0.0
      %v2324 = vsel %vm2228, %v2272, 0.0
      %v2325 = vsel %vm2229, %v2272, 0.0
      %v2326 = vsel %vm2230, %v2276, 0.0
      %v2327 = vsel %vm2231, %v2276, 0.0
      %v2328 = vsel %vm2232, %v2280, 0.0
      %v2329 = vsel %vm2233, %v2280, 0.0
      %v2330 = vsel %vm2234, %v2284, 0.0
      %v2331 = vsel %vm2235, %v2284, 0.0
      %v2332 = vsel %vm2236, %v2288, 0.0
      %v2333 = vsel %vm2237, %v2288, 0.0
      %v2334 = vsel %vm2238, %v2292, 0.0
      %v2335 = vsel %vm2239, %v2292, 0.0
      %v2336 = vsel %vm2240, %v2296, 0.0
      %v2337 = vsel %vm2241, %v2296, 0.0
      %v2338 = vsel %vm2242, %v2300, 0.0
      %v2339 = vsel %vm2243, %v2300, 0.0
      %v2340 = vsel %vm2244, %v2304, 0.0
      %v2341 = vsel %vm2245, %v2304, 0.0
      %v2342 = vsel %vm2246, %v2308, 0.0
      %v2343 = vsel %vm2247, %v2308, 0.0
      %v2344 = vsel %vm2248, %v2312, 0.0
      %v2345 = vsel %vm2249, %v2312, 0.0
      %v2346 = vadd.f32 %v2138, %v2314
      %v2347 = vadd.f32 %v2139, %v2315
      %v2348 = vadd.f32 %v2140, %v2316
      %v2349 = vadd.f32 %v2141, %v2317
      %v2350 = vadd.f32 %v2142, %v2318
      %v2351 = vadd.f32 %v2143, %v2319
      %v2352 = vadd.f32 %v2144, %v2320
      %v2353 = vadd.f32 %v2145, %v2321
      %v2354 = vadd.f32 %v2146, %v2322
      %v2355 = vadd.f32 %v2147, %v2323
      %v2356 = vadd.f32 %v2148, %v2324
      %v2357 = vadd.f32 %v2149, %v2325
      %v2358 = vadd.f32 %v2150, %v2326
      %v2359 = vadd.f32 %v2151, %v2327
      %v2360 = vadd.f32 %v2152, %v2328
      %v2361 = vadd.f32 %v2153, %v2329
      %v2362 = vadd.f32 %v2154, %v2330
      %v2363 = vadd.f32 %v2155, %v2331
      %v2364 = vadd.f32 %v2156, %v2332
      %v2365 = vadd.f32 %v2157, %v2333
      %v2366 = vadd.f32 %v2158, %v2334
      %v2367 = vadd.f32 %v2159, %v2335
      %v2368 = vadd.f32 %v2160, %v2336
      %v2369 = vadd.f32 %v2161, %v2337
      %v2370 = vadd.f32 %v2162, %v2338
      %v2371 = vadd.f32 %v2163, %v2339
      %v2372 = vadd.f32 %v2164, %v2340
      %v2373 = vadd.f32 %v2165, %v2341
      %v2374 = vadd.f32 %v2166, %v2342
      %v2375 = vadd.f32 %v2167, %v2343
      %v2376 = vadd.f32 %v2168, %v2344
      %v2377 = vadd.f32 %v2169, %v2345
      %2378 = vset.pattern.permute.xlu0 3
      %2379 = vperm.xlu0 %2378, %v1320
      %v2380 = vpop.permute.xlu0 %2379
      %2381 = vset.pattern.permute.xlu0 3
      %2382 = vperm.xlu0 %2381, %v1321
      %v2383 = vpop.permute.xlu0 %2382
      %2384 = vset.pattern.permute.xlu0 3
      %2385 = vperm.xlu0 %2384, %v1322
      %v2386 = vpop.permute.xlu0 %2385
      %2387 = vset.pattern.permute.xlu0 3
      %2388 = vperm.xlu0 %2387, %v1323
      %v2389 = vpop.permute.xlu0 %2388
      %2390 = vset.pattern.permute.xlu0 3
      %2391 = vperm.xlu0 %2390, %v1324
      %v2392 = vpop.permute.xlu0 %2391
      %2393 = vset.pattern.permute.xlu0 3
      %2394 = vperm.xlu0 %2393, %v1325
      %v2395 = vpop.permute.xlu0 %2394
      %2396 = vset.pattern.permute.xlu0 3
      %2397 = vperm.xlu0 %2396, %v1326
      %v2398 = vpop.permute.xlu0 %2397
      %2399 = vset.pattern.permute.xlu0 3
      %2400 = vperm.xlu0 %2399, %v1327
      %v2401 = vpop.permute.xlu0 %2400
      %2402 = vset.pattern.permute.xlu0 3
      %2403 = vperm.xlu0 %2402, %v1328
      %v2404 = vpop.permute.xlu0 %2403
      %2405 = vset.pattern.permute.xlu0 3
      %2406 = vperm.xlu0 %2405, %v1329
      %v2407 = vpop.permute.xlu0 %2406
      %2408 = vset.pattern.permute.xlu0 3
      %2409 = vperm.xlu0 %2408, %v1330
      %v2410 = vpop.permute.xlu0 %2409
      %2411 = vset.pattern.permute.xlu0 3
      %2412 = vperm.xlu0 %2411, %v1331
      %v2413 = vpop.permute.xlu0 %2412
      %2414 = vset.pattern.permute.xlu0 3
      %2415 = vperm.xlu0 %2414, %v1332
      %v2416 = vpop.permute.xlu0 %2415
      %2417 = vset.pattern.permute.xlu0 3
      %2418 = vperm.xlu0 %2417, %v1333
      %v2419 = vpop.permute.xlu0 %2418
      %2420 = vset.pattern.permute.xlu0 3
      %2421 = vperm.xlu0 %2420, %v1334
      %v2422 = vpop.permute.xlu0 %2421
      %2423 = vset.pattern.permute.xlu0 3
      %2424 = vperm.xlu0 %2423, %v1335
      %v2425 = vpop.permute.xlu0 %2424
      %vm2426 = vcmp.eq.s32.totalorder %v486, %v2380
      %vm2427 = vcmp.eq.s32.totalorder %v487, %v2380
      %vm2428 = vcmp.eq.s32.totalorder %v486, %v2383
      %vm2429 = vcmp.eq.s32.totalorder %v487, %v2383
      %vm2430 = vcmp.eq.s32.totalorder %v486, %v2386
      %vm2431 = vcmp.eq.s32.totalorder %v487, %v2386
      %vm2432 = vcmp.eq.s32.totalorder %v486, %v2389
      %vm2433 = vcmp.eq.s32.totalorder %v487, %v2389
      %vm2434 = vcmp.eq.s32.totalorder %v486, %v2392
      %vm2435 = vcmp.eq.s32.totalorder %v487, %v2392
      %vm2436 = vcmp.eq.s32.totalorder %v486, %v2395
      %vm2437 = vcmp.eq.s32.totalorder %v487, %v2395
      %vm2438 = vcmp.eq.s32.totalorder %v486, %v2398
      %vm2439 = vcmp.eq.s32.totalorder %v487, %v2398
      %vm2440 = vcmp.eq.s32.totalorder %v486, %v2401
      %vm2441 = vcmp.eq.s32.totalorder %v487, %v2401
      %vm2442 = vcmp.eq.s32.totalorder %v486, %v2404
      %vm2443 = vcmp.eq.s32.totalorder %v487, %v2404
      %vm2444 = vcmp.eq.s32.totalorder %v486, %v2407
      %vm2445 = vcmp.eq.s32.totalorder %v487, %v2407
      %vm2446 = vcmp.eq.s32.totalorder %v486, %v2410
      %vm2447 = vcmp.eq.s32.totalorder %v487, %v2410
      %vm2448 = vcmp.eq.s32.totalorder %v486, %v2413
      %vm2449 = vcmp.eq.s32.totalorder %v487, %v2413
      %vm2450 = vcmp.eq.s32.totalorder %v486, %v2416
      %vm2451 = vcmp.eq.s32.totalorder %v487, %v2416
      %vm2452 = vcmp.eq.s32.totalorder %v486, %v2419
      %vm2453 = vcmp.eq.s32.totalorder %v487, %v2419
      %vm2454 = vcmp.eq.s32.totalorder %v486, %v2422
      %vm2455 = vcmp.eq.s32.totalorder %v487, %v2422
      %vm2456 = vcmp.eq.s32.totalorder %v486, %v2425
      %vm2457 = vcmp.eq.s32.totalorder %v487, %v2425
      %2458 = vset.pattern.permute.xlu0 3
      %2459 = vperm.xlu0 %2458, %v1288
      %v2460 = vpop.permute.xlu0 %2459
      %2462 = vset.pattern.permute.xlu0 3
      %2463 = vperm.xlu0 %2462, %v1289
      %v2464 = vpop.permute.xlu0 %2463
      %2466 = vset.pattern.permute.xlu0 3
      %2467 = vperm.xlu0 %2466, %v1290
      %v2468 = vpop.permute.xlu0 %2467
      %2470 = vset.pattern.permute.xlu0 3
      %2471 = vperm.xlu0 %2470, %v1291
      %v2472 = vpop.permute.xlu0 %2471
      %2474 = vset.pattern.permute.xlu0 3
      %2475 = vperm.xlu0 %2474, %v1292
      %v2476 = vpop.permute.xlu0 %2475
      %2478 = vset.pattern.permute.xlu0 3
      %2479 = vperm.xlu0 %2478, %v1293
      %v2480 = vpop.permute.xlu0 %2479
      %2482 = vset.pattern.permute.xlu0 3
      %2483 = vperm.xlu0 %2482, %v1294
      %v2484 = vpop.permute.xlu0 %2483
      %2486 = vset.pattern.permute.xlu0 3
      %2487 = vperm.xlu0 %2486, %v1295
      %v2488 = vpop.permute.xlu0 %2487
      %2490 = vset.pattern.permute.xlu0 3
      %2491 = vperm.xlu0 %2490, %v1296
      %v2492 = vpop.permute.xlu0 %2491
      %2494 = vset.pattern.permute.xlu0 3
      %2495 = vperm.xlu0 %2494, %v1297
      %v2496 = vpop.permute.xlu0 %2495
      %2498 = vset.pattern.permute.xlu0 3
      %2499 = vperm.xlu0 %2498, %v1298
      %v2500 = vpop.permute.xlu0 %2499
      %2502 = vset.pattern.permute.xlu0 3
      %2503 = vperm.xlu0 %2502, %v1299
      %v2504 = vpop.permute.xlu0 %2503
      %2506 = vset.pattern.permute.xlu0 3
      %2507 = vperm.xlu0 %2506, %v1300
      %v2508 = vpop.permute.xlu0 %2507
      %2510 = vset.pattern.permute.xlu0 3
      %2511 = vperm.xlu0 %2510, %v1301
      %v2512 = vpop.permute.xlu0 %2511
      %2514 = vset.pattern.permute.xlu0 3
      %2515 = vperm.xlu0 %2514, %v1302
      %v2516 = vpop.permute.xlu0 %2515
      %2518 = vset.pattern.permute.xlu0 3
      %2519 = vperm.xlu0 %2518, %v1303
      %v2520 = vpop.permute.xlu0 %2519
      %v2522 = vsel %vm2426, %v2460, 0.0
      %v2523 = vsel %vm2427, %v2460, 0.0
      %v2524 = vsel %vm2428, %v2464, 0.0
      %v2525 = vsel %vm2429, %v2464, 0.0
      %v2526 = vsel %vm2430, %v2468, 0.0
      %v2527 = vsel %vm2431, %v2468, 0.0
      %v2528 = vsel %vm2432, %v2472, 0.0
      %v2529 = vsel %vm2433, %v2472, 0.0
      %v2530 = vsel %vm2434, %v2476, 0.0
      %v2531 = vsel %vm2435, %v2476, 0.0
      %v2532 = vsel %vm2436, %v2480, 0.0
      %v2533 = vsel %vm2437, %v2480, 0.0
      %v2534 = vsel %vm2438, %v2484, 0.0
      %v2535 = vsel %vm2439, %v2484, 0.0
      %v2536 = vsel %vm2440, %v2488, 0.0
      %v2537 = vsel %vm2441, %v2488, 0.0
      %v2538 = vsel %vm2442, %v2492, 0.0
      %v2539 = vsel %vm2443, %v2492, 0.0
      %v2540 = vsel %vm2444, %v2496, 0.0
      %v2541 = vsel %vm2445, %v2496, 0.0
      %v2542 = vsel %vm2446, %v2500, 0.0
      %v2543 = vsel %vm2447, %v2500, 0.0
      %v2544 = vsel %vm2448, %v2504, 0.0
      %v2545 = vsel %vm2449, %v2504, 0.0
      %v2546 = vsel %vm2450, %v2508, 0.0
      %v2547 = vsel %vm2451, %v2508, 0.0
      %v2548 = vsel %vm2452, %v2512, 0.0
      %v2549 = vsel %vm2453, %v2512, 0.0
      %v2550 = vsel %vm2454, %v2516, 0.0
      %v2551 = vsel %vm2455, %v2516, 0.0
      %v2552 = vsel %vm2456, %v2520, 0.0
      %v2553 = vsel %vm2457, %v2520, 0.0
      %v2554 = vadd.f32 %v2346, %v2522
      %v2555 = vadd.f32 %v2347, %v2523
      %v2556 = vadd.f32 %v2348, %v2524
      %v2557 = vadd.f32 %v2349, %v2525
      %v2558 = vadd.f32 %v2350, %v2526
      %v2559 = vadd.f32 %v2351, %v2527
      %v2560 = vadd.f32 %v2352, %v2528
      %v2561 = vadd.f32 %v2353, %v2529
      %v2562 = vadd.f32 %v2354, %v2530
      %v2563 = vadd.f32 %v2355, %v2531
      %v2564 = vadd.f32 %v2356, %v2532
      %v2565 = vadd.f32 %v2357, %v2533
      %v2566 = vadd.f32 %v2358, %v2534
      %v2567 = vadd.f32 %v2359, %v2535
      %v2568 = vadd.f32 %v2360, %v2536
      %v2569 = vadd.f32 %v2361, %v2537
      %v2570 = vadd.f32 %v2362, %v2538
      %v2571 = vadd.f32 %v2363, %v2539
      %v2572 = vadd.f32 %v2364, %v2540
      %v2573 = vadd.f32 %v2365, %v2541
      %v2574 = vadd.f32 %v2366, %v2542
      %v2575 = vadd.f32 %v2367, %v2543
      %v2576 = vadd.f32 %v2368, %v2544
      %v2577 = vadd.f32 %v2369, %v2545
      %v2578 = vadd.f32 %v2370, %v2546
      %v2579 = vadd.f32 %v2371, %v2547
      %v2580 = vadd.f32 %v2372, %v2548
      %v2581 = vadd.f32 %v2373, %v2549
      %v2582 = vadd.f32 %v2374, %v2550
      %v2583 = vadd.f32 %v2375, %v2551
      %v2584 = vadd.f32 %v2376, %v2552
      %v2585 = vadd.f32 %v2377, %v2553
      %2586 = vset.pattern.permute.xlu0 3
      %2587 = vperm.xlu0 %2586, %v1576
      %v2588 = vpop.permute.xlu0 %2587
      %2589 = vset.pattern.permute.xlu0 3
      %2590 = vperm.xlu0 %2589, %v1577
      %v2591 = vpop.permute.xlu0 %2590
      %2592 = vset.pattern.permute.xlu0 3
      %2593 = vperm.xlu0 %2592, %v1578
      %v2594 = vpop.permute.xlu0 %2593
      %2595 = vset.pattern.permute.xlu0 3
      %2596 = vperm.xlu0 %2595, %v1579
      %v2597 = vpop.permute.xlu0 %2596
      %2598 = vset.pattern.permute.xlu0 3
      %2599 = vperm.xlu0 %2598, %v1580
      %v2600 = vpop.permute.xlu0 %2599
      %2601 = vset.pattern.permute.xlu0 3
      %2602 = vperm.xlu0 %2601, %v1581
      %v2603 = vpop.permute.xlu0 %2602
      %2604 = vset.pattern.permute.xlu0 3
      %2605 = vperm.xlu0 %2604, %v1582
      %v2606 = vpop.permute.xlu0 %2605
      %2607 = vset.pattern.permute.xlu0 3
      %2608 = vperm.xlu0 %2607, %v1583
      %v2609 = vpop.permute.xlu0 %2608
      %2610 = vset.pattern.permute.xlu0 3
      %2611 = vperm.xlu0 %2610, %v1584
      %v2612 = vpop.permute.xlu0 %2611
      %2613 = vset.pattern.permute.xlu0 3
      %2614 = vperm.xlu0 %2613, %v1585
      %v2615 = vpop.permute.xlu0 %2614
      %2616 = vset.pattern.permute.xlu0 3
      %2617 = vperm.xlu0 %2616, %v1586
      %v2618 = vpop.permute.xlu0 %2617
      %2619 = vset.pattern.permute.xlu0 3
      %2620 = vperm.xlu0 %2619, %v1587
      %v2621 = vpop.permute.xlu0 %2620
      %2622 = vset.pattern.permute.xlu0 3
      %2623 = vperm.xlu0 %2622, %v1588
      %v2624 = vpop.permute.xlu0 %2623
      %2625 = vset.pattern.permute.xlu0 3
      %2626 = vperm.xlu0 %2625, %v1589
      %v2627 = vpop.permute.xlu0 %2626
      %2628 = vset.pattern.permute.xlu0 3
      %2629 = vperm.xlu0 %2628, %v1590
      %v2630 = vpop.permute.xlu0 %2629
      %2631 = vset.pattern.permute.xlu0 3
      %2632 = vperm.xlu0 %2631, %v1591
      %v2633 = vpop.permute.xlu0 %2632
      %vm2634 = vcmp.eq.s32.totalorder %v486, %v2588
      %vm2635 = vcmp.eq.s32.totalorder %v487, %v2588
      %vm2636 = vcmp.eq.s32.totalorder %v486, %v2591
      %vm2637 = vcmp.eq.s32.totalorder %v487, %v2591
      %vm2638 = vcmp.eq.s32.totalorder %v486, %v2594
      %vm2639 = vcmp.eq.s32.totalorder %v487, %v2594
      %vm2640 = vcmp.eq.s32.totalorder %v486, %v2597
      %vm2641 = vcmp.eq.s32.totalorder %v487, %v2597
      %vm2642 = vcmp.eq.s32.totalorder %v486, %v2600
      %vm2643 = vcmp.eq.s32.totalorder %v487, %v2600
      %vm2644 = vcmp.eq.s32.totalorder %v486, %v2603
      %vm2645 = vcmp.eq.s32.totalorder %v487, %v2603
      %vm2646 = vcmp.eq.s32.totalorder %v486, %v2606
      %vm2647 = vcmp.eq.s32.totalorder %v487, %v2606
      %vm2648 = vcmp.eq.s32.totalorder %v486, %v2609
      %vm2649 = vcmp.eq.s32.totalorder %v487, %v2609
      %vm2650 = vcmp.eq.s32.totalorder %v486, %v2612
      %vm2651 = vcmp.eq.s32.totalorder %v487, %v2612
      %vm2652 = vcmp.eq.s32.totalorder %v486, %v2615
      %vm2653 = vcmp.eq.s32.totalorder %v487, %v2615
      %vm2654 = vcmp.eq.s32.totalorder %v486, %v2618
      %vm2655 = vcmp.eq.s32.totalorder %v487, %v2618
      %vm2656 = vcmp.eq.s32.totalorder %v486, %v2621
      %vm2657 = vcmp.eq.s32.totalorder %v487, %v2621
      %vm2658 = vcmp.eq.s32.totalorder %v486, %v2624
      %vm2659 = vcmp.eq.s32.totalorder %v487, %v2624
      %vm2660 = vcmp.eq.s32.totalorder %v486, %v2627
      %vm2661 = vcmp.eq.s32.totalorder %v487, %v2627
      %vm2662 = vcmp.eq.s32.totalorder %v486, %v2630
      %vm2663 = vcmp.eq.s32.totalorder %v487, %v2630
      %vm2664 = vcmp.eq.s32.totalorder %v486, %v2633
      %vm2665 = vcmp.eq.s32.totalorder %v487, %v2633
      %2666 = vset.pattern.permute.xlu0 3
      %2667 = vperm.xlu0 %2666, %v1560
      %v2668 = vpop.permute.xlu0 %2667
      %2670 = vset.pattern.permute.xlu0 3
      %2671 = vperm.xlu0 %2670, %v1561
      %v2672 = vpop.permute.xlu0 %2671
      %2674 = vset.pattern.permute.xlu0 3
      %2675 = vperm.xlu0 %2674, %v1562
      %v2676 = vpop.permute.xlu0 %2675
      %2678 = vset.pattern.permute.xlu0 3
      %2679 = vperm.xlu0 %2678, %v1563
      %v2680 = vpop.permute.xlu0 %2679
      %2682 = vset.pattern.permute.xlu0 3
      %2683 = vperm.xlu0 %2682, %v1564
      %v2684 = vpop.permute.xlu0 %2683
      %2686 = vset.pattern.permute.xlu0 3
      %2687 = vperm.xlu0 %2686, %v1565
      %v2688 = vpop.permute.xlu0 %2687
      %2690 = vset.pattern.permute.xlu0 3
      %2691 = vperm.xlu0 %2690, %v1566
      %v2692 = vpop.permute.xlu0 %2691
      %2694 = vset.pattern.permute.xlu0 3
      %2695 = vperm.xlu0 %2694, %v1567
      %v2696 = vpop.permute.xlu0 %2695
      %2698 = vset.pattern.permute.xlu0 3
      %2699 = vperm.xlu0 %2698, %v1568
      %v2700 = vpop.permute.xlu0 %2699
      %2702 = vset.pattern.permute.xlu0 3
      %2703 = vperm.xlu0 %2702, %v1569
      %v2704 = vpop.permute.xlu0 %2703
      %2706 = vset.pattern.permute.xlu0 3
      %2707 = vperm.xlu0 %2706, %v1570
      %v2708 = vpop.permute.xlu0 %2707
      %2710 = vset.pattern.permute.xlu0 3
      %2711 = vperm.xlu0 %2710, %v1571
      %v2712 = vpop.permute.xlu0 %2711
      %2714 = vset.pattern.permute.xlu0 3
      %2715 = vperm.xlu0 %2714, %v1572
      %v2716 = vpop.permute.xlu0 %2715
      %2718 = vset.pattern.permute.xlu0 3
      %2719 = vperm.xlu0 %2718, %v1573
      %v2720 = vpop.permute.xlu0 %2719
      %2722 = vset.pattern.permute.xlu0 3
      %2723 = vperm.xlu0 %2722, %v1574
      %v2724 = vpop.permute.xlu0 %2723
      %2726 = vset.pattern.permute.xlu0 3
      %2727 = vperm.xlu0 %2726, %v1575
      %v2728 = vpop.permute.xlu0 %2727
      %v2730 = vsel %vm2634, %v2668, 0.0
      %v2731 = vsel %vm2635, %v2668, 0.0
      %v2732 = vsel %vm2636, %v2672, 0.0
      %v2733 = vsel %vm2637, %v2672, 0.0
      %v2734 = vsel %vm2638, %v2676, 0.0
      %v2735 = vsel %vm2639, %v2676, 0.0
      %v2736 = vsel %vm2640, %v2680, 0.0
      %v2737 = vsel %vm2641, %v2680, 0.0
      %v2738 = vsel %vm2642, %v2684, 0.0
      %v2739 = vsel %vm2643, %v2684, 0.0
      %v2740 = vsel %vm2644, %v2688, 0.0
      %v2741 = vsel %vm2645, %v2688, 0.0
      %v2742 = vsel %vm2646, %v2692, 0.0
      %v2743 = vsel %vm2647, %v2692, 0.0
      %v2744 = vsel %vm2648, %v2696, 0.0
      %v2745 = vsel %vm2649, %v2696, 0.0
      %v2746 = vsel %vm2650, %v2700, 0.0
      %v2747 = vsel %vm2651, %v2700, 0.0
      %v2748 = vsel %vm2652, %v2704, 0.0
      %v2749 = vsel %vm2653, %v2704, 0.0
      %v2750 = vsel %vm2654, %v2708, 0.0
      %v2751 = vsel %vm2655, %v2708, 0.0
      %v2752 = vsel %vm2656, %v2712, 0.0
      %v2753 = vsel %vm2657, %v2712, 0.0
      %v2754 = vsel %vm2658, %v2716, 0.0
      %v2755 = vsel %vm2659, %v2716, 0.0
      %v2756 = vsel %vm2660, %v2720, 0.0
      %v2757 = vsel %vm2661, %v2720, 0.0
      %v2758 = vsel %vm2662, %v2724, 0.0
      %v2759 = vsel %vm2663, %v2724, 0.0
      %v2760 = vsel %vm2664, %v2728, 0.0
      %v2761 = vsel %vm2665, %v2728, 0.0
      %v2762 = vadd.f32 %v2554, %v2730
      %v2763 = vadd.f32 %v2555, %v2731
      %v2764 = vadd.f32 %v2556, %v2732
      %v2765 = vadd.f32 %v2557, %v2733
      %v2766 = vadd.f32 %v2558, %v2734
      %v2767 = vadd.f32 %v2559, %v2735
      %v2768 = vadd.f32 %v2560, %v2736
      %v2769 = vadd.f32 %v2561, %v2737
      %v2770 = vadd.f32 %v2562, %v2738
      %v2771 = vadd.f32 %v2563, %v2739
      %v2772 = vadd.f32 %v2564, %v2740
      %v2773 = vadd.f32 %v2565, %v2741
      %v2774 = vadd.f32 %v2566, %v2742
      %v2775 = vadd.f32 %v2567, %v2743
      %v2776 = vadd.f32 %v2568, %v2744
      %v2777 = vadd.f32 %v2569, %v2745
      %v2778 = vadd.f32 %v2570, %v2746
      %v2779 = vadd.f32 %v2571, %v2747
      %v2780 = vadd.f32 %v2572, %v2748
      %v2781 = vadd.f32 %v2573, %v2749
      %v2782 = vadd.f32 %v2574, %v2750
      %v2783 = vadd.f32 %v2575, %v2751
      %v2784 = vadd.f32 %v2576, %v2752
      %v2785 = vadd.f32 %v2577, %v2753
      %v2786 = vadd.f32 %v2578, %v2754
      %v2787 = vadd.f32 %v2579, %v2755
      %v2788 = vadd.f32 %v2580, %v2756
      %v2789 = vadd.f32 %v2581, %v2757
      %v2790 = vadd.f32 %v2582, %v2758
      %v2791 = vadd.f32 %v2583, %v2759
      %v2792 = vadd.f32 %v2584, %v2760
      %v2793 = vadd.f32 %v2585, %v2761
      %2826 = vrot.lane.b32.xlu0 %v1816, 120
      %v2827 = vpop.permute.xlu0 %2826
      %2828 = vrot.lane.b32.xlu0 %v1817, 120
      %v2829 = vpop.permute.xlu0 %2828
      %2830 = vrot.lane.b32.xlu0 %v1818, 120
      %v2831 = vpop.permute.xlu0 %2830
      %2832 = vrot.lane.b32.xlu0 %v1819, 120
      %v2833 = vpop.permute.xlu0 %2832
      %2834 = vrot.lane.b32.xlu0 %v1820, 120
      %v2835 = vpop.permute.xlu0 %2834
      %2836 = vrot.lane.b32.xlu0 %v1821, 120
      %v2837 = vpop.permute.xlu0 %2836
      %2838 = vrot.lane.b32.xlu0 %v1822, 120
      %v2839 = vpop.permute.xlu0 %2838
      %2840 = vrot.lane.b32.xlu0 %v1823, 120
      %v2841 = vpop.permute.xlu0 %2840
      %2842 = vrot.lane.b32.xlu0 %v1824, 120
      %v2843 = vpop.permute.xlu0 %2842
      %2844 = vrot.lane.b32.xlu0 %v1825, 120
      %v2845 = vpop.permute.xlu0 %2844
      %2846 = vrot.lane.b32.xlu0 %v1826, 120
      %v2847 = vpop.permute.xlu0 %2846
      %2848 = vrot.lane.b32.xlu0 %v1827, 120
      %v2849 = vpop.permute.xlu0 %2848
      %2850 = vrot.lane.b32.xlu0 %v1828, 120
      %v2851 = vpop.permute.xlu0 %2850
      %2852 = vrot.lane.b32.xlu0 %v1829, 120
      %v2853 = vpop.permute.xlu0 %2852
      %2854 = vrot.lane.b32.xlu0 %v1830, 120
      %v2855 = vpop.permute.xlu0 %2854
      %2856 = vrot.lane.b32.xlu0 %v1831, 120
      %v2857 = vpop.permute.xlu0 %2856
      %2858 = vrot.lane.b32.xlu0 %v1832, 120
      %v2859 = vpop.permute.xlu0 %2858
      %2860 = vrot.lane.b32.xlu0 %v1833, 120
      %v2861 = vpop.permute.xlu0 %2860
      %2862 = vrot.lane.b32.xlu0 %v1834, 120
      %v2863 = vpop.permute.xlu0 %2862
      %2864 = vrot.lane.b32.xlu0 %v1835, 120
      %v2865 = vpop.permute.xlu0 %2864
      %2866 = vrot.lane.b32.xlu0 %v1836, 120
      %v2867 = vpop.permute.xlu0 %2866
      %2868 = vrot.lane.b32.xlu0 %v1837, 120
      %v2869 = vpop.permute.xlu0 %2868
      %2870 = vrot.lane.b32.xlu0 %v1838, 120
      %v2871 = vpop.permute.xlu0 %2870
      %2872 = vrot.lane.b32.xlu0 %v1839, 120
      %v2873 = vpop.permute.xlu0 %2872
      %2874 = vrot.lane.b32.xlu0 %v1840, 120
      %v2875 = vpop.permute.xlu0 %2874
      %2876 = vrot.lane.b32.xlu0 %v1841, 120
      %v2877 = vpop.permute.xlu0 %2876
      %2878 = vrot.lane.b32.xlu0 %v1842, 120
      %v2879 = vpop.permute.xlu0 %2878
      %2880 = vrot.lane.b32.xlu0 %v1843, 120
      %v2881 = vpop.permute.xlu0 %2880
      %2882 = vrot.lane.b32.xlu0 %v1844, 120
      %v2883 = vpop.permute.xlu0 %2882
      %2884 = vrot.lane.b32.xlu0 %v1845, 120
      %v2885 = vpop.permute.xlu0 %2884
      %2886 = vrot.lane.b32.xlu0 %v1846, 120
      %v2887 = vpop.permute.xlu0 %2886
      %2888 = vrot.lane.b32.xlu0 %v1847, 120
      %v2889 = vpop.permute.xlu0 %2888
      %2922 = vmatprep.subr.mxu0 0.0
      %2923 = vmatpush1.msra.mxu0 %v2827
      %2924 = vmatprep.subr.mxu0 0.0
      %2925 = vmatpush1.msra.mxu0 %v2829
      %2926 = vmatprep.subr.mxu0 0.0
      %2927 = vmatpush1.msra.mxu0 %v2831
      %2928 = vmatprep.subr.mxu0 0.0
      %2929 = vmatpush1.msra.mxu0 %v2833
      %2930 = vmatprep.subr.mxu0 0.0
      %2931 = vmatpush1.msra.mxu0 %v2835
      %2932 = vmatprep.subr.mxu0 0.0
      %2933 = vmatpush1.msra.mxu0 %v2837
      %2934 = vmatprep.subr.mxu0 0.0
      %2935 = vmatpush1.msra.mxu0 %v2839
      %2936 = vmatprep.subr.mxu0 0.0
      %2937 = vmatpush1.msra.mxu0 %v2841
      %2938 = vmatprep.subr.mxu0 0.0
      %2939 = vmatpush1.msra.mxu0 %v2843
      %2940 = vmatprep.subr.mxu0 0.0
      %2941 = vmatpush1.msra.mxu0 %v2845
      %2942 = vmatprep.subr.mxu0 0.0
      %2943 = vmatpush1.msra.mxu0 %v2847
      %2944 = vmatprep.subr.mxu0 0.0
      %2945 = vmatpush1.msra.mxu0 %v2849
      %2946 = vmatprep.subr.mxu0 0.0
      %2947 = vmatpush1.msra.mxu0 %v2851
      %2948 = vmatprep.subr.mxu0 0.0
      %2949 = vmatpush1.msra.mxu0 %v2853
      %2950 = vmatprep.subr.mxu0 0.0
      %2951 = vmatpush1.msra.mxu0 %v2855
      %2952 = vmatprep.subr.mxu0 0.0
      %2953 = vmatpush1.msra.mxu0 %v2857
      %2954 = vmatprep.subr.mxu0 0.0
      %2955 = vmatpush1.msra.mxu0 %v2859
      %2956 = vmatprep.subr.mxu0 0.0
      %2957 = vmatpush1.msra.mxu0 %v2861
      %2958 = vmatprep.subr.mxu0 0.0
      %2959 = vmatpush1.msra.mxu0 %v2863
      %2960 = vmatprep.subr.mxu0 0.0
      %2961 = vmatpush1.msra.mxu0 %v2865
      %2962 = vmatprep.subr.mxu0 0.0
      %2963 = vmatpush1.msra.mxu0 %v2867
      %2964 = vmatprep.subr.mxu0 0.0
      %2965 = vmatpush1.msra.mxu0 %v2869
      %2966 = vmatprep.subr.mxu0 0.0
      %2967 = vmatpush1.msra.mxu0 %v2871
      %2968 = vmatprep.subr.mxu0 0.0
      %2969 = vmatpush1.msra.mxu0 %v2873
      %2970 = vmatprep.subr.mxu0 0.0
      %2971 = vmatpush1.msra.mxu0 %v2875
      %2972 = vmatprep.subr.mxu0 0.0
      %2973 = vmatpush1.msra.mxu0 %v2877
      %2974 = vmatprep.subr.mxu0 0.0
      %2975 = vmatpush1.msra.mxu0 %v2879
      %2976 = vmatprep.subr.mxu0 0.0
      %2977 = vmatpush1.msra.mxu0 %v2881
      %2978 = vmatprep.subr.mxu0 0.0
      %2979 = vmatpush1.msra.mxu0 %v2883
      %2980 = vmatprep.subr.mxu0 0.0
      %2981 = vmatpush1.msra.mxu0 %v2885
      %2982 = vmatprep.subr.mxu0 0.0
      %2983 = vmatpush1.msra.mxu0 %v2887
      %2984 = vmatprep.subr.mxu0 0.0
      %2985 = vmatpush1.msra.mxu0 %v2889
      %2986 = vmatprep.mubr.f32.mxu0 %v2763
      %2987 = vmatmul.mubr.f32.gmra.mrb[0].mxu0 %v2762
      %v2988 = vpop.f32.mrb[0].mxu0
      %v2989 = vadd.f32 0.0, %v2988
      %v2990 = vpop.f32.mrb[0].mxu0
      %2991 = vmatprep.mubr.f32.mxu0 %v2765
      %2992 = vmatmul.mubr.f32.gmra.mrb[0].mxu0 %v2764
      %v2993 = vpop.f32.mrb[0].mxu0
      %v2994 = vadd.f32 0.0, %v2993
      %v2995 = vpop.f32.mrb[0].mxu0
      %2996 = vmatprep.mubr.f32.mxu0 %v2767
      %2997 = vmatmul.mubr.f32.gmra.mrb[0].mxu0 %v2766
      %v2998 = vpop.f32.mrb[0].mxu0
      %v2999 = vadd.f32 0.0, %v2998
      %v3000 = vpop.f32.mrb[0].mxu0
      %3001 = vmatprep.mubr.f32.mxu0 %v2769
      %3002 = vmatmul.mubr.f32.gmra.mrb[0].mxu0 %v2768
      %v3003 = vpop.f32.mrb[0].mxu0
      %v3004 = vadd.f32 0.0, %v3003
      %v3005 = vpop.f32.mrb[0].mxu0
      %3006 = vmatprep.mubr.f32.mxu0 %v2771
      %3007 = vmatmul.mubr.f32.gmra.mrb[0].mxu0 %v2770
      %v3008 = vpop.f32.mrb[0].mxu0
      %v3009 = vadd.f32 0.0, %v3008
      %v3010 = vpop.f32.mrb[0].mxu0
      %3011 = vmatprep.mubr.f32.mxu0 %v2773
      %3012 = vmatmul.mubr.f32.gmra.mrb[0].mxu0 %v2772
      %v3013 = vpop.f32.mrb[0].mxu0
      %v3014 = vadd.f32 0.0, %v3013
      %v3015 = vpop.f32.mrb[0].mxu0
      %3016 = vmatprep.mubr.f32.mxu0 %v2775
      %3017 = vmatmul.mubr.f32.gmra.mrb[0].mxu0 %v2774
      %v3018 = vpop.f32.mrb[0].mxu0
      %v3019 = vadd.f32 0.0, %v3018
      %v3020 = vpop.f32.mrb[0].mxu0
      %3021 = vmatprep.mubr.f32.mxu0 %v2777
      %3022 = vmatmul.mubr.f32.gmra.mrb[0].mxu0 %v2776
      %v3023 = vpop.f32.mrb[0].mxu0
      %v3024 = vadd.f32 0.0, %v3023
      %v3025 = vpop.f32.mrb[0].mxu0
      %3026 = vmatprep.mubr.f32.mxu0 %v2779
      %3027 = vmatmul.mubr.f32.gmra.mrb[0].mxu0 %v2778
      %v3028 = vpop.f32.mrb[0].mxu0
      %v3029 = vadd.f32 0.0, %v3028
      %v3030 = vpop.f32.mrb[0].mxu0
      %3031 = vmatprep.mubr.f32.mxu0 %v2781
      %3032 = vmatmul.mubr.f32.gmra.mrb[0].mxu0 %v2780
      %v3033 = vpop.f32.mrb[0].mxu0
      %v3034 = vadd.f32 0.0, %v3033
      %v3035 = vpop.f32.mrb[0].mxu0
      %3036 = vmatprep.mubr.f32.mxu0 %v2783
      %3037 = vmatmul.mubr.f32.gmra.mrb[0].mxu0 %v2782
      %v3038 = vpop.f32.mrb[0].mxu0
      %v3039 = vadd.f32 0.0, %v3038
      %v3040 = vpop.f32.mrb[0].mxu0
      %3041 = vmatprep.mubr.f32.mxu0 %v2785
      %3042 = vmatmul.mubr.f32.gmra.mrb[0].mxu0 %v2784
      %v3043 = vpop.f32.mrb[0].mxu0
      %v3044 = vadd.f32 0.0, %v3043
      %v3045 = vpop.f32.mrb[0].mxu0
      %3046 = vmatprep.mubr.f32.mxu0 %v2787
      %3047 = vmatmul.mubr.f32.gmra.mrb[0].mxu0 %v2786
      %v3048 = vpop.f32.mrb[0].mxu0
      %v3049 = vadd.f32 0.0, %v3048
      %v3050 = vpop.f32.mrb[0].mxu0
      %3051 = vmatprep.mubr.f32.mxu0 %v2789
      %3052 = vmatmul.mubr.f32.gmra.mrb[0].mxu0 %v2788
      %v3053 = vpop.f32.mrb[0].mxu0
      %v3054 = vadd.f32 0.0, %v3053
      %v3055 = vpop.f32.mrb[0].mxu0
      %3056 = vmatprep.mubr.f32.mxu0 %v2791
      %3057 = vmatmul.mubr.f32.gmra.mrb[0].mxu0 %v2790
      %v3058 = vpop.f32.mrb[0].mxu0
      %v3059 = vadd.f32 0.0, %v3058
      %v3060 = vpop.f32.mrb[0].mxu0
      %3061 = vmatprep.mubr.f32.mxu0 %v2793
      %3062 = vmatmul.mubr.f32.gmra.mrb[0].mxu0 %v2792
      %v3063 = vpop.f32.mrb[0].mxu0
      %v3064 = vadd.f32 0.0, %v3063
      %v3065 = vpop.f32.mrb[0].mxu0
      %3066 = vdwg.mxu0
      %v3067 = vld [vmem:[%s2 + $0x8] sm:$0xff]
      %vm3068 = vcmask 64512
      %v3070 = vsel %vm3068, %v2989, 0
      %v3073 = vsel %vm3068, %v2994, 0
      %v3076 = vsel %vm3068, %v2999, 0
      %v3079 = vsel %vm3068, %v3004, 0
      %v3082 = vsel %vm3068, %v3009, 0
      %v3085 = vsel %vm3068, %v3014, 0
      %v3088 = vsel %vm3068, %v3019, 0
      %v3091 = vsel %vm3068, %v3024, 0
      %v3094 = vsel %vm3068, %v3029, 0
      %v3097 = vsel %vm3068, %v3034, 0
      %v3100 = vsel %vm3068, %v3039, 0
      %v3103 = vsel %vm3068, %v3044, 0
      %v3106 = vsel %vm3068, %v3049, 0
      %v3109 = vsel %vm3068, %v3054, 0
      %v3112 = vsel %vm3068, %v3059, 0
      %v3115 = vsel %vm3068, %v3064, 0
      %3117 = vmatprep.subr.mxu0 0.0
      %3118 = vmatpush1.msra.mxu0 %v3067
      %3119 = vmatprep.subr.mxu0 0.0
      %3120 = vmatpush1.msra.mxu0 0.0
      %3121 = vmatprep.subr.mxu0 0.0
      %3122 = vmatpush1.msra.mxu0 0.0
      %3123 = vmatprep.subr.mxu0 0.0
      %3124 = vmatpush1.msra.mxu0 0.0
      %3125 = vmatprep.subr.mxu0 0.0
      %3126 = vmatpush1.msra.mxu0 0.0
      %3127 = vmatprep.subr.mxu0 0.0
      %3128 = vmatpush1.msra.mxu0 0.0
      %3129 = vmatprep.subr.mxu0 0.0
      %3130 = vmatpush1.msra.mxu0 0.0
      %3131 = vmatprep.subr.mxu0 0.0
      %3132 = vmatpush1.msra.mxu0 0.0
      %3133 = vmatprep.subr.mxu0 0.0
      %3134 = vmatpush1.msra.mxu0 0.0
      %3135 = vmatprep.subr.mxu0 0.0
      %3136 = vmatpush1.msra.mxu0 0.0
      %3137 = vmatprep.subr.mxu0 0.0
      %3138 = vmatpush1.msra.mxu0 0.0
      %3139 = vmatprep.subr.mxu0 0.0
      %3140 = vmatpush1.msra.mxu0 0.0
      %3141 = vmatprep.subr.mxu0 0.0
      %3142 = vmatpush1.msra.mxu0 0.0
      %3143 = vmatprep.subr.mxu0 0.0
      %3144 = vmatpush1.msra.mxu0 0.0
      %3145 = vmatprep.subr.mxu0 0.0
      %3146 = vmatpush1.msra.mxu0 0.0
      %3147 = vmatprep.subr.mxu0 0.0
      %3148 = vmatpush1.msra.mxu0 0.0
      %3149 = vmatprep.subr.mxu0 0.0
      %3150 = vmatpush1.msra.mxu0 0.0
      %3151 = vmatprep.subr.mxu0 0.0
      %3152 = vmatpush1.msra.mxu0 0.0
      %3153 = vmatprep.subr.mxu0 0.0
      %3154 = vmatpush1.msra.mxu0 0.0
      %3155 = vmatprep.subr.mxu0 0.0
      %3156 = vmatpush1.msra.mxu0 0.0
      %3157 = vmatprep.subr.mxu0 0.0
      %3158 = vmatpush1.msra.mxu0 0.0
      %3159 = vmatprep.subr.mxu0 0.0
      %3160 = vmatpush1.msra.mxu0 0.0
      %3161 = vmatprep.subr.mxu0 0.0
      %3162 = vmatpush1.msra.mxu0 0.0
      %3163 = vmatprep.subr.mxu0 0.0
      %3164 = vmatpush1.msra.mxu0 0.0
      %3165 = vmatprep.subr.mxu0 0.0
      %3166 = vmatpush1.msra.mxu0 0.0
      %3167 = vmatprep.subr.mxu0 0.0
      %3168 = vmatpush1.msra.mxu0 0.0
      %3169 = vmatprep.subr.mxu0 0.0
      %3170 = vmatpush1.msra.mxu0 0.0
      %3171 = vmatprep.subr.mxu0 0.0
      %3172 = vmatpush1.msra.mxu0 0.0
      %3173 = vmatprep.subr.mxu0 0.0
      %3174 = vmatpush1.msra.mxu0 0.0
      %3175 = vmatprep.subr.mxu0 0.0
      %3176 = vmatpush1.msra.mxu0 0.0
      %3177 = vmatprep.subr.mxu0 0.0
      %3178 = vmatpush1.msra.mxu0 0.0
      %3179 = vmatprep.subr.mxu0 0.0
      %3180 = vmatpush1.msra.mxu0 0.0
      %3181 = vmatprep.mubr.f32.mxu0 0.0
      %3182 = vmatmul.mubr.f32.gmra.mrb[0].mxu0 %v3070
      %v3183 = vpop.f32.mrb[0].mxu0
      %v3184 = vadd.f32 0.0, %v3183
      %v3185 = vpop.f32.mrb[0].mxu0
      %3186 = vmatprep.mubr.f32.mxu0 0.0
      %3187 = vmatmul.mubr.f32.gmra.mrb[0].mxu0 %v3073
      %v3188 = vpop.f32.mrb[0].mxu0
      %v3189 = vadd.f32 0.0, %v3188
      %v3190 = vpop.f32.mrb[0].mxu0
      %3191 = vmatprep.mubr.f32.mxu0 0.0
      %3192 = vmatmul.mubr.f32.gmra.mrb[0].mxu0 %v3076
      %v3193 = vpop.f32.mrb[0].mxu0
      %v3194 = vadd.f32 0.0, %v3193
      %v3195 = vpop.f32.mrb[0].mxu0
      %3196 = vmatprep.mubr.f32.mxu0 0.0
      %3197 = vmatmul.mubr.f32.gmra.mrb[0].mxu0 %v3079
      %v3198 = vpop.f32.mrb[0].mxu0
      %v3199 = vadd.f32 0.0, %v3198
      %v3200 = vpop.f32.mrb[0].mxu0
      %3201 = vmatprep.mubr.f32.mxu0 0.0
      %3202 = vmatmul.mubr.f32.gmra.mrb[0].mxu0 %v3082
      %v3203 = vpop.f32.mrb[0].mxu0
      %v3204 = vadd.f32 0.0, %v3203
      %v3205 = vpop.f32.mrb[0].mxu0
      %3206 = vmatprep.mubr.f32.mxu0 0.0
      %3207 = vmatmul.mubr.f32.gmra.mrb[0].mxu0 %v3085
      %v3208 = vpop.f32.mrb[0].mxu0
      %v3209 = vadd.f32 0.0, %v3208
      %v3210 = vpop.f32.mrb[0].mxu0
      %3211 = vmatprep.mubr.f32.mxu0 0.0
      %3212 = vmatmul.mubr.f32.gmra.mrb[0].mxu0 %v3088
      %v3213 = vpop.f32.mrb[0].mxu0
      %v3214 = vadd.f32 0.0, %v3213
      %v3215 = vpop.f32.mrb[0].mxu0
      %3216 = vmatprep.mubr.f32.mxu0 0.0
      %3217 = vmatmul.mubr.f32.gmra.mrb[0].mxu0 %v3091
      %v3218 = vpop.f32.mrb[0].mxu0
      %v3219 = vadd.f32 0.0, %v3218
      %v3220 = vpop.f32.mrb[0].mxu0
      %3221 = vmatprep.mubr.f32.mxu0 0.0
      %3222 = vmatmul.mubr.f32.gmra.mrb[0].mxu0 %v3094
      %v3223 = vpop.f32.mrb[0].mxu0
      %v3224 = vadd.f32 0.0, %v3223
      %v3225 = vpop.f32.mrb[0].mxu0
      %3226 = vmatprep.mubr.f32.mxu0 0.0
      %3227 = vmatmul.mubr.f32.gmra.mrb[0].mxu0 %v3097
      %v3228 = vpop.f32.mrb[0].mxu0
      %v3229 = vadd.f32 0.0, %v3228
      %v3230 = vpop.f32.mrb[0].mxu0
      %3231 = vmatprep.mubr.f32.mxu0 0.0
      %3232 = vmatmul.mubr.f32.gmra.mrb[0].mxu0 %v3100
      %v3233 = vpop.f32.mrb[0].mxu0
      %v3234 = vadd.f32 0.0, %v3233
      %v3235 = vpop.f32.mrb[0].mxu0
      %3236 = vmatprep.mubr.f32.mxu0 0.0
      %3237 = vmatmul.mubr.f32.gmra.mrb[0].mxu0 %v3103
      %v3238 = vpop.f32.mrb[0].mxu0
      %v3239 = vadd.f32 0.0, %v3238
      %v3240 = vpop.f32.mrb[0].mxu0
      %3241 = vmatprep.mubr.f32.mxu0 0.0
      %3242 = vmatmul.mubr.f32.gmra.mrb[0].mxu0 %v3106
      %v3243 = vpop.f32.mrb[0].mxu0
      %v3244 = vadd.f32 0.0, %v3243
      %v3245 = vpop.f32.mrb[0].mxu0
      %3246 = vmatprep.mubr.f32.mxu0 0.0
      %3247 = vmatmul.mubr.f32.gmra.mrb[0].mxu0 %v3109
      %v3248 = vpop.f32.mrb[0].mxu0
      %v3249 = vadd.f32 0.0, %v3248
      %v3250 = vpop.f32.mrb[0].mxu0
      %3251 = vmatprep.mubr.f32.mxu0 0.0
      %3252 = vmatmul.mubr.f32.gmra.mrb[0].mxu0 %v3112
      %v3253 = vpop.f32.mrb[0].mxu0
      %v3254 = vadd.f32 0.0, %v3253
      %v3255 = vpop.f32.mrb[0].mxu0
      %3256 = vmatprep.mubr.f32.mxu0 0.0
      %3257 = vmatmul.mubr.f32.gmra.mrb[0].mxu0 %v3115
      %v3258 = vpop.f32.mrb[0].mxu0
      %v3259 = vadd.f32 0.0, %v3258
      %v3260 = vpop.f32.mrb[0].mxu0
      %3261 = vdwg.mxu0
      %v3263 = vsel %vm3068, %v1915, 0
      %v3266 = vsel %vm3068, %v1920, 0
      %v3269 = vsel %vm3068, %v1925, 0
      %v3272 = vsel %vm3068, %v1930, 0
      %v3275 = vsel %vm3068, %v1935, 0
      %v3278 = vsel %vm3068, %v1940, 0
      %v3281 = vsel %vm3068, %v1945, 0
      %v3284 = vsel %vm3068, %v1950, 0
      %v3287 = vsel %vm3068, %v1955, 0
      %v3290 = vsel %vm3068, %v1960, 0
      %v3293 = vsel %vm3068, %v1965, 0
      %v3296 = vsel %vm3068, %v1970, 0
      %v3299 = vsel %vm3068, %v1975, 0
      %v3302 = vsel %vm3068, %v1980, 0
      %v3305 = vsel %vm3068, %v1985, 0
      %v3308 = vsel %vm3068, %v1990, 0
      %3310 = vmatprep.subr.mxu0 0.0
      %3311 = vmatpush1.msra.mxu0 %v1993
      %3312 = vmatprep.subr.mxu0 0.0
      %3313 = vmatpush1.msra.mxu0 0.0
      %3314 = vmatprep.subr.mxu0 0.0
      %3315 = vmatpush1.msra.mxu0 0.0
      %3316 = vmatprep.subr.mxu0 0.0
      %3317 = vmatpush1.msra.mxu0 0.0
      %3318 = vmatprep.subr.mxu0 0.0
      %3319 = vmatpush1.msra.mxu0 0.0
      %3320 = vmatprep.subr.mxu0 0.0
      %3321 = vmatpush1.msra.mxu0 0.0
      %3322 = vmatprep.subr.mxu0 0.0
      %3323 = vmatpush1.msra.mxu0 0.0
      %3324 = vmatprep.subr.mxu0 0.0
      %3325 = vmatpush1.msra.mxu0 0.0
      %3326 = vmatprep.subr.mxu0 0.0
      %3327 = vmatpush1.msra.mxu0 0.0
      %3328 = vmatprep.subr.mxu0 0.0
      %3329 = vmatpush1.msra.mxu0 0.0
      %3330 = vmatprep.subr.mxu0 0.0
      %3331 = vmatpush1.msra.mxu0 0.0
      %3332 = vmatprep.subr.mxu0 0.0
      %3333 = vmatpush1.msra.mxu0 0.0
      %3334 = vmatprep.subr.mxu0 0.0
      %3335 = vmatpush1.msra.mxu0 0.0
      %3336 = vmatprep.subr.mxu0 0.0
      %3337 = vmatpush1.msra.mxu0 0.0
      %3338 = vmatprep.subr.mxu0 0.0
      %3339 = vmatpush1.msra.mxu0 0.0
      %3340 = vmatprep.subr.mxu0 0.0
      %3341 = vmatpush1.msra.mxu0 0.0
      %3342 = vmatprep.subr.mxu0 0.0
      %3343 = vmatpush1.msra.mxu0 0.0
      %3344 = vmatprep.subr.mxu0 0.0
      %3345 = vmatpush1.msra.mxu0 0.0
      %3346 = vmatprep.subr.mxu0 0.0
      %3347 = vmatpush1.msra.mxu0 0.0
      %3348 = vmatprep.subr.mxu0 0.0
      %3349 = vmatpush1.msra.mxu0 0.0
      %3350 = vmatprep.subr.mxu0 0.0
      %3351 = vmatpush1.msra.mxu0 0.0
      %3352 = vmatprep.subr.mxu0 0.0
      %3353 = vmatpush1.msra.mxu0 0.0
      %3354 = vmatprep.subr.mxu0 0.0
      %3355 = vmatpush1.msra.mxu0 0.0
      %3356 = vmatprep.subr.mxu0 0.0
      %3357 = vmatpush1.msra.mxu0 0.0
      %3358 = vmatprep.subr.mxu0 0.0
      %3359 = vmatpush1.msra.mxu0 0.0
      %3360 = vmatprep.subr.mxu0 0.0
      %3361 = vmatpush1.msra.mxu0 0.0
      %3362 = vmatprep.subr.mxu0 0.0
      %3363 = vmatpush1.msra.mxu0 0.0
      %3364 = vmatprep.subr.mxu0 0.0
      %3365 = vmatpush1.msra.mxu0 0.0
      %3366 = vmatprep.subr.mxu0 0.0
      %3367 = vmatpush1.msra.mxu0 0.0
      %3368 = vmatprep.subr.mxu0 0.0
      %3369 = vmatpush1.msra.mxu0 0.0
      %3370 = vmatprep.subr.mxu0 0.0
      %3371 = vmatpush1.msra.mxu0 0.0
      %3372 = vmatprep.subr.mxu0 0.0
      %3373 = vmatpush1.msra.mxu0 0.0
      %3374 = vmatprep.mubr.f32.mxu0 0.0
      %3375 = vmatmul.mubr.f32.gmra.mrb[0].mxu0 %v3263
      %v3376 = vpop.f32.mrb[0].mxu0
      %v3377 = vadd.f32 %v3184, %v3376
      %v3378 = vpop.f32.mrb[0].mxu0
      %3379 = vmatprep.mubr.f32.mxu0 0.0
      %3380 = vmatmul.mubr.f32.gmra.mrb[0].mxu0 %v3266
      %v3381 = vpop.f32.mrb[0].mxu0
      %v3382 = vadd.f32 %v3189, %v3381
      %v3383 = vpop.f32.mrb[0].mxu0
      %3384 = vmatprep.mubr.f32.mxu0 0.0
      %3385 = vmatmul.mubr.f32.gmra.mrb[0].mxu0 %v3269
      %v3386 = vpop.f32.mrb[0].mxu0
      %v3387 = vadd.f32 %v3194, %v3386
      %v3388 = vpop.f32.mrb[0].mxu0
      %3389 = vmatprep.mubr.f32.mxu0 0.0
      %3390 = vmatmul.mubr.f32.gmra.mrb[0].mxu0 %v3272
      %v3391 = vpop.f32.mrb[0].mxu0
      %v3392 = vadd.f32 %v3199, %v3391
      %v3393 = vpop.f32.mrb[0].mxu0
      %3394 = vmatprep.mubr.f32.mxu0 0.0
      %3395 = vmatmul.mubr.f32.gmra.mrb[0].mxu0 %v3275
      %v3396 = vpop.f32.mrb[0].mxu0
      %v3397 = vadd.f32 %v3204, %v3396
      %v3398 = vpop.f32.mrb[0].mxu0
      %3399 = vmatprep.mubr.f32.mxu0 0.0
      %3400 = vmatmul.mubr.f32.gmra.mrb[0].mxu0 %v3278
      %v3401 = vpop.f32.mrb[0].mxu0
      %v3402 = vadd.f32 %v3209, %v3401
      %v3403 = vpop.f32.mrb[0].mxu0
      %3404 = vmatprep.mubr.f32.mxu0 0.0
      %3405 = vmatmul.mubr.f32.gmra.mrb[0].mxu0 %v3281
      %v3406 = vpop.f32.mrb[0].mxu0
      %v3407 = vadd.f32 %v3214, %v3406
      %v3408 = vpop.f32.mrb[0].mxu0
      %3409 = vmatprep.mubr.f32.mxu0 0.0
      %3410 = vmatmul.mubr.f32.gmra.mrb[0].mxu0 %v3284
      %v3411 = vpop.f32.mrb[0].mxu0
      %v3412 = vadd.f32 %v3219, %v3411
      %v3413 = vpop.f32.mrb[0].mxu0
      %3414 = vmatprep.mubr.f32.mxu0 0.0
      %3415 = vmatmul.mubr.f32.gmra.mrb[0].mxu0 %v3287
      %v3416 = vpop.f32.mrb[0].mxu0
      %v3417 = vadd.f32 %v3224, %v3416
      %v3418 = vpop.f32.mrb[0].mxu0
      %3419 = vmatprep.mubr.f32.mxu0 0.0
      %3420 = vmatmul.mubr.f32.gmra.mrb[0].mxu0 %v3290
      %v3421 = vpop.f32.mrb[0].mxu0
      %v3422 = vadd.f32 %v3229, %v3421
      %v3423 = vpop.f32.mrb[0].mxu0
      %3424 = vmatprep.mubr.f32.mxu0 0.0
      %3425 = vmatmul.mubr.f32.gmra.mrb[0].mxu0 %v3293
      %v3426 = vpop.f32.mrb[0].mxu0
      %v3427 = vadd.f32 %v3234, %v3426
      %v3428 = vpop.f32.mrb[0].mxu0
      %3429 = vmatprep.mubr.f32.mxu0 0.0
      %3430 = vmatmul.mubr.f32.gmra.mrb[0].mxu0 %v3296
      %v3431 = vpop.f32.mrb[0].mxu0
      %v3432 = vadd.f32 %v3239, %v3431
      %v3433 = vpop.f32.mrb[0].mxu0
      %3434 = vmatprep.mubr.f32.mxu0 0.0
      %3435 = vmatmul.mubr.f32.gmra.mrb[0].mxu0 %v3299
      %v3436 = vpop.f32.mrb[0].mxu0
      %v3437 = vadd.f32 %v3244, %v3436
      %v3438 = vpop.f32.mrb[0].mxu0
      %3439 = vmatprep.mubr.f32.mxu0 0.0
      %3440 = vmatmul.mubr.f32.gmra.mrb[0].mxu0 %v3302
      %v3441 = vpop.f32.mrb[0].mxu0
      %v3442 = vadd.f32 %v3249, %v3441
      %v3443 = vpop.f32.mrb[0].mxu0
      %3444 = vmatprep.mubr.f32.mxu0 0.0
      %3445 = vmatmul.mubr.f32.gmra.mrb[0].mxu0 %v3305
      %v3446 = vpop.f32.mrb[0].mxu0
      %v3447 = vadd.f32 %v3254, %v3446
      %v3448 = vpop.f32.mrb[0].mxu0
      %3449 = vmatprep.mubr.f32.mxu0 0.0
      %3450 = vmatmul.mubr.f32.gmra.mrb[0].mxu0 %v3308
      %v3451 = vpop.f32.mrb[0].mxu0
      %v3452 = vadd.f32 %v3259, %v3451
      %v3453 = vpop.f32.mrb[0].mxu0
      %3454 = vdwg.mxu0
      %3455 = vset.pattern.permute.xlu0 5
      %3456 = vperm.xlu0 %3455, %v728
      %v3457 = vpop.permute.xlu0 %3456
      %3458 = vset.pattern.permute.xlu0 5
      %3459 = vperm.xlu0 %3458, %v729
      %v3460 = vpop.permute.xlu0 %3459
      %3461 = vset.pattern.permute.xlu0 5
      %3462 = vperm.xlu0 %3461, %v730
      %v3463 = vpop.permute.xlu0 %3462
      %3464 = vset.pattern.permute.xlu0 5
      %3465 = vperm.xlu0 %3464, %v731
      %v3466 = vpop.permute.xlu0 %3465
      %3467 = vset.pattern.permute.xlu0 5
      %3468 = vperm.xlu0 %3467, %v732
      %v3469 = vpop.permute.xlu0 %3468
      %3470 = vset.pattern.permute.xlu0 5
      %3471 = vperm.xlu0 %3470, %v733
      %v3472 = vpop.permute.xlu0 %3471
      %3473 = vset.pattern.permute.xlu0 5
      %3474 = vperm.xlu0 %3473, %v734
      %v3475 = vpop.permute.xlu0 %3474
      %3476 = vset.pattern.permute.xlu0 5
      %3477 = vperm.xlu0 %3476, %v735
      %v3478 = vpop.permute.xlu0 %3477
      %3479 = vset.pattern.permute.xlu0 5
      %3480 = vperm.xlu0 %3479, %v736
      %v3481 = vpop.permute.xlu0 %3480
      %3482 = vset.pattern.permute.xlu0 5
      %3483 = vperm.xlu0 %3482, %v737
      %v3484 = vpop.permute.xlu0 %3483
      %3485 = vset.pattern.permute.xlu0 5
      %3486 = vperm.xlu0 %3485, %v738
      %v3487 = vpop.permute.xlu0 %3486
      %3488 = vset.pattern.permute.xlu0 5
      %3489 = vperm.xlu0 %3488, %v739
      %v3490 = vpop.permute.xlu0 %3489
      %3491 = vset.pattern.permute.xlu0 5
      %3492 = vperm.xlu0 %3491, %v740
      %v3493 = vpop.permute.xlu0 %3492
      %3494 = vset.pattern.permute.xlu0 5
      %3495 = vperm.xlu0 %3494, %v741
      %v3496 = vpop.permute.xlu0 %3495
      %3497 = vset.pattern.permute.xlu0 5
      %3498 = vperm.xlu0 %3497, %v742
      %v3499 = vpop.permute.xlu0 %3498
      %3500 = vset.pattern.permute.xlu0 5
      %3501 = vperm.xlu0 %3500, %v743
      %v3502 = vpop.permute.xlu0 %3501
      %vm3503 = vcmp.eq.s32.totalorder %v486, %v3457
      %vm3504 = vcmp.eq.s32.totalorder %v487, %v3457
      %vm3505 = vcmp.eq.s32.totalorder %v486, %v3460
      %vm3506 = vcmp.eq.s32.totalorder %v487, %v3460
      %vm3507 = vcmp.eq.s32.totalorder %v486, %v3463
      %vm3508 = vcmp.eq.s32.totalorder %v487, %v3463
      %vm3509 = vcmp.eq.s32.totalorder %v486, %v3466
      %vm3510 = vcmp.eq.s32.totalorder %v487, %v3466
      %vm3511 = vcmp.eq.s32.totalorder %v486, %v3469
      %vm3512 = vcmp.eq.s32.totalorder %v487, %v3469
      %vm3513 = vcmp.eq.s32.totalorder %v486, %v3472
      %vm3514 = vcmp.eq.s32.totalorder %v487, %v3472
      %vm3515 = vcmp.eq.s32.totalorder %v486, %v3475
      %vm3516 = vcmp.eq.s32.totalorder %v487, %v3475
      %vm3517 = vcmp.eq.s32.totalorder %v486, %v3478
      %vm3518 = vcmp.eq.s32.totalorder %v487, %v3478
      %vm3519 = vcmp.eq.s32.totalorder %v486, %v3481
      %vm3520 = vcmp.eq.s32.totalorder %v487, %v3481
      %vm3521 = vcmp.eq.s32.totalorder %v486, %v3484
      %vm3522 = vcmp.eq.s32.totalorder %v487, %v3484
      %vm3523 = vcmp.eq.s32.totalorder %v486, %v3487
      %vm3524 = vcmp.eq.s32.totalorder %v487, %v3487
      %vm3525 = vcmp.eq.s32.totalorder %v486, %v3490
      %vm3526 = vcmp.eq.s32.totalorder %v487, %v3490
      %vm3527 = vcmp.eq.s32.totalorder %v486, %v3493
      %vm3528 = vcmp.eq.s32.totalorder %v487, %v3493
      %vm3529 = vcmp.eq.s32.totalorder %v486, %v3496
      %vm3530 = vcmp.eq.s32.totalorder %v487, %v3496
      %vm3531 = vcmp.eq.s32.totalorder %v486, %v3499
      %vm3532 = vcmp.eq.s32.totalorder %v487, %v3499
      %vm3533 = vcmp.eq.s32.totalorder %v486, %v3502
      %vm3534 = vcmp.eq.s32.totalorder %v487, %v3502
      %3535 = vset.pattern.permute.xlu0 5
      %3536 = vperm.xlu0 %3535, %v664
      %v3537 = vpop.permute.xlu0 %3536
      %3539 = vset.pattern.permute.xlu0 5
      %3540 = vperm.xlu0 %3539, %v665
      %v3541 = vpop.permute.xlu0 %3540
      %3543 = vset.pattern.permute.xlu0 5
      %3544 = vperm.xlu0 %3543, %v666
      %v3545 = vpop.permute.xlu0 %3544
      %3547 = vset.pattern.permute.xlu0 5
      %3548 = vperm.xlu0 %3547, %v667
      %v3549 = vpop.permute.xlu0 %3548
      %3551 = vset.pattern.permute.xlu0 5
      %3552 = vperm.xlu0 %3551, %v668
      %v3553 = vpop.permute.xlu0 %3552
      %3555 = vset.pattern.permute.xlu0 5
      %3556 = vperm.xlu0 %3555, %v669
      %v3557 = vpop.permute.xlu0 %3556
      %3559 = vset.pattern.permute.xlu0 5
      %3560 = vperm.xlu0 %3559, %v670
      %v3561 = vpop.permute.xlu0 %3560
      %3563 = vset.pattern.permute.xlu0 5
      %3564 = vperm.xlu0 %3563, %v671
      %v3565 = vpop.permute.xlu0 %3564
      %3567 = vset.pattern.permute.xlu0 5
      %3568 = vperm.xlu0 %3567, %v672
      %v3569 = vpop.permute.xlu0 %3568
      %3571 = vset.pattern.permute.xlu0 5
      %3572 = vperm.xlu0 %3571, %v673
      %v3573 = vpop.permute.xlu0 %3572
      %3575 = vset.pattern.permute.xlu0 5
      %3576 = vperm.xlu0 %3575, %v674
      %v3577 = vpop.permute.xlu0 %3576
      %3579 = vset.pattern.permute.xlu0 5
      %3580 = vperm.xlu0 %3579, %v675
      %v3581 = vpop.permute.xlu0 %3580
      %3583 = vset.pattern.permute.xlu0 5
      %3584 = vperm.xlu0 %3583, %v676
      %v3585 = vpop.permute.xlu0 %3584
      %3587 = vset.pattern.permute.xlu0 5
      %3588 = vperm.xlu0 %3587, %v677
      %v3589 = vpop.permute.xlu0 %3588
      %3591 = vset.pattern.permute.xlu0 5
      %3592 = vperm.xlu0 %3591, %v678
      %v3593 = vpop.permute.xlu0 %3592
      %3595 = vset.pattern.permute.xlu0 5
      %3596 = vperm.xlu0 %3595, %v679
      %v3597 = vpop.permute.xlu0 %3596
      %v3599 = vsel %vm3503, %v3537, 0.0
      %v3600 = vsel %vm3504, %v3537, 0.0
      %v3601 = vsel %vm3505, %v3541, 0.0
      %v3602 = vsel %vm3506, %v3541, 0.0
      %v3603 = vsel %vm3507, %v3545, 0.0
      %v3604 = vsel %vm3508, %v3545, 0.0
      %v3605 = vsel %vm3509, %v3549, 0.0
      %v3606 = vsel %vm3510, %v3549, 0.0
      %v3607 = vsel %vm3511, %v3553, 0.0
      %v3608 = vsel %vm3512, %v3553, 0.0
      %v3609 = vsel %vm3513, %v3557, 0.0
      %v3610 = vsel %vm3514, %v3557, 0.0
      %v3611 = vsel %vm3515, %v3561, 0.0
      %v3612 = vsel %vm3516, %v3561, 0.0
      %v3613 = vsel %vm3517, %v3565, 0.0
      %v3614 = vsel %vm3518, %v3565, 0.0
      %v3615 = vsel %vm3519, %v3569, 0.0
      %v3616 = vsel %vm3520, %v3569, 0.0
      %v3617 = vsel %vm3521, %v3573, 0.0
      %v3618 = vsel %vm3522, %v3573, 0.0
      %v3619 = vsel %vm3523, %v3577, 0.0
      %v3620 = vsel %vm3524, %v3577, 0.0
      %v3621 = vsel %vm3525, %v3581, 0.0
      %v3622 = vsel %vm3526, %v3581, 0.0
      %v3623 = vsel %vm3527, %v3585, 0.0
      %v3624 = vsel %vm3528, %v3585, 0.0
      %v3625 = vsel %vm3529, %v3589, 0.0
      %v3626 = vsel %vm3530, %v3589, 0.0
      %v3627 = vsel %vm3531, %v3593, 0.0
      %v3628 = vsel %vm3532, %v3593, 0.0
      %v3629 = vsel %vm3533, %v3597, 0.0
      %v3630 = vsel %vm3534, %v3597, 0.0
      %3631 = vset.pattern.permute.xlu0 5
      %3632 = vperm.xlu0 %3631, %v1048
      %v3633 = vpop.permute.xlu0 %3632
      %3634 = vset.pattern.permute.xlu0 5
      %3635 = vperm.xlu0 %3634, %v1049
      %v3636 = vpop.permute.xlu0 %3635
      %3637 = vset.pattern.permute.xlu0 5
      %3638 = vperm.xlu0 %3637, %v1050
      %v3639 = vpop.permute.xlu0 %3638
      %3640 = vset.pattern.permute.xlu0 5
      %3641 = vperm.xlu0 %3640, %v1051
      %v3642 = vpop.permute.xlu0 %3641
      %3643 = vset.pattern.permute.xlu0 5
      %3644 = vperm.xlu0 %3643, %v1052
      %v3645 = vpop.permute.xlu0 %3644
      %3646 = vset.pattern.permute.xlu0 5
      %3647 = vperm.xlu0 %3646, %v1053
      %v3648 = vpop.permute.xlu0 %3647
      %3649 = vset.pattern.permute.xlu0 5
      %3650 = vperm.xlu0 %3649, %v1054
      %v3651 = vpop.permute.xlu0 %3650
      %3652 = vset.pattern.permute.xlu0 5
      %3653 = vperm.xlu0 %3652, %v1055
      %v3654 = vpop.permute.xlu0 %3653
      %3655 = vset.pattern.permute.xlu0 5
      %3656 = vperm.xlu0 %3655, %v1056
      %v3657 = vpop.permute.xlu0 %3656
      %3658 = vset.pattern.permute.xlu0 5
      %3659 = vperm.xlu0 %3658, %v1057
      %v3660 = vpop.permute.xlu0 %3659
      %3661 = vset.pattern.permute.xlu0 5
      %3662 = vperm.xlu0 %3661, %v1058
      %v3663 = vpop.permute.xlu0 %3662
      %3664 = vset.pattern.permute.xlu0 5
      %3665 = vperm.xlu0 %3664, %v1059
      %v3666 = vpop.permute.xlu0 %3665
      %3667 = vset.pattern.permute.xlu0 5
      %3668 = vperm.xlu0 %3667, %v1060
      %v3669 = vpop.permute.xlu0 %3668
      %3670 = vset.pattern.permute.xlu0 5
      %3671 = vperm.xlu0 %3670, %v1061
      %v3672 = vpop.permute.xlu0 %3671
      %3673 = vset.pattern.permute.xlu0 5
      %3674 = vperm.xlu0 %3673, %v1062
      %v3675 = vpop.permute.xlu0 %3674
      %3676 = vset.pattern.permute.xlu0 5
      %3677 = vperm.xlu0 %3676, %v1063
      %v3678 = vpop.permute.xlu0 %3677
      %vm3679 = vcmp.eq.s32.totalorder %v486, %v3633
      %vm3680 = vcmp.eq.s32.totalorder %v487, %v3633
      %vm3681 = vcmp.eq.s32.totalorder %v486, %v3636
      %vm3682 = vcmp.eq.s32.totalorder %v487, %v3636
      %vm3683 = vcmp.eq.s32.totalorder %v486, %v3639
      %vm3684 = vcmp.eq.s32.totalorder %v487, %v3639
      %vm3685 = vcmp.eq.s32.totalorder %v486, %v3642
      %vm3686 = vcmp.eq.s32.totalorder %v487, %v3642
      %vm3687 = vcmp.eq.s32.totalorder %v486, %v3645
      %vm3688 = vcmp.eq.s32.totalorder %v487, %v3645
      %vm3689 = vcmp.eq.s32.totalorder %v486, %v3648
      %vm3690 = vcmp.eq.s32.totalorder %v487, %v3648
      %vm3691 = vcmp.eq.s32.totalorder %v486, %v3651
      %vm3692 = vcmp.eq.s32.totalorder %v487, %v3651
      %vm3693 = vcmp.eq.s32.totalorder %v486, %v3654
      %vm3694 = vcmp.eq.s32.totalorder %v487, %v3654
      %vm3695 = vcmp.eq.s32.totalorder %v486, %v3657
      %vm3696 = vcmp.eq.s32.totalorder %v487, %v3657
      %vm3697 = vcmp.eq.s32.totalorder %v486, %v3660
      %vm3698 = vcmp.eq.s32.totalorder %v487, %v3660
      %vm3699 = vcmp.eq.s32.totalorder %v486, %v3663
      %vm3700 = vcmp.eq.s32.totalorder %v487, %v3663
      %vm3701 = vcmp.eq.s32.totalorder %v486, %v3666
      %vm3702 = vcmp.eq.s32.totalorder %v487, %v3666
      %vm3703 = vcmp.eq.s32.totalorder %v486, %v3669
      %vm3704 = vcmp.eq.s32.totalorder %v487, %v3669
      %vm3705 = vcmp.eq.s32.totalorder %v486, %v3672
      %vm3706 = vcmp.eq.s32.totalorder %v487, %v3672
      %vm3707 = vcmp.eq.s32.totalorder %v486, %v3675
      %vm3708 = vcmp.eq.s32.totalorder %v487, %v3675
      %vm3709 = vcmp.eq.s32.totalorder %v486, %v3678
      %vm3710 = vcmp.eq.s32.totalorder %v487, %v3678
      %3711 = vset.pattern.permute.xlu0 5
      %3712 = vperm.xlu0 %3711, %v1000
      %v3713 = vpop.permute.xlu0 %3712
      %3715 = vset.pattern.permute.xlu0 5
      %3716 = vperm.xlu0 %3715, %v1001
      %v3717 = vpop.permute.xlu0 %3716
      %3719 = vset.pattern.permute.xlu0 5
      %3720 = vperm.xlu0 %3719, %v1002
      %v3721 = vpop.permute.xlu0 %3720
      %3723 = vset.pattern.permute.xlu0 5
      %3724 = vperm.xlu0 %3723, %v1003
      %v3725 = vpop.permute.xlu0 %3724
      %3727 = vset.pattern.permute.xlu0 5
      %3728 = vperm.xlu0 %3727, %v1004
      %v3729 = vpop.permute.xlu0 %3728
      %3731 = vset.pattern.permute.xlu0 5
      %3732 = vperm.xlu0 %3731, %v1005
      %v3733 = vpop.permute.xlu0 %3732
      %3735 = vset.pattern.permute.xlu0 5
      %3736 = vperm.xlu0 %3735, %v1006
      %v3737 = vpop.permute.xlu0 %3736
      %3739 = vset.pattern.permute.xlu0 5
      %3740 = vperm.xlu0 %3739, %v1007
      %v3741 = vpop.permute.xlu0 %3740
      %3743 = vset.pattern.permute.xlu0 5
      %3744 = vperm.xlu0 %3743, %v1008
      %v3745 = vpop.permute.xlu0 %3744
      %3747 = vset.pattern.permute.xlu0 5
      %3748 = vperm.xlu0 %3747, %v1009
      %v3749 = vpop.permute.xlu0 %3748
      %3751 = vset.pattern.permute.xlu0 5
      %3752 = vperm.xlu0 %3751, %v1010
      %v3753 = vpop.permute.xlu0 %3752
      %3755 = vset.pattern.permute.xlu0 5
      %3756 = vperm.xlu0 %3755, %v1011
      %v3757 = vpop.permute.xlu0 %3756
      %3759 = vset.pattern.permute.xlu0 5
      %3760 = vperm.xlu0 %3759, %v1012
      %v3761 = vpop.permute.xlu0 %3760
      %3763 = vset.pattern.permute.xlu0 5
      %3764 = vperm.xlu0 %3763, %v1013
      %v3765 = vpop.permute.xlu0 %3764
      %3767 = vset.pattern.permute.xlu0 5
      %3768 = vperm.xlu0 %3767, %v1014
      %v3769 = vpop.permute.xlu0 %3768
      %3771 = vset.pattern.permute.xlu0 5
      %3772 = vperm.xlu0 %3771, %v1015
      %v3773 = vpop.permute.xlu0 %3772
      %v3775 = vsel %vm3679, %v3713, 0.0
      %v3776 = vsel %vm3680, %v3713, 0.0
      %v3777 = vsel %vm3681, %v3717, 0.0
      %v3778 = vsel %vm3682, %v3717, 0.0
      %v3779 = vsel %vm3683, %v3721, 0.0
      %v3780 = vsel %vm3684, %v3721, 0.0
      %v3781 = vsel %vm3685, %v3725, 0.0
      %v3782 = vsel %vm3686, %v3725, 0.0
      %v3783 = vsel %vm3687, %v3729, 0.0
      %v3784 = vsel %vm3688, %v3729, 0.0
      %v3785 = vsel %vm3689, %v3733, 0.0
      %v3786 = vsel %vm3690, %v3733, 0.0
      %v3787 = vsel %vm3691, %v3737, 0.0
      %v3788 = vsel %vm3692, %v3737, 0.0
      %v3789 = vsel %vm3693, %v3741, 0.0
      %v3790 = vsel %vm3694, %v3741, 0.0
      %v3791 = vsel %vm3695, %v3745, 0.0
      %v3792 = vsel %vm3696, %v3745, 0.0
      %v3793 = vsel %vm3697, %v3749, 0.0
      %v3794 = vsel %vm3698, %v3749, 0.0
      %v3795 = vsel %vm3699, %v3753, 0.0
      %v3796 = vsel %vm3700, %v3753, 0.0
      %v3797 = vsel %vm3701, %v3757, 0.0
      %v3798 = vsel %vm3702, %v3757, 0.0
      %v3799 = vsel %vm3703, %v3761, 0.0
      %v3800 = vsel %vm3704, %v3761, 0.0
      %v3801 = vsel %vm3705, %v3765, 0.0
      %v3802 = vsel %vm3706, %v3765, 0.0
      %v3803 = vsel %vm3707, %v3769, 0.0
      %v3804 = vsel %vm3708, %v3769, 0.0
      %v3805 = vsel %vm3709, %v3773, 0.0
      %v3806 = vsel %vm3710, %v3773, 0.0
      %v3807 = vadd.f32 %v3599, %v3775
      %v3808 = vadd.f32 %v3600, %v3776
      %v3809 = vadd.f32 %v3601, %v3777
      %v3810 = vadd.f32 %v3602, %v3778
      %v3811 = vadd.f32 %v3603, %v3779
      %v3812 = vadd.f32 %v3604, %v3780
      %v3813 = vadd.f32 %v3605, %v3781
      %v3814 = vadd.f32 %v3606, %v3782
      %v3815 = vadd.f32 %v3607, %v3783
      %v3816 = vadd.f32 %v3608, %v3784
      %v3817 = vadd.f32 %v3609, %v3785
      %v3818 = vadd.f32 %v3610, %v3786
      %v3819 = vadd.f32 %v3611, %v3787
      %v3820 = vadd.f32 %v3612, %v3788
      %v3821 = vadd.f32 %v3613, %v3789
      %v3822 = vadd.f32 %v3614, %v3790
      %v3823 = vadd.f32 %v3615, %v3791
      %v3824 = vadd.f32 %v3616, %v3792
      %v3825 = vadd.f32 %v3617, %v3793
      %v3826 = vadd.f32 %v3618, %v3794
      %v3827 = vadd.f32 %v3619, %v3795
      %v3828 = vadd.f32 %v3620, %v3796
      %v3829 = vadd.f32 %v3621, %v3797
      %v3830 = vadd.f32 %v3622, %v3798
      %v3831 = vadd.f32 %v3623, %v3799
      %v3832 = vadd.f32 %v3624, %v3800
      %v3833 = vadd.f32 %v3625, %v3801
      %v3834 = vadd.f32 %v3626, %v3802
      %v3835 = vadd.f32 %v3627, %v3803
      %v3836 = vadd.f32 %v3628, %v3804
      %v3837 = vadd.f32 %v3629, %v3805
      %v3838 = vadd.f32 %v3630, %v3806
      %3839 = vset.pattern.permute.xlu0 5
      %3840 = vperm.xlu0 %3839, %v1320
      %v3841 = vpop.permute.xlu0 %3840
      %3842 = vset.pattern.permute.xlu0 5
      %3843 = vperm.xlu0 %3842, %v1321
      %v3844 = vpop.permute.xlu0 %3843
      %3845 = vset.pattern.permute.xlu0 5
      %3846 = vperm.xlu0 %3845, %v1322
      %v3847 = vpop.permute.xlu0 %3846
      %3848 = vset.pattern.permute.xlu0 5
      %3849 = vperm.xlu0 %3848, %v1323
      %v3850 = vpop.permute.xlu0 %3849
      %3851 = vset.pattern.permute.xlu0 5
      %3852 = vperm.xlu0 %3851, %v1324
      %v3853 = vpop.permute.xlu0 %3852
      %3854 = vset.pattern.permute.xlu0 5
      %3855 = vperm.xlu0 %3854, %v1325
      %v3856 = vpop.permute.xlu0 %3855
      %3857 = vset.pattern.permute.xlu0 5
      %3858 = vperm.xlu0 %3857, %v1326
      %v3859 = vpop.permute.xlu0 %3858
      %3860 = vset.pattern.permute.xlu0 5
      %3861 = vperm.xlu0 %3860, %v1327
      %v3862 = vpop.permute.xlu0 %3861
      %3863 = vset.pattern.permute.xlu0 5
      %3864 = vperm.xlu0 %3863, %v1328
      %v3865 = vpop.permute.xlu0 %3864
      %3866 = vset.pattern.permute.xlu0 5
      %3867 = vperm.xlu0 %3866, %v1329
      %v3868 = vpop.permute.xlu0 %3867
      %3869 = vset.pattern.permute.xlu0 5
      %3870 = vperm.xlu0 %3869, %v1330
      %v3871 = vpop.permute.xlu0 %3870
      %3872 = vset.pattern.permute.xlu0 5
      %3873 = vperm.xlu0 %3872, %v1331
      %v3874 = vpop.permute.xlu0 %3873
      %3875 = vset.pattern.permute.xlu0 5
      %3876 = vperm.xlu0 %3875, %v1332
      %v3877 = vpop.permute.xlu0 %3876
      %3878 = vset.pattern.permute.xlu0 5
      %3879 = vperm.xlu0 %3878, %v1333
      %v3880 = vpop.permute.xlu0 %3879
      %3881 = vset.pattern.permute.xlu0 5
      %3882 = vperm.xlu0 %3881, %v1334
      %v3883 = vpop.permute.xlu0 %3882
      %3884 = vset.pattern.permute.xlu0 5
      %3885 = vperm.xlu0 %3884, %v1335
      %v3886 = vpop.permute.xlu0 %3885
      %vm3887 = vcmp.eq.s32.totalorder %v486, %v3841
      %vm3888 = vcmp.eq.s32.totalorder %v487, %v3841
      %vm3889 = vcmp.eq.s32.totalorder %v486, %v3844
      %vm3890 = vcmp.eq.s32.totalorder %v487, %v3844
      %vm3891 = vcmp.eq.s32.totalorder %v486, %v3847
      %vm3892 = vcmp.eq.s32.totalorder %v487, %v3847
      %vm3893 = vcmp.eq.s32.totalorder %v486, %v3850
      %vm3894 = vcmp.eq.s32.totalorder %v487, %v3850
      %vm3895 = vcmp.eq.s32.totalorder %v486, %v3853
      %vm3896 = vcmp.eq.s32.totalorder %v487, %v3853
      %vm3897 = vcmp.eq.s32.totalorder %v486, %v3856
      %vm3898 = vcmp.eq.s32.totalorder %v487, %v3856
      %vm3899 = vcmp.eq.s32.totalorder %v486, %v3859
      %vm3900 = vcmp.eq.s32.totalorder %v487, %v3859
      %vm3901 = vcmp.eq.s32.totalorder %v486, %v3862
      %vm3902 = vcmp.eq.s32.totalorder %v487, %v3862
      %vm3903 = vcmp.eq.s32.totalorder %v486, %v3865
      %vm3904 = vcmp.eq.s32.totalorder %v487, %v3865
      %vm3905 = vcmp.eq.s32.totalorder %v486, %v3868
      %vm3906 = vcmp.eq.s32.totalorder %v487, %v3868
      %vm3907 = vcmp.eq.s32.totalorder %v486, %v3871
      %vm3908 = vcmp.eq.s32.totalorder %v487, %v3871
      %vm3909 = vcmp.eq.s32.totalorder %v486, %v3874
      %vm3910 = vcmp.eq.s32.totalorder %v487, %v3874
      %vm3911 = vcmp.eq.s32.totalorder %v486, %v3877
      %vm3912 = vcmp.eq.s32.totalorder %v487, %v3877
      %vm3913 = vcmp.eq.s32.totalorder %v486, %v3880
      %vm3914 = vcmp.eq.s32.totalorder %v487, %v3880
      %vm3915 = vcmp.eq.s32.totalorder %v486, %v3883
      %vm3916 = vcmp.eq.s32.totalorder %v487, %v3883
      %vm3917 = vcmp.eq.s32.totalorder %v486, %v3886
      %vm3918 = vcmp.eq.s32.totalorder %v487, %v3886
      %3919 = vset.pattern.permute.xlu0 5
      %3920 = vperm.xlu0 %3919, %v1288
      %v3921 = vpop.permute.xlu0 %3920
      %3923 = vset.pattern.permute.xlu0 5
      %3924 = vperm.xlu0 %3923, %v1289
      %v3925 = vpop.permute.xlu0 %3924
      %3927 = vset.pattern.permute.xlu0 5
      %3928 = vperm.xlu0 %3927, %v1290
      %v3929 = vpop.permute.xlu0 %3928
      %3931 = vset.pattern.permute.xlu0 5
      %3932 = vperm.xlu0 %3931, %v1291
      %v3933 = vpop.permute.xlu0 %3932
      %3935 = vset.pattern.permute.xlu0 5
      %3936 = vperm.xlu0 %3935, %v1292
      %v3937 = vpop.permute.xlu0 %3936
      %3939 = vset.pattern.permute.xlu0 5
      %3940 = vperm.xlu0 %3939, %v1293
      %v3941 = vpop.permute.xlu0 %3940
      %3943 = vset.pattern.permute.xlu0 5
      %3944 = vperm.xlu0 %3943, %v1294
      %v3945 = vpop.permute.xlu0 %3944
      %3947 = vset.pattern.permute.xlu0 5
      %3948 = vperm.xlu0 %3947, %v1295
      %v3949 = vpop.permute.xlu0 %3948
      %3951 = vset.pattern.permute.xlu0 5
      %3952 = vperm.xlu0 %3951, %v1296
      %v3953 = vpop.permute.xlu0 %3952
      %3955 = vset.pattern.permute.xlu0 5
      %3956 = vperm.xlu0 %3955, %v1297
      %v3957 = vpop.permute.xlu0 %3956
      %3959 = vset.pattern.permute.xlu0 5
      %3960 = vperm.xlu0 %3959, %v1298
      %v3961 = vpop.permute.xlu0 %3960
      %3963 = vset.pattern.permute.xlu0 5
      %3964 = vperm.xlu0 %3963, %v1299
      %v3965 = vpop.permute.xlu0 %3964
      %3967 = vset.pattern.permute.xlu0 5
      %3968 = vperm.xlu0 %3967, %v1300
      %v3969 = vpop.permute.xlu0 %3968
      %3971 = vset.pattern.permute.xlu0 5
      %3972 = vperm.xlu0 %3971, %v1301
      %v3973 = vpop.permute.xlu0 %3972
      %3975 = vset.pattern.permute.xlu0 5
      %3976 = vperm.xlu0 %3975, %v1302
      %v3977 = vpop.permute.xlu0 %3976
      %3979 = vset.pattern.permute.xlu0 5
      %3980 = vperm.xlu0 %3979, %v1303
      %v3981 = vpop.permute.xlu0 %3980
      %v3983 = vsel %vm3887, %v3921, 0.0
      %v3984 = vsel %vm3888, %v3921, 0.0
      %v3985 = vsel %vm3889, %v3925, 0.0
      %v3986 = vsel %vm3890, %v3925, 0.0
      %v3987 = vsel %vm3891, %v3929, 0.0
      %v3988 = vsel %vm3892, %v3929, 0.0
      %v3989 = vsel %vm3893, %v3933, 0.0
      %v3990 = vsel %vm3894, %v3933, 0.0
      %v3991 = vsel %vm3895, %v3937, 0.0
      %v3992 = vsel %vm3896, %v3937, 0.0
      %v3993 = vsel %vm3897, %v3941, 0.0
      %v3994 = vsel %vm3898, %v3941, 0.0
      %v3995 = vsel %vm3899, %v3945, 0.0
      %v3996 = vsel %vm3900, %v3945, 0.0
      %v3997 = vsel %vm3901, %v3949, 0.0
      %v3998 = vsel %vm3902, %v3949, 0.0
      %v3999 = vsel %vm3903, %v3953, 0.0
      %v4000 = vsel %vm3904, %v3953, 0.0
      %v4001 = vsel %vm3905, %v3957, 0.0
      %v4002 = vsel %vm3906, %v3957, 0.0
      %v4003 = vsel %vm3907, %v3961, 0.0
      %v4004 = vsel %vm3908, %v3961, 0.0
      %v4005 = vsel %vm3909, %v3965, 0.0
      %v4006 = vsel %vm3910, %v3965, 0.0
      %v4007 = vsel %vm3911, %v3969, 0.0
      %v4008 = vsel %vm3912, %v3969, 0.0
      %v4009 = vsel %vm3913, %v3973, 0.0
      %v4010 = vsel %vm3914, %v3973, 0.0
      %v4011 = vsel %vm3915, %v3977, 0.0
      %v4012 = vsel %vm3916, %v3977, 0.0
      %v4013 = vsel %vm3917, %v3981, 0.0
      %v4014 = vsel %vm3918, %v3981, 0.0
      %v4015 = vadd.f32 %v3807, %v3983
      %v4016 = vadd.f32 %v3808, %v3984
      %v4017 = vadd.f32 %v3809, %v3985
      %v4018 = vadd.f32 %v3810, %v3986
      %v4019 = vadd.f32 %v3811, %v3987
      %v4020 = vadd.f32 %v3812, %v3988
      %v4021 = vadd.f32 %v3813, %v3989
      %v4022 = vadd.f32 %v3814, %v3990
      %v4023 = vadd.f32 %v3815, %v3991
      %v4024 = vadd.f32 %v3816, %v3992
      %v4025 = vadd.f32 %v3817, %v3993
      %v4026 = vadd.f32 %v3818, %v3994
      %v4027 = vadd.f32 %v3819, %v3995
      %v4028 = vadd.f32 %v3820, %v3996
      %v4029 = vadd.f32 %v3821, %v3997
      %v4030 = vadd.f32 %v3822, %v3998
      %v4031 = vadd.f32 %v3823, %v3999
      %v4032 = vadd.f32 %v3824, %v4000
      %v4033 = vadd.f32 %v3825, %v4001
      %v4034 = vadd.f32 %v3826, %v4002
      %v4035 = vadd.f32 %v3827, %v4003
      %v4036 = vadd.f32 %v3828, %v4004
      %v4037 = vadd.f32 %v3829, %v4005
      %v4038 = vadd.f32 %v3830, %v4006
      %v4039 = vadd.f32 %v3831, %v4007
      %v4040 = vadd.f32 %v3832, %v4008
      %v4041 = vadd.f32 %v3833, %v4009
      %v4042 = vadd.f32 %v3834, %v4010
      %v4043 = vadd.f32 %v3835, %v4011
      %v4044 = vadd.f32 %v3836, %v4012
      %v4045 = vadd.f32 %v3837, %v4013
      %v4046 = vadd.f32 %v3838, %v4014
      %4047 = vset.pattern.permute.xlu0 5
      %4048 = vperm.xlu0 %4047, %v1576
      %v4049 = vpop.permute.xlu0 %4048
      %4050 = vset.pattern.permute.xlu0 5
      %4051 = vperm.xlu0 %4050, %v1577
      %v4052 = vpop.permute.xlu0 %4051
      %4053 = vset.pattern.permute.xlu0 5
      %4054 = vperm.xlu0 %4053, %v1578
      %v4055 = vpop.permute.xlu0 %4054
      %4056 = vset.pattern.permute.xlu0 5
      %4057 = vperm.xlu0 %4056, %v1579
      %v4058 = vpop.permute.xlu0 %4057
      %4059 = vset.pattern.permute.xlu0 5
      %4060 = vperm.xlu0 %4059, %v1580
      %v4061 = vpop.permute.xlu0 %4060
      %4062 = vset.pattern.permute.xlu0 5
      %4063 = vperm.xlu0 %4062, %v1581
      %v4064 = vpop.permute.xlu0 %4063
      %4065 = vset.pattern.permute.xlu0 5
      %4066 = vperm.xlu0 %4065, %v1582
      %v4067 = vpop.permute.xlu0 %4066
      %4068 = vset.pattern.permute.xlu0 5
      %4069 = vperm.xlu0 %4068, %v1583
      %v4070 = vpop.permute.xlu0 %4069
      %4071 = vset.pattern.permute.xlu0 5
      %4072 = vperm.xlu0 %4071, %v1584
      %v4073 = vpop.permute.xlu0 %4072
      %4074 = vset.pattern.permute.xlu0 5
      %4075 = vperm.xlu0 %4074, %v1585
      %v4076 = vpop.permute.xlu0 %4075
      %4077 = vset.pattern.permute.xlu0 5
      %4078 = vperm.xlu0 %4077, %v1586
      %v4079 = vpop.permute.xlu0 %4078
      %4080 = vset.pattern.permute.xlu0 5
      %4081 = vperm.xlu0 %4080, %v1587
      %v4082 = vpop.permute.xlu0 %4081
      %4083 = vset.pattern.permute.xlu0 5
      %4084 = vperm.xlu0 %4083, %v1588
      %v4085 = vpop.permute.xlu0 %4084
      %4086 = vset.pattern.permute.xlu0 5
      %4087 = vperm.xlu0 %4086, %v1589
      %v4088 = vpop.permute.xlu0 %4087
      %4089 = vset.pattern.permute.xlu0 5
      %4090 = vperm.xlu0 %4089, %v1590
      %v4091 = vpop.permute.xlu0 %4090
      %4092 = vset.pattern.permute.xlu0 5
      %4093 = vperm.xlu0 %4092, %v1591
      %v4094 = vpop.permute.xlu0 %4093
      %vm4095 = vcmp.eq.s32.totalorder %v486, %v4049
      %vm4096 = vcmp.eq.s32.totalorder %v487, %v4049
      %vm4097 = vcmp.eq.s32.totalorder %v486, %v4052
      %vm4098 = vcmp.eq.s32.totalorder %v487, %v4052
      %vm4099 = vcmp.eq.s32.totalorder %v486, %v4055
      %vm4100 = vcmp.eq.s32.totalorder %v487, %v4055
      %vm4101 = vcmp.eq.s32.totalorder %v486, %v4058
      %vm4102 = vcmp.eq.s32.totalorder %v487, %v4058
      %vm4103 = vcmp.eq.s32.totalorder %v486, %v4061
      %vm4104 = vcmp.eq.s32.totalorder %v487, %v4061
      %vm4105 = vcmp.eq.s32.totalorder %v486, %v4064
      %vm4106 = vcmp.eq.s32.totalorder %v487, %v4064
      %vm4107 = vcmp.eq.s32.totalorder %v486, %v4067
      %vm4108 = vcmp.eq.s32.totalorder %v487, %v4067
      %vm4109 = vcmp.eq.s32.totalorder %v486, %v4070
      %vm4110 = vcmp.eq.s32.totalorder %v487, %v4070
      %vm4111 = vcmp.eq.s32.totalorder %v486, %v4073
      %vm4112 = vcmp.eq.s32.totalorder %v487, %v4073
      %vm4113 = vcmp.eq.s32.totalorder %v486, %v4076
      %vm4114 = vcmp.eq.s32.totalorder %v487, %v4076
      %vm4115 = vcmp.eq.s32.totalorder %v486, %v4079
      %vm4116 = vcmp.eq.s32.totalorder %v487, %v4079
      %vm4117 = vcmp.eq.s32.totalorder %v486, %v4082
      %vm4118 = vcmp.eq.s32.totalorder %v487, %v4082
      %vm4119 = vcmp.eq.s32.totalorder %v486, %v4085
      %vm4120 = vcmp.eq.s32.totalorder %v487, %v4085
      %vm4121 = vcmp.eq.s32.totalorder %v486, %v4088
      %vm4122 = vcmp.eq.s32.totalorder %v487, %v4088
      %vm4123 = vcmp.eq.s32.totalorder %v486, %v4091
      %vm4124 = vcmp.eq.s32.totalorder %v487, %v4091
      %vm4125 = vcmp.eq.s32.totalorder %v486, %v4094
      %vm4126 = vcmp.eq.s32.totalorder %v487, %v4094
      %4127 = vset.pattern.permute.xlu0 5
      %4128 = vperm.xlu0 %4127, %v1560
      %v4129 = vpop.permute.xlu0 %4128
      %4131 = vset.pattern.permute.xlu0 5
      %4132 = vperm.xlu0 %4131, %v1561
      %v4133 = vpop.permute.xlu0 %4132
      %4135 = vset.pattern.permute.xlu0 5
      %4136 = vperm.xlu0 %4135, %v1562
      %v4137 = vpop.permute.xlu0 %4136
      %4139 = vset.pattern.permute.xlu0 5
      %4140 = vperm.xlu0 %4139, %v1563
      %v4141 = vpop.permute.xlu0 %4140
      %4143 = vset.pattern.permute.xlu0 5
      %4144 = vperm.xlu0 %4143, %v1564
      %v4145 = vpop.permute.xlu0 %4144
      %4147 = vset.pattern.permute.xlu0 5
      %4148 = vperm.xlu0 %4147, %v1565
      %v4149 = vpop.permute.xlu0 %4148
      %4151 = vset.pattern.permute.xlu0 5
      %4152 = vperm.xlu0 %4151, %v1566
      %v4153 = vpop.permute.xlu0 %4152
      %4155 = vset.pattern.permute.xlu0 5
      %4156 = vperm.xlu0 %4155, %v1567
      %v4157 = vpop.permute.xlu0 %4156
      %4159 = vset.pattern.permute.xlu0 5
      %4160 = vperm.xlu0 %4159, %v1568
      %v4161 = vpop.permute.xlu0 %4160
      %4163 = vset.pattern.permute.xlu0 5
      %4164 = vperm.xlu0 %4163, %v1569
      %v4165 = vpop.permute.xlu0 %4164
      %4167 = vset.pattern.permute.xlu0 5
      %4168 = vperm.xlu0 %4167, %v1570
      %v4169 = vpop.permute.xlu0 %4168
      %4171 = vset.pattern.permute.xlu0 5
      %4172 = vperm.xlu0 %4171, %v1571
      %v4173 = vpop.permute.xlu0 %4172
      %4175 = vset.pattern.permute.xlu0 5
      %4176 = vperm.xlu0 %4175, %v1572
      %v4177 = vpop.permute.xlu0 %4176
      %4179 = vset.pattern.permute.xlu0 5
      %4180 = vperm.xlu0 %4179, %v1573
      %v4181 = vpop.permute.xlu0 %4180
      %4183 = vset.pattern.permute.xlu0 5
      %4184 = vperm.xlu0 %4183, %v1574
      %v4185 = vpop.permute.xlu0 %4184
      %4187 = vset.pattern.permute.xlu0 5
      %4188 = vperm.xlu0 %4187, %v1575
      %v4189 = vpop.permute.xlu0 %4188
      %v4191 = vsel %vm4095, %v4129, 0.0
      %v4192 = vsel %vm4096, %v4129, 0.0
      %v4193 = vsel %vm4097, %v4133, 0.0
      %v4194 = vsel %vm4098, %v4133, 0.0
      %v4195 = vsel %vm4099, %v4137, 0.0
      %v4196 = vsel %vm4100, %v4137, 0.0
      %v4197 = vsel %vm4101, %v4141, 0.0
      %v4198 = vsel %vm4102, %v4141, 0.0
      %v4199 = vsel %vm4103, %v4145, 0.0
      %v4200 = vsel %vm4104, %v4145, 0.0
      %v4201 = vsel %vm4105, %v4149, 0.0
      %v4202 = vsel %vm4106, %v4149, 0.0
      %v4203 = vsel %vm4107, %v4153, 0.0
      %v4204 = vsel %vm4108, %v4153, 0.0
      %v4205 = vsel %vm4109, %v4157, 0.0
      %v4206 = vsel %vm4110, %v4157, 0.0
      %v4207 = vsel %vm4111, %v4161, 0.0
      %v4208 = vsel %vm4112, %v4161, 0.0
      %v4209 = vsel %vm4113, %v4165, 0.0
      %v4210 = vsel %vm4114, %v4165, 0.0
      %v4211 = vsel %vm4115, %v4169, 0.0
      %v4212 = vsel %vm4116, %v4169, 0.0
      %v4213 = vsel %vm4117, %v4173, 0.0
      %v4214 = vsel %vm4118, %v4173, 0.0
      %v4215 = vsel %vm4119, %v4177, 0.0
      %v4216 = vsel %vm4120, %v4177, 0.0
      %v4217 = vsel %vm4121, %v4181, 0.0
      %v4218 = vsel %vm4122, %v4181, 0.0
      %v4219 = vsel %vm4123, %v4185, 0.0
      %v4220 = vsel %vm4124, %v4185, 0.0
      %v4221 = vsel %vm4125, %v4189, 0.0
      %v4222 = vsel %vm4126, %v4189, 0.0
      %v4223 = vadd.f32 %v4015, %v4191
      %v4224 = vadd.f32 %v4016, %v4192
      %v4225 = vadd.f32 %v4017, %v4193
      %v4226 = vadd.f32 %v4018, %v4194
      %v4227 = vadd.f32 %v4019, %v4195
      %v4228 = vadd.f32 %v4020, %v4196
      %v4229 = vadd.f32 %v4021, %v4197
      %v4230 = vadd.f32 %v4022, %v4198
      %v4231 = vadd.f32 %v4023, %v4199
      %v4232 = vadd.f32 %v4024, %v4200
      %v4233 = vadd.f32 %v4025, %v4201
      %v4234 = vadd.f32 %v4026, %v4202
      %v4235 = vadd.f32 %v4027, %v4203
      %v4236 = vadd.f32 %v4028, %v4204
      %v4237 = vadd.f32 %v4029, %v4205
      %v4238 = vadd.f32 %v4030, %v4206
      %v4239 = vadd.f32 %v4031, %v4207
      %v4240 = vadd.f32 %v4032, %v4208
      %v4241 = vadd.f32 %v4033, %v4209
      %v4242 = vadd.f32 %v4034, %v4210
      %v4243 = vadd.f32 %v4035, %v4211
      %v4244 = vadd.f32 %v4036, %v4212
      %v4245 = vadd.f32 %v4037, %v4213
      %v4246 = vadd.f32 %v4038, %v4214
      %v4247 = vadd.f32 %v4039, %v4215
      %v4248 = vadd.f32 %v4040, %v4216
      %v4249 = vadd.f32 %v4041, %v4217
      %v4250 = vadd.f32 %v4042, %v4218
      %v4251 = vadd.f32 %v4043, %v4219
      %v4252 = vadd.f32 %v4044, %v4220
      %v4253 = vadd.f32 %v4045, %v4221
      %v4254 = vadd.f32 %v4046, %v4222
      %4255 = vrot.lane.b32.xlu0 %v1816, 112
      %v4256 = vpop.permute.xlu0 %4255
      %4257 = vrot.lane.b32.xlu0 %v1817, 112
      %v4258 = vpop.permute.xlu0 %4257
      %4259 = vrot.lane.b32.xlu0 %v1818, 112
      %v4260 = vpop.permute.xlu0 %4259
      %4261 = vrot.lane.b32.xlu0 %v1819, 112
      %v4262 = vpop.permute.xlu0 %4261
      %4263 = vrot.lane.b32.xlu0 %v1820, 112
      %v4264 = vpop.permute.xlu0 %4263
      %4265 = vrot.lane.b32.xlu0 %v1821, 112
      %v4266 = vpop.permute.xlu0 %4265
      %4267 = vrot.lane.b32.xlu0 %v1822, 112
      %v4268 = vpop.permute.xlu0 %4267
      %4269 = vrot.lane.b32.xlu0 %v1823, 112
      %v4270 = vpop.permute.xlu0 %4269
      %4271 = vrot.lane.b32.xlu0 %v1824, 112
      %v4272 = vpop.permute.xlu0 %4271
      %4273 = vrot.lane.b32.xlu0 %v1825, 112
      %v4274 = vpop.permute.xlu0 %4273
      %4275 = vrot.lane.b32.xlu0 %v1826, 112
      %v4276 = vpop.permute.xlu0 %4275
      %4277 = vrot.lane.b32.xlu0 %v1827, 112
      %v4278 = vpop.permute.xlu0 %4277
      %4279 = vrot.lane.b32.xlu0 %v1828, 112
      %v4280 = vpop.permute.xlu0 %4279
      %4281 = vrot.lane.b32.xlu0 %v1829, 112
      %v4282 = vpop.permute.xlu0 %4281
      %4283 = vrot.lane.b32.xlu0 %v1830, 112
      %v4284 = vpop.permute.xlu0 %4283
      %4285 = vrot.lane.b32.xlu0 %v1831, 112
      %v4286 = vpop.permute.xlu0 %4285
      %4287 = vrot.lane.b32.xlu0 %v1832, 112
      %v4288 = vpop.permute.xlu0 %4287
      %4289 = vrot.lane.b32.xlu0 %v1833, 112
      %v4290 = vpop.permute.xlu0 %4289
      %4291 = vrot.lane.b32.xlu0 %v1834, 112
      %v4292 = vpop.permute.xlu0 %4291
      %4293 = vrot.lane.b32.xlu0 %v1835, 112
      %v4294 = vpop.permute.xlu0 %4293
      %4295 = vrot.lane.b32.xlu0 %v1836, 112
      %v4296 = vpop.permute.xlu0 %4295
      %4297 = vrot.lane.b32.xlu0 %v1837, 112
      %v4298 = vpop.permute.xlu0 %4297
      %4299 = vrot.lane.b32.xlu0 %v1838, 112
      %v4300 = vpop.permute.xlu0 %4299
      %4301 = vrot.lane.b32.xlu0 %v1839, 112
      %v4302 = vpop.permute.xlu0 %4301
      %4303 = vrot.lane.b32.xlu0 %v1840, 112
      %v4304 = vpop.permute.xlu0 %4303
      %4305 = vrot.lane.b32.xlu0 %v1841, 112
      %v4306 = vpop.permute.xlu0 %4305
      %4307 = vrot.lane.b32.xlu0 %v1842, 112
      %v4308 = vpop.permute.xlu0 %4307
      %4309 = vrot.lane.b32.xlu0 %v1843, 112
      %v4310 = vpop.permute.xlu0 %4309
      %4311 = vrot.lane.b32.xlu0 %v1844, 112
      %v4312 = vpop.permute.xlu0 %4311
      %4313 = vrot.lane.b32.xlu0 %v1845, 112
      %v4314 = vpop.permute.xlu0 %4313
      %4315 = vrot.lane.b32.xlu0 %v1846, 112
      %v4316 = vpop.permute.xlu0 %4315
      %4317 = vrot.lane.b32.xlu0 %v1847, 112
      %v4318 = vpop.permute.xlu0 %4317
      %4351 = vmatprep.subr.mxu0 0.0
      %4352 = vmatpush1.msra.mxu0 %v4256
      %4353 = vmatprep.subr.mxu0 0.0
      %4354 = vmatpush1.msra.mxu0 %v4258
      %4355 = vmatprep.subr.mxu0 0.0
      %4356 = vmatpush1.msra.mxu0 %v4260
      %4357 = vmatprep.subr.mxu0 0.0
      %4358 = vmatpush1.msra.mxu0 %v4262
      %4359 = vmatprep.subr.mxu0 0.0
      %4360 = vmatpush1.msra.mxu0 %v4264
      %4361 = vmatprep.subr.mxu0 0.0
      %4362 = vmatpush1.msra.mxu0 %v4266
      %4363 = vmatprep.subr.mxu0 0.0
      %4364 = vmatpush1.msra.mxu0 %v4268
      %4365 = vmatprep.subr.mxu0 0.0
      %4366 = vmatpush1.msra.mxu0 %v4270
      %4367 = vmatprep.subr.mxu0 0.0
      %4368 = vmatpush1.msra.mxu0 %v4272
      %4369 = vmatprep.subr.mxu0 0.0
      %4370 = vmatpush1.msra.mxu0 %v4274
      %4371 = vmatprep.subr.mxu0 0.0
      %4372 = vmatpush1.msra.mxu0 %v4276
      %4373 = vmatprep.subr.mxu0 0.0
      %4374 = vmatpush1.msra.mxu0 %v4278
      %4375 = vmatprep.subr.mxu0 0.0
      %4376 = vmatpush1.msra.mxu0 %v4280
      %4377 = vmatprep.subr.mxu0 0.0
      %4378 = vmatpush1.msra.mxu0 %v4282
      %4379 = vmatprep.subr.mxu0 0.0
      %4380 = vmatpush1.msra.mxu0 %v4284
      %4381 = vmatprep.subr.mxu0 0.0
      %4382 = vmatpush1.msra.mxu0 %v4286
      %4383 = vmatprep.subr.mxu0 0.0
      %4384 = vmatpush1.msra.mxu0 %v4288
      %4385 = vmatprep.subr.mxu0 0.0
      %4386 = vmatpush1.msra.mxu0 %v4290
      %4387 = vmatprep.subr.mxu0 0.0
      %4388 = vmatpush1.msra.mxu0 %v4292
      %4389 = vmatprep.subr.mxu0 0.0
      %4390 = vmatpush1.msra.mxu0 %v4294
      %4391 = vmatprep.subr.mxu0 0.0
      %4392 = vmatpush1.msra.mxu0 %v4296
      %4393 = vmatprep.subr.mxu0 0.0
      %4394 = vmatpush1.msra.mxu0 %v4298
      %4395 = vmatprep.subr.mxu0 0.0
      %4396 = vmatpush1.msra.mxu0 %v4300
      %4397 = vmatprep.subr.mxu0 0.0
      %4398 = vmatpush1.msra.mxu0 %v4302
      %4399 = vmatprep.subr.mxu0 0.0
      %4400 = vmatpush1.msra.mxu0 %v4304
      %4401 = vmatprep.subr.mxu0 0.0
      %4402 = vmatpush1.msra.mxu0 %v4306
      %4403 = vmatprep.subr.mxu0 0.0
      %4404 = vmatpush1.msra.mxu0 %v4308
      %4405 = vmatprep.subr.mxu0 0.0
      %4406 = vmatpush1.msra.mxu0 %v4310
      %4407 = vmatprep.subr.mxu0 0.0
      %4408 = vmatpush1.msra.mxu0 %v4312
      %4409 = vmatprep.subr.mxu0 0.0
      %4410 = vmatpush1.msra.mxu0 %v4314
      %4411 = vmatprep.subr.mxu0 0.0
      %4412 = vmatpush1.msra.mxu0 %v4316
      %4413 = vmatprep.subr.mxu0 0.0
      %4414 = vmatpush1.msra.mxu0 %v4318
      %4415 = vmatprep.mubr.f32.mxu0 %v4224
      %4416 = vmatmul.mubr.f32.gmra.mrb[0].mxu0 %v4223
      %v4417 = vpop.f32.mrb[0].mxu0
      %v4418 = vadd.f32 0.0, %v4417
      %v4419 = vpop.f32.mrb[0].mxu0
      %4420 = vmatprep.mubr.f32.mxu0 %v4226
      %4421 = vmatmul.mubr.f32.gmra.mrb[0].mxu0 %v4225
      %v4422 = vpop.f32.mrb[0].mxu0
      %v4423 = vadd.f32 0.0, %v4422
      %v4424 = vpop.f32.mrb[0].mxu0
      %4425 = vmatprep.mubr.f32.mxu0 %v4228
      %4426 = vmatmul.mubr.f32.gmra.mrb[0].mxu0 %v4227
      %v4427 = vpop.f32.mrb[0].mxu0
      %v4428 = vadd.f32 0.0, %v4427
      %v4429 = vpop.f32.mrb[0].mxu0
      %4430 = vmatprep.mubr.f32.mxu0 %v4230
      %4431 = vmatmul.mubr.f32.gmra.mrb[0].mxu0 %v4229
      %v4432 = vpop.f32.mrb[0].mxu0
      %v4433 = vadd.f32 0.0, %v4432
      %v4434 = vpop.f32.mrb[0].mxu0
      %4435 = vmatprep.mubr.f32.mxu0 %v4232
      %4436 = vmatmul.mubr.f32.gmra.mrb[0].mxu0 %v4231
      %v4437 = vpop.f32.mrb[0].mxu0
      %v4438 = vadd.f32 0.0, %v4437
      %v4439 = vpop.f32.mrb[0].mxu0
      %4440 = vmatprep.mubr.f32.mxu0 %v4234
      %4441 = vmatmul.mubr.f32.gmra.mrb[0].mxu0 %v4233
      %v4442 = vpop.f32.mrb[0].mxu0
      %v4443 = vadd.f32 0.0, %v4442
      %v4444 = vpop.f32.mrb[0].mxu0
      %4445 = vmatprep.mubr.f32.mxu0 %v4236
      %4446 = vmatmul.mubr.f32.gmra.mrb[0].mxu0 %v4235
      %v4447 = vpop.f32.mrb[0].mxu0
      %v4448 = vadd.f32 0.0, %v4447
      %v4449 = vpop.f32.mrb[0].mxu0
      %4450 = vmatprep.mubr.f32.mxu0 %v4238
      %4451 = vmatmul.mubr.f32.gmra.mrb[0].mxu0 %v4237
      %v4452 = vpop.f32.mrb[0].mxu0
      %v4453 = vadd.f32 0.0, %v4452
      %v4454 = vpop.f32.mrb[0].mxu0
      %4455 = vmatprep.mubr.f32.mxu0 %v4240
      %4456 = vmatmul.mubr.f32.gmra.mrb[0].mxu0 %v4239
      %v4457 = vpop.f32.mrb[0].mxu0
      %v4458 = vadd.f32 0.0, %v4457
      %v4459 = vpop.f32.mrb[0].mxu0
      %4460 = vmatprep.mubr.f32.mxu0 %v4242
      %4461 = vmatmul.mubr.f32.gmra.mrb[0].mxu0 %v4241
      %v4462 = vpop.f32.mrb[0].mxu0
      %v4463 = vadd.f32 0.0, %v4462
      %v4464 = vpop.f32.mrb[0].mxu0
      %4465 = vmatprep.mubr.f32.mxu0 %v4244
      %4466 = vmatmul.mubr.f32.gmra.mrb[0].mxu0 %v4243
      %v4467 = vpop.f32.mrb[0].mxu0
      %v4468 = vadd.f32 0.0, %v4467
      %v4469 = vpop.f32.mrb[0].mxu0
      %4470 = vmatprep.mubr.f32.mxu0 %v4246
      %4471 = vmatmul.mubr.f32.gmra.mrb[0].mxu0 %v4245
      %v4472 = vpop.f32.mrb[0].mxu0
      %v4473 = vadd.f32 0.0, %v4472
      %v4474 = vpop.f32.mrb[0].mxu0
      %4475 = vmatprep.mubr.f32.mxu0 %v4248
      %4476 = vmatmul.mubr.f32.gmra.mrb[0].mxu0 %v4247
      %v4477 = vpop.f32.mrb[0].mxu0
      %v4478 = vadd.f32 0.0, %v4477
      %v4479 = vpop.f32.mrb[0].mxu0
      %4480 = vmatprep.mubr.f32.mxu0 %v4250
      %4481 = vmatmul.mubr.f32.gmra.mrb[0].mxu0 %v4249
      %v4482 = vpop.f32.mrb[0].mxu0
      %v4483 = vadd.f32 0.0, %v4482
      %v4484 = vpop.f32.mrb[0].mxu0
      %4485 = vmatprep.mubr.f32.mxu0 %v4252
      %4486 = vmatmul.mubr.f32.gmra.mrb[0].mxu0 %v4251
      %v4487 = vpop.f32.mrb[0].mxu0
      %v4488 = vadd.f32 0.0, %v4487
      %v4489 = vpop.f32.mrb[0].mxu0
      %4490 = vmatprep.mubr.f32.mxu0 %v4254
      %4491 = vmatmul.mubr.f32.gmra.mrb[0].mxu0 %v4253
      %v4492 = vpop.f32.mrb[0].mxu0
      %v4493 = vadd.f32 0.0, %v4492
      %v4494 = vpop.f32.mrb[0].mxu0
      %4495 = vdwg.mxu0
      %v4496 = vld [vmem:[%s2 + $0x10] sm:$0xff]
      %v4498 = vsel %vm3068, %v4418, 0
      %v4501 = vsel %vm3068, %v4423, 0
      %v4504 = vsel %vm3068, %v4428, 0
      %v4507 = vsel %vm3068, %v4433, 0
      %v4510 = vsel %vm3068, %v4438, 0
      %v4513 = vsel %vm3068, %v4443, 0
      %v4516 = vsel %vm3068, %v4448, 0
      %v4519 = vsel %vm3068, %v4453, 0
      %v4522 = vsel %vm3068, %v4458, 0
      %v4525 = vsel %vm3068, %v4463, 0
      %v4528 = vsel %vm3068, %v4468, 0
      %v4531 = vsel %vm3068, %v4473, 0
      %v4534 = vsel %vm3068, %v4478, 0
      %v4537 = vsel %vm3068, %v4483, 0
      %v4540 = vsel %vm3068, %v4488, 0
      %v4543 = vsel %vm3068, %v4493, 0
      %4545 = vmatprep.subr.mxu0 0.0
      %4546 = vmatpush1.msra.mxu0 %v4496
      %4547 = vmatprep.subr.mxu0 0.0
      %4548 = vmatpush1.msra.mxu0 0.0
      %4549 = vmatprep.subr.mxu0 0.0
      %4550 = vmatpush1.msra.mxu0 0.0
      %4551 = vmatprep.subr.mxu0 0.0
      %4552 = vmatpush1.msra.mxu0 0.0
      %4553 = vmatprep.subr.mxu0 0.0
      %4554 = vmatpush1.msra.mxu0 0.0
      %4555 = vmatprep.subr.mxu0 0.0
      %4556 = vmatpush1.msra.mxu0 0.0
      %4557 = vmatprep.subr.mxu0 0.0
      %4558 = vmatpush1.msra.mxu0 0.0
      %4559 = vmatprep.subr.mxu0 0.0
      %4560 = vmatpush1.msra.mxu0 0.0
      %4561 = vmatprep.subr.mxu0 0.0
      %4562 = vmatpush1.msra.mxu0 0.0
      %4563 = vmatprep.subr.mxu0 0.0
      %4564 = vmatpush1.msra.mxu0 0.0
      %4565 = vmatprep.subr.mxu0 0.0
      %4566 = vmatpush1.msra.mxu0 0.0
      %4567 = vmatprep.subr.mxu0 0.0
      %4568 = vmatpush1.msra.mxu0 0.0
      %4569 = vmatprep.subr.mxu0 0.0
      %4570 = vmatpush1.msra.mxu0 0.0
      %4571 = vmatprep.subr.mxu0 0.0
      %4572 = vmatpush1.msra.mxu0 0.0
      %4573 = vmatprep.subr.mxu0 0.0
      %4574 = vmatpush1.msra.mxu0 0.0
      %4575 = vmatprep.subr.mxu0 0.0
      %4576 = vmatpush1.msra.mxu0 0.0
      %4577 = vmatprep.subr.mxu0 0.0
      %4578 = vmatpush1.msra.mxu0 0.0
      %4579 = vmatprep.subr.mxu0 0.0
      %4580 = vmatpush1.msra.mxu0 0.0
      %4581 = vmatprep.subr.mxu0 0.0
      %4582 = vmatpush1.msra.mxu0 0.0
      %4583 = vmatprep.subr.mxu0 0.0
      %4584 = vmatpush1.msra.mxu0 0.0
      %4585 = vmatprep.subr.mxu0 0.0
      %4586 = vmatpush1.msra.mxu0 0.0
      %4587 = vmatprep.subr.mxu0 0.0
      %4588 = vmatpush1.msra.mxu0 0.0
      %4589 = vmatprep.subr.mxu0 0.0
      %4590 = vmatpush1.msra.mxu0 0.0
      %4591 = vmatprep.subr.mxu0 0.0
      %4592 = vmatpush1.msra.mxu0 0.0
      %4593 = vmatprep.subr.mxu0 0.0
      %4594 = vmatpush1.msra.mxu0 0.0
      %4595 = vmatprep.subr.mxu0 0.0
      %4596 = vmatpush1.msra.mxu0 0.0
      %4597 = vmatprep.subr.mxu0 0.0
      %4598 = vmatpush1.msra.mxu0 0.0
      %4599 = vmatprep.subr.mxu0 0.0
      %4600 = vmatpush1.msra.mxu0 0.0
      %4601 = vmatprep.subr.mxu0 0.0
      %4602 = vmatpush1.msra.mxu0 0.0
      %4603 = vmatprep.subr.mxu0 0.0
      %4604 = vmatpush1.msra.mxu0 0.0
      %4605 = vmatprep.subr.mxu0 0.0
      %4606 = vmatpush1.msra.mxu0 0.0
      %4607 = vmatprep.subr.mxu0 0.0
      %4608 = vmatpush1.msra.mxu0 0.0
      %4609 = vmatprep.mubr.f32.mxu0 0.0
      %4610 = vmatmul.mubr.f32.gmra.mrb[0].mxu0 %v4498
      %v4611 = vpop.f32.mrb[0].mxu0
      %v4612 = vadd.f32 0.0, %v4611
      %v4613 = vpop.f32.mrb[0].mxu0
      %4614 = vmatprep.mubr.f32.mxu0 0.0
      %4615 = vmatmul.mubr.f32.gmra.mrb[0].mxu0 %v4501
      %v4616 = vpop.f32.mrb[0].mxu0
      %v4617 = vadd.f32 0.0, %v4616
      %v4618 = vpop.f32.mrb[0].mxu0
      %4619 = vmatprep.mubr.f32.mxu0 0.0
      %4620 = vmatmul.mubr.f32.gmra.mrb[0].mxu0 %v4504
      %v4621 = vpop.f32.mrb[0].mxu0
      %v4622 = vadd.f32 0.0, %v4621
      %v4623 = vpop.f32.mrb[0].mxu0
      %4624 = vmatprep.mubr.f32.mxu0 0.0
      %4625 = vmatmul.mubr.f32.gmra.mrb[0].mxu0 %v4507
      %v4626 = vpop.f32.mrb[0].mxu0
      %v4627 = vadd.f32 0.0, %v4626
      %v4628 = vpop.f32.mrb[0].mxu0
      %4629 = vmatprep.mubr.f32.mxu0 0.0
      %4630 = vmatmul.mubr.f32.gmra.mrb[0].mxu0 %v4510
      %v4631 = vpop.f32.mrb[0].mxu0
      %v4632 = vadd.f32 0.0, %v4631
      %v4633 = vpop.f32.mrb[0].mxu0
      %4634 = vmatprep.mubr.f32.mxu0 0.0
      %4635 = vmatmul.mubr.f32.gmra.mrb[0].mxu0 %v4513
      %v4636 = vpop.f32.mrb[0].mxu0
      %v4637 = vadd.f32 0.0, %v4636
      %v4638 = vpop.f32.mrb[0].mxu0
      %4639 = vmatprep.mubr.f32.mxu0 0.0
      %4640 = vmatmul.mubr.f32.gmra.mrb[0].mxu0 %v4516
      %v4641 = vpop.f32.mrb[0].mxu0
      %v4642 = vadd.f32 0.0, %v4641
      %v4643 = vpop.f32.mrb[0].mxu0
      %4644 = vmatprep.mubr.f32.mxu0 0.0
      %4645 = vmatmul.mubr.f32.gmra.mrb[0].mxu0 %v4519
      %v4646 = vpop.f32.mrb[0].mxu0
      %v4647 = vadd.f32 0.0, %v4646
      %v4648 = vpop.f32.mrb[0].mxu0
      %4649 = vmatprep.mubr.f32.mxu0 0.0
      %4650 = vmatmul.mubr.f32.gmra.mrb[0].mxu0 %v4522
      %v4651 = vpop.f32.mrb[0].mxu0
      %v4652 = vadd.f32 0.0, %v4651
      %v4653 = vpop.f32.mrb[0].mxu0
      %4654 = vmatprep.mubr.f32.mxu0 0.0
      %4655 = vmatmul.mubr.f32.gmra.mrb[0].mxu0 %v4525
      %v4656 = vpop.f32.mrb[0].mxu0
      %v4657 = vadd.f32 0.0, %v4656
      %v4658 = vpop.f32.mrb[0].mxu0
      %4659 = vmatprep.mubr.f32.mxu0 0.0
      %4660 = vmatmul.mubr.f32.gmra.mrb[0].mxu0 %v4528
      %v4661 = vpop.f32.mrb[0].mxu0
      %v4662 = vadd.f32 0.0, %v4661
      %v4663 = vpop.f32.mrb[0].mxu0
      %4664 = vmatprep.mubr.f32.mxu0 0.0
      %4665 = vmatmul.mubr.f32.gmra.mrb[0].mxu0 %v4531
      %v4666 = vpop.f32.mrb[0].mxu0
      %v4667 = vadd.f32 0.0, %v4666
      %v4668 = vpop.f32.mrb[0].mxu0
      %4669 = vmatprep.mubr.f32.mxu0 0.0
      %4670 = vmatmul.mubr.f32.gmra.mrb[0].mxu0 %v4534
      %v4671 = vpop.f32.mrb[0].mxu0
      %v4672 = vadd.f32 0.0, %v4671
      %v4673 = vpop.f32.mrb[0].mxu0
      %4674 = vmatprep.mubr.f32.mxu0 0.0
      %4675 = vmatmul.mubr.f32.gmra.mrb[0].mxu0 %v4537
      %v4676 = vpop.f32.mrb[0].mxu0
      %v4677 = vadd.f32 0.0, %v4676
      %v4678 = vpop.f32.mrb[0].mxu0
      %4679 = vmatprep.mubr.f32.mxu0 0.0
      %4680 = vmatmul.mubr.f32.gmra.mrb[0].mxu0 %v4540
      %v4681 = vpop.f32.mrb[0].mxu0
      %v4682 = vadd.f32 0.0, %v4681
      %v4683 = vpop.f32.mrb[0].mxu0
      %4684 = vmatprep.mubr.f32.mxu0 0.0
      %4685 = vmatmul.mubr.f32.gmra.mrb[0].mxu0 %v4543
      %v4686 = vpop.f32.mrb[0].mxu0
      %v4687 = vadd.f32 0.0, %v4686
      %v4688 = vpop.f32.mrb[0].mxu0
      %4689 = vdwg.mxu0
      %v4690 = vadd.f32 %v3377, %v4612
      %v4691 = vadd.f32 %v3382, %v4617
      %v4692 = vadd.f32 %v3387, %v4622
      %v4693 = vadd.f32 %v3392, %v4627
      %v4694 = vadd.f32 %v3397, %v4632
      %v4695 = vadd.f32 %v3402, %v4637
      %v4696 = vadd.f32 %v3407, %v4642
      %v4697 = vadd.f32 %v3412, %v4647
      %v4698 = vadd.f32 %v3417, %v4652
      %v4699 = vadd.f32 %v3422, %v4657
      %v4700 = vadd.f32 %v3427, %v4662
      %v4701 = vadd.f32 %v3432, %v4667
      %v4702 = vadd.f32 %v3437, %v4672
      %v4703 = vadd.f32 %v3442, %v4677
      %v4704 = vadd.f32 %v3447, %v4682
      %v4705 = vadd.f32 %v3452, %v4687
      %v4706 = vld [vmem:[%s3] sm:$0x1]
      %v4708 = vlaneseq
      %v4709 = vshrl.u32 %v4708, 7
      %v4710 = vsub.s32 0, %v4709
      %v4711 = vrot.slane %v4706, %v4710
      %v4713 = vadd.f32 %v4690, %v4711
      %v4714 = vadd.f32 %v4691, %v4711
      %v4715 = vadd.f32 %v4692, %v4711
      %v4716 = vadd.f32 %v4693, %v4711
      %v4717 = vadd.f32 %v4694, %v4711
      %v4718 = vadd.f32 %v4695, %v4711
      %v4719 = vadd.f32 %v4696, %v4711
      %v4720 = vadd.f32 %v4697, %v4711
      %v4721 = vadd.f32 %v4698, %v4711
      %v4722 = vadd.f32 %v4699, %v4711
      %v4723 = vadd.f32 %v4700, %v4711
      %v4724 = vadd.f32 %v4701, %v4711
      %v4725 = vadd.f32 %v4702, %v4711
      %v4726 = vadd.f32 %v4703, %v4711
      %v4727 = vadd.f32 %v4704, %v4711
      %v4728 = vadd.f32 %v4705, %v4711
      %v4729 = vpack.c.bf16 %v4714, %v4713
      %v4730 = vpack.c.bf16 %v4716, %v4715
      %v4731 = vpack.c.bf16 %v4718, %v4717
      %v4732 = vpack.c.bf16 %v4720, %v4719
      %v4733 = vpack.c.bf16 %v4722, %v4721
      %v4734 = vpack.c.bf16 %v4724, %v4723
      %v4735 = vpack.c.bf16 %v4726, %v4725
      %v4736 = vpack.c.bf16 %v4728, %v4727
      %v4737 = vld [vmem:[%s4] sm:$0xff]
      %v4738 = vld [vmem:[%s4 + $0x8] sm:$0xff]
      %v4739 = vld [vmem:[%s4 + $0x10] sm:$0xf]
      %v4740 = vld [vmem:[%s4 + $0x14] sm:$0xff]
      %v4741 = vld [vmem:[%s4 + $0x1c] sm:$0xff]
      %v4742 = vld [vmem:[%s4 + $0x24] sm:$0xf]
      %v4743 = vld [vmem:[%s4 + $0x28] sm:$0xff]
      %v4744 = vld [vmem:[%s4 + $0x30] sm:$0xff]
      %v4745 = vld [vmem:[%s4 + $0x38] sm:$0xf]
      %v4746 = vld [vmem:[%s4 + $0x3c] sm:$0xff]
      %v4747 = vld [vmem:[%s4 + $0x44] sm:$0xff]
      %v4748 = vld [vmem:[%s4 + $0x4c] sm:$0xf]
      %v4749 = vld [vmem:[%s4 + $0x50] sm:$0xff]
      %v4750 = vld [vmem:[%s4 + $0x58] sm:$0xff]
      %v4751 = vld [vmem:[%s4 + $0x60] sm:$0xf]
      %v4752 = vld [vmem:[%s4 + $0x64] sm:$0xff]
      %v4753 = vld [vmem:[%s4 + $0x6c] sm:$0xff]
      %v4754 = vld [vmem:[%s4 + $0x74] sm:$0xf]
      %v4755 = vld [vmem:[%s4 + $0x78] sm:$0xff]
      %v4756 = vld [vmem:[%s4 + $0x80] sm:$0xff]
      %v4757 = vld [vmem:[%s4 + $0x88] sm:$0xf]
      %v4758 = vld [vmem:[%s4 + $0x8c] sm:$0xff]
      %v4759 = vld [vmem:[%s4 + $0x94] sm:$0xff]
      %v4760 = vld [vmem:[%s4 + $0x9c] sm:$0xf]
      %v4761 = vld [vmem:[%s4 + $0xa0] sm:$0xff]
      %v4762 = vld [vmem:[%s4 + $0xa8] sm:$0xff]
      %v4763 = vld [vmem:[%s4 + $0xb0] sm:$0xf]
      %v4764 = vld [vmem:[%s4 + $0xb4] sm:$0xff]
      %v4765 = vld [vmem:[%s4 + $0xbc] sm:$0xff]
      %v4766 = vld [vmem:[%s4 + $0xc4] sm:$0xf]
      %v4767 = vld [vmem:[%s4 + $0xc8] sm:$0xff]
      %v4768 = vld [vmem:[%s4 + $0xd0] sm:$0xff]
      %v4769 = vld [vmem:[%s4 + $0xd8] sm:$0xf]
      %v4770 = vld [vmem:[%s4 + $0xdc] sm:$0xff]
      %v4771 = vld [vmem:[%s4 + $0xe4] sm:$0xff]
      %v4772 = vld [vmem:[%s4 + $0xec] sm:$0xf]
      %v4773 = vld [vmem:[%s4 + $0xf0] sm:$0xff]
      %v4774 = vld [vmem:[%s4 + $0xf8] sm:$0xff]
      %v4775 = vld [vmem:[%s4 + $0x100] sm:$0xf]
      %v4776 = vld [vmem:[%s4 + $0x104] sm:$0xff]
      %v4777 = vld [vmem:[%s4 + $0x10c] sm:$0xff]
      %v4778 = vld [vmem:[%s4 + $0x114] sm:$0xf]
      %v4779 = vld [vmem:[%s4 + $0x118] sm:$0xff]
      %v4780 = vld [vmem:[%s4 + $0x120] sm:$0xff]
      %v4781 = vld [vmem:[%s4 + $0x128] sm:$0xf]
      %v4782 = vld [vmem:[%s4 + $0x12c] sm:$0xff]
      %v4783 = vld [vmem:[%s4 + $0x134] sm:$0xff]
      %v4784 = vld [vmem:[%s4 + $0x13c] sm:$0xf]
      %v4785 = vld [vmem:[%s5] sm:$0x1f]
      %v4787 = vlaneseq
      %v4788 = vshrl.u32 %v4787, 7
      %v4789 = vsub.s32 0, %v4788
      %v4790 = vrot.slane %v4785, %v4789
      %v4791 = vlaneseq
      %v4792 = vshrl.u32 %v4791, 7
      %v4793 = vsub.s32 1, %v4792
      %v4794 = vrot.slane %v4785, %v4793
      %v4795 = vlaneseq
      %v4796 = vshrl.u32 %v4795, 7
      %v4797 = vsub.s32 2, %v4796
      %v4798 = vrot.slane %v4785, %v4797
      %v4799 = vlaneseq
      %v4800 = vshrl.u32 %v4799, 7
      %v4801 = vsub.s32 3, %v4800
      %v4802 = vrot.slane %v4785, %v4801
      %v4803 = vlaneseq
      %v4804 = vshrl.u32 %v4803, 7
      %v4805 = vsub.s32 4, %v4804
      %v4806 = vrot.slane %v4785, %v4805
      %v4860 = vunpack.c.l.b16 %v4737
      %v4861 = vunpack.c.h.b16 %v4737
      %v4862 = vunpack.c.l.b16 %v4738
      %v4863 = vunpack.c.h.b16 %v4738
      %v4864 = vunpack.c.l.b16 %v4739
      %v4865 = vunpack.c.l.b16 %v4740
      %v4866 = vunpack.c.h.b16 %v4740
      %v4867 = vunpack.c.l.b16 %v4741
      %v4868 = vunpack.c.h.b16 %v4741
      %v4869 = vunpack.c.l.b16 %v4742
      %v4870 = vunpack.c.l.b16 %v4743
      %v4871 = vunpack.c.h.b16 %v4743
      %v4872 = vunpack.c.l.b16 %v4744
      %v4873 = vunpack.c.h.b16 %v4744
      %v4874 = vunpack.c.l.b16 %v4745
      %v4875 = vunpack.c.l.b16 %v4746
      %v4876 = vunpack.c.h.b16 %v4746
      %v4877 = vunpack.c.l.b16 %v4747
      %v4878 = vunpack.c.h.b16 %v4747
      %v4879 = vunpack.c.l.b16 %v4748
      %v4880 = vunpack.c.l.b16 %v4749
      %v4881 = vunpack.c.h.b16 %v4749
      %v4882 = vunpack.c.l.b16 %v4750
      %v4883 = vunpack.c.h.b16 %v4750
      %v4884 = vunpack.c.l.b16 %v4751
      %v4885 = vunpack.c.l.b16 %v4752
      %v4886 = vunpack.c.h.b16 %v4752
      %v4887 = vunpack.c.l.b16 %v4753
      %v4888 = vunpack.c.h.b16 %v4753
      %v4889 = vunpack.c.l.b16 %v4754
      %v4890 = vunpack.c.l.b16 %v4755
      %v4891 = vunpack.c.h.b16 %v4755
      %v4892 = vunpack.c.l.b16 %v4756
      %v4893 = vunpack.c.h.b16 %v4756
      %v4894 = vunpack.c.l.b16 %v4757
      %v4895 = vunpack.c.l.b16 %v4758
      %v4896 = vunpack.c.h.b16 %v4758
      %v4897 = vunpack.c.l.b16 %v4759
      %v4898 = vunpack.c.h.b16 %v4759
      %v4899 = vunpack.c.l.b16 %v4760
      %v4900 = vunpack.c.l.b16 %v4761
      %v4901 = vunpack.c.h.b16 %v4761
      %v4902 = vunpack.c.l.b16 %v4762
      %v4903 = vunpack.c.h.b16 %v4762
      %v4904 = vunpack.c.l.b16 %v4763
      %v4905 = vunpack.c.l.b16 %v4764
      %v4906 = vunpack.c.h.b16 %v4764
      %v4907 = vunpack.c.l.b16 %v4765
      %v4908 = vunpack.c.h.b16 %v4765
      %v4909 = vunpack.c.l.b16 %v4766
      %v4910 = vunpack.c.l.b16 %v4767
      %v4911 = vunpack.c.h.b16 %v4767
      %v4912 = vunpack.c.l.b16 %v4768
      %v4913 = vunpack.c.h.b16 %v4768
      %v4914 = vunpack.c.l.b16 %v4769
      %v4915 = vunpack.c.l.b16 %v4770
      %v4916 = vunpack.c.h.b16 %v4770
      %v4917 = vunpack.c.l.b16 %v4771
      %v4918 = vunpack.c.h.b16 %v4771
      %v4919 = vunpack.c.l.b16 %v4772
      %v4920 = vunpack.c.l.b16 %v4773
      %v4921 = vunpack.c.h.b16 %v4773
      %v4922 = vunpack.c.l.b16 %v4774
      %v4923 = vunpack.c.h.b16 %v4774
      %v4924 = vunpack.c.l.b16 %v4775
      %v4925 = vunpack.c.l.b16 %v4776
      %v4926 = vunpack.c.h.b16 %v4776
      %v4927 = vunpack.c.l.b16 %v4777
      %v4928 = vunpack.c.h.b16 %v4777
      %v4929 = vunpack.c.l.b16 %v4778
      %v4930 = vunpack.c.l.b16 %v4779
      %v4931 = vunpack.c.h.b16 %v4779
      %v4932 = vunpack.c.l.b16 %v4780
      %v4933 = vunpack.c.h.b16 %v4780
      %v4934 = vunpack.c.l.b16 %v4781
      %v4935 = vunpack.c.l.b16 %v4782
      %v4936 = vunpack.c.h.b16 %v4782
      %v4937 = vunpack.c.l.b16 %v4783
      %v4938 = vunpack.c.h.b16 %v4783
      %v4939 = vunpack.c.l.b16 %v4784
      %v4940 = vpack.c.b16 %v4865, %v4860
      %v4941 = vpack.c.b16 %v4866, %v4861
      %v4942 = vpack.c.b16 %v4867, %v4862
      %v4943 = vpack.c.b16 %v4868, %v4863
      %v4944 = vpack.c.b16 %v4869, %v4864
      %v4945 = vpack.c.b16 %v4875, %v4870
      %v4946 = vpack.c.b16 %v4876, %v4871
      %v4947 = vpack.c.b16 %v4877, %v4872
      %v4948 = vpack.c.b16 %v4878, %v4873
      %v4949 = vpack.c.b16 %v4879, %v4874
      %v4950 = vpack.c.b16 %v4885, %v4880
      %v4951 = vpack.c.b16 %v4886, %v4881
      %v4952 = vpack.c.b16 %v4887, %v4882
      %v4953 = vpack.c.b16 %v4888, %v4883
      %v4954 = vpack.c.b16 %v4889, %v4884
      %v4955 = vpack.c.b16 %v4895, %v4890
      %v4956 = vpack.c.b16 %v4896, %v4891
      %v4957 = vpack.c.b16 %v4897, %v4892
      %v4958 = vpack.c.b16 %v4898, %v4893
      %v4959 = vpack.c.b16 %v4899, %v4894
      %v4960 = vpack.c.b16 %v4905, %v4900
      %v4961 = vpack.c.b16 %v4906, %v4901
      %v4962 = vpack.c.b16 %v4907, %v4902
      %v4963 = vpack.c.b16 %v4908, %v4903
      %v4964 = vpack.c.b16 %v4909, %v4904
      %v4965 = vpack.c.b16 %v4915, %v4910
      %v4966 = vpack.c.b16 %v4916, %v4911
      %v4967 = vpack.c.b16 %v4917, %v4912
      %v4968 = vpack.c.b16 %v4918, %v4913
      %v4969 = vpack.c.b16 %v4919, %v4914
      %v4970 = vpack.c.b16 %v4925, %v4920
      %v4971 = vpack.c.b16 %v4926, %v4921
      %v4972 = vpack.c.b16 %v4927, %v4922
      %v4973 = vpack.c.b16 %v4928, %v4923
      %v4974 = vpack.c.b16 %v4929, %v4924
      %v4975 = vpack.c.b16 %v4935, %v4930
      %v4976 = vpack.c.b16 %v4936, %v4931
      %v4977 = vpack.c.b16 %v4937, %v4932
      %v4978 = vpack.c.b16 %v4938, %v4933
      %v4979 = vpack.c.b16 %v4939, %v4934
      %5020 = vmatprep.subr.bf16.mxu0 %v4941
      %5021 = vmatpush1.bf16.msra.mxu0 %v4940
      %5022 = vmatprep.subr.bf16.mxu0 %v4946
      %5023 = vmatpush1.bf16.msra.mxu0 %v4945
      %5024 = vmatprep.subr.bf16.mxu0 %v4951
      %5025 = vmatpush1.bf16.msra.mxu0 %v4950
      %5026 = vmatprep.subr.bf16.mxu0 %v4956
      %5027 = vmatpush1.bf16.msra.mxu0 %v4955
      %5028 = vmatprep.subr.bf16.mxu0 %v4961
      %5029 = vmatpush1.bf16.msra.mxu0 %v4960
      %5030 = vmatprep.subr.bf16.mxu0 %v4966
      %5031 = vmatpush1.bf16.msra.mxu0 %v4965
      %5032 = vmatprep.subr.bf16.mxu0 %v4971
      %5033 = vmatpush1.bf16.msra.mxu0 %v4970
      %5034 = vmatprep.subr.bf16.mxu0 %v4976
      %5035 = vmatpush1.bf16.msra.mxu0 %v4975
      %5036 = vmatprep.subr.bf16.mxu0 0
      %5037 = vmatpush1.bf16.msra.mxu0 0
      %5038 = vmatprep.subr.bf16.mxu0 0
      %5039 = vmatpush1.bf16.msra.mxu0 0
      %5040 = vmatprep.subr.bf16.mxu0 0
      %5041 = vmatpush1.bf16.msra.mxu0 0
      %5042 = vmatprep.subr.bf16.mxu0 0
      %5043 = vmatpush1.bf16.msra.mxu0 0
      %5044 = vmatprep.subr.bf16.mxu0 0
      %5045 = vmatpush1.bf16.msra.mxu0 0
      %5046 = vmatprep.subr.bf16.mxu0 0
      %5047 = vmatpush1.bf16.msra.mxu0 0
      %5048 = vmatprep.subr.bf16.mxu0 0
      %5049 = vmatpush1.bf16.msra.mxu0 0
      %5050 = vmatprep.subr.bf16.mxu0 0
      %5051 = vmatpush1.bf16.msra.mxu0 0
      %5052 = vmatprep.mubr.bf16.mxu0 0
      %5053 = vmatmul.mubr.bf16.gmra.mrb[0].mxu0 %v4729
      %v5054 = vpop.f32.mrb[0].mxu0
      %v5055 = vadd.f32 %v4790, %v5054
      %v5056 = vpop.f32.mrb[0].mxu0
      %v5057 = vadd.f32 %v4794, %v5056
      %v5058 = vpop.f32.mrb[0].mxu0
      %v5059 = vadd.f32 %v4790, %v5058
      %v5060 = vpop.f32.mrb[0].mxu0
      %v5061 = vadd.f32 %v4794, %v5060
      %5062 = vmatprep.mubr.bf16.mxu0 0
      %5063 = vmatmul.mubr.bf16.gmra.mrb[0].mxu0 %v4730
      %v5064 = vpop.f32.mrb[0].mxu0
      %v5065 = vadd.f32 %v4790, %v5064
      %v5066 = vpop.f32.mrb[0].mxu0
      %v5067 = vadd.f32 %v4794, %v5066
      %v5068 = vpop.f32.mrb[0].mxu0
      %v5069 = vadd.f32 %v4790, %v5068
      %v5070 = vpop.f32.mrb[0].mxu0
      %v5071 = vadd.f32 %v4794, %v5070
      %5072 = vmatprep.mubr.bf16.mxu0 0
      %5073 = vmatmul.mubr.bf16.gmra.mrb[0].mxu0 %v4731
      %v5074 = vpop.f32.mrb[0].mxu0
      %v5075 = vadd.f32 %v4790, %v5074
      %v5076 = vpop.f32.mrb[0].mxu0
      %v5077 = vadd.f32 %v4794, %v5076
      %v5078 = vpop.f32.mrb[0].mxu0
      %v5079 = vadd.f32 %v4790, %v5078
      %v5080 = vpop.f32.mrb[0].mxu0
      %v5081 = vadd.f32 %v4794, %v5080
      %5082 = vmatprep.mubr.bf16.mxu0 0
      %5083 = vmatmul.mubr.bf16.gmra.mrb[0].mxu0 %v4732
      %v5084 = vpop.f32.mrb[0].mxu0
      %v5085 = vadd.f32 %v4790, %v5084
      %v5086 = vpop.f32.mrb[0].mxu0
      %v5087 = vadd.f32 %v4794, %v5086
      %v5088 = vpop.f32.mrb[0].mxu0
      %v5089 = vadd.f32 %v4790, %v5088
      %v5090 = vpop.f32.mrb[0].mxu0
      %v5091 = vadd.f32 %v4794, %v5090
      %5092 = vmatprep.mubr.bf16.mxu0 0
      %5093 = vmatmul.mubr.bf16.gmra.mrb[0].mxu0 %v4733
      %v5094 = vpop.f32.mrb[0].mxu0
      %v5095 = vadd.f32 %v4790, %v5094
      %v5096 = vpop.f32.mrb[0].mxu0
      %v5097 = vadd.f32 %v4794, %v5096
      %v5098 = vpop.f32.mrb[0].mxu0
      %v5099 = vadd.f32 %v4790, %v5098
      %v5100 = vpop.f32.mrb[0].mxu0
      %v5101 = vadd.f32 %v4794, %v5100
      %5102 = vmatprep.mubr.bf16.mxu0 0
      %5103 = vmatmul.mubr.bf16.gmra.mrb[0].mxu0 %v4734
      %v5104 = vpop.f32.mrb[0].mxu0
      %v5105 = vadd.f32 %v4790, %v5104
      %v5106 = vpop.f32.mrb[0].mxu0
      %v5107 = vadd.f32 %v4794, %v5106
      %v5108 = vpop.f32.mrb[0].mxu0
      %v5109 = vadd.f32 %v4790, %v5108
      %v5110 = vpop.f32.mrb[0].mxu0
      %v5111 = vadd.f32 %v4794, %v5110
      %5112 = vmatprep.mubr.bf16.mxu0 0
      %5113 = vmatmul.mubr.bf16.gmra.mrb[0].mxu0 %v4735
      %v5114 = vpop.f32.mrb[0].mxu0
      %v5115 = vadd.f32 %v4790, %v5114
      %v5116 = vpop.f32.mrb[0].mxu0
      %v5117 = vadd.f32 %v4794, %v5116
      %v5118 = vpop.f32.mrb[0].mxu0
      %v5119 = vadd.f32 %v4790, %v5118
      %v5120 = vpop.f32.mrb[0].mxu0
      %v5121 = vadd.f32 %v4794, %v5120
      %5122 = vmatprep.mubr.bf16.mxu0 0
      %5123 = vmatmul.mubr.bf16.gmra.mrb[0].mxu0 %v4736
      %v5124 = vpop.f32.mrb[0].mxu0
      %v5125 = vadd.f32 %v4790, %v5124
      %v5126 = vpop.f32.mrb[0].mxu0
      %v5127 = vadd.f32 %v4794, %v5126
      %v5128 = vpop.f32.mrb[0].mxu0
      %v5129 = vadd.f32 %v4790, %v5128
      %v5130 = vpop.f32.mrb[0].mxu0
      %v5131 = vadd.f32 %v4794, %v5130
      %5132 = vdwg.mxu0
      %5133 = vmatprep.subr.bf16.mxu0 %v4943
      %5134 = vmatpush1.bf16.msra.mxu0 %v4942
      %5135 = vmatprep.subr.bf16.mxu0 %v4948
      %5136 = vmatpush1.bf16.msra.mxu0 %v4947
      %5137 = vmatprep.subr.bf16.mxu0 %v4953
      %5138 = vmatpush1.bf16.msra.mxu0 %v4952
      %5139 = vmatprep.subr.bf16.mxu0 %v4958
      %5140 = vmatpush1.bf16.msra.mxu0 %v4957
      %5141 = vmatprep.subr.bf16.mxu0 %v4963
      %5142 = vmatpush1.bf16.msra.mxu0 %v4962
      %5143 = vmatprep.subr.bf16.mxu0 %v4968
      %5144 = vmatpush1.bf16.msra.mxu0 %v4967
      %5145 = vmatprep.subr.bf16.mxu0 %v4973
      %5146 = vmatpush1.bf16.msra.mxu0 %v4972
      %5147 = vmatprep.subr.bf16.mxu0 %v4978
      %5148 = vmatpush1.bf16.msra.mxu0 %v4977
      %5149 = vmatprep.subr.bf16.mxu0 0
      %5150 = vmatpush1.bf16.msra.mxu0 0
      %5151 = vmatprep.subr.bf16.mxu0 0
      %5152 = vmatpush1.bf16.msra.mxu0 0
      %5153 = vmatprep.subr.bf16.mxu0 0
      %5154 = vmatpush1.bf16.msra.mxu0 0
      %5155 = vmatprep.subr.bf16.mxu0 0
      %5156 = vmatpush1.bf16.msra.mxu0 0
      %5157 = vmatprep.subr.bf16.mxu0 0
      %5158 = vmatpush1.bf16.msra.mxu0 0
      %5159 = vmatprep.subr.bf16.mxu0 0
      %5160 = vmatpush1.bf16.msra.mxu0 0
      %5161 = vmatprep.subr.bf16.mxu0 0
      %5162 = vmatpush1.bf16.msra.mxu0 0
      %5163 = vmatprep.subr.bf16.mxu0 0
      %5164 = vmatpush1.bf16.msra.mxu0 0
      %5165 = vmatprep.mubr.bf16.mxu0 0
      %5166 = vmatmul.mubr.bf16.gmra.mrb[0].mxu0 %v4729
      %v5167 = vpop.f32.mrb[0].mxu0
      %v5168 = vadd.f32 %v4798, %v5167
      %v5169 = vpop.f32.mrb[0].mxu0
      %v5170 = vadd.f32 %v4802, %v5169
      %v5171 = vpop.f32.mrb[0].mxu0
      %v5172 = vadd.f32 %v4798, %v5171
      %v5173 = vpop.f32.mrb[0].mxu0
      %v5174 = vadd.f32 %v4802, %v5173
      %5175 = vmatprep.mubr.bf16.mxu0 0
      %5176 = vmatmul.mubr.bf16.gmra.mrb[0].mxu0 %v4730
      %v5177 = vpop.f32.mrb[0].mxu0
      %v5178 = vadd.f32 %v4798, %v5177
      %v5179 = vpop.f32.mrb[0].mxu0
      %v5180 = vadd.f32 %v4802, %v5179
      %v5181 = vpop.f32.mrb[0].mxu0
      %v5182 = vadd.f32 %v4798, %v5181
      %v5183 = vpop.f32.mrb[0].mxu0
      %v5184 = vadd.f32 %v4802, %v5183
      %5185 = vmatprep.mubr.bf16.mxu0 0
      %5186 = vmatmul.mubr.bf16.gmra.mrb[0].mxu0 %v4731
      %v5187 = vpop.f32.mrb[0].mxu0
      %v5188 = vadd.f32 %v4798, %v5187
      %v5189 = vpop.f32.mrb[0].mxu0
      %v5190 = vadd.f32 %v4802, %v5189
      %v5191 = vpop.f32.mrb[0].mxu0
      %v5192 = vadd.f32 %v4798, %v5191
      %v5193 = vpop.f32.mrb[0].mxu0
      %v5194 = vadd.f32 %v4802, %v5193
      %5195 = vmatprep.mubr.bf16.mxu0 0
      %5196 = vmatmul.mubr.bf16.gmra.mrb[0].mxu0 %v4732
      %v5197 = vpop.f32.mrb[0].mxu0
      %v5198 = vadd.f32 %v4798, %v5197
      %v5199 = vpop.f32.mrb[0].mxu0
      %v5200 = vadd.f32 %v4802, %v5199
      %v5201 = vpop.f32.mrb[0].mxu0
      %v5202 = vadd.f32 %v4798, %v5201
      %v5203 = vpop.f32.mrb[0].mxu0
      %v5204 = vadd.f32 %v4802, %v5203
      %5205 = vmatprep.mubr.bf16.mxu0 0
      %5206 = vmatmul.mubr.bf16.gmra.mrb[0].mxu0 %v4733
      %v5207 = vpop.f32.mrb[0].mxu0
      %v5208 = vadd.f32 %v4798, %v5207
      %v5209 = vpop.f32.mrb[0].mxu0
      %v5210 = vadd.f32 %v4802, %v5209
      %v5211 = vpop.f32.mrb[0].mxu0
      %v5212 = vadd.f32 %v4798, %v5211
      %v5213 = vpop.f32.mrb[0].mxu0
      %v5214 = vadd.f32 %v4802, %v5213
      %5215 = vmatprep.mubr.bf16.mxu0 0
      %5216 = vmatmul.mubr.bf16.gmra.mrb[0].mxu0 %v4734
      %v5217 = vpop.f32.mrb[0].mxu0
      %v5218 = vadd.f32 %v4798, %v5217
      %v5219 = vpop.f32.mrb[0].mxu0
      %v5220 = vadd.f32 %v4802, %v5219
      %v5221 = vpop.f32.mrb[0].mxu0
      %v5222 = vadd.f32 %v4798, %v5221
      %v5223 = vpop.f32.mrb[0].mxu0
      %v5224 = vadd.f32 %v4802, %v5223
      %5225 = vmatprep.mubr.bf16.mxu0 0
      %5226 = vmatmul.mubr.bf16.gmra.mrb[0].mxu0 %v4735
      %v5227 = vpop.f32.mrb[0].mxu0
      %v5228 = vadd.f32 %v4798, %v5227
      %v5229 = vpop.f32.mrb[0].mxu0
      %v5230 = vadd.f32 %v4802, %v5229
      %v5231 = vpop.f32.mrb[0].mxu0
      %v5232 = vadd.f32 %v4798, %v5231
      %v5233 = vpop.f32.mrb[0].mxu0
      %v5234 = vadd.f32 %v4802, %v5233
      %5235 = vmatprep.mubr.bf16.mxu0 0
      %5236 = vmatmul.mubr.bf16.gmra.mrb[0].mxu0 %v4736
      %v5237 = vpop.f32.mrb[0].mxu0
      %v5238 = vadd.f32 %v4798, %v5237
      %v5239 = vpop.f32.mrb[0].mxu0
      %v5240 = vadd.f32 %v4802, %v5239
      %v5241 = vpop.f32.mrb[0].mxu0
      %v5242 = vadd.f32 %v4798, %v5241
      %v5243 = vpop.f32.mrb[0].mxu0
      %v5244 = vadd.f32 %v4802, %v5243
      %5245 = vdwg.mxu0
      %5246 = vmatprep.subr.bf16.mxu0 0
      %5247 = vmatpush1.bf16.msra.mxu0 %v4944
      %5248 = vmatprep.subr.bf16.mxu0 0
      %5249 = vmatpush1.bf16.msra.mxu0 %v4949
      %5250 = vmatprep.subr.bf16.mxu0 0
      %5251 = vmatpush1.bf16.msra.mxu0 %v4954
      %5252 = vmatprep.subr.bf16.mxu0 0
      %5253 = vmatpush1.bf16.msra.mxu0 %v4959
      %5254 = vmatprep.subr.bf16.mxu0 0
      %5255 = vmatpush1.bf16.msra.mxu0 %v4964
      %5256 = vmatprep.subr.bf16.mxu0 0
      %5257 = vmatpush1.bf16.msra.mxu0 %v4969
      %5258 = vmatprep.subr.bf16.mxu0 0
      %5259 = vmatpush1.bf16.msra.mxu0 %v4974
      %5260 = vmatprep.subr.bf16.mxu0 0
      %5261 = vmatpush1.bf16.msra.mxu0 %v4979
      %5262 = vmatprep.subr.bf16.mxu0 0
      %5263 = vmatpush1.bf16.msra.mxu0 0
      %5264 = vmatprep.subr.bf16.mxu0 0
      %5265 = vmatpush1.bf16.msra.mxu0 0
      %5266 = vmatprep.subr.bf16.mxu0 0
      %5267 = vmatpush1.bf16.msra.mxu0 0
      %5268 = vmatprep.subr.bf16.mxu0 0
      %5269 = vmatpush1.bf16.msra.mxu0 0
      %5270 = vmatprep.subr.bf16.mxu0 0
      %5271 = vmatpush1.bf16.msra.mxu0 0
      %5272 = vmatprep.subr.bf16.mxu0 0
      %5273 = vmatpush1.bf16.msra.mxu0 0
      %5274 = vmatprep.subr.bf16.mxu0 0
      %5275 = vmatpush1.bf16.msra.mxu0 0
      %5276 = vmatprep.subr.bf16.mxu0 0
      %5277 = vmatpush1.bf16.msra.mxu0 0
      %5278 = vmatprep.mubr.bf16.mxu0 0
      %5279 = vmatmul.mubr.bf16.gmra.mrb[0].mxu0 %v4729
      %v5280 = vpop.f32.mrb[0].mxu0
      %v5281 = vadd.f32 %v4806, %v5280
      %v5282 = vpop.f32.mrb[0].mxu0
      %v5283 = vpop.f32.mrb[0].mxu0
      %v5284 = vadd.f32 %v4806, %v5283
      %v5285 = vpop.f32.mrb[0].mxu0
      %5286 = vmatprep.mubr.bf16.mxu0 0
      %5287 = vmatmul.mubr.bf16.gmra.mrb[0].mxu0 %v4730
      %v5288 = vpop.f32.mrb[0].mxu0
      %v5289 = vadd.f32 %v4806, %v5288
      %v5290 = vpop.f32.mrb[0].mxu0
      %v5291 = vpop.f32.mrb[0].mxu0
      %v5292 = vadd.f32 %v4806, %v5291
      %v5293 = vpop.f32.mrb[0].mxu0
      %5294 = vmatprep.mubr.bf16.mxu0 0
      %5295 = vmatmul.mubr.bf16.gmra.mrb[0].mxu0 %v4731
      %v5296 = vpop.f32.mrb[0].mxu0
      %v5297 = vadd.f32 %v4806, %v5296
      %v5298 = vpop.f32.mrb[0].mxu0
      %v5299 = vpop.f32.mrb[0].mxu0
      %v5300 = vadd.f32 %v4806, %v5299
      %v5301 = vpop.f32.mrb[0].mxu0
      %5302 = vmatprep.mubr.bf16.mxu0 0
      %5303 = vmatmul.mubr.bf16.gmra.mrb[0].mxu0 %v4732
      %v5304 = vpop.f32.mrb[0].mxu0
      %v5305 = vadd.f32 %v4806, %v5304
      %v5306 = vpop.f32.mrb[0].mxu0
      %v5307 = vpop.f32.mrb[0].mxu0
      %v5308 = vadd.f32 %v4806, %v5307
      %v5309 = vpop.f32.mrb[0].mxu0
      %5310 = vmatprep.mubr.bf16.mxu0 0
      %5311 = vmatmul.mubr.bf16.gmra.mrb[0].mxu0 %v4733
      %v5312 = vpop.f32.mrb[0].mxu0
      %v5313 = vadd.f32 %v4806, %v5312
      %v5314 = vpop.f32.mrb[0].mxu0
      %v5315 = vpop.f32.mrb[0].mxu0
      %v5316 = vadd.f32 %v4806, %v5315
      %v5317 = vpop.f32.mrb[0].mxu0
      %5318 = vmatprep.mubr.bf16.mxu0 0
      %5319 = vmatmul.mubr.bf16.gmra.mrb[0].mxu0 %v4734
      %v5320 = vpop.f32.mrb[0].mxu0
      %v5321 = vadd.f32 %v4806, %v5320
      %v5322 = vpop.f32.mrb[0].mxu0
      %v5323 = vpop.f32.mrb[0].mxu0
      %v5324 = vadd.f32 %v4806, %v5323
      %v5325 = vpop.f32.mrb[0].mxu0
      %5326 = vmatprep.mubr.bf16.mxu0 0
      %5327 = vmatmul.mubr.bf16.gmra.mrb[0].mxu0 %v4735
      %v5328 = vpop.f32.mrb[0].mxu0
      %v5329 = vadd.f32 %v4806, %v5328
      %v5330 = vpop.f32.mrb[0].mxu0
      %v5331 = vpop.f32.mrb[0].mxu0
      %v5332 = vadd.f32 %v4806, %v5331
      %v5333 = vpop.f32.mrb[0].mxu0
      %5334 = vmatprep.mubr.bf16.mxu0 0
      %5335 = vmatmul.mubr.bf16.gmra.mrb[0].mxu0 %v4736
      %v5336 = vpop.f32.mrb[0].mxu0
      %v5337 = vadd.f32 %v4806, %v5336
      %v5338 = vpop.f32.mrb[0].mxu0
      %v5339 = vpop.f32.mrb[0].mxu0
      %v5340 = vadd.f32 %v4806, %v5339
      %v5341 = vpop.f32.mrb[0].mxu0
      %5342 = vdwg.mxu0
      %v5343 = vmax.f32 %v5055, 0.0
      %v5344 = vmax.f32 %v5059, 0.0
      %v5345 = vmax.f32 %v5065, 0.0
      %v5346 = vmax.f32 %v5069, 0.0
      %v5347 = vmax.f32 %v5075, 0.0
      %v5348 = vmax.f32 %v5079, 0.0
      %v5349 = vmax.f32 %v5085, 0.0
      %v5350 = vmax.f32 %v5089, 0.0
      %v5351 = vmax.f32 %v5095, 0.0
      %v5352 = vmax.f32 %v5099, 0.0
      %v5353 = vmax.f32 %v5105, 0.0
      %v5354 = vmax.f32 %v5109, 0.0
      %v5355 = vmax.f32 %v5115, 0.0
      %v5356 = vmax.f32 %v5119, 0.0
      %v5357 = vmax.f32 %v5125, 0.0
      %v5358 = vmax.f32 %v5129, 0.0
      %v5359 = vpack.c.bf16 %v5344, %v5343
      %v5360 = vpack.c.bf16 %v5346, %v5345
      %v5361 = vpack.c.bf16 %v5348, %v5347
      %v5362 = vpack.c.bf16 %v5350, %v5349
      %v5363 = vpack.c.bf16 %v5352, %v5351
      %v5364 = vpack.c.bf16 %v5354, %v5353
      %v5365 = vpack.c.bf16 %v5356, %v5355
      %v5366 = vpack.c.bf16 %v5358, %v5357
      %v5367 = vld [vmem:[%s6] sm:$0xf]
      %v5368 = vld [vmem:[%s6 + $0x4] sm:$0xf]
      %v5369 = vld [vmem:[%s6 + $0x8] sm:$0xf]
      %v5370 = vld [vmem:[%s6 + $0xc] sm:$0xf]
      %v5371 = vld [vmem:[%s6 + $0x10] sm:$0xf]
      %v5372 = vld [vmem:[%s6 + $0x14] sm:$0xf]
      %v5373 = vld [vmem:[%s6 + $0x18] sm:$0xf]
      %v5374 = vld [vmem:[%s6 + $0x1c] sm:$0xf]
      %v5375 = vld [vmem:[%s6 + $0x20] sm:$0xf]
      %v5376 = vld [vmem:[%s6 + $0x24] sm:$0xf]
      %v5377 = vld [vmem:[%s6 + $0x28] sm:$0xf]
      %v5378 = vld [vmem:[%s6 + $0x2c] sm:$0xf]
      %v5379 = vld [vmem:[%s6 + $0x30] sm:$0xf]
      %v5380 = vld [vmem:[%s6 + $0x34] sm:$0xf]
      %v5381 = vld [vmem:[%s6 + $0x38] sm:$0xf]
      %v5382 = vld [vmem:[%s6 + $0x3c] sm:$0xf]
      %v5383 = vld [vmem:[%s7] sm:$0x1]
      %v5385 = vlaneseq
      %v5386 = vshrl.u32 %v5385, 7
      %v5387 = vsub.s32 0, %v5386
      %v5388 = vrot.slane %v5383, %v5387
      %v5406 = vunpack.c.l.b16 %v5367
      %v5407 = vunpack.c.l.b16 %v5368
      %v5408 = vunpack.c.l.b16 %v5369
      %v5409 = vunpack.c.l.b16 %v5370
      %v5410 = vunpack.c.l.b16 %v5371
      %v5411 = vunpack.c.l.b16 %v5372
      %v5412 = vunpack.c.l.b16 %v5373
      %v5413 = vunpack.c.l.b16 %v5374
      %v5414 = vunpack.c.l.b16 %v5375
      %v5415 = vunpack.c.l.b16 %v5376
      %v5416 = vunpack.c.l.b16 %v5377
      %v5417 = vunpack.c.l.b16 %v5378
      %v5418 = vunpack.c.l.b16 %v5379
      %v5419 = vunpack.c.l.b16 %v5380
      %v5420 = vunpack.c.l.b16 %v5381
      %v5421 = vunpack.c.l.b16 %v5382
      %v5422 = vpack.c.b16 %v5407, %v5406
      %v5423 = vpack.c.b16 %v5409, %v5408
      %v5424 = vpack.c.b16 %v5411, %v5410
      %v5425 = vpack.c.b16 %v5413, %v5412
      %v5426 = vpack.c.b16 %v5415, %v5414
      %v5427 = vpack.c.b16 %v5417, %v5416
      %v5428 = vpack.c.b16 %v5419, %v5418
      %v5429 = vpack.c.b16 %v5421, %v5420
      %5438 = vmatprep.subr.bf16.mxu0 0
      %5439 = vmatpush1.bf16.msra.mxu0 %v5422
      %5440 = vmatprep.subr.bf16.mxu0 0
      %5441 = vmatpush1.bf16.msra.mxu0 %v5423
      %5442 = vmatprep.subr.bf16.mxu0 0
      %5443 = vmatpush1.bf16.msra.mxu0 %v5424
      %5444 = vmatprep.subr.bf16.mxu0 0
      %5445 = vmatpush1.bf16.msra.mxu0 %v5425
      %5446 = vmatprep.subr.bf16.mxu0 0
      %5447 = vmatpush1.bf16.msra.mxu0 %v5426
      %5448 = vmatprep.subr.bf16.mxu0 0
      %5449 = vmatpush1.bf16.msra.mxu0 %v5427
      %5450 = vmatprep.subr.bf16.mxu0 0
      %5451 = vmatpush1.bf16.msra.mxu0 %v5428
      %5452 = vmatprep.subr.bf16.mxu0 0
      %5453 = vmatpush1.bf16.msra.mxu0 %v5429
      %5454 = vmatprep.subr.bf16.mxu0 0
      %5455 = vmatpush1.bf16.msra.mxu0 0
      %5456 = vmatprep.subr.bf16.mxu0 0
      %5457 = vmatpush1.bf16.msra.mxu0 0
      %5458 = vmatprep.subr.bf16.mxu0 0
      %5459 = vmatpush1.bf16.msra.mxu0 0
      %5460 = vmatprep.subr.bf16.mxu0 0
      %5461 = vmatpush1.bf16.msra.mxu0 0
      %5462 = vmatprep.subr.bf16.mxu0 0
      %5463 = vmatpush1.bf16.msra.mxu0 0
      %5464 = vmatprep.subr.bf16.mxu0 0
      %5465 = vmatpush1.bf16.msra.mxu0 0
      %5466 = vmatprep.subr.bf16.mxu0 0
      %5467 = vmatpush1.bf16.msra.mxu0 0
      %5468 = vmatprep.subr.bf16.mxu0 0
      %5469 = vmatpush1.bf16.msra.mxu0 0
      %5470 = vmatprep.mubr.bf16.mxu0 0
      %5471 = vmatmul.mubr.bf16.gmra.mrb[0].mxu0 %v5359
      %v5472 = vpop.f32.mrb[0].mxu0
      %v5473 = vadd.f32 %v5388, %v5472
      %v5474 = vpop.f32.mrb[0].mxu0
      %v5475 = vpop.f32.mrb[0].mxu0
      %v5476 = vadd.f32 %v5388, %v5475
      %v5477 = vpop.f32.mrb[0].mxu0
      %5478 = vmatprep.mubr.bf16.mxu0 0
      %5479 = vmatmul.mubr.bf16.gmra.mrb[0].mxu0 %v5360
      %v5480 = vpop.f32.mrb[0].mxu0
      %v5481 = vadd.f32 %v5388, %v5480
      %v5482 = vpop.f32.mrb[0].mxu0
      %v5483 = vpop.f32.mrb[0].mxu0
      %v5484 = vadd.f32 %v5388, %v5483
      %v5485 = vpop.f32.mrb[0].mxu0
      %5486 = vmatprep.mubr.bf16.mxu0 0
      %5487 = vmatmul.mubr.bf16.gmra.mrb[0].mxu0 %v5361
      %v5488 = vpop.f32.mrb[0].mxu0
      %v5489 = vadd.f32 %v5388, %v5488
      %v5490 = vpop.f32.mrb[0].mxu0
      %v5491 = vpop.f32.mrb[0].mxu0
      %v5492 = vadd.f32 %v5388, %v5491
      %v5493 = vpop.f32.mrb[0].mxu0
      %5494 = vmatprep.mubr.bf16.mxu0 0
      %5495 = vmatmul.mubr.bf16.gmra.mrb[0].mxu0 %v5362
      %v5496 = vpop.f32.mrb[0].mxu0
      %v5497 = vadd.f32 %v5388, %v5496
      %v5498 = vpop.f32.mrb[0].mxu0
      %v5499 = vpop.f32.mrb[0].mxu0
      %v5500 = vadd.f32 %v5388, %v5499
      %v5501 = vpop.f32.mrb[0].mxu0
      %5502 = vmatprep.mubr.bf16.mxu0 0
      %5503 = vmatmul.mubr.bf16.gmra.mrb[0].mxu0 %v5363
      %v5504 = vpop.f32.mrb[0].mxu0
      %v5505 = vadd.f32 %v5388, %v5504
      %v5506 = vpop.f32.mrb[0].mxu0
      %v5507 = vpop.f32.mrb[0].mxu0
      %v5508 = vadd.f32 %v5388, %v5507
      %v5509 = vpop.f32.mrb[0].mxu0
      %5510 = vmatprep.mubr.bf16.mxu0 0
      %5511 = vmatmul.mubr.bf16.gmra.mrb[0].mxu0 %v5364
      %v5512 = vpop.f32.mrb[0].mxu0
      %v5513 = vadd.f32 %v5388, %v5512
      %v5514 = vpop.f32.mrb[0].mxu0
      %v5515 = vpop.f32.mrb[0].mxu0
      %v5516 = vadd.f32 %v5388, %v5515
      %v5517 = vpop.f32.mrb[0].mxu0
      %5518 = vmatprep.mubr.bf16.mxu0 0
      %5519 = vmatmul.mubr.bf16.gmra.mrb[0].mxu0 %v5365
      %v5520 = vpop.f32.mrb[0].mxu0
      %v5521 = vadd.f32 %v5388, %v5520
      %v5522 = vpop.f32.mrb[0].mxu0
      %v5523 = vpop.f32.mrb[0].mxu0
      %v5524 = vadd.f32 %v5388, %v5523
      %v5525 = vpop.f32.mrb[0].mxu0
      %5526 = vmatprep.mubr.bf16.mxu0 0
      %5527 = vmatmul.mubr.bf16.gmra.mrb[0].mxu0 %v5366
      %v5528 = vpop.f32.mrb[0].mxu0
      %v5529 = vadd.f32 %v5388, %v5528
      %v5530 = vpop.f32.mrb[0].mxu0
      %v5531 = vpop.f32.mrb[0].mxu0
      %v5532 = vadd.f32 %v5388, %v5531
      %v5533 = vpop.f32.mrb[0].mxu0
      %5534 = vdwg.mxu0
      %v5535 = vmax.f32 %v5473, 0.0
      %v5536 = vmax.f32 %v5476, 0.0
      %v5537 = vmax.f32 %v5481, 0.0
      %v5538 = vmax.f32 %v5484, 0.0
      %v5539 = vmax.f32 %v5489, 0.0
      %v5540 = vmax.f32 %v5492, 0.0
      %v5541 = vmax.f32 %v5497, 0.0
      %v5542 = vmax.f32 %v5500, 0.0
      %v5543 = vmax.f32 %v5505, 0.0
      %v5544 = vmax.f32 %v5508, 0.0
      %v5545 = vmax.f32 %v5513, 0.0
      %v5546 = vmax.f32 %v5516, 0.0
      %v5547 = vmax.f32 %v5521, 0.0
      %v5548 = vmax.f32 %v5524, 0.0
      %v5549 = vmax.f32 %v5529, 0.0
      %v5550 = vmax.f32 %v5532, 0.0
      %v5551 = vpack.c.bf16 %v5536, %v5535
      %v5552 = vpack.c.bf16 %v5538, %v5537
      %v5553 = vpack.c.bf16 %v5540, %v5539
      %v5554 = vpack.c.bf16 %v5542, %v5541
      %v5555 = vpack.c.bf16 %v5544, %v5543
      %v5556 = vpack.c.bf16 %v5546, %v5545
      %v5557 = vpack.c.bf16 %v5548, %v5547
      %v5558 = vpack.c.bf16 %v5550, %v5549
      %v5559 = vld [vmem:[%s8] sm:$0xf]
      %v5560 = vld [vmem:[%s8 + $0x4] sm:$0xf]
      %v5561 = vld [vmem:[%s8 + $0x8] sm:$0xf]
      %v5562 = vld [vmem:[%s8 + $0xc] sm:$0xf]
      %v5563 = vld [vmem:[%s8 + $0x10] sm:$0xf]
      %v5564 = vld [vmem:[%s8 + $0x14] sm:$0xf]
      %v5565 = vld [vmem:[%s8 + $0x18] sm:$0xf]
      %v5566 = vld [vmem:[%s8 + $0x1c] sm:$0xf]
      %v5567 = vld [vmem:[%s8 + $0x20] sm:$0xf]
      %v5568 = vld [vmem:[%s8 + $0x24] sm:$0xf]
      %v5569 = vld [vmem:[%s8 + $0x28] sm:$0xf]
      %v5570 = vld [vmem:[%s8 + $0x2c] sm:$0xf]
      %v5571 = vld [vmem:[%s8 + $0x30] sm:$0xf]
      %v5572 = vld [vmem:[%s8 + $0x34] sm:$0xf]
      %v5573 = vld [vmem:[%s8 + $0x38] sm:$0xf]
      %v5574 = vld [vmem:[%s8 + $0x3c] sm:$0xf]
      %v5575 = vld [vmem:[%s9] sm:$0x1]
      %v5577 = vlaneseq
      %v5578 = vshrl.u32 %v5577, 7
      %v5579 = vsub.s32 0, %v5578
      %v5580 = vrot.slane %v5575, %v5579
      %v5598 = vunpack.c.l.b16 %v5559
      %v5599 = vunpack.c.l.b16 %v5560
      %v5600 = vunpack.c.l.b16 %v5561
      %v5601 = vunpack.c.l.b16 %v5562
      %v5602 = vunpack.c.l.b16 %v5563
      %v5603 = vunpack.c.l.b16 %v5564
      %v5604 = vunpack.c.l.b16 %v5565
      %v5605 = vunpack.c.l.b16 %v5566
      %v5606 = vunpack.c.l.b16 %v5567
      %v5607 = vunpack.c.l.b16 %v5568
      %v5608 = vunpack.c.l.b16 %v5569
      %v5609 = vunpack.c.l.b16 %v5570
      %v5610 = vunpack.c.l.b16 %v5571
      %v5611 = vunpack.c.l.b16 %v5572
      %v5612 = vunpack.c.l.b16 %v5573
      %v5613 = vunpack.c.l.b16 %v5574
      %v5614 = vpack.c.b16 %v5599, %v5598
      %v5615 = vpack.c.b16 %v5601, %v5600
      %v5616 = vpack.c.b16 %v5603, %v5602
      %v5617 = vpack.c.b16 %v5605, %v5604
      %v5618 = vpack.c.b16 %v5607, %v5606
      %v5619 = vpack.c.b16 %v5609, %v5608
      %v5620 = vpack.c.b16 %v5611, %v5610
      %v5621 = vpack.c.b16 %v5613, %v5612
      %5630 = vmatprep.subr.bf16.mxu0 0
      %5631 = vmatpush1.bf16.msra.mxu0 %v5614
      %5632 = vmatprep.subr.bf16.mxu0 0
      %5633 = vmatpush1.bf16.msra.mxu0 %v5615
      %5634 = vmatprep.subr.bf16.mxu0 0
      %5635 = vmatpush1.bf16.msra.mxu0 %v5616
      %5636 = vmatprep.subr.bf16.mxu0 0
      %5637 = vmatpush1.bf16.msra.mxu0 %v5617
      %5638 = vmatprep.subr.bf16.mxu0 0
      %5639 = vmatpush1.bf16.msra.mxu0 %v5618
      %5640 = vmatprep.subr.bf16.mxu0 0
      %5641 = vmatpush1.bf16.msra.mxu0 %v5619
      %5642 = vmatprep.subr.bf16.mxu0 0
      %5643 = vmatpush1.bf16.msra.mxu0 %v5620
      %5644 = vmatprep.subr.bf16.mxu0 0
      %5645 = vmatpush1.bf16.msra.mxu0 %v5621
      %5646 = vmatprep.subr.bf16.mxu0 0
      %5647 = vmatpush1.bf16.msra.mxu0 0
      %5648 = vmatprep.subr.bf16.mxu0 0
      %5649 = vmatpush1.bf16.msra.mxu0 0
      %5650 = vmatprep.subr.bf16.mxu0 0
      %5651 = vmatpush1.bf16.msra.mxu0 0
      %5652 = vmatprep.subr.bf16.mxu0 0
      %5653 = vmatpush1.bf16.msra.mxu0 0
      %5654 = vmatprep.subr.bf16.mxu0 0
      %5655 = vmatpush1.bf16.msra.mxu0 0
      %5656 = vmatprep.subr.bf16.mxu0 0
      %5657 = vmatpush1.bf16.msra.mxu0 0
      %5658 = vmatprep.subr.bf16.mxu0 0
      %5659 = vmatpush1.bf16.msra.mxu0 0
      %5660 = vmatprep.subr.bf16.mxu0 0
      %5661 = vmatpush1.bf16.msra.mxu0 0
      %5662 = vmatprep.mubr.bf16.mxu0 0
      %5663 = vmatmul.mubr.bf16.gmra.mrb[0].mxu0 %v5551
      %v5664 = vpop.f32.mrb[0].mxu0
      %v5665 = vadd.f32 %v5580, %v5664
      %v5666 = vpop.f32.mrb[0].mxu0
      %v5667 = vpop.f32.mrb[0].mxu0
      %v5668 = vadd.f32 %v5580, %v5667
      %v5669 = vpop.f32.mrb[0].mxu0
      %5670 = vmatprep.mubr.bf16.mxu0 0
      %5671 = vmatmul.mubr.bf16.gmra.mrb[0].mxu0 %v5552
      %v5672 = vpop.f32.mrb[0].mxu0
      %v5673 = vadd.f32 %v5580, %v5672
      %v5674 = vpop.f32.mrb[0].mxu0
      %v5675 = vpop.f32.mrb[0].mxu0
      %v5676 = vadd.f32 %v5580, %v5675
      %v5677 = vpop.f32.mrb[0].mxu0
      %5678 = vmatprep.mubr.bf16.mxu0 0
      %5679 = vmatmul.mubr.bf16.gmra.mrb[0].mxu0 %v5553
      %v5680 = vpop.f32.mrb[0].mxu0
      %v5681 = vadd.f32 %v5580, %v5680
      %v5682 = vpop.f32.mrb[0].mxu0
      %v5683 = vpop.f32.mrb[0].mxu0
      %v5684 = vadd.f32 %v5580, %v5683
      %v5685 = vpop.f32.mrb[0].mxu0
      %5686 = vmatprep.mubr.bf16.mxu0 0
      %5687 = vmatmul.mubr.bf16.gmra.mrb[0].mxu0 %v5554
      %v5688 = vpop.f32.mrb[0].mxu0
      %v5689 = vadd.f32 %v5580, %v5688
      %v5690 = vpop.f32.mrb[0].mxu0
      %v5691 = vpop.f32.mrb[0].mxu0
      %v5692 = vadd.f32 %v5580, %v5691
      %v5693 = vpop.f32.mrb[0].mxu0
      %5694 = vmatprep.mubr.bf16.mxu0 0
      %5695 = vmatmul.mubr.bf16.gmra.mrb[0].mxu0 %v5555
      %v5696 = vpop.f32.mrb[0].mxu0
      %v5697 = vadd.f32 %v5580, %v5696
      %v5698 = vpop.f32.mrb[0].mxu0
      %v5699 = vpop.f32.mrb[0].mxu0
      %v5700 = vadd.f32 %v5580, %v5699
      %v5701 = vpop.f32.mrb[0].mxu0
      %5702 = vmatprep.mubr.bf16.mxu0 0
      %5703 = vmatmul.mubr.bf16.gmra.mrb[0].mxu0 %v5556
      %v5704 = vpop.f32.mrb[0].mxu0
      %v5705 = vadd.f32 %v5580, %v5704
      %v5706 = vpop.f32.mrb[0].mxu0
      %v5707 = vpop.f32.mrb[0].mxu0
      %v5708 = vadd.f32 %v5580, %v5707
      %v5709 = vpop.f32.mrb[0].mxu0
      %5710 = vmatprep.mubr.bf16.mxu0 0
      %5711 = vmatmul.mubr.bf16.gmra.mrb[0].mxu0 %v5557
      %v5712 = vpop.f32.mrb[0].mxu0
      %v5713 = vadd.f32 %v5580, %v5712
      %v5714 = vpop.f32.mrb[0].mxu0
      %v5715 = vpop.f32.mrb[0].mxu0
      %v5716 = vadd.f32 %v5580, %v5715
      %v5717 = vpop.f32.mrb[0].mxu0
      %5718 = vmatprep.mubr.bf16.mxu0 0
      %5719 = vmatmul.mubr.bf16.gmra.mrb[0].mxu0 %v5558
      %v5720 = vpop.f32.mrb[0].mxu0
      %v5721 = vadd.f32 %v5580, %v5720
      %v5722 = vpop.f32.mrb[0].mxu0
      %v5723 = vpop.f32.mrb[0].mxu0
      %v5724 = vadd.f32 %v5580, %v5723
      %v5725 = vpop.f32.mrb[0].mxu0
      %5726 = vdwg.mxu0
      %v5727 = vadd.f32 %v5055, %v5665
      %v5728 = vadd.f32 %v5059, %v5668
      %v5729 = vadd.f32 %v5065, %v5673
      %v5730 = vadd.f32 %v5069, %v5676
      %v5731 = vadd.f32 %v5075, %v5681
      %v5732 = vadd.f32 %v5079, %v5684
      %v5733 = vadd.f32 %v5085, %v5689
      %v5734 = vadd.f32 %v5089, %v5692
      %v5735 = vadd.f32 %v5095, %v5697
      %v5736 = vadd.f32 %v5099, %v5700
      %v5737 = vadd.f32 %v5105, %v5705
      %v5738 = vadd.f32 %v5109, %v5708
      %v5739 = vadd.f32 %v5115, %v5713
      %v5740 = vadd.f32 %v5119, %v5716
      %v5741 = vadd.f32 %v5125, %v5721
      %v5742 = vadd.f32 %v5129, %v5724
      %v5743 = vadd.f32 %v5727, %v5057
      %v5744 = vadd.f32 %v5728, %v5061
      %v5745 = vadd.f32 %v5729, %v5067
      %v5746 = vadd.f32 %v5730, %v5071
      %v5747 = vadd.f32 %v5731, %v5077
      %v5748 = vadd.f32 %v5732, %v5081
      %v5749 = vadd.f32 %v5733, %v5087
      %v5750 = vadd.f32 %v5734, %v5091
      %v5751 = vadd.f32 %v5735, %v5097
      %v5752 = vadd.f32 %v5736, %v5101
      %v5753 = vadd.f32 %v5737, %v5107
      %v5754 = vadd.f32 %v5738, %v5111
      %v5755 = vadd.f32 %v5739, %v5117
      %v5756 = vadd.f32 %v5740, %v5121
      %v5757 = vadd.f32 %v5741, %v5127
      %v5758 = vadd.f32 %v5742, %v5131
      %v5759 = vmax.f32 %v5743, 0.0
      %v5760 = vmax.f32 %v5744, 0.0
      %v5761 = vmax.f32 %v5745, 0.0
      %v5762 = vmax.f32 %v5746, 0.0
      %v5763 = vmax.f32 %v5747, 0.0
      %v5764 = vmax.f32 %v5748, 0.0
      %v5765 = vmax.f32 %v5749, 0.0
      %v5766 = vmax.f32 %v5750, 0.0
      %v5767 = vmax.f32 %v5751, 0.0
      %v5768 = vmax.f32 %v5752, 0.0
      %v5769 = vmax.f32 %v5753, 0.0
      %v5770 = vmax.f32 %v5754, 0.0
      %v5771 = vmax.f32 %v5755, 0.0
      %v5772 = vmax.f32 %v5756, 0.0
      %v5773 = vmax.f32 %v5757, 0.0
      %v5774 = vmax.f32 %v5758, 0.0
      %v5775 = vpack.c.bf16 %v5760, %v5759
      %v5776 = vpack.c.bf16 %v5762, %v5761
      %v5777 = vpack.c.bf16 %v5764, %v5763
      %v5778 = vpack.c.bf16 %v5766, %v5765
      %v5779 = vpack.c.bf16 %v5768, %v5767
      %v5780 = vpack.c.bf16 %v5770, %v5769
      %v5781 = vpack.c.bf16 %v5772, %v5771
      %v5782 = vpack.c.bf16 %v5774, %v5773
      %s5783 = scalar_lea.vmem %s6, 64
      %v5784 = vld [vmem:[%s5783] sm:$0xf]
      %v5785 = vld [vmem:[%s5783 + $0x4] sm:$0xf]
      %v5786 = vld [vmem:[%s5783 + $0x8] sm:$0xf]
      %v5787 = vld [vmem:[%s5783 + $0xc] sm:$0xf]
      %v5788 = vld [vmem:[%s5783 + $0x10] sm:$0xf]
      %v5789 = vld [vmem:[%s5783 + $0x14] sm:$0xf]
      %v5790 = vld [vmem:[%s5783 + $0x18] sm:$0xf]
      %v5791 = vld [vmem:[%s5783 + $0x1c] sm:$0xf]
      %v5792 = vld [vmem:[%s5783 + $0x20] sm:$0xf]
      %v5793 = vld [vmem:[%s5783 + $0x24] sm:$0xf]
      %v5794 = vld [vmem:[%s5783 + $0x28] sm:$0xf]
      %v5795 = vld [vmem:[%s5783 + $0x2c] sm:$0xf]
      %v5796 = vld [vmem:[%s5783 + $0x30] sm:$0xf]
      %v5797 = vld [vmem:[%s5783 + $0x34] sm:$0xf]
      %v5798 = vld [vmem:[%s5783 + $0x38] sm:$0xf]
      %v5799 = vld [vmem:[%s5783 + $0x3c] sm:$0xf]
      %s5800 = scalar_lea.vmem %s7, 1
      %v5801 = vld [vmem:[%s5800] sm:$0x1]
      %v5803 = vlaneseq
      %v5804 = vshrl.u32 %v5803, 7
      %v5805 = vsub.s32 0, %v5804
      %v5806 = vrot.slane %v5801, %v5805
      %v5824 = vunpack.c.l.b16 %v5784
      %v5825 = vunpack.c.l.b16 %v5785
      %v5826 = vunpack.c.l.b16 %v5786
      %v5827 = vunpack.c.l.b16 %v5787
      %v5828 = vunpack.c.l.b16 %v5788
      %v5829 = vunpack.c.l.b16 %v5789
      %v5830 = vunpack.c.l.b16 %v5790
      %v5831 = vunpack.c.l.b16 %v5791
      %v5832 = vunpack.c.l.b16 %v5792
      %v5833 = vunpack.c.l.b16 %v5793
      %v5834 = vunpack.c.l.b16 %v5794
      %v5835 = vunpack.c.l.b16 %v5795
      %v5836 = vunpack.c.l.b16 %v5796
      %v5837 = vunpack.c.l.b16 %v5797
      %v5838 = vunpack.c.l.b16 %v5798
      %v5839 = vunpack.c.l.b16 %v5799
      %v5840 = vpack.c.b16 %v5825, %v5824
      %v5841 = vpack.c.b16 %v5827, %v5826
      %v5842 = vpack.c.b16 %v5829, %v5828
      %v5843 = vpack.c.b16 %v5831, %v5830
      %v5844 = vpack.c.b16 %v5833, %v5832
      %v5845 = vpack.c.b16 %v5835, %v5834
      %v5846 = vpack.c.b16 %v5837, %v5836
      %v5847 = vpack.c.b16 %v5839, %v5838
      %5856 = vmatprep.subr.bf16.mxu0 0
      %5857 = vmatpush1.bf16.msra.mxu0 %v5840
      %5858 = vmatprep.subr.bf16.mxu0 0
      %5859 = vmatpush1.bf16.msra.mxu0 %v5841
      %5860 = vmatprep.subr.bf16.mxu0 0
      %5861 = vmatpush1.bf16.msra.mxu0 %v5842
      %5862 = vmatprep.subr.bf16.mxu0 0
      %5863 = vmatpush1.bf16.msra.mxu0 %v5843
      %5864 = vmatprep.subr.bf16.mxu0 0
      %5865 = vmatpush1.bf16.msra.mxu0 %v5844
      %5866 = vmatprep.subr.bf16.mxu0 0
      %5867 = vmatpush1.bf16.msra.mxu0 %v5845
      %5868 = vmatprep.subr.bf16.mxu0 0
      %5869 = vmatpush1.bf16.msra.mxu0 %v5846
      %5870 = vmatprep.subr.bf16.mxu0 0
      %5871 = vmatpush1.bf16.msra.mxu0 %v5847
      %5872 = vmatprep.subr.bf16.mxu0 0
      %5873 = vmatpush1.bf16.msra.mxu0 0
      %5874 = vmatprep.subr.bf16.mxu0 0
      %5875 = vmatpush1.bf16.msra.mxu0 0
      %5876 = vmatprep.subr.bf16.mxu0 0
      %5877 = vmatpush1.bf16.msra.mxu0 0
      %5878 = vmatprep.subr.bf16.mxu0 0
      %5879 = vmatpush1.bf16.msra.mxu0 0
      %5880 = vmatprep.subr.bf16.mxu0 0
      %5881 = vmatpush1.bf16.msra.mxu0 0
      %5882 = vmatprep.subr.bf16.mxu0 0
      %5883 = vmatpush1.bf16.msra.mxu0 0
      %5884 = vmatprep.subr.bf16.mxu0 0
      %5885 = vmatpush1.bf16.msra.mxu0 0
      %5886 = vmatprep.subr.bf16.mxu0 0
      %5887 = vmatpush1.bf16.msra.mxu0 0
      %5888 = vmatprep.mubr.bf16.mxu0 0
      %5889 = vmatmul.mubr.bf16.gmra.mrb[0].mxu0 %v5775
      %v5890 = vpop.f32.mrb[0].mxu0
      %v5891 = vadd.f32 %v5806, %v5890
      %v5892 = vpop.f32.mrb[0].mxu0
      %v5893 = vpop.f32.mrb[0].mxu0
      %v5894 = vadd.f32 %v5806, %v5893
      %v5895 = vpop.f32.mrb[0].mxu0
      %5896 = vmatprep.mubr.bf16.mxu0 0
      %5897 = vmatmul.mubr.bf16.gmra.mrb[0].mxu0 %v5776
      %v5898 = vpop.f32.mrb[0].mxu0
      %v5899 = vadd.f32 %v5806, %v5898
      %v5900 = vpop.f32.mrb[0].mxu0
      %v5901 = vpop.f32.mrb[0].mxu0
      %v5902 = vadd.f32 %v5806, %v5901
      %v5903 = vpop.f32.mrb[0].mxu0
      %5904 = vmatprep.mubr.bf16.mxu0 0
      %5905 = vmatmul.mubr.bf16.gmra.mrb[0].mxu0 %v5777
      %v5906 = vpop.f32.mrb[0].mxu0
      %v5907 = vadd.f32 %v5806, %v5906
      %v5908 = vpop.f32.mrb[0].mxu0
      %v5909 = vpop.f32.mrb[0].mxu0
      %v5910 = vadd.f32 %v5806, %v5909
      %v5911 = vpop.f32.mrb[0].mxu0
      %5912 = vmatprep.mubr.bf16.mxu0 0
      %5913 = vmatmul.mubr.bf16.gmra.mrb[0].mxu0 %v5778
      %v5914 = vpop.f32.mrb[0].mxu0
      %v5915 = vadd.f32 %v5806, %v5914
      %v5916 = vpop.f32.mrb[0].mxu0
      %v5917 = vpop.f32.mrb[0].mxu0
      %v5918 = vadd.f32 %v5806, %v5917
      %v5919 = vpop.f32.mrb[0].mxu0
      %5920 = vmatprep.mubr.bf16.mxu0 0
      %5921 = vmatmul.mubr.bf16.gmra.mrb[0].mxu0 %v5779
      %v5922 = vpop.f32.mrb[0].mxu0
      %v5923 = vadd.f32 %v5806, %v5922
      %v5924 = vpop.f32.mrb[0].mxu0
      %v5925 = vpop.f32.mrb[0].mxu0
      %v5926 = vadd.f32 %v5806, %v5925
      %v5927 = vpop.f32.mrb[0].mxu0
      %5928 = vmatprep.mubr.bf16.mxu0 0
      %5929 = vmatmul.mubr.bf16.gmra.mrb[0].mxu0 %v5780
      %v5930 = vpop.f32.mrb[0].mxu0
      %v5931 = vadd.f32 %v5806, %v5930
      %v5932 = vpop.f32.mrb[0].mxu0
      %v5933 = vpop.f32.mrb[0].mxu0
      %v5934 = vadd.f32 %v5806, %v5933
      %v5935 = vpop.f32.mrb[0].mxu0
      %5936 = vmatprep.mubr.bf16.mxu0 0
      %5937 = vmatmul.mubr.bf16.gmra.mrb[0].mxu0 %v5781
      %v5938 = vpop.f32.mrb[0].mxu0
      %v5939 = vadd.f32 %v5806, %v5938
      %v5940 = vpop.f32.mrb[0].mxu0
      %v5941 = vpop.f32.mrb[0].mxu0
      %v5942 = vadd.f32 %v5806, %v5941
      %v5943 = vpop.f32.mrb[0].mxu0
      %5944 = vmatprep.mubr.bf16.mxu0 0
      %5945 = vmatmul.mubr.bf16.gmra.mrb[0].mxu0 %v5782
      %v5946 = vpop.f32.mrb[0].mxu0
      %v5947 = vadd.f32 %v5806, %v5946
      %v5948 = vpop.f32.mrb[0].mxu0
      %v5949 = vpop.f32.mrb[0].mxu0
      %v5950 = vadd.f32 %v5806, %v5949
      %v5951 = vpop.f32.mrb[0].mxu0
      %5952 = vdwg.mxu0
      %v5953 = vmax.f32 %v5891, 0.0
      %v5954 = vmax.f32 %v5894, 0.0
      %v5955 = vmax.f32 %v5899, 0.0
      %v5956 = vmax.f32 %v5902, 0.0
      %v5957 = vmax.f32 %v5907, 0.0
      %v5958 = vmax.f32 %v5910, 0.0
      %v5959 = vmax.f32 %v5915, 0.0
      %v5960 = vmax.f32 %v5918, 0.0
      %v5961 = vmax.f32 %v5923, 0.0
      %v5962 = vmax.f32 %v5926, 0.0
      %v5963 = vmax.f32 %v5931, 0.0
      %v5964 = vmax.f32 %v5934, 0.0
      %v5965 = vmax.f32 %v5939, 0.0
      %v5966 = vmax.f32 %v5942, 0.0
      %v5967 = vmax.f32 %v5947, 0.0
      %v5968 = vmax.f32 %v5950, 0.0
      %v5969 = vpack.c.bf16 %v5954, %v5953
      %v5970 = vpack.c.bf16 %v5956, %v5955
      %v5971 = vpack.c.bf16 %v5958, %v5957
      %v5972 = vpack.c.bf16 %v5960, %v5959
      %v5973 = vpack.c.bf16 %v5962, %v5961
      %v5974 = vpack.c.bf16 %v5964, %v5963
      %v5975 = vpack.c.bf16 %v5966, %v5965
      %v5976 = vpack.c.bf16 %v5968, %v5967
      %s5977 = scalar_lea.vmem %s8, 64
      %v5978 = vld [vmem:[%s5977] sm:$0xf]
      %v5979 = vld [vmem:[%s5977 + $0x4] sm:$0xf]
      %v5980 = vld [vmem:[%s5977 + $0x8] sm:$0xf]
      %v5981 = vld [vmem:[%s5977 + $0xc] sm:$0xf]
      %v5982 = vld [vmem:[%s5977 + $0x10] sm:$0xf]
      %v5983 = vld [vmem:[%s5977 + $0x14] sm:$0xf]
      %v5984 = vld [vmem:[%s5977 + $0x18] sm:$0xf]
      %v5985 = vld [vmem:[%s5977 + $0x1c] sm:$0xf]
      %v5986 = vld [vmem:[%s5977 + $0x20] sm:$0xf]
      %v5987 = vld [vmem:[%s5977 + $0x24] sm:$0xf]
      %v5988 = vld [vmem:[%s5977 + $0x28] sm:$0xf]
      %v5989 = vld [vmem:[%s5977 + $0x2c] sm:$0xf]
      %v5990 = vld [vmem:[%s5977 + $0x30] sm:$0xf]
      %v5991 = vld [vmem:[%s5977 + $0x34] sm:$0xf]
      %v5992 = vld [vmem:[%s5977 + $0x38] sm:$0xf]
      %v5993 = vld [vmem:[%s5977 + $0x3c] sm:$0xf]
      %s5994 = scalar_lea.vmem %s9, 1
      %v5995 = vld [vmem:[%s5994] sm:$0x1]
      %v5997 = vlaneseq
      %v5998 = vshrl.u32 %v5997, 7
      %v5999 = vsub.s32 0, %v5998
      %v6000 = vrot.slane %v5995, %v5999
      %v6018 = vunpack.c.l.b16 %v5978
      %v6019 = vunpack.c.l.b16 %v5979
      %v6020 = vunpack.c.l.b16 %v5980
      %v6021 = vunpack.c.l.b16 %v5981
      %v6022 = vunpack.c.l.b16 %v5982
      %v6023 = vunpack.c.l.b16 %v5983
      %v6024 = vunpack.c.l.b16 %v5984
      %v6025 = vunpack.c.l.b16 %v5985
      %v6026 = vunpack.c.l.b16 %v5986
      %v6027 = vunpack.c.l.b16 %v5987
      %v6028 = vunpack.c.l.b16 %v5988
      %v6029 = vunpack.c.l.b16 %v5989
      %v6030 = vunpack.c.l.b16 %v5990
      %v6031 = vunpack.c.l.b16 %v5991
      %v6032 = vunpack.c.l.b16 %v5992
      %v6033 = vunpack.c.l.b16 %v5993
      %v6034 = vpack.c.b16 %v6019, %v6018
      %v6035 = vpack.c.b16 %v6021, %v6020
      %v6036 = vpack.c.b16 %v6023, %v6022
      %v6037 = vpack.c.b16 %v6025, %v6024
      %v6038 = vpack.c.b16 %v6027, %v6026
      %v6039 = vpack.c.b16 %v6029, %v6028
      %v6040 = vpack.c.b16 %v6031, %v6030
      %v6041 = vpack.c.b16 %v6033, %v6032
      %6050 = vmatprep.subr.bf16.mxu0 0
      %6051 = vmatpush1.bf16.msra.mxu0 %v6034
      %6052 = vmatprep.subr.bf16.mxu0 0
      %6053 = vmatpush1.bf16.msra.mxu0 %v6035
      %6054 = vmatprep.subr.bf16.mxu0 0
      %6055 = vmatpush1.bf16.msra.mxu0 %v6036
      %6056 = vmatprep.subr.bf16.mxu0 0
      %6057 = vmatpush1.bf16.msra.mxu0 %v6037
      %6058 = vmatprep.subr.bf16.mxu0 0
      %6059 = vmatpush1.bf16.msra.mxu0 %v6038
      %6060 = vmatprep.subr.bf16.mxu0 0
      %6061 = vmatpush1.bf16.msra.mxu0 %v6039
      %6062 = vmatprep.subr.bf16.mxu0 0
      %6063 = vmatpush1.bf16.msra.mxu0 %v6040
      %6064 = vmatprep.subr.bf16.mxu0 0
      %6065 = vmatpush1.bf16.msra.mxu0 %v6041
      %6066 = vmatprep.subr.bf16.mxu0 0
      %6067 = vmatpush1.bf16.msra.mxu0 0
      %6068 = vmatprep.subr.bf16.mxu0 0
      %6069 = vmatpush1.bf16.msra.mxu0 0
      %6070 = vmatprep.subr.bf16.mxu0 0
      %6071 = vmatpush1.bf16.msra.mxu0 0
      %6072 = vmatprep.subr.bf16.mxu0 0
      %6073 = vmatpush1.bf16.msra.mxu0 0
      %6074 = vmatprep.subr.bf16.mxu0 0
      %6075 = vmatpush1.bf16.msra.mxu0 0
      %6076 = vmatprep.subr.bf16.mxu0 0
      %6077 = vmatpush1.bf16.msra.mxu0 0
      %6078 = vmatprep.subr.bf16.mxu0 0
      %6079 = vmatpush1.bf16.msra.mxu0 0
      %6080 = vmatprep.subr.bf16.mxu0 0
      %6081 = vmatpush1.bf16.msra.mxu0 0
      %6082 = vmatprep.mubr.bf16.mxu0 0
      %6083 = vmatmul.mubr.bf16.gmra.mrb[0].mxu0 %v5969
      %v6084 = vpop.f32.mrb[0].mxu0
      %v6085 = vadd.f32 %v6000, %v6084
      %v6086 = vpop.f32.mrb[0].mxu0
      %v6087 = vpop.f32.mrb[0].mxu0
      %v6088 = vadd.f32 %v6000, %v6087
      %v6089 = vpop.f32.mrb[0].mxu0
      %6090 = vmatprep.mubr.bf16.mxu0 0
      %6091 = vmatmul.mubr.bf16.gmra.mrb[0].mxu0 %v5970
      %v6092 = vpop.f32.mrb[0].mxu0
      %v6093 = vadd.f32 %v6000, %v6092
      %v6094 = vpop.f32.mrb[0].mxu0
      %v6095 = vpop.f32.mrb[0].mxu0
      %v6096 = vadd.f32 %v6000, %v6095
      %v6097 = vpop.f32.mrb[0].mxu0
      %6098 = vmatprep.mubr.bf16.mxu0 0
      %6099 = vmatmul.mubr.bf16.gmra.mrb[0].mxu0 %v5971
      %v6100 = vpop.f32.mrb[0].mxu0
      %v6101 = vadd.f32 %v6000, %v6100
      %v6102 = vpop.f32.mrb[0].mxu0
      %v6103 = vpop.f32.mrb[0].mxu0
      %v6104 = vadd.f32 %v6000, %v6103
      %v6105 = vpop.f32.mrb[0].mxu0
      %6106 = vmatprep.mubr.bf16.mxu0 0
      %6107 = vmatmul.mubr.bf16.gmra.mrb[0].mxu0 %v5972
      %v6108 = vpop.f32.mrb[0].mxu0
      %v6109 = vadd.f32 %v6000, %v6108
      %v6110 = vpop.f32.mrb[0].mxu0
      %v6111 = vpop.f32.mrb[0].mxu0
      %v6112 = vadd.f32 %v6000, %v6111
      %v6113 = vpop.f32.mrb[0].mxu0
      %6114 = vmatprep.mubr.bf16.mxu0 0
      %6115 = vmatmul.mubr.bf16.gmra.mrb[0].mxu0 %v5973
      %v6116 = vpop.f32.mrb[0].mxu0
      %v6117 = vadd.f32 %v6000, %v6116
      %v6118 = vpop.f32.mrb[0].mxu0
      %v6119 = vpop.f32.mrb[0].mxu0
      %v6120 = vadd.f32 %v6000, %v6119
      %v6121 = vpop.f32.mrb[0].mxu0
      %6122 = vmatprep.mubr.bf16.mxu0 0
      %6123 = vmatmul.mubr.bf16.gmra.mrb[0].mxu0 %v5974
      %v6124 = vpop.f32.mrb[0].mxu0
      %v6125 = vadd.f32 %v6000, %v6124
      %v6126 = vpop.f32.mrb[0].mxu0
      %v6127 = vpop.f32.mrb[0].mxu0
      %v6128 = vadd.f32 %v6000, %v6127
      %v6129 = vpop.f32.mrb[0].mxu0
      %6130 = vmatprep.mubr.bf16.mxu0 0
      %6131 = vmatmul.mubr.bf16.gmra.mrb[0].mxu0 %v5975
      %v6132 = vpop.f32.mrb[0].mxu0
      %v6133 = vadd.f32 %v6000, %v6132
      %v6134 = vpop.f32.mrb[0].mxu0
      %v6135 = vpop.f32.mrb[0].mxu0
      %v6136 = vadd.f32 %v6000, %v6135
      %v6137 = vpop.f32.mrb[0].mxu0
      %6138 = vmatprep.mubr.bf16.mxu0 0
      %6139 = vmatmul.mubr.bf16.gmra.mrb[0].mxu0 %v5976
      %v6140 = vpop.f32.mrb[0].mxu0
      %v6141 = vadd.f32 %v6000, %v6140
      %v6142 = vpop.f32.mrb[0].mxu0
      %v6143 = vpop.f32.mrb[0].mxu0
      %v6144 = vadd.f32 %v6000, %v6143
      %v6145 = vpop.f32.mrb[0].mxu0
      %6146 = vdwg.mxu0
      %v6147 = vadd.f32 %v5743, %v6085
      %v6148 = vadd.f32 %v5744, %v6088
      %v6149 = vadd.f32 %v5745, %v6093
      %v6150 = vadd.f32 %v5746, %v6096
      %v6151 = vadd.f32 %v5747, %v6101
      %v6152 = vadd.f32 %v5748, %v6104
      %v6153 = vadd.f32 %v5749, %v6109
      %v6154 = vadd.f32 %v5750, %v6112
      %v6155 = vadd.f32 %v5751, %v6117
      %v6156 = vadd.f32 %v5752, %v6120
      %v6157 = vadd.f32 %v5753, %v6125
      %v6158 = vadd.f32 %v5754, %v6128
      %v6159 = vadd.f32 %v5755, %v6133
      %v6160 = vadd.f32 %v5756, %v6136
      %v6161 = vadd.f32 %v5757, %v6141
      %v6162 = vadd.f32 %v5758, %v6144
      %v6163 = vadd.f32 %v6147, %v5168
      %v6164 = vadd.f32 %v6148, %v5172
      %v6165 = vadd.f32 %v6149, %v5178
      %v6166 = vadd.f32 %v6150, %v5182
      %v6167 = vadd.f32 %v6151, %v5188
      %v6168 = vadd.f32 %v6152, %v5192
      %v6169 = vadd.f32 %v6153, %v5198
      %v6170 = vadd.f32 %v6154, %v5202
      %v6171 = vadd.f32 %v6155, %v5208
      %v6172 = vadd.f32 %v6156, %v5212
      %v6173 = vadd.f32 %v6157, %v5218
      %v6174 = vadd.f32 %v6158, %v5222
      %v6175 = vadd.f32 %v6159, %v5228
      %v6176 = vadd.f32 %v6160, %v5232
      %v6177 = vadd.f32 %v6161, %v5238
      %v6178 = vadd.f32 %v6162, %v5242
      %v6179 = vmax.f32 %v6163, 0.0
      %v6180 = vmax.f32 %v6164, 0.0
      %v6181 = vmax.f32 %v6165, 0.0
      %v6182 = vmax.f32 %v6166, 0.0
      %v6183 = vmax.f32 %v6167, 0.0
      %v6184 = vmax.f32 %v6168, 0.0
      %v6185 = vmax.f32 %v6169, 0.0
      %v6186 = vmax.f32 %v6170, 0.0
      %v6187 = vmax.f32 %v6171, 0.0
      %v6188 = vmax.f32 %v6172, 0.0
      %v6189 = vmax.f32 %v6173, 0.0
      %v6190 = vmax.f32 %v6174, 0.0
      %v6191 = vmax.f32 %v6175, 0.0
      %v6192 = vmax.f32 %v6176, 0.0
      %v6193 = vmax.f32 %v6177, 0.0
      %v6194 = vmax.f32 %v6178, 0.0
      %v6195 = vpack.c.bf16 %v6180, %v6179
      %v6196 = vpack.c.bf16 %v6182, %v6181
      %v6197 = vpack.c.bf16 %v6184, %v6183
      %v6198 = vpack.c.bf16 %v6186, %v6185
      %v6199 = vpack.c.bf16 %v6188, %v6187
      %v6200 = vpack.c.bf16 %v6190, %v6189
      %v6201 = vpack.c.bf16 %v6192, %v6191
      %v6202 = vpack.c.bf16 %v6194, %v6193
      %s6203 = scalar_lea.vmem %s6, 128
      %v6204 = vld [vmem:[%s6203] sm:$0xf]
      %v6205 = vld [vmem:[%s6203 + $0x4] sm:$0xf]
      %v6206 = vld [vmem:[%s6203 + $0x8] sm:$0xf]
      %v6207 = vld [vmem:[%s6203 + $0xc] sm:$0xf]
      %v6208 = vld [vmem:[%s6203 + $0x10] sm:$0xf]
      %v6209 = vld [vmem:[%s6203 + $0x14] sm:$0xf]
      %v6210 = vld [vmem:[%s6203 + $0x18] sm:$0xf]
      %v6211 = vld [vmem:[%s6203 + $0x1c] sm:$0xf]
      %v6212 = vld [vmem:[%s6203 + $0x20] sm:$0xf]
      %v6213 = vld [vmem:[%s6203 + $0x24] sm:$0xf]
      %v6214 = vld [vmem:[%s6203 + $0x28] sm:$0xf]
      %v6215 = vld [vmem:[%s6203 + $0x2c] sm:$0xf]
      %v6216 = vld [vmem:[%s6203 + $0x30] sm:$0xf]
      %v6217 = vld [vmem:[%s6203 + $0x34] sm:$0xf]
      %v6218 = vld [vmem:[%s6203 + $0x38] sm:$0xf]
      %v6219 = vld [vmem:[%s6203 + $0x3c] sm:$0xf]
      %s6220 = scalar_lea.vmem %s7, 2
      %v6221 = vld [vmem:[%s6220] sm:$0x1]
      %v6223 = vlaneseq
      %v6224 = vshrl.u32 %v6223, 7
      %v6225 = vsub.s32 0, %v6224
      %v6226 = vrot.slane %v6221, %v6225
      %v6244 = vunpack.c.l.b16 %v6204
      %v6245 = vunpack.c.l.b16 %v6205
      %v6246 = vunpack.c.l.b16 %v6206
      %v6247 = vunpack.c.l.b16 %v6207
      %v6248 = vunpack.c.l.b16 %v6208
      %v6249 = vunpack.c.l.b16 %v6209
      %v6250 = vunpack.c.l.b16 %v6210
      %v6251 = vunpack.c.l.b16 %v6211
      %v6252 = vunpack.c.l.b16 %v6212
      %v6253 = vunpack.c.l.b16 %v6213
      %v6254 = vunpack.c.l.b16 %v6214
      %v6255 = vunpack.c.l.b16 %v6215
      %v6256 = vunpack.c.l.b16 %v6216
      %v6257 = vunpack.c.l.b16 %v6217
      %v6258 = vunpack.c.l.b16 %v6218
      %v6259 = vunpack.c.l.b16 %v6219
      %v6260 = vpack.c.b16 %v6245, %v6244
      %v6261 = vpack.c.b16 %v6247, %v6246
      %v6262 = vpack.c.b16 %v6249, %v6248
      %v6263 = vpack.c.b16 %v6251, %v6250
      %v6264 = vpack.c.b16 %v6253, %v6252
      %v6265 = vpack.c.b16 %v6255, %v6254
      %v6266 = vpack.c.b16 %v6257, %v6256
      %v6267 = vpack.c.b16 %v6259, %v6258
      %6276 = vmatprep.subr.bf16.mxu0 0
      %6277 = vmatpush1.bf16.msra.mxu0 %v6260
      %6278 = vmatprep.subr.bf16.mxu0 0
      %6279 = vmatpush1.bf16.msra.mxu0 %v6261
      %6280 = vmatprep.subr.bf16.mxu0 0
      %6281 = vmatpush1.bf16.msra.mxu0 %v6262
      %6282 = vmatprep.subr.bf16.mxu0 0
      %6283 = vmatpush1.bf16.msra.mxu0 %v6263
      %6284 = vmatprep.subr.bf16.mxu0 0
      %6285 = vmatpush1.bf16.msra.mxu0 %v6264
      %6286 = vmatprep.subr.bf16.mxu0 0
      %6287 = vmatpush1.bf16.msra.mxu0 %v6265
      %6288 = vmatprep.subr.bf16.mxu0 0
      %6289 = vmatpush1.bf16.msra.mxu0 %v6266
      %6290 = vmatprep.subr.bf16.mxu0 0
      %6291 = vmatpush1.bf16.msra.mxu0 %v6267
      %6292 = vmatprep.subr.bf16.mxu0 0
      %6293 = vmatpush1.bf16.msra.mxu0 0
      %6294 = vmatprep.subr.bf16.mxu0 0
      %6295 = vmatpush1.bf16.msra.mxu0 0
      %6296 = vmatprep.subr.bf16.mxu0 0
      %6297 = vmatpush1.bf16.msra.mxu0 0
      %6298 = vmatprep.subr.bf16.mxu0 0
      %6299 = vmatpush1.bf16.msra.mxu0 0
      %6300 = vmatprep.subr.bf16.mxu0 0
      %6301 = vmatpush1.bf16.msra.mxu0 0
      %6302 = vmatprep.subr.bf16.mxu0 0
      %6303 = vmatpush1.bf16.msra.mxu0 0
      %6304 = vmatprep.subr.bf16.mxu0 0
      %6305 = vmatpush1.bf16.msra.mxu0 0
      %6306 = vmatprep.subr.bf16.mxu0 0
      %6307 = vmatpush1.bf16.msra.mxu0 0
      %6308 = vmatprep.mubr.bf16.mxu0 0
      %6309 = vmatmul.mubr.bf16.gmra.mrb[0].mxu0 %v6195
      %v6310 = vpop.f32.mrb[0].mxu0
      %v6311 = vadd.f32 %v6226, %v6310
      %v6312 = vpop.f32.mrb[0].mxu0
      %v6313 = vpop.f32.mrb[0].mxu0
      %v6314 = vadd.f32 %v6226, %v6313
      %v6315 = vpop.f32.mrb[0].mxu0
      %6316 = vmatprep.mubr.bf16.mxu0 0
      %6317 = vmatmul.mubr.bf16.gmra.mrb[0].mxu0 %v6196
      %v6318 = vpop.f32.mrb[0].mxu0
      %v6319 = vadd.f32 %v6226, %v6318
      %v6320 = vpop.f32.mrb[0].mxu0
      %v6321 = vpop.f32.mrb[0].mxu0
      %v6322 = vadd.f32 %v6226, %v6321
      %v6323 = vpop.f32.mrb[0].mxu0
      %6324 = vmatprep.mubr.bf16.mxu0 0
      %6325 = vmatmul.mubr.bf16.gmra.mrb[0].mxu0 %v6197
      %v6326 = vpop.f32.mrb[0].mxu0
      %v6327 = vadd.f32 %v6226, %v6326
      %v6328 = vpop.f32.mrb[0].mxu0
      %v6329 = vpop.f32.mrb[0].mxu0
      %v6330 = vadd.f32 %v6226, %v6329
      %v6331 = vpop.f32.mrb[0].mxu0
      %6332 = vmatprep.mubr.bf16.mxu0 0
      %6333 = vmatmul.mubr.bf16.gmra.mrb[0].mxu0 %v6198
      %v6334 = vpop.f32.mrb[0].mxu0
      %v6335 = vadd.f32 %v6226, %v6334
      %v6336 = vpop.f32.mrb[0].mxu0
      %v6337 = vpop.f32.mrb[0].mxu0
      %v6338 = vadd.f32 %v6226, %v6337
      %v6339 = vpop.f32.mrb[0].mxu0
      %6340 = vmatprep.mubr.bf16.mxu0 0
      %6341 = vmatmul.mubr.bf16.gmra.mrb[0].mxu0 %v6199
      %v6342 = vpop.f32.mrb[0].mxu0
      %v6343 = vadd.f32 %v6226, %v6342
      %v6344 = vpop.f32.mrb[0].mxu0
      %v6345 = vpop.f32.mrb[0].mxu0
      %v6346 = vadd.f32 %v6226, %v6345
      %v6347 = vpop.f32.mrb[0].mxu0
      %6348 = vmatprep.mubr.bf16.mxu0 0
      %6349 = vmatmul.mubr.bf16.gmra.mrb[0].mxu0 %v6200
      %v6350 = vpop.f32.mrb[0].mxu0
      %v6351 = vadd.f32 %v6226, %v6350
      %v6352 = vpop.f32.mrb[0].mxu0
      %v6353 = vpop.f32.mrb[0].mxu0
      %v6354 = vadd.f32 %v6226, %v6353
      %v6355 = vpop.f32.mrb[0].mxu0
      %6356 = vmatprep.mubr.bf16.mxu0 0
      %6357 = vmatmul.mubr.bf16.gmra.mrb[0].mxu0 %v6201
      %v6358 = vpop.f32.mrb[0].mxu0
      %v6359 = vadd.f32 %v6226, %v6358
      %v6360 = vpop.f32.mrb[0].mxu0
      %v6361 = vpop.f32.mrb[0].mxu0
      %v6362 = vadd.f32 %v6226, %v6361
      %v6363 = vpop.f32.mrb[0].mxu0
      %6364 = vmatprep.mubr.bf16.mxu0 0
      %6365 = vmatmul.mubr.bf16.gmra.mrb[0].mxu0 %v6202
      %v6366 = vpop.f32.mrb[0].mxu0
      %v6367 = vadd.f32 %v6226, %v6366
      %v6368 = vpop.f32.mrb[0].mxu0
      %v6369 = vpop.f32.mrb[0].mxu0
      %v6370 = vadd.f32 %v6226, %v6369
      %v6371 = vpop.f32.mrb[0].mxu0
      %6372 = vdwg.mxu0
      %v6373 = vmax.f32 %v6311, 0.0
      %v6374 = vmax.f32 %v6314, 0.0
      %v6375 = vmax.f32 %v6319, 0.0
      %v6376 = vmax.f32 %v6322, 0.0
      %v6377 = vmax.f32 %v6327, 0.0
      %v6378 = vmax.f32 %v6330, 0.0
      %v6379 = vmax.f32 %v6335, 0.0
      %v6380 = vmax.f32 %v6338, 0.0
      %v6381 = vmax.f32 %v6343, 0.0
      %v6382 = vmax.f32 %v6346, 0.0
      %v6383 = vmax.f32 %v6351, 0.0
      %v6384 = vmax.f32 %v6354, 0.0
      %v6385 = vmax.f32 %v6359, 0.0
      %v6386 = vmax.f32 %v6362, 0.0
      %v6387 = vmax.f32 %v6367, 0.0
      %v6388 = vmax.f32 %v6370, 0.0
      %v6389 = vpack.c.bf16 %v6374, %v6373
      %v6390 = vpack.c.bf16 %v6376, %v6375
      %v6391 = vpack.c.bf16 %v6378, %v6377
      %v6392 = vpack.c.bf16 %v6380, %v6379
      %v6393 = vpack.c.bf16 %v6382, %v6381
      %v6394 = vpack.c.bf16 %v6384, %v6383
      %v6395 = vpack.c.bf16 %v6386, %v6385
      %v6396 = vpack.c.bf16 %v6388, %v6387
      %s6397 = scalar_lea.vmem %s8, 128
      %v6398 = vld [vmem:[%s6397] sm:$0xf]
      %v6399 = vld [vmem:[%s6397 + $0x4] sm:$0xf]
      %v6400 = vld [vmem:[%s6397 + $0x8] sm:$0xf]
      %v6401 = vld [vmem:[%s6397 + $0xc] sm:$0xf]
      %v6402 = vld [vmem:[%s6397 + $0x10] sm:$0xf]
      %v6403 = vld [vmem:[%s6397 + $0x14] sm:$0xf]
      %v6404 = vld [vmem:[%s6397 + $0x18] sm:$0xf]
      %v6405 = vld [vmem:[%s6397 + $0x1c] sm:$0xf]
      %v6406 = vld [vmem:[%s6397 + $0x20] sm:$0xf]
      %v6407 = vld [vmem:[%s6397 + $0x24] sm:$0xf]
      %v6408 = vld [vmem:[%s6397 + $0x28] sm:$0xf]
      %v6409 = vld [vmem:[%s6397 + $0x2c] sm:$0xf]
      %v6410 = vld [vmem:[%s6397 + $0x30] sm:$0xf]
      %v6411 = vld [vmem:[%s6397 + $0x34] sm:$0xf]
      %v6412 = vld [vmem:[%s6397 + $0x38] sm:$0xf]
      %v6413 = vld [vmem:[%s6397 + $0x3c] sm:$0xf]
      %s6414 = scalar_lea.vmem %s9, 2
      %v6415 = vld [vmem:[%s6414] sm:$0x1]
      %v6417 = vlaneseq
      %v6418 = vshrl.u32 %v6417, 7
      %v6419 = vsub.s32 0, %v6418
      %v6420 = vrot.slane %v6415, %v6419
      %v6438 = vunpack.c.l.b16 %v6398
      %v6439 = vunpack.c.l.b16 %v6399
      %v6440 = vunpack.c.l.b16 %v6400
      %v6441 = vunpack.c.l.b16 %v6401
      %v6442 = vunpack.c.l.b16 %v6402
      %v6443 = vunpack.c.l.b16 %v6403
      %v6444 = vunpack.c.l.b16 %v6404
      %v6445 = vunpack.c.l.b16 %v6405
      %v6446 = vunpack.c.l.b16 %v6406
      %v6447 = vunpack.c.l.b16 %v6407
      %v6448 = vunpack.c.l.b16 %v6408
      %v6449 = vunpack.c.l.b16 %v6409
      %v6450 = vunpack.c.l.b16 %v6410
      %v6451 = vunpack.c.l.b16 %v6411
      %v6452 = vunpack.c.l.b16 %v6412
      %v6453 = vunpack.c.l.b16 %v6413
      %v6454 = vpack.c.b16 %v6439, %v6438
      %v6455 = vpack.c.b16 %v6441, %v6440
      %v6456 = vpack.c.b16 %v6443, %v6442
      %v6457 = vpack.c.b16 %v6445, %v6444
      %v6458 = vpack.c.b16 %v6447, %v6446
      %v6459 = vpack.c.b16 %v6449, %v6448
      %v6460 = vpack.c.b16 %v6451, %v6450
      %v6461 = vpack.c.b16 %v6453, %v6452
      %6470 = vmatprep.subr.bf16.mxu0 0
      %6471 = vmatpush1.bf16.msra.mxu0 %v6454
      %6472 = vmatprep.subr.bf16.mxu0 0
      %6473 = vmatpush1.bf16.msra.mxu0 %v6455
      %6474 = vmatprep.subr.bf16.mxu0 0
      %6475 = vmatpush1.bf16.msra.mxu0 %v6456
      %6476 = vmatprep.subr.bf16.mxu0 0
      %6477 = vmatpush1.bf16.msra.mxu0 %v6457
      %6478 = vmatprep.subr.bf16.mxu0 0
      %6479 = vmatpush1.bf16.msra.mxu0 %v6458
      %6480 = vmatprep.subr.bf16.mxu0 0
      %6481 = vmatpush1.bf16.msra.mxu0 %v6459
      %6482 = vmatprep.subr.bf16.mxu0 0
      %6483 = vmatpush1.bf16.msra.mxu0 %v6460
      %6484 = vmatprep.subr.bf16.mxu0 0
      %6485 = vmatpush1.bf16.msra.mxu0 %v6461
      %6486 = vmatprep.subr.bf16.mxu0 0
      %6487 = vmatpush1.bf16.msra.mxu0 0
      %6488 = vmatprep.subr.bf16.mxu0 0
      %6489 = vmatpush1.bf16.msra.mxu0 0
      %6490 = vmatprep.subr.bf16.mxu0 0
      %6491 = vmatpush1.bf16.msra.mxu0 0
      %6492 = vmatprep.subr.bf16.mxu0 0
      %6493 = vmatpush1.bf16.msra.mxu0 0
      %6494 = vmatprep.subr.bf16.mxu0 0
      %6495 = vmatpush1.bf16.msra.mxu0 0
      %6496 = vmatprep.subr.bf16.mxu0 0
      %6497 = vmatpush1.bf16.msra.mxu0 0
      %6498 = vmatprep.subr.bf16.mxu0 0
      %6499 = vmatpush1.bf16.msra.mxu0 0
      %6500 = vmatprep.subr.bf16.mxu0 0
      %6501 = vmatpush1.bf16.msra.mxu0 0
      %6502 = vmatprep.mubr.bf16.mxu0 0
      %6503 = vmatmul.mubr.bf16.gmra.mrb[0].mxu0 %v6389
      %v6504 = vpop.f32.mrb[0].mxu0
      %v6505 = vadd.f32 %v6420, %v6504
      %v6506 = vpop.f32.mrb[0].mxu0
      %v6507 = vpop.f32.mrb[0].mxu0
      %v6508 = vadd.f32 %v6420, %v6507
      %v6509 = vpop.f32.mrb[0].mxu0
      %6510 = vmatprep.mubr.bf16.mxu0 0
      %6511 = vmatmul.mubr.bf16.gmra.mrb[0].mxu0 %v6390
      %v6512 = vpop.f32.mrb[0].mxu0
      %v6513 = vadd.f32 %v6420, %v6512
      %v6514 = vpop.f32.mrb[0].mxu0
      %v6515 = vpop.f32.mrb[0].mxu0
      %v6516 = vadd.f32 %v6420, %v6515
      %v6517 = vpop.f32.mrb[0].mxu0
      %6518 = vmatprep.mubr.bf16.mxu0 0
      %6519 = vmatmul.mubr.bf16.gmra.mrb[0].mxu0 %v6391
      %v6520 = vpop.f32.mrb[0].mxu0
      %v6521 = vadd.f32 %v6420, %v6520
      %v6522 = vpop.f32.mrb[0].mxu0
      %v6523 = vpop.f32.mrb[0].mxu0
      %v6524 = vadd.f32 %v6420, %v6523
      %v6525 = vpop.f32.mrb[0].mxu0
      %6526 = vmatprep.mubr.bf16.mxu0 0
      %6527 = vmatmul.mubr.bf16.gmra.mrb[0].mxu0 %v6392
      %v6528 = vpop.f32.mrb[0].mxu0
      %v6529 = vadd.f32 %v6420, %v6528
      %v6530 = vpop.f32.mrb[0].mxu0
      %v6531 = vpop.f32.mrb[0].mxu0
      %v6532 = vadd.f32 %v6420, %v6531
      %v6533 = vpop.f32.mrb[0].mxu0
      %6534 = vmatprep.mubr.bf16.mxu0 0
      %6535 = vmatmul.mubr.bf16.gmra.mrb[0].mxu0 %v6393
      %v6536 = vpop.f32.mrb[0].mxu0
      %v6537 = vadd.f32 %v6420, %v6536
      %v6538 = vpop.f32.mrb[0].mxu0
      %v6539 = vpop.f32.mrb[0].mxu0
      %v6540 = vadd.f32 %v6420, %v6539
      %v6541 = vpop.f32.mrb[0].mxu0
      %6542 = vmatprep.mubr.bf16.mxu0 0
      %6543 = vmatmul.mubr.bf16.gmra.mrb[0].mxu0 %v6394
      %v6544 = vpop.f32.mrb[0].mxu0
      %v6545 = vadd.f32 %v6420, %v6544
      %v6546 = vpop.f32.mrb[0].mxu0
      %v6547 = vpop.f32.mrb[0].mxu0
      %v6548 = vadd.f32 %v6420, %v6547
      %v6549 = vpop.f32.mrb[0].mxu0
      %6550 = vmatprep.mubr.bf16.mxu0 0
      %6551 = vmatmul.mubr.bf16.gmra.mrb[0].mxu0 %v6395
      %v6552 = vpop.f32.mrb[0].mxu0
      %v6553 = vadd.f32 %v6420, %v6552
      %v6554 = vpop.f32.mrb[0].mxu0
      %v6555 = vpop.f32.mrb[0].mxu0
      %v6556 = vadd.f32 %v6420, %v6555
      %v6557 = vpop.f32.mrb[0].mxu0
      %6558 = vmatprep.mubr.bf16.mxu0 0
      %6559 = vmatmul.mubr.bf16.gmra.mrb[0].mxu0 %v6396
      %v6560 = vpop.f32.mrb[0].mxu0
      %v6561 = vadd.f32 %v6420, %v6560
      %v6562 = vpop.f32.mrb[0].mxu0
      %v6563 = vpop.f32.mrb[0].mxu0
      %v6564 = vadd.f32 %v6420, %v6563
      %v6565 = vpop.f32.mrb[0].mxu0
      %6566 = vdwg.mxu0
      %v6567 = vadd.f32 %v6163, %v6505
      %v6568 = vadd.f32 %v6164, %v6508
      %v6569 = vadd.f32 %v6165, %v6513
      %v6570 = vadd.f32 %v6166, %v6516
      %v6571 = vadd.f32 %v6167, %v6521
      %v6572 = vadd.f32 %v6168, %v6524
      %v6573 = vadd.f32 %v6169, %v6529
      %v6574 = vadd.f32 %v6170, %v6532
      %v6575 = vadd.f32 %v6171, %v6537
      %v6576 = vadd.f32 %v6172, %v6540
      %v6577 = vadd.f32 %v6173, %v6545
      %v6578 = vadd.f32 %v6174, %v6548
      %v6579 = vadd.f32 %v6175, %v6553
      %v6580 = vadd.f32 %v6176, %v6556
      %v6581 = vadd.f32 %v6177, %v6561
      %v6582 = vadd.f32 %v6178, %v6564
      %v6583 = vadd.f32 %v6567, %v5170
      %v6584 = vadd.f32 %v6568, %v5174
      %v6585 = vadd.f32 %v6569, %v5180
      %v6586 = vadd.f32 %v6570, %v5184
      %v6587 = vadd.f32 %v6571, %v5190
      %v6588 = vadd.f32 %v6572, %v5194
      %v6589 = vadd.f32 %v6573, %v5200
      %v6590 = vadd.f32 %v6574, %v5204
      %v6591 = vadd.f32 %v6575, %v5210
      %v6592 = vadd.f32 %v6576, %v5214
      %v6593 = vadd.f32 %v6577, %v5220
      %v6594 = vadd.f32 %v6578, %v5224
      %v6595 = vadd.f32 %v6579, %v5230
      %v6596 = vadd.f32 %v6580, %v5234
      %v6597 = vadd.f32 %v6581, %v5240
      %v6598 = vadd.f32 %v6582, %v5244
      %v6599 = vmax.f32 %v6583, 0.0
      %v6600 = vmax.f32 %v6584, 0.0
      %v6601 = vmax.f32 %v6585, 0.0
      %v6602 = vmax.f32 %v6586, 0.0
      %v6603 = vmax.f32 %v6587, 0.0
      %v6604 = vmax.f32 %v6588, 0.0
      %v6605 = vmax.f32 %v6589, 0.0
      %v6606 = vmax.f32 %v6590, 0.0
      %v6607 = vmax.f32 %v6591, 0.0
      %v6608 = vmax.f32 %v6592, 0.0
      %v6609 = vmax.f32 %v6593, 0.0
      %v6610 = vmax.f32 %v6594, 0.0
      %v6611 = vmax.f32 %v6595, 0.0
      %v6612 = vmax.f32 %v6596, 0.0
      %v6613 = vmax.f32 %v6597, 0.0
      %v6614 = vmax.f32 %v6598, 0.0
      %v6615 = vpack.c.bf16 %v6600, %v6599
      %v6616 = vpack.c.bf16 %v6602, %v6601
      %v6617 = vpack.c.bf16 %v6604, %v6603
      %v6618 = vpack.c.bf16 %v6606, %v6605
      %v6619 = vpack.c.bf16 %v6608, %v6607
      %v6620 = vpack.c.bf16 %v6610, %v6609
      %v6621 = vpack.c.bf16 %v6612, %v6611
      %v6622 = vpack.c.bf16 %v6614, %v6613
      %s6623 = scalar_lea.vmem %s6, 192
      %v6624 = vld [vmem:[%s6623] sm:$0xf]
      %v6625 = vld [vmem:[%s6623 + $0x4] sm:$0xf]
      %v6626 = vld [vmem:[%s6623 + $0x8] sm:$0xf]
      %v6627 = vld [vmem:[%s6623 + $0xc] sm:$0xf]
      %v6628 = vld [vmem:[%s6623 + $0x10] sm:$0xf]
      %v6629 = vld [vmem:[%s6623 + $0x14] sm:$0xf]
      %v6630 = vld [vmem:[%s6623 + $0x18] sm:$0xf]
      %v6631 = vld [vmem:[%s6623 + $0x1c] sm:$0xf]
      %v6632 = vld [vmem:[%s6623 + $0x20] sm:$0xf]
      %v6633 = vld [vmem:[%s6623 + $0x24] sm:$0xf]
      %v6634 = vld [vmem:[%s6623 + $0x28] sm:$0xf]
      %v6635 = vld [vmem:[%s6623 + $0x2c] sm:$0xf]
      %v6636 = vld [vmem:[%s6623 + $0x30] sm:$0xf]
      %v6637 = vld [vmem:[%s6623 + $0x34] sm:$0xf]
      %v6638 = vld [vmem:[%s6623 + $0x38] sm:$0xf]
      %v6639 = vld [vmem:[%s6623 + $0x3c] sm:$0xf]
      %s6640 = scalar_lea.vmem %s7, 3
      %v6641 = vld [vmem:[%s6640] sm:$0x1]
      %v6643 = vlaneseq
      %v6644 = vshrl.u32 %v6643, 7
      %v6645 = vsub.s32 0, %v6644
      %v6646 = vrot.slane %v6641, %v6645
      %v6664 = vunpack.c.l.b16 %v6624
      %v6665 = vunpack.c.l.b16 %v6625
      %v6666 = vunpack.c.l.b16 %v6626
      %v6667 = vunpack.c.l.b16 %v6627
      %v6668 = vunpack.c.l.b16 %v6628
      %v6669 = vunpack.c.l.b16 %v6629
      %v6670 = vunpack.c.l.b16 %v6630
      %v6671 = vunpack.c.l.b16 %v6631
      %v6672 = vunpack.c.l.b16 %v6632
      %v6673 = vunpack.c.l.b16 %v6633
      %v6674 = vunpack.c.l.b16 %v6634
      %v6675 = vunpack.c.l.b16 %v6635
      %v6676 = vunpack.c.l.b16 %v6636
      %v6677 = vunpack.c.l.b16 %v6637
      %v6678 = vunpack.c.l.b16 %v6638
      %v6679 = vunpack.c.l.b16 %v6639
      %v6680 = vpack.c.b16 %v6665, %v6664
      %v6681 = vpack.c.b16 %v6667, %v6666
      %v6682 = vpack.c.b16 %v6669, %v6668
      %v6683 = vpack.c.b16 %v6671, %v6670
      %v6684 = vpack.c.b16 %v6673, %v6672
      %v6685 = vpack.c.b16 %v6675, %v6674
      %v6686 = vpack.c.b16 %v6677, %v6676
      %v6687 = vpack.c.b16 %v6679, %v6678
      %6696 = vmatprep.subr.bf16.mxu0 0
      %6697 = vmatpush1.bf16.msra.mxu0 %v6680
      %6698 = vmatprep.subr.bf16.mxu0 0
      %6699 = vmatpush1.bf16.msra.mxu0 %v6681
      %6700 = vmatprep.subr.bf16.mxu0 0
      %6701 = vmatpush1.bf16.msra.mxu0 %v6682
      %6702 = vmatprep.subr.bf16.mxu0 0
      %6703 = vmatpush1.bf16.msra.mxu0 %v6683
      %6704 = vmatprep.subr.bf16.mxu0 0
      %6705 = vmatpush1.bf16.msra.mxu0 %v6684
      %6706 = vmatprep.subr.bf16.mxu0 0
      %6707 = vmatpush1.bf16.msra.mxu0 %v6685
      %6708 = vmatprep.subr.bf16.mxu0 0
      %6709 = vmatpush1.bf16.msra.mxu0 %v6686
      %6710 = vmatprep.subr.bf16.mxu0 0
      %6711 = vmatpush1.bf16.msra.mxu0 %v6687
      %6712 = vmatprep.subr.bf16.mxu0 0
      %6713 = vmatpush1.bf16.msra.mxu0 0
      %6714 = vmatprep.subr.bf16.mxu0 0
      %6715 = vmatpush1.bf16.msra.mxu0 0
      %6716 = vmatprep.subr.bf16.mxu0 0
      %6717 = vmatpush1.bf16.msra.mxu0 0
      %6718 = vmatprep.subr.bf16.mxu0 0
      %6719 = vmatpush1.bf16.msra.mxu0 0
      %6720 = vmatprep.subr.bf16.mxu0 0
      %6721 = vmatpush1.bf16.msra.mxu0 0
      %6722 = vmatprep.subr.bf16.mxu0 0
      %6723 = vmatpush1.bf16.msra.mxu0 0
      %6724 = vmatprep.subr.bf16.mxu0 0
      %6725 = vmatpush1.bf16.msra.mxu0 0
      %6726 = vmatprep.subr.bf16.mxu0 0
      %6727 = vmatpush1.bf16.msra.mxu0 0
      %6728 = vmatprep.mubr.bf16.mxu0 0
      %6729 = vmatmul.mubr.bf16.gmra.mrb[0].mxu0 %v6615
      %v6730 = vpop.f32.mrb[0].mxu0
      %v6731 = vadd.f32 %v6646, %v6730
      %v6732 = vpop.f32.mrb[0].mxu0
      %v6733 = vpop.f32.mrb[0].mxu0
      %v6734 = vadd.f32 %v6646, %v6733
      %v6735 = vpop.f32.mrb[0].mxu0
      %6736 = vmatprep.mubr.bf16.mxu0 0
      %6737 = vmatmul.mubr.bf16.gmra.mrb[0].mxu0 %v6616
      %v6738 = vpop.f32.mrb[0].mxu0
      %v6739 = vadd.f32 %v6646, %v6738
      %v6740 = vpop.f32.mrb[0].mxu0
      %v6741 = vpop.f32.mrb[0].mxu0
      %v6742 = vadd.f32 %v6646, %v6741
      %v6743 = vpop.f32.mrb[0].mxu0
      %6744 = vmatprep.mubr.bf16.mxu0 0
      %6745 = vmatmul.mubr.bf16.gmra.mrb[0].mxu0 %v6617
      %v6746 = vpop.f32.mrb[0].mxu0
      %v6747 = vadd.f32 %v6646, %v6746
      %v6748 = vpop.f32.mrb[0].mxu0
      %v6749 = vpop.f32.mrb[0].mxu0
      %v6750 = vadd.f32 %v6646, %v6749
      %v6751 = vpop.f32.mrb[0].mxu0
      %6752 = vmatprep.mubr.bf16.mxu0 0
      %6753 = vmatmul.mubr.bf16.gmra.mrb[0].mxu0 %v6618
      %v6754 = vpop.f32.mrb[0].mxu0
      %v6755 = vadd.f32 %v6646, %v6754
      %v6756 = vpop.f32.mrb[0].mxu0
      %v6757 = vpop.f32.mrb[0].mxu0
      %v6758 = vadd.f32 %v6646, %v6757
      %v6759 = vpop.f32.mrb[0].mxu0
      %6760 = vmatprep.mubr.bf16.mxu0 0
      %6761 = vmatmul.mubr.bf16.gmra.mrb[0].mxu0 %v6619
      %v6762 = vpop.f32.mrb[0].mxu0
      %v6763 = vadd.f32 %v6646, %v6762
      %v6764 = vpop.f32.mrb[0].mxu0
      %v6765 = vpop.f32.mrb[0].mxu0
      %v6766 = vadd.f32 %v6646, %v6765
      %v6767 = vpop.f32.mrb[0].mxu0
      %6768 = vmatprep.mubr.bf16.mxu0 0
      %6769 = vmatmul.mubr.bf16.gmra.mrb[0].mxu0 %v6620
      %v6770 = vpop.f32.mrb[0].mxu0
      %v6771 = vadd.f32 %v6646, %v6770
      %v6772 = vpop.f32.mrb[0].mxu0
      %v6773 = vpop.f32.mrb[0].mxu0
      %v6774 = vadd.f32 %v6646, %v6773
      %v6775 = vpop.f32.mrb[0].mxu0
      %6776 = vmatprep.mubr.bf16.mxu0 0
      %6777 = vmatmul.mubr.bf16.gmra.mrb[0].mxu0 %v6621
      %v6778 = vpop.f32.mrb[0].mxu0
      %v6779 = vadd.f32 %v6646, %v6778
      %v6780 = vpop.f32.mrb[0].mxu0
      %v6781 = vpop.f32.mrb[0].mxu0
      %v6782 = vadd.f32 %v6646, %v6781
      %v6783 = vpop.f32.mrb[0].mxu0
      %6784 = vmatprep.mubr.bf16.mxu0 0
      %6785 = vmatmul.mubr.bf16.gmra.mrb[0].mxu0 %v6622
      %v6786 = vpop.f32.mrb[0].mxu0
      %v6787 = vadd.f32 %v6646, %v6786
      %v6788 = vpop.f32.mrb[0].mxu0
      %v6789 = vpop.f32.mrb[0].mxu0
      %v6790 = vadd.f32 %v6646, %v6789
      %v6791 = vpop.f32.mrb[0].mxu0
      %6792 = vdwg.mxu0
      %v6793 = vmax.f32 %v6731, 0.0
      %v6794 = vmax.f32 %v6734, 0.0
      %v6795 = vmax.f32 %v6739, 0.0
      %v6796 = vmax.f32 %v6742, 0.0
      %v6797 = vmax.f32 %v6747, 0.0
      %v6798 = vmax.f32 %v6750, 0.0
      %v6799 = vmax.f32 %v6755, 0.0
      %v6800 = vmax.f32 %v6758, 0.0
      %v6801 = vmax.f32 %v6763, 0.0
      %v6802 = vmax.f32 %v6766, 0.0
      %v6803 = vmax.f32 %v6771, 0.0
      %v6804 = vmax.f32 %v6774, 0.0
      %v6805 = vmax.f32 %v6779, 0.0
      %v6806 = vmax.f32 %v6782, 0.0
      %v6807 = vmax.f32 %v6787, 0.0
      %v6808 = vmax.f32 %v6790, 0.0
      %v6809 = vpack.c.bf16 %v6794, %v6793
      %v6810 = vpack.c.bf16 %v6796, %v6795
      %v6811 = vpack.c.bf16 %v6798, %v6797
      %v6812 = vpack.c.bf16 %v6800, %v6799
      %v6813 = vpack.c.bf16 %v6802, %v6801
      %v6814 = vpack.c.bf16 %v6804, %v6803
      %v6815 = vpack.c.bf16 %v6806, %v6805
      %v6816 = vpack.c.bf16 %v6808, %v6807
      %s6817 = scalar_lea.vmem %s8, 192
      %v6818 = vld [vmem:[%s6817] sm:$0xf]
      %v6819 = vld [vmem:[%s6817 + $0x4] sm:$0xf]
      %v6820 = vld [vmem:[%s6817 + $0x8] sm:$0xf]
      %v6821 = vld [vmem:[%s6817 + $0xc] sm:$0xf]
      %v6822 = vld [vmem:[%s6817 + $0x10] sm:$0xf]
      %v6823 = vld [vmem:[%s6817 + $0x14] sm:$0xf]
      %v6824 = vld [vmem:[%s6817 + $0x18] sm:$0xf]
      %v6825 = vld [vmem:[%s6817 + $0x1c] sm:$0xf]
      %v6826 = vld [vmem:[%s6817 + $0x20] sm:$0xf]
      %v6827 = vld [vmem:[%s6817 + $0x24] sm:$0xf]
      %v6828 = vld [vmem:[%s6817 + $0x28] sm:$0xf]
      %v6829 = vld [vmem:[%s6817 + $0x2c] sm:$0xf]
      %v6830 = vld [vmem:[%s6817 + $0x30] sm:$0xf]
      %v6831 = vld [vmem:[%s6817 + $0x34] sm:$0xf]
      %v6832 = vld [vmem:[%s6817 + $0x38] sm:$0xf]
      %v6833 = vld [vmem:[%s6817 + $0x3c] sm:$0xf]
      %s6834 = scalar_lea.vmem %s9, 3
      %v6835 = vld [vmem:[%s6834] sm:$0x1]
      %v6837 = vlaneseq
      %v6838 = vshrl.u32 %v6837, 7
      %v6839 = vsub.s32 0, %v6838
      %v6840 = vrot.slane %v6835, %v6839
      %v6858 = vunpack.c.l.b16 %v6818
      %v6859 = vunpack.c.l.b16 %v6819
      %v6860 = vunpack.c.l.b16 %v6820
      %v6861 = vunpack.c.l.b16 %v6821
      %v6862 = vunpack.c.l.b16 %v6822
      %v6863 = vunpack.c.l.b16 %v6823
      %v6864 = vunpack.c.l.b16 %v6824
      %v6865 = vunpack.c.l.b16 %v6825
      %v6866 = vunpack.c.l.b16 %v6826
      %v6867 = vunpack.c.l.b16 %v6827
      %v6868 = vunpack.c.l.b16 %v6828
      %v6869 = vunpack.c.l.b16 %v6829
      %v6870 = vunpack.c.l.b16 %v6830
      %v6871 = vunpack.c.l.b16 %v6831
      %v6872 = vunpack.c.l.b16 %v6832
      %v6873 = vunpack.c.l.b16 %v6833
      %v6874 = vpack.c.b16 %v6859, %v6858
      %v6875 = vpack.c.b16 %v6861, %v6860
      %v6876 = vpack.c.b16 %v6863, %v6862
      %v6877 = vpack.c.b16 %v6865, %v6864
      %v6878 = vpack.c.b16 %v6867, %v6866
      %v6879 = vpack.c.b16 %v6869, %v6868
      %v6880 = vpack.c.b16 %v6871, %v6870
      %v6881 = vpack.c.b16 %v6873, %v6872
      %6890 = vmatprep.subr.bf16.mxu0 0
      %6891 = vmatpush1.bf16.msra.mxu0 %v6874
      %6892 = vmatprep.subr.bf16.mxu0 0
      %6893 = vmatpush1.bf16.msra.mxu0 %v6875
      %6894 = vmatprep.subr.bf16.mxu0 0
      %6895 = vmatpush1.bf16.msra.mxu0 %v6876
      %6896 = vmatprep.subr.bf16.mxu0 0
      %6897 = vmatpush1.bf16.msra.mxu0 %v6877
      %6898 = vmatprep.subr.bf16.mxu0 0
      %6899 = vmatpush1.bf16.msra.mxu0 %v6878
      %6900 = vmatprep.subr.bf16.mxu0 0
      %6901 = vmatpush1.bf16.msra.mxu0 %v6879
      %6902 = vmatprep.subr.bf16.mxu0 0
      %6903 = vmatpush1.bf16.msra.mxu0 %v6880
      %6904 = vmatprep.subr.bf16.mxu0 0
      %6905 = vmatpush1.bf16.msra.mxu0 %v6881
      %6906 = vmatprep.subr.bf16.mxu0 0
      %6907 = vmatpush1.bf16.msra.mxu0 0
      %6908 = vmatprep.subr.bf16.mxu0 0
      %6909 = vmatpush1.bf16.msra.mxu0 0
      %6910 = vmatprep.subr.bf16.mxu0 0
      %6911 = vmatpush1.bf16.msra.mxu0 0
      %6912 = vmatprep.subr.bf16.mxu0 0
      %6913 = vmatpush1.bf16.msra.mxu0 0
      %6914 = vmatprep.subr.bf16.mxu0 0
      %6915 = vmatpush1.bf16.msra.mxu0 0
      %6916 = vmatprep.subr.bf16.mxu0 0
      %6917 = vmatpush1.bf16.msra.mxu0 0
      %6918 = vmatprep.subr.bf16.mxu0 0
      %6919 = vmatpush1.bf16.msra.mxu0 0
      %6920 = vmatprep.subr.bf16.mxu0 0
      %6921 = vmatpush1.bf16.msra.mxu0 0
      %6922 = vmatprep.mubr.bf16.mxu0 0
      %6923 = vmatmul.mubr.bf16.gmra.mrb[0].mxu0 %v6809
      %v6924 = vpop.f32.mrb[0].mxu0
      %v6925 = vadd.f32 %v6840, %v6924
      %v6926 = vpop.f32.mrb[0].mxu0
      %v6927 = vpop.f32.mrb[0].mxu0
      %v6928 = vadd.f32 %v6840, %v6927
      %v6929 = vpop.f32.mrb[0].mxu0
      %6930 = vmatprep.mubr.bf16.mxu0 0
      %6931 = vmatmul.mubr.bf16.gmra.mrb[0].mxu0 %v6810
      %v6932 = vpop.f32.mrb[0].mxu0
      %v6933 = vadd.f32 %v6840, %v6932
      %v6934 = vpop.f32.mrb[0].mxu0
      %v6935 = vpop.f32.mrb[0].mxu0
      %v6936 = vadd.f32 %v6840, %v6935
      %v6937 = vpop.f32.mrb[0].mxu0
      %6938 = vmatprep.mubr.bf16.mxu0 0
      %6939 = vmatmul.mubr.bf16.gmra.mrb[0].mxu0 %v6811
      %v6940 = vpop.f32.mrb[0].mxu0
      %v6941 = vadd.f32 %v6840, %v6940
      %v6942 = vpop.f32.mrb[0].mxu0
      %v6943 = vpop.f32.mrb[0].mxu0
      %v6944 = vadd.f32 %v6840, %v6943
      %v6945 = vpop.f32.mrb[0].mxu0
      %6946 = vmatprep.mubr.bf16.mxu0 0
      %6947 = vmatmul.mubr.bf16.gmra.mrb[0].mxu0 %v6812
      %v6948 = vpop.f32.mrb[0].mxu0
      %v6949 = vadd.f32 %v6840, %v6948
      %v6950 = vpop.f32.mrb[0].mxu0
      %v6951 = vpop.f32.mrb[0].mxu0
      %v6952 = vadd.f32 %v6840, %v6951
      %v6953 = vpop.f32.mrb[0].mxu0
      %6954 = vmatprep.mubr.bf16.mxu0 0
      %6955 = vmatmul.mubr.bf16.gmra.mrb[0].mxu0 %v6813
      %v6956 = vpop.f32.mrb[0].mxu0
      %v6957 = vadd.f32 %v6840, %v6956
      %v6958 = vpop.f32.mrb[0].mxu0
      %v6959 = vpop.f32.mrb[0].mxu0
      %v6960 = vadd.f32 %v6840, %v6959
      %v6961 = vpop.f32.mrb[0].mxu0
      %6962 = vmatprep.mubr.bf16.mxu0 0
      %6963 = vmatmul.mubr.bf16.gmra.mrb[0].mxu0 %v6814
      %v6964 = vpop.f32.mrb[0].mxu0
      %v6965 = vadd.f32 %v6840, %v6964
      %v6966 = vpop.f32.mrb[0].mxu0
      %v6967 = vpop.f32.mrb[0].mxu0
      %v6968 = vadd.f32 %v6840, %v6967
      %v6969 = vpop.f32.mrb[0].mxu0
      %6970 = vmatprep.mubr.bf16.mxu0 0
      %6971 = vmatmul.mubr.bf16.gmra.mrb[0].mxu0 %v6815
      %v6972 = vpop.f32.mrb[0].mxu0
      %v6973 = vadd.f32 %v6840, %v6972
      %v6974 = vpop.f32.mrb[0].mxu0
      %v6975 = vpop.f32.mrb[0].mxu0
      %v6976 = vadd.f32 %v6840, %v6975
      %v6977 = vpop.f32.mrb[0].mxu0
      %6978 = vmatprep.mubr.bf16.mxu0 0
      %6979 = vmatmul.mubr.bf16.gmra.mrb[0].mxu0 %v6816
      %v6980 = vpop.f32.mrb[0].mxu0
      %v6981 = vadd.f32 %v6840, %v6980
      %v6982 = vpop.f32.mrb[0].mxu0
      %v6983 = vpop.f32.mrb[0].mxu0
      %v6984 = vadd.f32 %v6840, %v6983
      %v6985 = vpop.f32.mrb[0].mxu0
      %6986 = vdwg.mxu0
      %v6987 = vadd.f32 %v6583, %v6925
      %v6988 = vadd.f32 %v6584, %v6928
      %v6989 = vadd.f32 %v6585, %v6933
      %v6990 = vadd.f32 %v6586, %v6936
      %v6991 = vadd.f32 %v6587, %v6941
      %v6992 = vadd.f32 %v6588, %v6944
      %v6993 = vadd.f32 %v6589, %v6949
      %v6994 = vadd.f32 %v6590, %v6952
      %v6995 = vadd.f32 %v6591, %v6957
      %v6996 = vadd.f32 %v6592, %v6960
      %v6997 = vadd.f32 %v6593, %v6965
      %v6998 = vadd.f32 %v6594, %v6968
      %v6999 = vadd.f32 %v6595, %v6973
      %v7000 = vadd.f32 %v6596, %v6976
      %v7001 = vadd.f32 %v6597, %v6981
      %v7002 = vadd.f32 %v6598, %v6984
      %v7003 = vadd.f32 %v6987, %v5281
      %v7004 = vadd.f32 %v6988, %v5284
      %v7005 = vadd.f32 %v6989, %v5289
      %v7006 = vadd.f32 %v6990, %v5292
      %v7007 = vadd.f32 %v6991, %v5297
      %v7008 = vadd.f32 %v6992, %v5300
      %v7009 = vadd.f32 %v6993, %v5305
      %v7010 = vadd.f32 %v6994, %v5308
      %v7011 = vadd.f32 %v6995, %v5313
      %v7012 = vadd.f32 %v6996, %v5316
      %v7013 = vadd.f32 %v6997, %v5321
      %v7014 = vadd.f32 %v6998, %v5324
      %v7015 = vadd.f32 %v6999, %v5329
      %v7016 = vadd.f32 %v7000, %v5332
      %v7017 = vadd.f32 %v7001, %v5337
      %v7018 = vadd.f32 %v7002, %v5340
      %v7019 = vmax.f32 %v7003, 0.0
      %v7020 = vmax.f32 %v7004, 0.0
      %v7021 = vmax.f32 %v7005, 0.0
      %v7022 = vmax.f32 %v7006, 0.0
      %v7023 = vmax.f32 %v7007, 0.0
      %v7024 = vmax.f32 %v7008, 0.0
      %v7025 = vmax.f32 %v7009, 0.0
      %v7026 = vmax.f32 %v7010, 0.0
      %v7027 = vmax.f32 %v7011, 0.0
      %v7028 = vmax.f32 %v7012, 0.0
      %v7029 = vmax.f32 %v7013, 0.0
      %v7030 = vmax.f32 %v7014, 0.0
      %v7031 = vmax.f32 %v7015, 0.0
      %v7032 = vmax.f32 %v7016, 0.0
      %v7033 = vmax.f32 %v7017, 0.0
      %v7034 = vmax.f32 %v7018, 0.0
      %v7035 = vpack.c.bf16 %v7020, %v7019
      %v7036 = vpack.c.bf16 %v7022, %v7021
      %v7037 = vpack.c.bf16 %v7024, %v7023
      %v7038 = vpack.c.bf16 %v7026, %v7025
      %v7039 = vpack.c.bf16 %v7028, %v7027
      %v7040 = vpack.c.bf16 %v7030, %v7029
      %v7041 = vpack.c.bf16 %v7032, %v7031
      %v7042 = vpack.c.bf16 %v7034, %v7033
      %s7043 = scalar_lea.vmem %s6, 256
      %v7044 = vld [vmem:[%s7043] sm:$0xf]
      %v7045 = vld [vmem:[%s7043 + $0x4] sm:$0xf]
      %v7046 = vld [vmem:[%s7043 + $0x8] sm:$0xf]
      %v7047 = vld [vmem:[%s7043 + $0xc] sm:$0xf]
      %v7048 = vld [vmem:[%s7043 + $0x10] sm:$0xf]
      %v7049 = vld [vmem:[%s7043 + $0x14] sm:$0xf]
      %v7050 = vld [vmem:[%s7043 + $0x18] sm:$0xf]
      %v7051 = vld [vmem:[%s7043 + $0x1c] sm:$0xf]
      %v7052 = vld [vmem:[%s7043 + $0x20] sm:$0xf]
      %v7053 = vld [vmem:[%s7043 + $0x24] sm:$0xf]
      %v7054 = vld [vmem:[%s7043 + $0x28] sm:$0xf]
      %v7055 = vld [vmem:[%s7043 + $0x2c] sm:$0xf]
      %v7056 = vld [vmem:[%s7043 + $0x30] sm:$0xf]
      %v7057 = vld [vmem:[%s7043 + $0x34] sm:$0xf]
      %v7058 = vld [vmem:[%s7043 + $0x38] sm:$0xf]
      %v7059 = vld [vmem:[%s7043 + $0x3c] sm:$0xf]
      %s7060 = scalar_lea.vmem %s7, 4
      %v7061 = vld [vmem:[%s7060] sm:$0x1]
      %v7063 = vlaneseq
      %v7064 = vshrl.u32 %v7063, 7
      %v7065 = vsub.s32 0, %v7064
      %v7066 = vrot.slane %v7061, %v7065
      %v7084 = vunpack.c.l.b16 %v7044
      %v7085 = vunpack.c.l.b16 %v7045
      %v7086 = vunpack.c.l.b16 %v7046
      %v7087 = vunpack.c.l.b16 %v7047
      %v7088 = vunpack.c.l.b16 %v7048
      %v7089 = vunpack.c.l.b16 %v7049
      %v7090 = vunpack.c.l.b16 %v7050
      %v7091 = vunpack.c.l.b16 %v7051
      %v7092 = vunpack.c.l.b16 %v7052
      %v7093 = vunpack.c.l.b16 %v7053
      %v7094 = vunpack.c.l.b16 %v7054
      %v7095 = vunpack.c.l.b16 %v7055
      %v7096 = vunpack.c.l.b16 %v7056
      %v7097 = vunpack.c.l.b16 %v7057
      %v7098 = vunpack.c.l.b16 %v7058
      %v7099 = vunpack.c.l.b16 %v7059
      %v7100 = vpack.c.b16 %v7085, %v7084
      %v7101 = vpack.c.b16 %v7087, %v7086
      %v7102 = vpack.c.b16 %v7089, %v7088
      %v7103 = vpack.c.b16 %v7091, %v7090
      %v7104 = vpack.c.b16 %v7093, %v7092
      %v7105 = vpack.c.b16 %v7095, %v7094
      %v7106 = vpack.c.b16 %v7097, %v7096
      %v7107 = vpack.c.b16 %v7099, %v7098
      %7116 = vmatprep.subr.bf16.mxu0 0
      %7117 = vmatpush1.bf16.msra.mxu0 %v7100
      %7118 = vmatprep.subr.bf16.mxu0 0
      %7119 = vmatpush1.bf16.msra.mxu0 %v7101
      %7120 = vmatprep.subr.bf16.mxu0 0
      %7121 = vmatpush1.bf16.msra.mxu0 %v7102
      %7122 = vmatprep.subr.bf16.mxu0 0
      %7123 = vmatpush1.bf16.msra.mxu0 %v7103
      %7124 = vmatprep.subr.bf16.mxu0 0
      %7125 = vmatpush1.bf16.msra.mxu0 %v7104
      %7126 = vmatprep.subr.bf16.mxu0 0
      %7127 = vmatpush1.bf16.msra.mxu0 %v7105
      %7128 = vmatprep.subr.bf16.mxu0 0
      %7129 = vmatpush1.bf16.msra.mxu0 %v7106
      %7130 = vmatprep.subr.bf16.mxu0 0
      %7131 = vmatpush1.bf16.msra.mxu0 %v7107
      %7132 = vmatprep.subr.bf16.mxu0 0
      %7133 = vmatpush1.bf16.msra.mxu0 0
      %7134 = vmatprep.subr.bf16.mxu0 0
      %7135 = vmatpush1.bf16.msra.mxu0 0
      %7136 = vmatprep.subr.bf16.mxu0 0
      %7137 = vmatpush1.bf16.msra.mxu0 0
      %7138 = vmatprep.subr.bf16.mxu0 0
      %7139 = vmatpush1.bf16.msra.mxu0 0
      %7140 = vmatprep.subr.bf16.mxu0 0
      %7141 = vmatpush1.bf16.msra.mxu0 0
      %7142 = vmatprep.subr.bf16.mxu0 0
      %7143 = vmatpush1.bf16.msra.mxu0 0
      %7144 = vmatprep.subr.bf16.mxu0 0
      %7145 = vmatpush1.bf16.msra.mxu0 0
      %7146 = vmatprep.subr.bf16.mxu0 0
      %7147 = vmatpush1.bf16.msra.mxu0 0
      %7148 = vmatprep.mubr.bf16.mxu0 0
      %7149 = vmatmul.mubr.bf16.gmra.mrb[0].mxu0 %v7035
      %v7150 = vpop.f32.mrb[0].mxu0
      %v7151 = vadd.f32 %v7066, %v7150
      %v7152 = vpop.f32.mrb[0].mxu0
      %v7153 = vpop.f32.mrb[0].mxu0
      %v7154 = vadd.f32 %v7066, %v7153
      %v7155 = vpop.f32.mrb[0].mxu0
      %7156 = vmatprep.mubr.bf16.mxu0 0
      %7157 = vmatmul.mubr.bf16.gmra.mrb[0].mxu0 %v7036
      %v7158 = vpop.f32.mrb[0].mxu0
      %v7159 = vadd.f32 %v7066, %v7158
      %v7160 = vpop.f32.mrb[0].mxu0
      %v7161 = vpop.f32.mrb[0].mxu0
      %v7162 = vadd.f32 %v7066, %v7161
      %v7163 = vpop.f32.mrb[0].mxu0
      %7164 = vmatprep.mubr.bf16.mxu0 0
      %7165 = vmatmul.mubr.bf16.gmra.mrb[0].mxu0 %v7037
      %v7166 = vpop.f32.mrb[0].mxu0
      %v7167 = vadd.f32 %v7066, %v7166
      %v7168 = vpop.f32.mrb[0].mxu0
      %v7169 = vpop.f32.mrb[0].mxu0
      %v7170 = vadd.f32 %v7066, %v7169
      %v7171 = vpop.f32.mrb[0].mxu0
      %7172 = vmatprep.mubr.bf16.mxu0 0
      %7173 = vmatmul.mubr.bf16.gmra.mrb[0].mxu0 %v7038
      %v7174 = vpop.f32.mrb[0].mxu0
      %v7175 = vadd.f32 %v7066, %v7174
      %v7176 = vpop.f32.mrb[0].mxu0
      %v7177 = vpop.f32.mrb[0].mxu0
      %v7178 = vadd.f32 %v7066, %v7177
      %v7179 = vpop.f32.mrb[0].mxu0
      %7180 = vmatprep.mubr.bf16.mxu0 0
      %7181 = vmatmul.mubr.bf16.gmra.mrb[0].mxu0 %v7039
      %v7182 = vpop.f32.mrb[0].mxu0
      %v7183 = vadd.f32 %v7066, %v7182
      %v7184 = vpop.f32.mrb[0].mxu0
      %v7185 = vpop.f32.mrb[0].mxu0
      %v7186 = vadd.f32 %v7066, %v7185
      %v7187 = vpop.f32.mrb[0].mxu0
      %7188 = vmatprep.mubr.bf16.mxu0 0
      %7189 = vmatmul.mubr.bf16.gmra.mrb[0].mxu0 %v7040
      %v7190 = vpop.f32.mrb[0].mxu0
      %v7191 = vadd.f32 %v7066, %v7190
      %v7192 = vpop.f32.mrb[0].mxu0
      %v7193 = vpop.f32.mrb[0].mxu0
      %v7194 = vadd.f32 %v7066, %v7193
      %v7195 = vpop.f32.mrb[0].mxu0
      %7196 = vmatprep.mubr.bf16.mxu0 0
      %7197 = vmatmul.mubr.bf16.gmra.mrb[0].mxu0 %v7041
      %v7198 = vpop.f32.mrb[0].mxu0
      %v7199 = vadd.f32 %v7066, %v7198
      %v7200 = vpop.f32.mrb[0].mxu0
      %v7201 = vpop.f32.mrb[0].mxu0
      %v7202 = vadd.f32 %v7066, %v7201
      %v7203 = vpop.f32.mrb[0].mxu0
      %7204 = vmatprep.mubr.bf16.mxu0 0
      %7205 = vmatmul.mubr.bf16.gmra.mrb[0].mxu0 %v7042
      %v7206 = vpop.f32.mrb[0].mxu0
      %v7207 = vadd.f32 %v7066, %v7206
      %v7208 = vpop.f32.mrb[0].mxu0
      %v7209 = vpop.f32.mrb[0].mxu0
      %v7210 = vadd.f32 %v7066, %v7209
      %v7211 = vpop.f32.mrb[0].mxu0
      %7212 = vdwg.mxu0
      %v7213 = vmax.f32 %v7151, 0.0
      %v7214 = vmax.f32 %v7154, 0.0
      %v7215 = vmax.f32 %v7159, 0.0
      %v7216 = vmax.f32 %v7162, 0.0
      %v7217 = vmax.f32 %v7167, 0.0
      %v7218 = vmax.f32 %v7170, 0.0
      %v7219 = vmax.f32 %v7175, 0.0
      %v7220 = vmax.f32 %v7178, 0.0
      %v7221 = vmax.f32 %v7183, 0.0
      %v7222 = vmax.f32 %v7186, 0.0
      %v7223 = vmax.f32 %v7191, 0.0
      %v7224 = vmax.f32 %v7194, 0.0
      %v7225 = vmax.f32 %v7199, 0.0
      %v7226 = vmax.f32 %v7202, 0.0
      %v7227 = vmax.f32 %v7207, 0.0
      %v7228 = vmax.f32 %v7210, 0.0
      %v7229 = vpack.c.bf16 %v7214, %v7213
      %v7230 = vpack.c.bf16 %v7216, %v7215
      %v7231 = vpack.c.bf16 %v7218, %v7217
      %v7232 = vpack.c.bf16 %v7220, %v7219
      %v7233 = vpack.c.bf16 %v7222, %v7221
      %v7234 = vpack.c.bf16 %v7224, %v7223
      %v7235 = vpack.c.bf16 %v7226, %v7225
      %v7236 = vpack.c.bf16 %v7228, %v7227
      %s7237 = scalar_lea.vmem %s8, 256
      %v7238 = vld [vmem:[%s7237] sm:$0xf]
      %v7239 = vld [vmem:[%s7237 + $0x4] sm:$0xf]
      %v7240 = vld [vmem:[%s7237 + $0x8] sm:$0xf]
      %v7241 = vld [vmem:[%s7237 + $0xc] sm:$0xf]
      %v7242 = vld [vmem:[%s7237 + $0x10] sm:$0xf]
      %v7243 = vld [vmem:[%s7237 + $0x14] sm:$0xf]
      %v7244 = vld [vmem:[%s7237 + $0x18] sm:$0xf]
      %v7245 = vld [vmem:[%s7237 + $0x1c] sm:$0xf]
      %v7246 = vld [vmem:[%s7237 + $0x20] sm:$0xf]
      %v7247 = vld [vmem:[%s7237 + $0x24] sm:$0xf]
      %v7248 = vld [vmem:[%s7237 + $0x28] sm:$0xf]
      %v7249 = vld [vmem:[%s7237 + $0x2c] sm:$0xf]
      %v7250 = vld [vmem:[%s7237 + $0x30] sm:$0xf]
      %v7251 = vld [vmem:[%s7237 + $0x34] sm:$0xf]
      %v7252 = vld [vmem:[%s7237 + $0x38] sm:$0xf]
      %v7253 = vld [vmem:[%s7237 + $0x3c] sm:$0xf]
      %s7254 = scalar_lea.vmem %s9, 4
      %v7255 = vld [vmem:[%s7254] sm:$0x1]
      %v7257 = vlaneseq
      %v7258 = vshrl.u32 %v7257, 7
      %v7259 = vsub.s32 0, %v7258
      %v7260 = vrot.slane %v7255, %v7259
      %v7278 = vunpack.c.l.b16 %v7238
      %v7279 = vunpack.c.l.b16 %v7239
      %v7280 = vunpack.c.l.b16 %v7240
      %v7281 = vunpack.c.l.b16 %v7241
      %v7282 = vunpack.c.l.b16 %v7242
      %v7283 = vunpack.c.l.b16 %v7243
      %v7284 = vunpack.c.l.b16 %v7244
      %v7285 = vunpack.c.l.b16 %v7245
      %v7286 = vunpack.c.l.b16 %v7246
      %v7287 = vunpack.c.l.b16 %v7247
      %v7288 = vunpack.c.l.b16 %v7248
      %v7289 = vunpack.c.l.b16 %v7249
      %v7290 = vunpack.c.l.b16 %v7250
      %v7291 = vunpack.c.l.b16 %v7251
      %v7292 = vunpack.c.l.b16 %v7252
      %v7293 = vunpack.c.l.b16 %v7253
      %v7294 = vpack.c.b16 %v7279, %v7278
      %v7295 = vpack.c.b16 %v7281, %v7280
      %v7296 = vpack.c.b16 %v7283, %v7282
      %v7297 = vpack.c.b16 %v7285, %v7284
      %v7298 = vpack.c.b16 %v7287, %v7286
      %v7299 = vpack.c.b16 %v7289, %v7288
      %v7300 = vpack.c.b16 %v7291, %v7290
      %v7301 = vpack.c.b16 %v7293, %v7292
      %7310 = vmatprep.subr.bf16.mxu0 0
      %7311 = vmatpush1.bf16.msra.mxu0 %v7294
      %7312 = vmatprep.subr.bf16.mxu0 0
      %7313 = vmatpush1.bf16.msra.mxu0 %v7295
      %7314 = vmatprep.subr.bf16.mxu0 0
      %7315 = vmatpush1.bf16.msra.mxu0 %v7296
      %7316 = vmatprep.subr.bf16.mxu0 0
      %7317 = vmatpush1.bf16.msra.mxu0 %v7297
      %7318 = vmatprep.subr.bf16.mxu0 0
      %7319 = vmatpush1.bf16.msra.mxu0 %v7298
      %7320 = vmatprep.subr.bf16.mxu0 0
      %7321 = vmatpush1.bf16.msra.mxu0 %v7299
      %7322 = vmatprep.subr.bf16.mxu0 0
      %7323 = vmatpush1.bf16.msra.mxu0 %v7300
      %7324 = vmatprep.subr.bf16.mxu0 0
      %7325 = vmatpush1.bf16.msra.mxu0 %v7301
      %7326 = vmatprep.subr.bf16.mxu0 0
      %7327 = vmatpush1.bf16.msra.mxu0 0
      %7328 = vmatprep.subr.bf16.mxu0 0
      %7329 = vmatpush1.bf16.msra.mxu0 0
      %7330 = vmatprep.subr.bf16.mxu0 0
      %7331 = vmatpush1.bf16.msra.mxu0 0
      %7332 = vmatprep.subr.bf16.mxu0 0
      %7333 = vmatpush1.bf16.msra.mxu0 0
      %7334 = vmatprep.subr.bf16.mxu0 0
      %7335 = vmatpush1.bf16.msra.mxu0 0
      %7336 = vmatprep.subr.bf16.mxu0 0
      %7337 = vmatpush1.bf16.msra.mxu0 0
      %7338 = vmatprep.subr.bf16.mxu0 0
      %7339 = vmatpush1.bf16.msra.mxu0 0
      %7340 = vmatprep.subr.bf16.mxu0 0
      %7341 = vmatpush1.bf16.msra.mxu0 0
      %7342 = vmatprep.mubr.bf16.mxu0 0
      %7343 = vmatmul.mubr.bf16.gmra.mrb[0].mxu0 %v7229
      %v7344 = vpop.f32.mrb[0].mxu0
      %v7345 = vadd.f32 %v7260, %v7344
      %v7346 = vpop.f32.mrb[0].mxu0
      %v7347 = vpop.f32.mrb[0].mxu0
      %v7348 = vadd.f32 %v7260, %v7347
      %v7349 = vpop.f32.mrb[0].mxu0
      %7350 = vmatprep.mubr.bf16.mxu0 0
      %7351 = vmatmul.mubr.bf16.gmra.mrb[0].mxu0 %v7230
      %v7352 = vpop.f32.mrb[0].mxu0
      %v7353 = vadd.f32 %v7260, %v7352
      %v7354 = vpop.f32.mrb[0].mxu0
      %v7355 = vpop.f32.mrb[0].mxu0
      %v7356 = vadd.f32 %v7260, %v7355
      %v7357 = vpop.f32.mrb[0].mxu0
      %7358 = vmatprep.mubr.bf16.mxu0 0
      %7359 = vmatmul.mubr.bf16.gmra.mrb[0].mxu0 %v7231
      %v7360 = vpop.f32.mrb[0].mxu0
      %v7361 = vadd.f32 %v7260, %v7360
      %v7362 = vpop.f32.mrb[0].mxu0
      %v7363 = vpop.f32.mrb[0].mxu0
      %v7364 = vadd.f32 %v7260, %v7363
      %v7365 = vpop.f32.mrb[0].mxu0
      %7366 = vmatprep.mubr.bf16.mxu0 0
      %7367 = vmatmul.mubr.bf16.gmra.mrb[0].mxu0 %v7232
      %v7368 = vpop.f32.mrb[0].mxu0
      %v7369 = vadd.f32 %v7260, %v7368
      %v7370 = vpop.f32.mrb[0].mxu0
      %v7371 = vpop.f32.mrb[0].mxu0
      %v7372 = vadd.f32 %v7260, %v7371
      %v7373 = vpop.f32.mrb[0].mxu0
      %7374 = vmatprep.mubr.bf16.mxu0 0
      %7375 = vmatmul.mubr.bf16.gmra.mrb[0].mxu0 %v7233
      %v7376 = vpop.f32.mrb[0].mxu0
      %v7377 = vadd.f32 %v7260, %v7376
      %v7378 = vpop.f32.mrb[0].mxu0
      %v7379 = vpop.f32.mrb[0].mxu0
      %v7380 = vadd.f32 %v7260, %v7379
      %v7381 = vpop.f32.mrb[0].mxu0
      %7382 = vmatprep.mubr.bf16.mxu0 0
      %7383 = vmatmul.mubr.bf16.gmra.mrb[0].mxu0 %v7234
      %v7384 = vpop.f32.mrb[0].mxu0
      %v7385 = vadd.f32 %v7260, %v7384
      %v7386 = vpop.f32.mrb[0].mxu0
      %v7387 = vpop.f32.mrb[0].mxu0
      %v7388 = vadd.f32 %v7260, %v7387
      %v7389 = vpop.f32.mrb[0].mxu0
      %7390 = vmatprep.mubr.bf16.mxu0 0
      %7391 = vmatmul.mubr.bf16.gmra.mrb[0].mxu0 %v7235
      %v7392 = vpop.f32.mrb[0].mxu0
      %v7393 = vadd.f32 %v7260, %v7392
      %v7394 = vpop.f32.mrb[0].mxu0
      %v7395 = vpop.f32.mrb[0].mxu0
      %v7396 = vadd.f32 %v7260, %v7395
      %v7397 = vpop.f32.mrb[0].mxu0
      %7398 = vmatprep.mubr.bf16.mxu0 0
      %7399 = vmatmul.mubr.bf16.gmra.mrb[0].mxu0 %v7236
      %v7400 = vpop.f32.mrb[0].mxu0
      %v7401 = vadd.f32 %v7260, %v7400
      %v7402 = vpop.f32.mrb[0].mxu0
      %v7403 = vpop.f32.mrb[0].mxu0
      %v7404 = vadd.f32 %v7260, %v7403
      %v7405 = vpop.f32.mrb[0].mxu0
      %7406 = vdwg.mxu0
      %v7407 = vadd.f32 %v7003, %v7345
      %v7408 = vadd.f32 %v7004, %v7348
      %v7409 = vadd.f32 %v7005, %v7353
      %v7410 = vadd.f32 %v7006, %v7356
      %v7411 = vadd.f32 %v7007, %v7361
      %v7412 = vadd.f32 %v7008, %v7364
      %v7413 = vadd.f32 %v7009, %v7369
      %v7414 = vadd.f32 %v7010, %v7372
      %v7415 = vadd.f32 %v7011, %v7377
      %v7416 = vadd.f32 %v7012, %v7380
      %v7417 = vadd.f32 %v7013, %v7385
      %v7418 = vadd.f32 %v7014, %v7388
      %v7419 = vadd.f32 %v7015, %v7393
      %v7420 = vadd.f32 %v7016, %v7396
      %v7421 = vadd.f32 %v7017, %v7401
      %v7422 = vadd.f32 %v7018, %v7404
      %v7423 = vld [vmem:[%s10] sm:$0xff]
      %v7424 = vld [vmem:[%s11] sm:$0xff]
      %7426 = vset.pattern.permute.xlu0 0
      %7427 = vperm.xlu0 %7426, %v7424
      %v7428 = vpop.permute.xlu0 %7427
      %7430 = vmatprep.subr.mxu0 0.0
      %7431 = vmatpush1.xpose.msra.mxu0 %v7407
      %7432 = vmatprep.subr.mxu0 0.0
      %7433 = vmatpush1.xpose.msra.mxu0 %v7408
      %7434 = vmatprep.subr.mxu0 0.0
      %7435 = vmatpush1.xpose.msra.mxu0 %v7409
      %7436 = vmatprep.subr.mxu0 0.0
      %7437 = vmatpush1.xpose.msra.mxu0 %v7410
      %7438 = vmatprep.subr.mxu0 0.0
      %7439 = vmatpush1.xpose.msra.mxu0 %v7411
      %7440 = vmatprep.subr.mxu0 0.0
      %7441 = vmatpush1.xpose.msra.mxu0 %v7412
      %7442 = vmatprep.subr.mxu0 0.0
      %7443 = vmatpush1.xpose.msra.mxu0 %v7413
      %7444 = vmatprep.subr.mxu0 0.0
      %7445 = vmatpush1.xpose.msra.mxu0 %v7414
      %7446 = vmatprep.subr.mxu0 0.0
      %7447 = vmatpush1.xpose.msra.mxu0 %v7415
      %7448 = vmatprep.subr.mxu0 0.0
      %7449 = vmatpush1.xpose.msra.mxu0 %v7416
      %7450 = vmatprep.subr.mxu0 0.0
      %7451 = vmatpush1.xpose.msra.mxu0 %v7417
      %7452 = vmatprep.subr.mxu0 0.0
      %7453 = vmatpush1.xpose.msra.mxu0 %v7418
      %7454 = vmatprep.subr.mxu0 0.0
      %7455 = vmatpush1.xpose.msra.mxu0 %v7419
      %7456 = vmatprep.subr.mxu0 0.0
      %7457 = vmatpush1.xpose.msra.mxu0 %v7420
      %7458 = vmatprep.subr.mxu0 0.0
      %7459 = vmatpush1.xpose.msra.mxu0 %v7421
      %7460 = vmatprep.subr.mxu0 0.0
      %7461 = vmatpush1.xpose.msra.mxu0 %v7422
      %7462 = vmatprep.subr.mxu0 0.0
      %7463 = vmatpush1.xpose.msra.mxu0 0.0
      %7464 = vmatprep.subr.mxu0 0.0
      %7465 = vmatpush1.xpose.msra.mxu0 0.0
      %7466 = vmatprep.subr.mxu0 0.0
      %7467 = vmatpush1.xpose.msra.mxu0 0.0
      %7468 = vmatprep.subr.mxu0 0.0
      %7469 = vmatpush1.xpose.msra.mxu0 0.0
      %7470 = vmatprep.subr.mxu0 0.0
      %7471 = vmatpush1.xpose.msra.mxu0 0.0
      %7472 = vmatprep.subr.mxu0 0.0
      %7473 = vmatpush1.xpose.msra.mxu0 0.0
      %7474 = vmatprep.subr.mxu0 0.0
      %7475 = vmatpush1.xpose.msra.mxu0 0.0
      %7476 = vmatprep.subr.mxu0 0.0
      %7477 = vmatpush1.xpose.msra.mxu0 0.0
      %7478 = vmatprep.subr.mxu0 0.0
      %7479 = vmatpush1.xpose.msra.mxu0 0.0
      %7480 = vmatprep.subr.mxu0 0.0
      %7481 = vmatpush1.xpose.msra.mxu0 0.0
      %7482 = vmatprep.subr.mxu0 0.0
      %7483 = vmatpush1.xpose.msra.mxu0 0.0
      %7484 = vmatprep.subr.mxu0 0.0
      %7485 = vmatpush1.xpose.msra.mxu0 0.0
      %7486 = vmatprep.subr.mxu0 0.0
      %7487 = vmatpush1.xpose.msra.mxu0 0.0
      %7488 = vmatprep.subr.mxu0 0.0
      %7489 = vmatpush1.xpose.msra.mxu0 0.0
      %7490 = vmatprep.subr.mxu0 0.0
      %7491 = vmatpush1.xpose.msra.mxu0 0.0
      %7492 = vmatprep.subr.mxu0 0.0
      %7493 = vmatpush1.xpose.msra.mxu0 0.0
      %7494 = vmatprep.mubr.f32.mxu0 0.0
      %7495 = vmatmul.mubr.f32.gmra.mrb[0].mxu0 %v7423
      %v7496 = vpop.f32.mrb[0].mxu0
      %v7497 = vadd.f32 %v7428, %v7496
      %v7498 = vpop.f32.mrb[0].mxu0
      %7499 = vdwg.mxu0
      %7500 = vst [vmem:[%s467] sm:$0xff] %v7497
      %p7501 = scmp.lt.s32.totalorder %s27, 1
      %s7502 = scalar_select %p7501, %s27, 1
      %p7503 = scmp.lt.s32.totalorder %s28, 0
      %s7504 = scalar_select %p7503, %s28, 0
      %s7505 = sadd.s32 %s7504, %s7502
      %s7506 = smul.addr %s7505, 8
      %s7507 = scalar_lea.vmem %s12, %s7506
      // Predicated region
      $region69: #{tri_equi_local_decoder_forward.1} parent=67 // pred_check
        %p7508 = pneg %p319
      $region70: #{tri_equi_local_decoder_forward.1} parent=67 // pred_check_branch
        %7510 = sbr.rel (%p7508) target = $region72
      $region71: #{tri_equi_local_decoder_forward.1} parent=67 // pred_region
        _
      $region72: #{tri_equi_local_decoder_forward.1} parent=67 // pred_fallthru
        _
    $region68: #{tri_equi_local_decoder_forward.1} parent=5 // pred_fallthru
      _
    %p7511 = scmp.le.s32.totalorder 2, %s18
    // Predicated region
    $region73: #{tri_equi_local_decoder_forward.1} parent=5 // pred_check
      %p7512 = pneg %p7511
    $region74: #{tri_equi_local_decoder_forward.1} parent=5 // pred_check_branch
      %7514 = sbr.rel (%p7512) target = $region76
    $region75: #{tri_equi_local_decoder_forward.1} parent=5 // pred_region
      %s7515 = ssub.s32 %s18, 2
      // Predicated region
      $region77: #{tri_equi_local_decoder_forward.1} parent=75 // pred_check
        %p7516 = pneg %p325
      $region78: #{tri_equi_local_decoder_forward.1} parent=75 // pred_check_branch
        %7518 = sbr.rel (%p7516) target = $region80
      $region79: #{tri_equi_local_decoder_forward.1} parent=75 // pred_region
        %p7519 = scmp.lt.s32.totalorder %s29, 1
        %s7520 = scalar_select %p7519, %s29, 1
        %p7521 = scmp.lt.s32.totalorder %s30, 0
        %s7522 = scalar_select %p7521, %s30, 0
        %s7523 = sadd.s32 %s7522, %s7520
        %s7524 = smul.addr %s7523, 8
        %s7525 = scalar_lea.vmem %s12, %s7524
      $region80: #{tri_equi_local_decoder_forward.1} parent=75 // pred_fallthru
        _
    $region76: #{tri_equi_local_decoder_forward.1} parent=5 // pred_fallthru
      _
  $region6: #{tri_equi_local_decoder_forward.1} parent=0 // loop_footer
    %s22 = sadd.s32 1, %s18
  $region7: #{tri_equi_local_decoder_forward.1} parent=0 // loop_footer_branch
    %17 = sbr.rel target = $region3
  $region8: #{tri_equi_local_decoder_forward.1} parent=0 // loop_exit
    _

</llo_original>
